<compile_context>
chip_gen: v5e
topology: v5e:2x2
jax: 0.10.0
libtpu: 0.0.40
codegen_flags: <defaults>
</compile_context>

<pallas_src>
import math

import jax
import jax.numpy as jnp
from jax import lax
from jax.experimental import pallas as pl
from jax.experimental.pallas import tpu as pltpu


# -----------------------------------------------------------------------------
# Fused LlamaBlock kernel (one (batch, query-tile) per grid step)
# -----------------------------------------------------------------------------
def _make_block_kernel(n_heads, head_dim, seq_len, q_tile, kv_tile, hidden_dim,
                       eps=1e-6):
    nh, hd, S, TQ, TKV, H = n_heads, head_dim, seq_len, q_tile, kv_tile, hidden_dim
    dh = hd // 2
    assert S % TQ == 0 and TQ % TKV == 0
    assert hd % 8 == 0
    r = TQ // TKV  # number of diagonal KV blocks per query tile

    def rmsnorm(v, w):  # v, w in f32
        ms = jnp.mean(v * v, axis=-1, keepdims=True)
        return w * v * lax.rsqrt(ms + eps)

    def rotary2(t, cos, sin):
        # t: (R, hd) f32 ; cos/sin: (R, dh) f32  (same half-split as apply_rotary_emb)
        # TODO(synk): at real head_dim (128) use pltpu.roll + lane-dense full-width
        # cos/sin tables instead of sub-lane half slices + concat.
        t1, t2 = t[:, :dh], t[:, dh:]
        return jnp.concatenate([t1 * cos - t2 * sin, t1 * sin + t2 * cos], axis=-1)

    def kernel(x_ref, cos_ref, sin_ref,
               wq_ref, wk_ref, wv_ref, wo_ref,
               anorm_ref, mnorm_ref, w13_ref, w2_ref,
               out_ref,
               h_sc, k_sc, v_sc):
        qi = pl.program_id(1)
        q_start = pl.multiple_of(qi * TQ, TQ)

        # ---- K/V fill: once per batch element (only at qi == 0) --------------
        @pl.when(qi == 0)
        def _fill_kv():
            x_all = x_ref[...].astype(jnp.float32)                      # (S, D)
            h_all = rmsnorm(x_all, anorm_ref[...]).astype(jnp.bfloat16)
            h_sc[...] = h_all
            # full-width projections: (S, D) @ (D, D), bf16 operands, f32 acc
            k_full = jnp.dot(h_all, wk_ref[...],
                             preferred_element_type=jnp.float32)
            v_full = jnp.dot(h_all, wv_ref[...],
                             preferred_element_type=jnp.float32)
            cos_all = cos_ref[...]
            sin_all = sin_ref[...]
            k_sc[...] = jnp.stack(
                [rotary2(k_full[:, h * hd:(h + 1) * hd], cos_all, sin_all)
                 for h in range(nh)], axis=0).astype(jnp.bfloat16)
            v_sc[...] = jnp.stack(
                [v_full[:, h * hd:(h + 1) * hd] for h in range(nh)],
                axis=0).astype(jnp.bfloat16)

        # ---- Q for this tile: one full-width matmul (wq pre-scaled) ----------
        h_q = h_sc[pl.ds(q_start, TQ), :]                               # (TQ, D) bf16
        q_full = jnp.dot(h_q, wq_ref[...], preferred_element_type=jnp.float32)
        cos_q = cos_ref[pl.ds(q_start, TQ), :]
        sin_q = sin_ref[pl.ds(q_start, TQ), :]
        q_bf = jnp.stack(
            [rotary2(q_full[:, h * hd:(h + 1) * hd], cos_q, sin_q)
             for h in range(nh)], axis=0).astype(jnp.bfloat16)          # (nh, TQ, hd)

        # ---- flash attention, online-softmax state carried in vregs ----------
        def attn_update(state, kv_start, mask):
            m_prev, l_prev, acc_prev = state
            k_blk = k_sc[:, pl.ds(kv_start, TKV), :]                    # (nh,TKV,hd) bf16
            v_blk = v_sc[:, pl.ds(kv_start, TKV), :]
            s = jnp.einsum('hqd,hkd->hqk', q_bf, k_blk,
                           preferred_element_type=jnp.float32)          # (nh,TQ,TKV)
            if mask is not None:
                s = jnp.where(mask, s, -1e30)
            m_new = jnp.maximum(m_prev, jnp.max(s, axis=-1, keepdims=True))
            alpha = jnp.exp(m_prev - m_new)
            p = jnp.exp(s - m_new)
            l_new = alpha * l_prev + jnp.sum(p, axis=-1, keepdims=True)
            pv = jnp.einsum('hqk,hkd->hqd', p.astype(jnp.bfloat16), v_blk,
                            preferred_element_type=jnp.float32)
            return m_new, l_new, alpha * acc_prev + pv

        state = (jnp.full((nh, TQ, 1), -1e30, jnp.float32),
                 jnp.zeros((nh, TQ, 1), jnp.float32),
                 jnp.zeros((nh, TQ, hd), jnp.float32))

        # strictly-below-diagonal blocks: no mask at all
        # TODO(synk): trip count is data-dependent (causal block skip), so
        # fori_loop unroll is unavailable here; the skip saves more than unroll.
        def kv_step(j, st):
            return attn_update(st, pl.multiple_of(j * TKV, TKV), None)
        state = lax.fori_loop(0, qi * r, kv_step, state)

        # diagonal blocks: peeled static code, compile-time triangular mask
        rows = lax.broadcasted_iota(jnp.int32, (1, TQ, TKV), 1)
        cols = lax.broadcasted_iota(jnp.int32, (1, TQ, TKV), 2)
        for d in range(r):
            mask = rows >= (cols + d * TKV)
            state = attn_update(state, pl.multiple_of(q_start + d * TKV, TKV), mask)

        m_f, l_f, acc_f = state
        inv_l = pl.reciprocal(l_f, approx=True)                          # EUP slot
        attn = (acc_f * inv_l).astype(jnp.bfloat16)                      # (nh, TQ, hd)
        # heads back onto the lane dim -> single full-K output projection
        attn_cat = jnp.concatenate([attn[h] for h in range(nh)], axis=-1)  # (TQ, D)

        x_q = x_ref[pl.ds(q_start, TQ), :].astype(jnp.float32)
        h1 = x_q + jnp.dot(attn_cat, wo_ref[...],
                           preferred_element_type=jnp.float32)           # (TQ, D) f32

        # ---- SwiGLU MLP: fused w1|w3 matmul ----------------------------------
        n2 = rmsnorm(h1, mnorm_ref[...]).astype(jnp.bfloat16)
        g = jnp.dot(n2, w13_ref[...], preferred_element_type=jnp.float32)  # (TQ, 2H)
        act = (jax.nn.silu(g[:, :H]) * g[:, H:]).astype(jnp.bfloat16)
        mlp = jnp.dot(act, w2_ref[...], preferred_element_type=jnp.float32)
        out_ref[...] = (h1 + mlp).astype(out_ref.dtype)

    return kernel


def pack_block_params(p, n_heads):
    """Cast raw f32 params into kernel-ready bf16 layout (once, at load time)."""
    D = p["wq"].shape[0]
    hd = D // n_heads
    bf = jnp.bfloat16
    return {
        # fold 1/sqrt(head_dim) into wq (RoPE is linear, so scaling commutes)
        "wq": (p["wq"] * (1.0 / math.sqrt(hd))).astype(bf),
        "wk": p["wk"].astype(bf),
        "wv": p["wv"].astype(bf),
        "wo": p["wo"].astype(bf),
        "w13": jnp.concatenate([p["w1"], p["w3"]], axis=1).astype(bf),
        "w2": p["w2"].astype(bf),
        "attn_norm_w": p["attn_norm_w"].reshape(1, D),
        "mlp_norm_w": p["mlp_norm_w"].reshape(1, D),
    }


def llama_block_pallas(x, cos, sin, packed, *, n_heads, q_tile=None, kv_tile=None):
    B, S, D = x.shape
    hd = D // n_heads
    dh = hd // 2
    H = packed["w13"].shape[1] // 2
    TQ = q_tile if q_tile is not None else min(S, 256)
    TKV = kv_tile if kv_tile is not None else TQ
    assert S % TQ == 0 and TQ % TKV == 0
    n_qt = S // TQ

    kernel = _make_block_kernel(n_heads, hd, S, TQ, TKV, H)

    def rep(shape):
        # constant-index blocks: DMA'd once (block index never changes)
        # TODO(synk): mark with pipeline_mode=pl.Buffered(1) for v7x VMEM headroom.
        return pl.BlockSpec(shape, lambda b, qi: (0, 0))

    return pl.pallas_call(
        kernel,
        out_shape=jax.ShapeDtypeStruct((B, S, D), jnp.bfloat16),
        grid=(B, n_qt),
        in_specs=[
            pl.BlockSpec((None, S, D), lambda b, qi: (b, 0, 0)),  # x (full seq, bf16)
            rep((S, dh)),                                          # cos
            rep((S, dh)),                                          # sin
            rep((D, D)),                                           # wq (pre-scaled)
            rep((D, D)),                                           # wk
            rep((D, D)),                                           # wv
            rep((D, D)),                                           # wo
            rep((1, D)),                                           # attn norm w
            rep((1, D)),                                           # mlp norm w
            rep((D, 2 * H)),                                       # fused w1|w3
            rep((H, D)),                                           # w2
        ],
        out_specs=pl.BlockSpec((None, TQ, D), lambda b, qi: (b, qi, 0)),
        scratch_shapes=[
            pltpu.VMEM((S, D), jnp.bfloat16),           # normalized activations
            pltpu.VMEM((n_heads, S, hd), jnp.bfloat16), # rotated K (per batch elem)
            pltpu.VMEM((n_heads, S, hd), jnp.bfloat16), # V (per batch elem)
        ],
        compiler_params=pltpu.CompilerParams(
            # q-tile axis must be "arbitrary": it reuses scratch filled at qi==0
            dimension_semantics=("parallel", "arbitrary"),
            vmem_limit_bytes=64 * 1024 * 1024),
    )(x, cos, sin,
      packed["wq"], packed["wk"], packed["wv"], packed["wo"],
      packed["attn_norm_w"], packed["mlp_norm_w"],
      packed["w13"], packed["w2"])


# -----------------------------------------------------------------------------
# Final norm + vocab projection kernel (vocab-tiled, weight slices streamed)
# -----------------------------------------------------------------------------
def _make_head_kernel(eps=1e-6):
    def kernel(h_ref, norm_ref, wout_ref, out_ref):
        h = h_ref[...].astype(jnp.float32)                            # (S, D)
        ms = jnp.mean(h * h, axis=-1, keepdims=True)
        n = (norm_ref[...] * h * lax.rsqrt(ms + eps)).astype(jnp.bfloat16)
        out_ref[...] = jnp.dot(
            n, wout_ref[...], preferred_element_type=jnp.float32
        ).astype(out_ref.dtype)
    return kernel


def llama_head_pallas(h, norm_w, wout_bf16, *, v_tile=256):
    B, S, D = h.shape
    V = wout_bf16.shape[1]
    TV = min(v_tile, V)
    assert V % TV == 0
    # TODO(synk): at real sizes also tile S and persist the normalized
    # activations across vocab tiles instead of recomputing the cheap RMSNorm.
    return pl.pallas_call(
        _make_head_kernel(),
        out_shape=jax.ShapeDtypeStruct((B, S, V), jnp.float32),
        grid=(B, V // TV),
        in_specs=[
            pl.BlockSpec((None, S, D), lambda b, vi: (b, 0, 0)),
            pl.BlockSpec((1, D), lambda b, vi: (0, 0)),
            pl.BlockSpec((D, TV), lambda b, vi: (0, vi)),   # streamed vocab slice
        ],
        out_specs=pl.BlockSpec((None, S, TV), lambda b, vi: (b, 0, vi)),
        compiler_params=pltpu.CompilerParams(
            dimension_semantics=("parallel", "parallel"),
            vmem_limit_bytes=64 * 1024 * 1024),
    )(h, norm_w.reshape(1, D), wout_bf16)


# -----------------------------------------------------------------------------
# Full LlamaModel forward (no KV-cache / no loss branch)
# -----------------------------------------------------------------------------
def llama_model_pallas(tokens, model, *, n_heads, q_tile=None):
    # TODO(synk): token-embedding gather, the decode-time KV-cache path, and the
    # optional cross-entropy branch are left to XLA / out of scope here.
    h = jnp.take(model["emb_bf16"], tokens, axis=0)              # (B, S, D) bf16
    for packed in model["packed_blocks"]:
        h = llama_block_pallas(h, model["cos"], model["sin"], packed,
                               n_heads=n_heads, q_tile=q_tile)
    return llama_head_pallas(h, model["final_norm_w"], model["wout_bf16"])


# -----------------------------------------------------------------------------
# Pure-JAX reference (mirrors the PyTorch module) for validation
# -----------------------------------------------------------------------------
def llama_block_ref(x, cos, sin, p, *, n_heads, eps=1e-6):
    B, S, D = x.shape
    hd = D // n_heads
    dh = hd // 2

    def rmsnorm(v, w):
        return w * v * lax.rsqrt(jnp.mean(v * v, axis=-1, keepdims=True) + eps)

    def rotary(t):
        t1, t2 = t[..., :dh], t[..., dh:]
        c = cos[None, :, None, :]
        s = sin[None, :, None, :]
        return jnp.concatenate([t1 * c - t2 * s, t1 * s + t2 * c], axis=-1)

    h = rmsnorm(x, p["attn_norm_w"])
    q = (h @ p["wq"]).reshape(B, S, n_heads, hd)
    k = (h @ p["wk"]).reshape(B, S, n_heads, hd)
    v = (h @ p["wv"]).reshape(B, S, n_heads, hd)
    q, k = rotary(q), rotary(k)
    scores = jnp.einsum("bqhd,bkhd->bhqk", q, k) / math.sqrt(hd)
    mask = jnp.tril(jnp.ones((S, S), dtype=bool))
    scores = jnp.where(mask[None, None], scores, -1e30)
    pr = jax.nn.softmax(scores, axis=-1)
    attn = jnp.einsum("bhqk,bkhd->bqhd", pr, v).reshape(B, S, D)
    h1 = x + attn @ p["wo"]
    n2 = rmsnorm(h1, p["mlp_norm_w"])
    return h1 + (jax.nn.silu(n2 @ p["w1"]) * (n2 @ p["w3"])) @ p["w2"]


def llama_model_ref(tokens, raw, *, n_heads, eps=1e-6):
    h = jnp.take(raw["embedding"], tokens, axis=0)
    for p in raw["blocks"]:
        h = llama_block_ref(h, raw["cos"], raw["sin"], p, n_heads=n_heads, eps=eps)
    n = raw["final_norm_w"] * h * lax.rsqrt(
        jnp.mean(h * h, axis=-1, keepdims=True) + eps)
    return n @ raw["wout"]


# -----------------------------------------------------------------------------
if __name__ == "__main__":
    # Small but layout-relevant shapes: S, D multiples of (8, 128) vreg tiles,
    # head_dim % 8 == 0, hidden_dim 256-aligned exactly as MLP.__init__ computes.
    B, S, D = 2, 128, 128
    n_layers = 2
    n_heads = 4
    head_dim = D // n_heads                       # 32
    vocab_size = 512
    mlp_dim = 4 * D                               # LlamaModel default
    hidden_dim = int(2 * mlp_dim / 3)
    hidden_dim = 256 * ((hidden_dim + 255) // 256)  # -> 512
    q_tile = 64                                   # grid (B=2, 2 q-tiles): exercises
                                                  # both the qi==0 fill and qi>0 reuse

    key = jax.random.PRNGKey(0)
    kit = iter(jax.random.split(key, 8 * n_layers + 4))

    def init(shape):
        return jax.random.normal(next(kit), shape, jnp.float32) * 0.02

    blocks = []
    for _ in range(n_layers):
        blocks.append({
            "wq": init((D, D)), "wk": init((D, D)),
            "wv": init((D, D)), "wo": init((D, D)),
            "w1": init((D, hidden_dim)),
            "w2": init((hidden_dim, D)),
            "w3": init((D, hidden_dim)),
            "attn_norm_w": jnp.ones((D,), jnp.float32),
            "mlp_norm_w": jnp.ones((D,), jnp.float32),
        })

    # RoPE tables exactly as precompute_freqs_cis builds them
    dh = head_dim // 2
    inv_freq = 1.0 / (10000.0 ** (
        jnp.arange(0, head_dim, 2)[:dh].astype(jnp.float32) / head_dim))
    pos = jnp.arange(S, dtype=jnp.float32)
    angles = pos[:, None] * inv_freq[None, :]
    cos, sin = jnp.cos(angles), jnp.sin(angles)

    raw = {
        "embedding": init((vocab_size, D)),
        "blocks": blocks,
        "final_norm_w": jnp.ones((D,), jnp.float32),
        "wout": init((D, vocab_size)),
        "cos": cos, "sin": sin,
    }
    model = {
        "emb_bf16": raw["embedding"].astype(jnp.bfloat16),
        "packed_blocks": [pack_block_params(p, n_heads) for p in blocks],
        "final_norm_w": raw["final_norm_w"],
        "wout_bf16": raw["wout"].astype(jnp.bfloat16),
        "cos": cos, "sin": sin,
    }

    tokens = jax.random.randint(next(kit), (B, S), 0, vocab_size)

    logits = llama_model_pallas(tokens, model, n_heads=n_heads, q_tile=q_tile)
    logits = jax.block_until_ready(logits)

    with jax.default_matmul_precision("float32"):
        ref = llama_model_ref(tokens, raw, n_heads=n_heads)
        ref = jax.block_until_ready(ref)

    assert logits.shape == (B, S, vocab_size)
    err = float(jnp.max(jnp.abs(logits - ref)))
    # bf16 matmul operands + bf16 residual stream between layers + approx
    # reciprocal in the softmax, compared against an all-f32 reference.
    assert err < 3e-2, f"max abs err {err}"
    print("KERNEL_OK")
</pallas_src>

<mosaic_0001>
module attributes {stable_mosaic.version = 11 : i64} {
  func.func @kernel(%arg0: i32, %arg1: i32, %arg2: memref<1x128x128xbf16, #tpu.memory_space<vmem>>, %arg3: memref<128x16xf32, #tpu.memory_space<vmem>>, %arg4: memref<128x16xf32, #tpu.memory_space<vmem>>, %arg5: memref<128x128xbf16, #tpu.memory_space<vmem>>, %arg6: memref<128x128xbf16, #tpu.memory_space<vmem>>, %arg7: memref<128x128xbf16, #tpu.memory_space<vmem>>, %arg8: memref<128x128xbf16, #tpu.memory_space<vmem>>, %arg9: memref<1x128xf32, #tpu.memory_space<vmem>>, %arg10: memref<1x128xf32, #tpu.memory_space<vmem>>, %arg11: memref<128x1024xbf16, #tpu.memory_space<vmem>>, %arg12: memref<512x128xbf16, #tpu.memory_space<vmem>>, %arg13: memref<1x64x128xbf16, #tpu.memory_space<vmem>>, %arg14: memref<128x128xbf16, #tpu.memory_space<vmem>>, %arg15: memref<4x128x32xbf16, #tpu.memory_space<vmem>>, %arg16: memref<4x128x32xbf16, #tpu.memory_space<vmem>>) attributes {dimension_semantics = [#tpu.dimension_semantics<parallel>, #tpu.dimension_semantics<arbitrary>], iteration_bounds = array<i64: 2, 2>, scalar_prefetch = 0 : i64, scratch_operands = 3 : i64, tpu.core_type = #tpu.core_type<tc>, window_params = [{transform_indices = @transform_0, window_bounds = array<i64: 1, 128, 128>}, {pipeline_mode = #tpu.pipeline_mode<synchronous>, transform_indices = @transform_1, window_bounds = array<i64: 128, 16>}, {pipeline_mode = #tpu.pipeline_mode<synchronous>, transform_indices = @transform_2, window_bounds = array<i64: 128, 16>}, {pipeline_mode = #tpu.pipeline_mode<synchronous>, transform_indices = @transform_3, window_bounds = array<i64: 128, 128>}, {pipeline_mode = #tpu.pipeline_mode<synchronous>, transform_indices = @transform_4, window_bounds = array<i64: 128, 128>}, {pipeline_mode = #tpu.pipeline_mode<synchronous>, transform_indices = @transform_5, window_bounds = array<i64: 128, 128>}, {pipeline_mode = #tpu.pipeline_mode<synchronous>, transform_indices = @transform_6, window_bounds = array<i64: 128, 128>}, {pipeline_mode = #tpu.pipeline_mode<synchronous>, transform_indices = @transform_7, window_bounds = array<i64: 1, 128>}, {pipeline_mode = #tpu.pipeline_mode<synchronous>, transform_indices = @transform_8, window_bounds = array<i64: 1, 128>}, {pipeline_mode = #tpu.pipeline_mode<synchronous>, transform_indices = @transform_9, window_bounds = array<i64: 128, 1024>}, {pipeline_mode = #tpu.pipeline_mode<synchronous>, transform_indices = @transform_10, window_bounds = array<i64: 512, 128>}, {transform_indices = @transform_11, window_bounds = array<i64: 1, 64, 128>}]} {
    %c64_i32 = arith.constant 64 : i32
    %0 = arith.muli %arg1, %c64_i32 : i32
    %1 = tpu.assume_multiple %0, 64 : i32
    %c0_i32 = arith.constant 0 : i32
    %2 = arith.cmpi eq, %arg1, %c0_i32 : i32
    %3 = arith.extui %2 : i1 to i32
    %c0_i32_0 = arith.constant 0 : i32
    %4 = arith.cmpi ne, %3, %c0_i32_0 : i32
    scf.if %4 {
      %c0_41 = arith.constant 0 : index
      %c0_42 = arith.constant 0 : index
      %c0_43 = arith.constant 0 : index
      %152 = vector.load %arg2[%c0_41, %c0_42, %c0_43] : memref<1x128x128xbf16, #tpu.memory_space<vmem>>, vector<1x128x128xbf16>
      %153 = vector.shape_cast %152 : vector<1x128x128xbf16> to vector<128x128xbf16>
      %154 = arith.extf %153 : vector<128x128xbf16> to vector<128x128xf32>
      %c0_44 = arith.constant 0 : index
      %c0_45 = arith.constant 0 : index
      %155 = vector.load %arg9[%c0_44, %c0_45] : memref<1x128xf32, #tpu.memory_space<vmem>>, vector<1x128xf32>
      %156 = arith.mulf %154, %154 : vector<128x128xf32>
      %cst_46 = arith.constant dense<0.000000e+00> : vector<128xf32>
      %157 = vector.multi_reduction <add>, %156, %cst_46 [1] : vector<128x128xf32> to vector<128xf32>
      %158 = vector.shape_cast %157 : vector<128xf32> to vector<128x1xf32>
      %cst_47 = arith.constant 1.280000e+02 : f32
      %159 = vector.broadcast %cst_47 : f32 to vector<128x1xf32>
      %160 = arith.divf %158, %159 : vector<128x1xf32>
      %161 = vector.broadcast %155 : vector<1x128xf32> to vector<128x128xf32>
      %162 = arith.mulf %161, %154 : vector<128x128xf32>
      %cst_48 = arith.constant 9.99999997E-7 : f32
      %163 = vector.broadcast %cst_48 : f32 to vector<128x1xf32>
      %164 = arith.addf %160, %163 : vector<128x1xf32>
      %165 = math.rsqrt %164 : vector<128x1xf32>
      %166 = vector.broadcast %165 : vector<128x1xf32> to vector<128x128xf32>
      %167 = arith.mulf %162, %166 : vector<128x128xf32>
      %168 = arith.truncf %167 : vector<128x128xf32> to vector<128x128xbf16>
      %c0_49 = arith.constant 0 : index
      %c0_50 = arith.constant 0 : index
      %169 = vector.load %arg14[%c0_49, %c0_50] : memref<128x128xbf16, #tpu.memory_space<vmem>>, vector<128x128xbf16>
      tpu.vector_store %arg14[%c0_49, %c0_50], %168 {strides = array<i32>} : memref<128x128xbf16, #tpu.memory_space<vmem>>, vector<128x128xbf16>,
      %c0_51 = arith.constant 0 : index
      %c0_52 = arith.constant 0 : index
      %170 = vector.load %arg6[%c0_51, %c0_52] : memref<128x128xbf16, #tpu.memory_space<vmem>>, vector<128x128xbf16>
      %cst_53 = arith.constant dense<0.000000e+00> : vector<128x128xf32>
      %171 = tpu.matmul %168, %170, %cst_53 {dimension_numbers = #tpu.dot_dimension_numbers<[1], [0], [0], [1], [0, 0, 1, 1], [], []>} : vector<128x128xbf16>, vector<128x128xbf16>, vector<128x128xf32> -> vector<128x128xf32>
      %c0_54 = arith.constant 0 : index
      %c0_55 = arith.constant 0 : index
      %172 = vector.load %arg7[%c0_54, %c0_55] : memref<128x128xbf16, #tpu.memory_space<vmem>>, vector<128x128xbf16>
      %cst_56 = arith.constant dense<0.000000e+00> : vector<128x128xf32>
      %173 = tpu.matmul %168, %172, %cst_56 {dimension_numbers = #tpu.dot_dimension_numbers<[1], [0], [0], [1], [0, 0, 1, 1], [], []>} : vector<128x128xbf16>, vector<128x128xbf16>, vector<128x128xf32> -> vector<128x128xf32>
      %c0_57 = arith.constant 0 : index
      %c0_58 = arith.constant 0 : index
      %174 = vector.load %arg3[%c0_57, %c0_58] : memref<128x16xf32, #tpu.memory_space<vmem>>, vector<128x16xf32>
      %c0_59 = arith.constant 0 : index
      %c0_60 = arith.constant 0 : index
      %175 = vector.load %arg4[%c0_59, %c0_60] : memref<128x16xf32, #tpu.memory_space<vmem>>, vector<128x16xf32>
      %176 = vector.extract_strided_slice %171 {offsets = [0, 0], sizes = [128, 32], strides = [1, 1]} : vector<128x128xf32> to vector<128x32xf32>
      %177 = vector.extract_strided_slice %176 {offsets = [0, 0], sizes = [128, 16], strides = [1, 1]} : vector<128x32xf32> to vector<128x16xf32>
      %178 = vector.extract_strided_slice %176 {offsets = [0, 16], sizes = [128, 16], strides = [1, 1]} : vector<128x32xf32> to vector<128x16xf32>
      %179 = arith.mulf %177, %174 : vector<128x16xf32>
      %180 = arith.mulf %178, %175 : vector<128x16xf32>
      %181 = arith.subf %179, %180 : vector<128x16xf32>
      %182 = arith.mulf %177, %175 : vector<128x16xf32>
      %183 = arith.mulf %178, %174 : vector<128x16xf32>
      %184 = arith.addf %182, %183 : vector<128x16xf32>
      %185 = tpu.concatenate %181, %184 in 1 : vector<128x16xf32>, vector<128x16xf32> -> vector<128x32xf32>
      %186 = vector.extract_strided_slice %171 {offsets = [0, 32], sizes = [128, 32], strides = [1, 1]} : vector<128x128xf32> to vector<128x32xf32>
      %187 = vector.extract_strided_slice %186 {offsets = [0, 0], sizes = [128, 16], strides = [1, 1]} : vector<128x32xf32> to vector<128x16xf32>
      %188 = vector.extract_strided_slice %186 {offsets = [0, 16], sizes = [128, 16], strides = [1, 1]} : vector<128x32xf32> to vector<128x16xf32>
      %189 = arith.mulf %187, %174 : vector<128x16xf32>
      %190 = arith.mulf %188, %175 : vector<128x16xf32>
      %191 = arith.subf %189, %190 : vector<128x16xf32>
      %192 = arith.mulf %187, %175 : vector<128x16xf32>
      %193 = arith.mulf %188, %174 : vector<128x16xf32>
      %194 = arith.addf %192, %193 : vector<128x16xf32>
      %195 = tpu.concatenate %191, %194 in 1 : vector<128x16xf32>, vector<128x16xf32> -> vector<128x32xf32>
      %196 = vector.extract_strided_slice %171 {offsets = [0, 64], sizes = [128, 32], strides = [1, 1]} : vector<128x128xf32> to vector<128x32xf32>
      %197 = vector.extract_strided_slice %196 {offsets = [0, 0], sizes = [128, 16], strides = [1, 1]} : vector<128x32xf32> to vector<128x16xf32>
      %198 = vector.extract_strided_slice %196 {offsets = [0, 16], sizes = [128, 16], strides = [1, 1]} : vector<128x32xf32> to vector<128x16xf32>
      %199 = arith.mulf %197, %174 : vector<128x16xf32>
      %200 = arith.mulf %198, %175 : vector<128x16xf32>
      %201 = arith.subf %199, %200 : vector<128x16xf32>
      %202 = arith.mulf %197, %175 : vector<128x16xf32>
      %203 = arith.mulf %198, %174 : vector<128x16xf32>
      %204 = arith.addf %202, %203 : vector<128x16xf32>
      %205 = tpu.concatenate %201, %204 in 1 : vector<128x16xf32>, vector<128x16xf32> -> vector<128x32xf32>
      %206 = vector.extract_strided_slice %171 {offsets = [0, 96], sizes = [128, 32], strides = [1, 1]} : vector<128x128xf32> to vector<128x32xf32>
      %207 = vector.extract_strided_slice %206 {offsets = [0, 0], sizes = [128, 16], strides = [1, 1]} : vector<128x32xf32> to vector<128x16xf32>
      %208 = vector.extract_strided_slice %206 {offsets = [0, 16], sizes = [128, 16], strides = [1, 1]} : vector<128x32xf32> to vector<128x16xf32>
      %209 = arith.mulf %207, %174 : vector<128x16xf32>
      %210 = arith.mulf %208, %175 : vector<128x16xf32>
      %211 = arith.subf %209, %210 : vector<128x16xf32>
      %212 = arith.mulf %207, %175 : vector<128x16xf32>
      %213 = arith.mulf %208, %174 : vector<128x16xf32>
      %214 = arith.addf %212, %213 : vector<128x16xf32>
      %215 = tpu.concatenate %211, %214 in 1 : vector<128x16xf32>, vector<128x16xf32> -> vector<128x32xf32>
      %216 = vector.shape_cast %185 : vector<128x32xf32> to vector<1x128x32xf32>
      %217 = vector.shape_cast %195 : vector<128x32xf32> to vector<1x128x32xf32>
      %218 = vector.shape_cast %205 : vector<128x32xf32> to vector<1x128x32xf32>
      %219 = vector.shape_cast %215 : vector<128x32xf32> to vector<1x128x32xf32>
      %220 = tpu.concatenate %216, %217, %218, %219 in 0 : vector<1x128x32xf32>, vector<1x128x32xf32>, vector<1x128x32xf32>, vector<1x128x32xf32> -> vector<4x128x32xf32>
      %221 = arith.truncf %220 : vector<4x128x32xf32> to vector<4x128x32xbf16>
      %c0_61 = arith.constant 0 : index
      %c0_62 = arith.constant 0 : index
      %c0_63 = arith.constant 0 : index
      %222 = vector.load %arg15[%c0_61, %c0_62, %c0_63] : memref<4x128x32xbf16, #tpu.memory_space<vmem>>, vector<4x128x32xbf16>
      tpu.vector_store %arg15[%c0_61, %c0_62, %c0_63], %221 {strides = array<i32>} : memref<4x128x32xbf16, #tpu.memory_space<vmem>>, vector<4x128x32xbf16>,
      %223 = vector.extract_strided_slice %173 {offsets = [0, 0], sizes = [128, 32], strides = [1, 1]} : vector<128x128xf32> to vector<128x32xf32>
      %224 = vector.extract_strided_slice %173 {offsets = [0, 32], sizes = [128, 32], strides = [1, 1]} : vector<128x128xf32> to vector<128x32xf32>
      %225 = vector.extract_strided_slice %173 {offsets = [0, 64], sizes = [128, 32], strides = [1, 1]} : vector<128x128xf32> to vector<128x32xf32>
      %226 = vector.extract_strided_slice %173 {offsets = [0, 96], sizes = [128, 32], strides = [1, 1]} : vector<128x128xf32> to vector<128x32xf32>
      %227 = vector.shape_cast %223 : vector<128x32xf32> to vector<1x128x32xf32>
      %228 = vector.shape_cast %224 : vector<128x32xf32> to vector<1x128x32xf32>
      %229 = vector.shape_cast %225 : vector<128x32xf32> to vector<1x128x32xf32>
      %230 = vector.shape_cast %226 : vector<128x32xf32> to vector<1x128x32xf32>
      %231 = tpu.concatenate %227, %228, %229, %230 in 0 : vector<1x128x32xf32>, vector<1x128x32xf32>, vector<1x128x32xf32>, vector<1x128x32xf32> -> vector<4x128x32xf32>
      %232 = arith.truncf %231 : vector<4x128x32xf32> to vector<4x128x32xbf16>
      %c0_64 = arith.constant 0 : index
      %c0_65 = arith.constant 0 : index
      %c0_66 = arith.constant 0 : index
      %233 = vector.load %arg16[%c0_64, %c0_65, %c0_66] : memref<4x128x32xbf16, #tpu.memory_space<vmem>>, vector<4x128x32xbf16>
      tpu.vector_store %arg16[%c0_64, %c0_65, %c0_66], %232 {strides = array<i32>} : memref<4x128x32xbf16, #tpu.memory_space<vmem>>, vector<4x128x32xbf16>,
    } else {
    }
    %5 = arith.index_cast %1 : i32 to index
    %c0 = arith.constant 0 : index
    %6 = vector.load %arg14[%5, %c0] : memref<128x128xbf16, #tpu.memory_space<vmem>>, vector<64x128xbf16>
    %c0_1 = arith.constant 0 : index
    %c0_2 = arith.constant 0 : index
    %7 = vector.load %arg5[%c0_1, %c0_2] : memref<128x128xbf16, #tpu.memory_space<vmem>>, vector<128x128xbf16>
    %cst = arith.constant dense<0.000000e+00> : vector<64x128xf32>
    %8 = tpu.matmul %6, %7, %cst {dimension_numbers = #tpu.dot_dimension_numbers<[1], [0], [0], [1], [0, 0, 1, 1], [], []>} : vector<64x128xbf16>, vector<128x128xbf16>, vector<64x128xf32> -> vector<64x128xf32>
    %9 = arith.index_cast %1 : i32 to index
    %c0_3 = arith.constant 0 : index
    %10 = vector.load %arg3[%9, %c0_3] : memref<128x16xf32, #tpu.memory_space<vmem>>, vector<64x16xf32>
    %11 = arith.index_cast %1 : i32 to index
    %c0_4 = arith.constant 0 : index
    %12 = vector.load %arg4[%11, %c0_4] : memref<128x16xf32, #tpu.memory_space<vmem>>, vector<64x16xf32>
    %13 = vector.extract_strided_slice %8 {offsets = [0, 0], sizes = [64, 32], strides = [1, 1]} : vector<64x128xf32> to vector<64x32xf32>
    %14 = vector.extract_strided_slice %13 {offsets = [0, 0], sizes = [64, 16], strides = [1, 1]} : vector<64x32xf32> to vector<64x16xf32>
    %15 = vector.extract_strided_slice %13 {offsets = [0, 16], sizes = [64, 16], strides = [1, 1]} : vector<64x32xf32> to vector<64x16xf32>
    %16 = arith.mulf %14, %10 : vector<64x16xf32>
    %17 = arith.mulf %15, %12 : vector<64x16xf32>
    %18 = arith.subf %16, %17 : vector<64x16xf32>
    %19 = arith.mulf %14, %12 : vector<64x16xf32>
    %20 = arith.mulf %15, %10 : vector<64x16xf32>
    %21 = arith.addf %19, %20 : vector<64x16xf32>
    %22 = tpu.concatenate %18, %21 in 1 : vector<64x16xf32>, vector<64x16xf32> -> vector<64x32xf32>
    %23 = vector.extract_strided_slice %8 {offsets = [0, 32], sizes = [64, 32], strides = [1, 1]} : vector<64x128xf32> to vector<64x32xf32>
    %24 = vector.extract_strided_slice %23 {offsets = [0, 0], sizes = [64, 16], strides = [1, 1]} : vector<64x32xf32> to vector<64x16xf32>
    %25 = vector.extract_strided_slice %23 {offsets = [0, 16], sizes = [64, 16], strides = [1, 1]} : vector<64x32xf32> to vector<64x16xf32>
    %26 = arith.mulf %24, %10 : vector<64x16xf32>
    %27 = arith.mulf %25, %12 : vector<64x16xf32>
    %28 = arith.subf %26, %27 : vector<64x16xf32>
    %29 = arith.mulf %24, %12 : vector<64x16xf32>
    %30 = arith.mulf %25, %10 : vector<64x16xf32>
    %31 = arith.addf %29, %30 : vector<64x16xf32>
    %32 = tpu.concatenate %28, %31 in 1 : vector<64x16xf32>, vector<64x16xf32> -> vector<64x32xf32>
    %33 = vector.extract_strided_slice %8 {offsets = [0, 64], sizes = [64, 32], strides = [1, 1]} : vector<64x128xf32> to vector<64x32xf32>
    %34 = vector.extract_strided_slice %33 {offsets = [0, 0], sizes = [64, 16], strides = [1, 1]} : vector<64x32xf32> to vector<64x16xf32>
    %35 = vector.extract_strided_slice %33 {offsets = [0, 16], sizes = [64, 16], strides = [1, 1]} : vector<64x32xf32> to vector<64x16xf32>
    %36 = arith.mulf %34, %10 : vector<64x16xf32>
    %37 = arith.mulf %35, %12 : vector<64x16xf32>
    %38 = arith.subf %36, %37 : vector<64x16xf32>
    %39 = arith.mulf %34, %12 : vector<64x16xf32>
    %40 = arith.mulf %35, %10 : vector<64x16xf32>
    %41 = arith.addf %39, %40 : vector<64x16xf32>
    %42 = tpu.concatenate %38, %41 in 1 : vector<64x16xf32>, vector<64x16xf32> -> vector<64x32xf32>
    %43 = vector.extract_strided_slice %8 {offsets = [0, 96], sizes = [64, 32], strides = [1, 1]} : vector<64x128xf32> to vector<64x32xf32>
    %44 = vector.extract_strided_slice %43 {offsets = [0, 0], sizes = [64, 16], strides = [1, 1]} : vector<64x32xf32> to vector<64x16xf32>
    %45 = vector.extract_strided_slice %43 {offsets = [0, 16], sizes = [64, 16], strides = [1, 1]} : vector<64x32xf32> to vector<64x16xf32>
    %46 = arith.mulf %44, %10 : vector<64x16xf32>
    %47 = arith.mulf %45, %12 : vector<64x16xf32>
    %48 = arith.subf %46, %47 : vector<64x16xf32>
    %49 = arith.mulf %44, %12 : vector<64x16xf32>
    %50 = arith.mulf %45, %10 : vector<64x16xf32>
    %51 = arith.addf %49, %50 : vector<64x16xf32>
    %52 = tpu.concatenate %48, %51 in 1 : vector<64x16xf32>, vector<64x16xf32> -> vector<64x32xf32>
    %53 = vector.shape_cast %22 : vector<64x32xf32> to vector<1x64x32xf32>
    %54 = vector.shape_cast %32 : vector<64x32xf32> to vector<1x64x32xf32>
    %55 = vector.shape_cast %42 : vector<64x32xf32> to vector<1x64x32xf32>
    %56 = vector.shape_cast %52 : vector<64x32xf32> to vector<1x64x32xf32>
    %57 = tpu.concatenate %53, %54, %55, %56 in 0 : vector<1x64x32xf32>, vector<1x64x32xf32>, vector<1x64x32xf32>, vector<1x64x32xf32> -> vector<4x64x32xf32>
    %58 = arith.truncf %57 : vector<4x64x32xf32> to vector<4x64x32xbf16>
    %cst_5 = arith.constant -1.000000e+30 : f32
    %59 = vector.broadcast %cst_5 : f32 to vector<4x64x1xf32>
    %cst_6 = arith.constant 0.000000e+00 : f32
    %60 = vector.broadcast %cst_6 : f32 to vector<4x64x1xf32>
    %cst_7 = arith.constant 0.000000e+00 : f32
    %61 = vector.broadcast %cst_7 : f32 to vector<4x64x32xf32>
    %c1_i32 = arith.constant 1 : i32
    %62 = arith.muli %arg1, %c1_i32 : i32
    %c0_i32_8 = arith.constant 0 : i32
    %63 = arith.subi %62, %c0_i32_8 : i32
    %64 = arith.addi %c0_i32_8, %63 : i32
    %c1_i32_9 = arith.constant 1 : i32
    %65:3 = scf.for %arg17 = %c0_i32_8 to %64 step %c1_i32_9 iter_args(%arg18 = %59, %arg19 = %60, %arg20 = %61) -> (vector<4x64x1xf32>, vector<4x64x1xf32>, vector<4x64x32xf32>)  : i32 {
      %c64_i32_41 = arith.constant 64 : i32
      %152 = arith.muli %arg17, %c64_i32_41 : i32
      %153 = tpu.assume_multiple %152, 64 : i32
      %c0_42 = arith.constant 0 : index
      %154 = arith.index_cast %153 : i32 to index
      %c0_43 = arith.constant 0 : index
      %155 = vector.load %arg15[%c0_42, %154, %c0_43] : memref<4x128x32xbf16, #tpu.memory_space<vmem>>, vector<4x64x32xbf16>
      %c0_44 = arith.constant 0 : index
      %156 = arith.index_cast %153 : i32 to index
      %c0_45 = arith.constant 0 : index
      %157 = vector.load %arg16[%c0_44, %156, %c0_45] : memref<4x128x32xbf16, #tpu.memory_space<vmem>>, vector<4x64x32xbf16>
      "tpu.trace_start"() <{level = 10 : i32, message = "hqd,hkd->hqk"}> : () -> ()
      %cst_46 = arith.constant dense<0.000000e+00> : vector<4x64x64xf32>
      %158 = tpu.matmul %58, %155, %cst_46 {dimension_numbers = #tpu.dot_dimension_numbers<[2], [2], [1], [1], [0, 0, 0, 1, 1, 1], [0], [0]>} : vector<4x64x32xbf16>, vector<4x64x32xbf16>, vector<4x64x64xf32> -> vector<4x64x64xf32>
      "tpu.trace_stop"() : () -> ()
      %cst_47 = arith.constant dense<0xFF800000> : vector<4x64xf32>
      %159 = vector.multi_reduction <maximumf>, %158, %cst_47 [2] : vector<4x64x64xf32> to vector<4x64xf32>
      %160 = vector.shape_cast %159 : vector<4x64xf32> to vector<4x64x1xf32>
      %161 = arith.maximumf %arg18, %160 : vector<4x64x1xf32>
      %162 = arith.subf %arg18, %161 : vector<4x64x1xf32>
      %163 = math.exp %162 : vector<4x64x1xf32>
      %164 = vector.broadcast %161 : vector<4x64x1xf32> to vector<4x64x64xf32>
      %165 = arith.subf %158, %164 : vector<4x64x64xf32>
      %166 = math.exp %165 : vector<4x64x64xf32>
      %167 = arith.mulf %163, %arg19 : vector<4x64x1xf32>
      %cst_48 = arith.constant dense<0.000000e+00> : vector<4x64xf32>
      %168 = vector.multi_reduction <add>, %166, %cst_48 [2] : vector<4x64x64xf32> to vector<4x64xf32>
      %169 = vector.shape_cast %168 : vector<4x64xf32> to vector<4x64x1xf32>
      %170 = arith.addf %167, %169 : vector<4x64x1xf32>
      %171 = arith.truncf %166 : vector<4x64x64xf32> to vector<4x64x64xbf16>
      "tpu.trace_start"() <{level = 10 : i32, message = "hqk,hkd->hqd"}> : () -> ()
      %cst_49 = arith.constant dense<0.000000e+00> : vector<4x64x32xf32>
      %172 = tpu.matmul %171, %157, %cst_49 {dimension_numbers = #tpu.dot_dimension_numbers<[2], [1], [1], [2], [0, 0, 0, 1, 1, 2], [0], [0]>} : vector<4x64x64xbf16>, vector<4x64x32xbf16>, vector<4x64x32xf32> -> vector<4x64x32xf32>
      "tpu.trace_stop"() : () -> ()
      %173 = vector.broadcast %163 : vector<4x64x1xf32> to vector<4x64x32xf32>
      %174 = arith.mulf %173, %arg20 : vector<4x64x32xf32>
      %175 = arith.addf %174, %172 : vector<4x64x32xf32>
      scf.yield %161, %170, %175 : vector<4x64x1xf32>, vector<4x64x1xf32>, vector<4x64x32xf32>
    }
    %66 = tpu.iota {dimensions = array<i32: 1>} : vector<1x64x64xi32>
    %67 = tpu.iota {dimensions = array<i32: 2>} : vector<1x64x64xi32>
    %c0_i32_10 = arith.constant 0 : i32
    %68 = vector.broadcast %c0_i32_10 : i32 to vector<1x64x64xi32>
    %69 = arith.addi %67, %68 : vector<1x64x64xi32>
    %70 = arith.cmpi sge, %66, %69 : vector<1x64x64xi32>
    %c0_i32_11 = arith.constant 0 : i32
    %71 = arith.addi %1, %c0_i32_11 : i32
    %72 = tpu.assume_multiple %71, 64 : i32
    %c0_12 = arith.constant 0 : index
    %73 = arith.index_cast %72 : i32 to index
    %c0_13 = arith.constant 0 : index
    %74 = vector.load %arg15[%c0_12, %73, %c0_13] : memref<4x128x32xbf16, #tpu.memory_space<vmem>>, vector<4x64x32xbf16>
    %c0_14 = arith.constant 0 : index
    %75 = arith.index_cast %72 : i32 to index
    %c0_15 = arith.constant 0 : index
    %76 = vector.load %arg16[%c0_14, %75, %c0_15] : memref<4x128x32xbf16, #tpu.memory_space<vmem>>, vector<4x64x32xbf16>
    "tpu.trace_start"() <{level = 10 : i32, message = "hqd,hkd->hqk"}> : () -> ()
    %cst_16 = arith.constant dense<0.000000e+00> : vector<4x64x64xf32>
    %77 = tpu.matmul %58, %74, %cst_16 {dimension_numbers = #tpu.dot_dimension_numbers<[2], [2], [1], [1], [0, 0, 0, 1, 1, 1], [0], [0]>} : vector<4x64x32xbf16>, vector<4x64x32xbf16>, vector<4x64x64xf32> -> vector<4x64x64xf32>
    %cst_17 = arith.constant -1.000000e+30 : f32
    "tpu.trace_stop"() : () -> ()
    %78 = vector.shape_cast %70 : vector<1x64x64xi1> to vector<1x64x64xi1>
    %79 = vector.broadcast %78 : vector<1x64x64xi1> to vector<4x64x64xi1>
    %80 = vector.broadcast %cst_17 : f32 to vector<4x64x64xf32>
    %81 = arith.select %79, %77, %80 : vector<4x64x64xi1>, vector<4x64x64xf32>
    %cst_18 = arith.constant dense<0xFF800000> : vector<4x64xf32>
    %82 = vector.multi_reduction <maximumf>, %81, %cst_18 [2] : vector<4x64x64xf32> to vector<4x64xf32>
    %83 = vector.shape_cast %82 : vector<4x64xf32> to vector<4x64x1xf32>
    %84 = arith.maximumf %65#0, %83 : vector<4x64x1xf32>
    %85 = arith.subf %65#0, %84 : vector<4x64x1xf32>
    %86 = math.exp %85 : vector<4x64x1xf32>
    %87 = vector.broadcast %84 : vector<4x64x1xf32> to vector<4x64x64xf32>
    %88 = arith.subf %81, %87 : vector<4x64x64xf32>
    %89 = math.exp %88 : vector<4x64x64xf32>
    %90 = arith.mulf %86, %65#1 : vector<4x64x1xf32>
    %cst_19 = arith.constant dense<0.000000e+00> : vector<4x64xf32>
    %91 = vector.multi_reduction <add>, %89, %cst_19 [2] : vector<4x64x64xf32> to vector<4x64xf32>
    %92 = vector.shape_cast %91 : vector<4x64xf32> to vector<4x64x1xf32>
    %93 = arith.addf %90, %92 : vector<4x64x1xf32>
    %94 = arith.truncf %89 : vector<4x64x64xf32> to vector<4x64x64xbf16>
    "tpu.trace_start"() <{level = 10 : i32, message = "hqk,hkd->hqd"}> : () -> ()
    %cst_20 = arith.constant dense<0.000000e+00> : vector<4x64x32xf32>
    %95 = tpu.matmul %94, %76, %cst_20 {dimension_numbers = #tpu.dot_dimension_numbers<[2], [1], [1], [2], [0, 0, 0, 1, 1, 2], [0], [0]>} : vector<4x64x64xbf16>, vector<4x64x32xbf16>, vector<4x64x32xf32> -> vector<4x64x32xf32>
    "tpu.trace_stop"() : () -> ()
    %96 = vector.broadcast %86 : vector<4x64x1xf32> to vector<4x64x32xf32>
    %97 = arith.mulf %96, %65#2 : vector<4x64x32xf32>
    %98 = arith.addf %97, %95 : vector<4x64x32xf32>
    %99 = tpu.reciprocal %93 {approx = true} : vector<4x64x1xf32> -> vector<4x64x1xf32>
    %100 = vector.broadcast %99 : vector<4x64x1xf32> to vector<4x64x32xf32>
    %101 = arith.mulf %98, %100 : vector<4x64x32xf32>
    %102 = arith.truncf %101 : vector<4x64x32xf32> to vector<4x64x32xbf16>
    %103 = vector.extract_strided_slice %102 {offsets = [0, 0, 0], sizes = [1, 64, 32], strides = [1, 1, 1]} : vector<4x64x32xbf16> to vector<1x64x32xbf16>
    %104 = vector.shape_cast %103 : vector<1x64x32xbf16> to vector<64x32xbf16>
    %105 = vector.extract_strided_slice %102 {offsets = [1, 0, 0], sizes = [1, 64, 32], strides = [1, 1, 1]} : vector<4x64x32xbf16> to vector<1x64x32xbf16>
    %106 = vector.shape_cast %105 : vector<1x64x32xbf16> to vector<64x32xbf16>
    %107 = vector.extract_strided_slice %102 {offsets = [2, 0, 0], sizes = [1, 64, 32], strides = [1, 1, 1]} : vector<4x64x32xbf16> to vector<1x64x32xbf16>
    %108 = vector.shape_cast %107 : vector<1x64x32xbf16> to vector<64x32xbf16>
    %109 = vector.extract_strided_slice %102 {offsets = [3, 0, 0], sizes = [1, 64, 32], strides = [1, 1, 1]} : vector<4x64x32xbf16> to vector<1x64x32xbf16>
    %110 = vector.shape_cast %109 : vector<1x64x32xbf16> to vector<64x32xbf16>
    %111 = tpu.concatenate %104, %106, %108, %110 in 1 : vector<64x32xbf16>, vector<64x32xbf16>, vector<64x32xbf16>, vector<64x32xbf16> -> vector<64x128xbf16>
    %c0_21 = arith.constant 0 : index
    %112 = arith.index_cast %1 : i32 to index
    %c0_22 = arith.constant 0 : index
    %113 = vector.load %arg2[%c0_21, %112, %c0_22] : memref<1x128x128xbf16, #tpu.memory_space<vmem>>, vector<1x64x128xbf16>
    %114 = vector.shape_cast %113 : vector<1x64x128xbf16> to vector<64x128xbf16>
    %115 = arith.extf %114 : vector<64x128xbf16> to vector<64x128xf32>
    %c0_23 = arith.constant 0 : index
    %c0_24 = arith.constant 0 : index
    %116 = vector.load %arg8[%c0_23, %c0_24] : memref<128x128xbf16, #tpu.memory_space<vmem>>, vector<128x128xbf16>
    %cst_25 = arith.constant dense<0.000000e+00> : vector<64x128xf32>
    %117 = tpu.matmul %111, %116, %cst_25 {dimension_numbers = #tpu.dot_dimension_numbers<[1], [0], [0], [1], [0, 0, 1, 1], [], []>} : vector<64x128xbf16>, vector<128x128xbf16>, vector<64x128xf32> -> vector<64x128xf32>
    %118 = arith.addf %115, %117 : vector<64x128xf32>
    %c0_26 = arith.constant 0 : index
    %c0_27 = arith.constant 0 : index
    %119 = vector.load %arg10[%c0_26, %c0_27] : memref<1x128xf32, #tpu.memory_space<vmem>>, vector<1x128xf32>
    %120 = arith.mulf %118, %118 : vector<64x128xf32>
    %cst_28 = arith.constant dense<0.000000e+00> : vector<64xf32>
    %121 = vector.multi_reduction <add>, %120, %cst_28 [1] : vector<64x128xf32> to vector<64xf32>
    %122 = vector.shape_cast %121 : vector<64xf32> to vector<64x1xf32>
    %cst_29 = arith.constant 1.280000e+02 : f32
    %123 = vector.broadcast %cst_29 : f32 to vector<64x1xf32>
    %124 = arith.divf %122, %123 : vector<64x1xf32>
    %125 = vector.broadcast %119 : vector<1x128xf32> to vector<64x128xf32>
    %126 = arith.mulf %125, %118 : vector<64x128xf32>
    %cst_30 = arith.constant 9.99999997E-7 : f32
    %127 = vector.broadcast %cst_30 : f32 to vector<64x1xf32>
    %128 = arith.addf %124, %127 : vector<64x1xf32>
    %129 = math.rsqrt %128 : vector<64x1xf32>
    %130 = vector.broadcast %129 : vector<64x1xf32> to vector<64x128xf32>
    %131 = arith.mulf %126, %130 : vector<64x128xf32>
    %132 = arith.truncf %131 : vector<64x128xf32> to vector<64x128xbf16>
    %c0_31 = arith.constant 0 : index
    %c0_32 = arith.constant 0 : index
    %133 = vector.load %arg11[%c0_31, %c0_32] : memref<128x1024xbf16, #tpu.memory_space<vmem>>, vector<128x1024xbf16>
    %cst_33 = arith.constant dense<0.000000e+00> : vector<64x1024xf32>
    %134 = tpu.matmul %132, %133, %cst_33 {dimension_numbers = #tpu.dot_dimension_numbers<[1], [0], [0], [1], [0, 0, 1, 1], [], []>} : vector<64x128xbf16>, vector<128x1024xbf16>, vector<64x1024xf32> -> vector<64x1024xf32>
    %135 = vector.extract_strided_slice %134 {offsets = [0, 0], sizes = [64, 512], strides = [1, 1]} : vector<64x1024xf32> to vector<64x512xf32>
    %136 = arith.negf %135 : vector<64x512xf32>
    %137 = math.exp %136 : vector<64x512xf32>
    %cst_34 = arith.constant 1.000000e+00 : f32
    %138 = vector.broadcast %cst_34 : f32 to vector<64x512xf32>
    %139 = arith.addf %138, %137 : vector<64x512xf32>
    %140 = arith.divf %138, %139 : vector<64x512xf32>
    %141 = arith.mulf %135, %140 : vector<64x512xf32>
    %142 = vector.extract_strided_slice %134 {offsets = [0, 512], sizes = [64, 512], strides = [1, 1]} : vector<64x1024xf32> to vector<64x512xf32>
    %143 = arith.mulf %141, %142 : vector<64x512xf32>
    %144 = arith.truncf %143 : vector<64x512xf32> to vector<64x512xbf16>
    %c0_35 = arith.constant 0 : index
    %c0_36 = arith.constant 0 : index
    %145 = vector.load %arg12[%c0_35, %c0_36] : memref<512x128xbf16, #tpu.memory_space<vmem>>, vector<512x128xbf16>
    %cst_37 = arith.constant dense<0.000000e+00> : vector<64x128xf32>
    %146 = tpu.matmul %144, %145, %cst_37 {dimension_numbers = #tpu.dot_dimension_numbers<[1], [0], [0], [1], [0, 0, 1, 1], [], []>} : vector<64x512xbf16>, vector<512x128xbf16>, vector<64x128xf32> -> vector<64x128xf32>
    %147 = arith.addf %118, %146 : vector<64x128xf32>
    %148 = arith.truncf %147 : vector<64x128xf32> to vector<64x128xbf16>
    %c0_38 = arith.constant 0 : index
    %c0_39 = arith.constant 0 : index
    %c0_40 = arith.constant 0 : index
    %149 = vector.load %arg13[%c0_38, %c0_39, %c0_40] : memref<1x64x128xbf16, #tpu.memory_space<vmem>>, vector<1x64x128xbf16>
    %150 = vector.shape_cast %149 : vector<1x64x128xbf16> to vector<64x128xbf16>
    %151 = vector.shape_cast %148 : vector<64x128xbf16> to vector<1x64x128xbf16>
    tpu.vector_store %arg13[%c0_38, %c0_39, %c0_40], %151 {strides = array<i32>} : memref<1x64x128xbf16, #tpu.memory_space<vmem>>, vector<1x64x128xbf16>,
    return
  }
  func.func @transform_0(%arg0: i32, %arg1: i32) -> (i32, i32, i32) {
    %c0_i32 = arith.constant 0 : i32
    %c0_i32_0 = arith.constant 0 : i32
    %c0_i32_1 = arith.constant 0 : i32
    return %arg0, %c0_i32, %c0_i32_0 : i32, i32, i32
  }
  func.func @transform_1(%arg0: i32, %arg1: i32) -> (i32, i32) {
    %c0_i32 = arith.constant 0 : i32
    %c0_i32_0 = arith.constant 0 : i32
    %c0_i32_1 = arith.constant 0 : i32
    return %c0_i32, %c0_i32_0 : i32, i32
  }
  func.func @transform_2(%arg0: i32, %arg1: i32) -> (i32, i32) {
    %c0_i32 = arith.constant 0 : i32
    %c0_i32_0 = arith.constant 0 : i32
    %c0_i32_1 = arith.constant 0 : i32
    return %c0_i32, %c0_i32_0 : i32, i32
  }
  func.func @transform_3(%arg0: i32, %arg1: i32) -> (i32, i32) {
    %c0_i32 = arith.constant 0 : i32
    %c0_i32_0 = arith.constant 0 : i32
    %c0_i32_1 = arith.constant 0 : i32
    return %c0_i32, %c0_i32_0 : i32, i32
  }
  func.func @transform_4(%arg0: i32, %arg1: i32) -> (i32, i32) {
    %c0_i32 = arith.constant 0 : i32
    %c0_i32_0 = arith.constant 0 : i32
    %c0_i32_1 = arith.constant 0 : i32
    return %c0_i32, %c0_i32_0 : i32, i32
  }
  func.func @transform_5(%arg0: i32, %arg1: i32) -> (i32, i32) {
    %c0_i32 = arith.constant 0 : i32
    %c0_i32_0 = arith.constant 0 : i32
    %c0_i32_1 = arith.constant 0 : i32
    return %c0_i32, %c0_i32_0 : i32, i32
  }
  func.func @transform_6(%arg0: i32, %arg1: i32) -> (i32, i32) {
    %c0_i32 = arith.constant 0 : i32
    %c0_i32_0 = arith.constant 0 : i32
    %c0_i32_1 = arith.constant 0 : i32
    return %c0_i32, %c0_i32_0 : i32, i32
  }
  func.func @transform_7(%arg0: i32, %arg1: i32) -> (i32, i32) {
    %c0_i32 = arith.constant 0 : i32
    %c0_i32_0 = arith.constant 0 : i32
    %c0_i32_1 = arith.constant 0 : i32
    return %c0_i32, %c0_i32_0 : i32, i32
  }
  func.func @transform_8(%arg0: i32, %arg1: i32) -> (i32, i32) {
    %c0_i32 = arith.constant 0 : i32
    %c0_i32_0 = arith.constant 0 : i32
    %c0_i32_1 = arith.constant 0 : i32
    return %c0_i32, %c0_i32_0 : i32, i32
  }
  func.func @transform_9(%arg0: i32, %arg1: i32) -> (i32, i32) {
    %c0_i32 = arith.constant 0 : i32
    %c0_i32_0 = arith.constant 0 : i32
    %c0_i32_1 = arith.constant 0 : i32
    return %c0_i32, %c0_i32_0 : i32, i32
  }
  func.func @transform_10(%arg0: i32, %arg1: i32) -> (i32, i32) {
    %c0_i32 = arith.constant 0 : i32
    %c0_i32_0 = arith.constant 0 : i32
    %c0_i32_1 = arith.constant 0 : i32
    return %c0_i32, %c0_i32_0 : i32, i32
  }
  func.func @transform_11(%arg0: i32, %arg1: i32) -> (i32, i32, i32) {
    %c0_i32 = arith.constant 0 : i32
    %c0_i32_0 = arith.constant 0 : i32
    return %arg0, %arg1, %c0_i32 : i32, i32, i32
  }
}

</mosaic_0001>

<llo_original>
// kernel: tpu_custom_call.1
$region0: #{tpu_custom_call.1}
  #allocation0 [shape = 'u32[]', space=smem, size = 0x4, offset = 0x4, fixed_abs, tag = 'smem constant byte address 0x4 - core index']
  #allocation1 [shape = 'u32[72,128]{1,0:T(1,128)}', space=vmem, size = 0x9000, scoped, tag = 'internal scratch']
  #allocation2 [shape = 'bf16[128,128]{1,0:T(8,128)(2,1)}', space=vmem, size = 0x8000, scoped, tag = 'scratch operand']
  #allocation3 [shape = 'bf16[4,128,32]{2,1,0:T(8,128)(2,1)}', space=vmem, size = 0x20000, scoped, tag = 'scratch operand']
  #allocation4 [shape = 'bf16[4,128,32]{2,1,0:T(8,128)(2,1)}', space=vmem, size = 0x20000, scoped, tag = 'scratch operand']
  %s0 = inlined_call_operand.hbm [shape: bf16[2,128,128], index: 0, kind: input, shape index: {}]
  %s1 = inlined_call_operand.vmem [shape: f32[128,16], index: 1, kind: input, shape index: {}]
  %s2 = inlined_call_operand.vmem [shape: f32[128,16], index: 2, kind: input, shape index: {}]
  %s3 = inlined_call_operand.hbm [shape: bf16[128,128], index: 3, kind: input, shape index: {}]
  %s4 = inlined_call_operand.hbm [shape: bf16[128,128], index: 4, kind: input, shape index: {}]
  %s5 = inlined_call_operand.hbm [shape: bf16[128,128], index: 5, kind: input, shape index: {}]
  %s6 = inlined_call_operand.hbm [shape: bf16[128,128], index: 6, kind: input, shape index: {}]
  %s7 = inlined_call_operand.vmem [shape: f32[1,128], index: 7, kind: input, shape index: {}]
  %s8 = inlined_call_operand.vmem [shape: f32[1,128], index: 8, kind: input, shape index: {}]
  %s9 = inlined_call_operand.hbm [shape: bf16[128,1024], index: 9, kind: input, shape index: {}]
  %s10 = inlined_call_operand.vmem [shape: bf16[512,128], index: 10, kind: input, shape index: {}]
  %s11 = inlined_call_operand.hbm [shape: bf16[2,128,128], index: 11, kind: output, shape index: {}]
  %s12 = sld [smem:[#allocation0]]
  $region112: #{tpu_custom_call.1} parent=0
    _
  %s14 = ssub.s32 1, %s12
  %s15 = scalar_select 0, %s14, %s12
  $region1: #{tpu_custom_call.1} parent=0
    #allocation5 [shape = 'u8[65536]{0}', space=vmem, size = 0x10000, scoped, tag = 'input window, operand 0']
    #allocation6 [shape = 's32[2]{0}', space=sflag, size = 0x8, scoped, tag = 'scoped memory for tpu_custom_call.1']
    #allocation7 [shape = 's32[2]{0}', space=sflag, size = 0x8, scoped, tag = 'scoped memory for tpu_custom_call.1']
    #allocation8 [shape = 'u8[32768]{0}', space=vmem, size = 0x8000, scoped, tag = 'input window, operand 3, single buffered']
    #allocation9 [shape = 's32[1]{0}', space=sflag, size = 0x4, scoped, tag = 'scoped memory for tpu_custom_call.1']
    #allocation10 [shape = 'u8[32768]{0}', space=vmem, size = 0x8000, scoped, tag = 'input window, operand 4, single buffered']
    #allocation11 [shape = 'u8[32768]{0}', space=vmem, size = 0x8000, scoped, tag = 'input window, operand 5, single buffered']
    #allocation12 [shape = 's32[1]{0}', space=sflag, size = 0x4, scoped, tag = 'scoped memory for tpu_custom_call.1']
    #allocation13 [shape = 'u8[32768]{0}', space=vmem, size = 0x8000, scoped, tag = 'input window, operand 6, single buffered']
    #allocation14 [shape = 'u8[262144]{0}', space=vmem, size = 0x40000, scoped, tag = 'input window, operand 9, single buffered']
    #allocation15 [shape = 's32[1]{0}', space=sflag, size = 0x4, scoped, tag = 'scoped memory for tpu_custom_call.1']
    #allocation16 [shape = 'u8[32768]{0}', space=vmem, size = 0x8000, scoped, tag = 'output window, operand 0']
    %16 = vsyncpa [#allocation6], 0
    %s17 = scalar_lea.sflag [#allocation6], 1
    %18 = vsyncpa %s17, 0
    %19 = vsyncpa [#allocation9], 0
    %20 = vsyncpa [#allocation12], 0
    %21 = vsyncpa [#allocation15], 0
    %22 = vsyncpa [#allocation7], 0
    %s23 = scalar_lea.sflag [#allocation7], 1
    %24 = vsyncpa %s23, 0
    loop: start=0, step=1, limit=6
    $region2: #{tpu_custom_call.1} parent=1 // loop_pre_header
      _
    $region3: #{tpu_custom_call.1} parent=1 // loop_header
      %s26 = sphi 0, %s30
      %p27 = scmp.ge.s32.totalorder %s26, 6
      %s33 = sphi 0, %s45
      %s34 = sphi 0, %s41
      %s35 = sphi 0, %s33
      %s36 = sphi 0, %s34
      %s37 = sphi 0, %s35
      %s38 = sphi 0, %s36
      %s48 = sphi 0, %s50
      %s51 = sphi 0, %s48
      %s52 = sphi 0, %s51
      %s68 = sphi 0, %s52
      %s72 = sphi 0, %s72
      %s74 = sphi 0, %s72
      %s75 = sphi 0, %s74
      %s89 = sphi 0, %s75
      %s93 = sphi 0, %s93
      %s95 = sphi 0, %s93
      %s96 = sphi 0, %s95
      %s110 = sphi 0, %s96
      %s114 = sphi 0, %s114
      %s116 = sphi 0, %s114
      %s117 = sphi 0, %s116
      %s131 = sphi 0, %s117
      %s135 = sphi 0, %s135
      %s137 = sphi 0, %s135
      %s138 = sphi 0, %s137
      %s152 = sphi 0, %s138
      %s156 = sphi 0, %s156
      %s158 = sphi 0, %s156
      %s159 = sphi 0, %s158
      %s173 = sphi 0, %s159
      %s177 = sphi 0, %s177
      %s179 = sphi 0, %s177
      %s180 = sphi 0, %s179
      %s194 = sphi 0, %s180
      %s198 = sphi 0, %s198
      %s200 = sphi 0, %s198
      %s201 = sphi 0, %s200
      %s215 = sphi 0, %s201
      %s219 = sphi 0, %s219
      %s221 = sphi 0, %s219
      %s222 = sphi 0, %s221
      %s236 = sphi 0, %s222
      %s240 = sphi 0, %s240
      %s242 = sphi 0, %s240
      %s243 = sphi 0, %s242
      %s257 = sphi 0, %s243
      %s261 = sphi 0, %s261
      %s263 = sphi 0, %s261
      %s264 = sphi 0, %s263
      %s278 = sphi 0, %s264
      %s286 = sphi 0, %s288
      %s289 = sphi 0, %s286
      %s290 = sphi 0, %s289
      %s306 = sphi 0, %s290
    $region4: #{tpu_custom_call.1} parent=1 // loop_header_branch
      %29 = sbr.rel (%p27) target = $region8
    $region5: #{tpu_custom_call.1} parent=1 // loop_body
      %s31 = ssub.s32 %s26, 1
      %s32 = ssub.s32 %s26, 2
      %s39 = sadd.s32 1, %s34
      %p40 = scmp.ge.s32.totalorder %s39, 2
      %s41 = scalar_select %p40, 0, %s39
      %s42 = sadd.s32 1, %s33
      %s43 = scalar_select %p40, %s42, %s33
      %p44 = scmp.ge.s32.totalorder %s43, 2
      %s45 = scalar_select %p44, 0, %s43
      %s46 = ssub.s32 %s33, %s45
      %p47 = scmp.eq.s32.totalorder %s46, 0
      %s49 = sadd.s32 %s48, 1
      %s50 = scalar_select %p47, %s48, %s49
      %p53 = pneg %p47
      %p54 = scmp.eq.s32.totalorder %s26, 3
      %p55 = por %p53, %p54
      %p56 = scmp.ne.s32.totalorder %s48, %s51
      %p57 = scmp.eq.s32.totalorder %s26, 0
      %p58 = por %p56, %p57
      %p59 = scmp.ne.s32.totalorder %s48, %s51
      %p60 = scmp.eq.s32.totalorder %s31, 3
      %p61 = por %p59, %p60
      %p62 = scmp.ne.s32.totalorder %s51, %s52
      %p63 = scmp.eq.s32.totalorder %s31, 0
      %p64 = por %p62, %p63
      %p65 = scmp.ne.s32.totalorder %s51, %s52
      %p66 = scmp.eq.s32.totalorder %s32, 3
      %p67 = por %p65, %p66
      %p69 = scmp.ne.s32.totalorder %s52, %s68
      %p70 = scmp.eq.s32.totalorder %s32, 0
      %p71 = por %p69, %p70
      %s73 = sadd.s32 %s72, 1
      %p76 = scmp.eq.s32.totalorder %s26, 3
      %p77 = scmp.ne.s32.totalorder %s72, %s74
      %p78 = scmp.eq.s32.totalorder %s26, 0
      %p79 = por %p77, %p78
      %p80 = scmp.ne.s32.totalorder %s72, %s74
      %p81 = scmp.eq.s32.totalorder %s31, 3
      %p82 = por %p80, %p81
      %p83 = scmp.ne.s32.totalorder %s74, %s75
      %p84 = scmp.eq.s32.totalorder %s31, 0
      %p85 = por %p83, %p84
      %p86 = scmp.ne.s32.totalorder %s74, %s75
      %p87 = scmp.eq.s32.totalorder %s32, 3
      %p88 = por %p86, %p87
      %p90 = scmp.ne.s32.totalorder %s75, %s89
      %p91 = scmp.eq.s32.totalorder %s32, 0
      %p92 = por %p90, %p91
      %s94 = sadd.s32 %s93, 1
      %p97 = scmp.eq.s32.totalorder %s26, 3
      %p98 = scmp.ne.s32.totalorder %s93, %s95
      %p99 = scmp.eq.s32.totalorder %s26, 0
      %p100 = por %p98, %p99
      %p101 = scmp.ne.s32.totalorder %s93, %s95
      %p102 = scmp.eq.s32.totalorder %s31, 3
      %p103 = por %p101, %p102
      %p104 = scmp.ne.s32.totalorder %s95, %s96
      %p105 = scmp.eq.s32.totalorder %s31, 0
      %p106 = por %p104, %p105
      %p107 = scmp.ne.s32.totalorder %s95, %s96
      %p108 = scmp.eq.s32.totalorder %s32, 3
      %p109 = por %p107, %p108
      %p111 = scmp.ne.s32.totalorder %s96, %s110
      %p112 = scmp.eq.s32.totalorder %s32, 0
      %p113 = por %p111, %p112
      %s115 = sadd.s32 %s114, 1
      %p118 = scmp.eq.s32.totalorder %s26, 3
      %p119 = scmp.ne.s32.totalorder %s114, %s116
      %p120 = scmp.eq.s32.totalorder %s26, 0
      %p121 = por %p119, %p120
      %p122 = scmp.ne.s32.totalorder %s114, %s116
      %p123 = scmp.eq.s32.totalorder %s31, 3
      %p124 = por %p122, %p123
      %p125 = scmp.ne.s32.totalorder %s116, %s117
      %p126 = scmp.eq.s32.totalorder %s31, 0
      %p127 = por %p125, %p126
      %p128 = scmp.ne.s32.totalorder %s116, %s117
      %p129 = scmp.eq.s32.totalorder %s32, 3
      %p130 = por %p128, %p129
      %p132 = scmp.ne.s32.totalorder %s117, %s131
      %p133 = scmp.eq.s32.totalorder %s32, 0
      %p134 = por %p132, %p133
      %s136 = sadd.s32 %s135, 1
      %p139 = scmp.eq.s32.totalorder %s26, 3
      %p140 = scmp.ne.s32.totalorder %s135, %s137
      %p141 = scmp.eq.s32.totalorder %s26, 0
      %p142 = por %p140, %p141
      %p143 = scmp.ne.s32.totalorder %s135, %s137
      %p144 = scmp.eq.s32.totalorder %s31, 3
      %p145 = por %p143, %p144
      %p146 = scmp.ne.s32.totalorder %s137, %s138
      %p147 = scmp.eq.s32.totalorder %s31, 0
      %p148 = por %p146, %p147
      %p149 = scmp.ne.s32.totalorder %s137, %s138
      %p150 = scmp.eq.s32.totalorder %s32, 3
      %p151 = por %p149, %p150
      %p153 = scmp.ne.s32.totalorder %s138, %s152
      %p154 = scmp.eq.s32.totalorder %s32, 0
      %p155 = por %p153, %p154
      %s157 = sadd.s32 %s156, 1
      %p160 = scmp.eq.s32.totalorder %s26, 3
      %p161 = scmp.ne.s32.totalorder %s156, %s158
      %p162 = scmp.eq.s32.totalorder %s26, 0
      %p163 = por %p161, %p162
      %p164 = scmp.ne.s32.totalorder %s156, %s158
      %p165 = scmp.eq.s32.totalorder %s31, 3
      %p166 = por %p164, %p165
      %p167 = scmp.ne.s32.totalorder %s158, %s159
      %p168 = scmp.eq.s32.totalorder %s31, 0
      %p169 = por %p167, %p168
      %p170 = scmp.ne.s32.totalorder %s158, %s159
      %p171 = scmp.eq.s32.totalorder %s32, 3
      %p172 = por %p170, %p171
      %p174 = scmp.ne.s32.totalorder %s159, %s173
      %p175 = scmp.eq.s32.totalorder %s32, 0
      %p176 = por %p174, %p175
      %s178 = sadd.s32 %s177, 1
      %p181 = scmp.eq.s32.totalorder %s26, 3
      %p182 = scmp.ne.s32.totalorder %s177, %s179
      %p183 = scmp.eq.s32.totalorder %s26, 0
      %p184 = por %p182, %p183
      %p185 = scmp.ne.s32.totalorder %s177, %s179
      %p186 = scmp.eq.s32.totalorder %s31, 3
      %p187 = por %p185, %p186
      %p188 = scmp.ne.s32.totalorder %s179, %s180
      %p189 = scmp.eq.s32.totalorder %s31, 0
      %p190 = por %p188, %p189
      %p191 = scmp.ne.s32.totalorder %s179, %s180
      %p192 = scmp.eq.s32.totalorder %s32, 3
      %p193 = por %p191, %p192
      %p195 = scmp.ne.s32.totalorder %s180, %s194
      %p196 = scmp.eq.s32.totalorder %s32, 0
      %p197 = por %p195, %p196
      %s199 = sadd.s32 %s198, 1
      %p202 = scmp.eq.s32.totalorder %s26, 3
      %p203 = scmp.ne.s32.totalorder %s198, %s200
      %p204 = scmp.eq.s32.totalorder %s26, 0
      %p205 = por %p203, %p204
      %p206 = scmp.ne.s32.totalorder %s198, %s200
      %p207 = scmp.eq.s32.totalorder %s31, 3
      %p208 = por %p206, %p207
      %p209 = scmp.ne.s32.totalorder %s200, %s201
      %p210 = scmp.eq.s32.totalorder %s31, 0
      %p211 = por %p209, %p210
      %p212 = scmp.ne.s32.totalorder %s200, %s201
      %p213 = scmp.eq.s32.totalorder %s32, 3
      %p214 = por %p212, %p213
      %p216 = scmp.ne.s32.totalorder %s201, %s215
      %p217 = scmp.eq.s32.totalorder %s32, 0
      %p218 = por %p216, %p217
      %s220 = sadd.s32 %s219, 1
      %p223 = scmp.eq.s32.totalorder %s26, 3
      %p224 = scmp.ne.s32.totalorder %s219, %s221
      %p225 = scmp.eq.s32.totalorder %s26, 0
      %p226 = por %p224, %p225
      %p227 = scmp.ne.s32.totalorder %s219, %s221
      %p228 = scmp.eq.s32.totalorder %s31, 3
      %p229 = por %p227, %p228
      %p230 = scmp.ne.s32.totalorder %s221, %s222
      %p231 = scmp.eq.s32.totalorder %s31, 0
      %p232 = por %p230, %p231
      %p233 = scmp.ne.s32.totalorder %s221, %s222
      %p234 = scmp.eq.s32.totalorder %s32, 3
      %p235 = por %p233, %p234
      %p237 = scmp.ne.s32.totalorder %s222, %s236
      %p238 = scmp.eq.s32.totalorder %s32, 0
      %p239 = por %p237, %p238
      %s241 = sadd.s32 %s240, 1
      %p244 = scmp.eq.s32.totalorder %s26, 3
      %p245 = scmp.ne.s32.totalorder %s240, %s242
      %p246 = scmp.eq.s32.totalorder %s26, 0
      %p247 = por %p245, %p246
      %p248 = scmp.ne.s32.totalorder %s240, %s242
      %p249 = scmp.eq.s32.totalorder %s31, 3
      %p250 = por %p248, %p249
      %p251 = scmp.ne.s32.totalorder %s242, %s243
      %p252 = scmp.eq.s32.totalorder %s31, 0
      %p253 = por %p251, %p252
      %p254 = scmp.ne.s32.totalorder %s242, %s243
      %p255 = scmp.eq.s32.totalorder %s32, 3
      %p256 = por %p254, %p255
      %p258 = scmp.ne.s32.totalorder %s243, %s257
      %p259 = scmp.eq.s32.totalorder %s32, 0
      %p260 = por %p258, %p259
      %s262 = sadd.s32 %s261, 1
      %p265 = scmp.eq.s32.totalorder %s26, 3
      %p266 = scmp.ne.s32.totalorder %s261, %s263
      %p267 = scmp.eq.s32.totalorder %s26, 0
      %p268 = por %p266, %p267
      %p269 = scmp.ne.s32.totalorder %s261, %s263
      %p270 = scmp.eq.s32.totalorder %s31, 3
      %p271 = por %p269, %p270
      %p272 = scmp.ne.s32.totalorder %s263, %s264
      %p273 = scmp.eq.s32.totalorder %s31, 0
      %p274 = por %p272, %p273
      %p275 = scmp.ne.s32.totalorder %s263, %s264
      %p276 = scmp.eq.s32.totalorder %s32, 3
      %p277 = por %p275, %p276
      %p279 = scmp.ne.s32.totalorder %s264, %s278
      %p280 = scmp.eq.s32.totalorder %s32, 0
      %p281 = por %p279, %p280
      %s282 = ssub.s32 %s33, %s45
      %s283 = ssub.s32 %s34, %s41
      %s284 = sor.u32 %s282, %s283
      %p285 = scmp.eq.s32.totalorder %s284, 0
      %s287 = sadd.s32 %s286, 1
      %s288 = scalar_select %p285, %s286, %s287
      %p291 = pneg %p285
      %p292 = scmp.eq.s32.totalorder %s26, 3
      %p293 = por %p291, %p292
      %p294 = scmp.ne.s32.totalorder %s286, %s289
      %p295 = scmp.eq.s32.totalorder %s26, 0
      %p296 = por %p294, %p295
      %p297 = scmp.ne.s32.totalorder %s286, %s289
      %p298 = scmp.eq.s32.totalorder %s31, 3
      %p299 = por %p297, %p298
      %p300 = scmp.ne.s32.totalorder %s289, %s290
      %p301 = scmp.eq.s32.totalorder %s31, 0
      %p302 = por %p300, %p301
      %p303 = scmp.ne.s32.totalorder %s289, %s290
      %p304 = scmp.eq.s32.totalorder %s32, 3
      %p305 = por %p303, %p304
      %p307 = scmp.ne.s32.totalorder %s290, %s306
      %p308 = scmp.eq.s32.totalorder %s32, 0
      %p309 = por %p307, %p308
      %p310 = scmp.le.s32.totalorder 1, %s26
      %p311 = scmp.lt.s32.totalorder %s26, 5
      %p312 = pnand %p310, %p311
      %p313 = pneg %p312
      // Predicated region
      $region9: #{tpu_custom_call.1} parent=5 // pred_check
        _
      $region10: #{tpu_custom_call.1} parent=5 // pred_check_branch
        %315 = sbr.rel (%p312) target = $region12
      $region11: #{tpu_custom_call.1} parent=5 // pred_region
        %s316 = ssub.s32 %s26, 1
        // Predicated region
        $region13: #{tpu_custom_call.1} parent=11 // pred_check
          %p317 = pneg %p85
        $region14: #{tpu_custom_call.1} parent=11 // pred_check_branch
          %319 = sbr.rel (%p317) target = $region16
        $region15: #{tpu_custom_call.1} parent=11 // pred_region
          _
        $region16: #{tpu_custom_call.1} parent=11 // pred_fallthru
          _
        // Predicated region
        $region17: #{tpu_custom_call.1} parent=11 // pred_check
          %p320 = pneg %p106
        $region18: #{tpu_custom_call.1} parent=11 // pred_check_branch
          %322 = sbr.rel (%p320) target = $region20
        $region19: #{tpu_custom_call.1} parent=11 // pred_region
          _
        $region20: #{tpu_custom_call.1} parent=11 // pred_fallthru
          _
        // Predicated region
        $region21: #{tpu_custom_call.1} parent=11 // pred_check
          %p323 = pneg %p127
        $region22: #{tpu_custom_call.1} parent=11 // pred_check_branch
          %325 = sbr.rel (%p323) target = $region24
        $region23: #{tpu_custom_call.1} parent=11 // pred_region
          %327 = vsyncadd [#allocation9], 0
          %s328 = sshll.u32 %s3, 4
          %s329 = int_to_ptr.hbm [resolvable:$true] %s328
          %s330 = sshll.u32 [#allocation8], 4
          %s331 = int_to_ptr.vmem [resolvable:$true] %s330
          %336 = dma.hbm_to_vmem [thread:$0]  %s329, 1024, %s331, [#allocation9], 64, 64, 4
        $region24: #{tpu_custom_call.1} parent=11 // pred_fallthru
          _
        // Predicated region
        $region25: #{tpu_custom_call.1} parent=11 // pred_check
          %p337 = pneg %p148
        $region26: #{tpu_custom_call.1} parent=11 // pred_check_branch
          %339 = sbr.rel (%p337) target = $region28
        $region27: #{tpu_custom_call.1} parent=11 // pred_region
          %341 = vsyncadd [#allocation9], 0
          %s342 = sshll.u32 %s4, 4
          %s343 = int_to_ptr.hbm [resolvable:$true] %s342
          %s344 = sshll.u32 [#allocation10], 4
          %s345 = int_to_ptr.vmem [resolvable:$true] %s344
          %350 = dma.hbm_to_vmem [thread:$0]  %s343, 1024, %s345, [#allocation9], 64, 64, 4
        $region28: #{tpu_custom_call.1} parent=11 // pred_fallthru
          _
        // Predicated region
        $region29: #{tpu_custom_call.1} parent=11 // pred_check
          %p351 = pneg %p169
        $region30: #{tpu_custom_call.1} parent=11 // pred_check_branch
          %353 = sbr.rel (%p351) target = $region32
        $region31: #{tpu_custom_call.1} parent=11 // pred_region
          %355 = vsyncadd [#allocation12], 0
          %s356 = sshll.u32 %s5, 4
          %s357 = int_to_ptr.hbm [resolvable:$true] %s356
          %s358 = sshll.u32 [#allocation11], 4
          %s359 = int_to_ptr.vmem [resolvable:$true] %s358
          %364 = dma.hbm_to_vmem [thread:$0]  %s357, 1024, %s359, [#allocation12], 64, 64, 4
        $region32: #{tpu_custom_call.1} parent=11 // pred_fallthru
          _
        // Predicated region
        $region33: #{tpu_custom_call.1} parent=11 // pred_check
          %p365 = pneg %p190
        $region34: #{tpu_custom_call.1} parent=11 // pred_check_branch
          %367 = sbr.rel (%p365) target = $region36
        $region35: #{tpu_custom_call.1} parent=11 // pred_region
          %369 = vsyncadd [#allocation12], 0
          %s370 = sshll.u32 %s6, 4
          %s371 = int_to_ptr.hbm [resolvable:$true] %s370
          %s372 = sshll.u32 [#allocation13], 4
          %s373 = int_to_ptr.vmem [resolvable:$true] %s372
          %378 = dma.hbm_to_vmem [thread:$0]  %s371, 1024, %s373, [#allocation12], 64, 64, 4
        $region36: #{tpu_custom_call.1} parent=11 // pred_fallthru
          _
        // Predicated region
        $region37: #{tpu_custom_call.1} parent=11 // pred_check
          %p379 = pneg %p211
        $region38: #{tpu_custom_call.1} parent=11 // pred_check_branch
          %381 = sbr.rel (%p379) target = $region40
        $region39: #{tpu_custom_call.1} parent=11 // pred_region
          _
        $region40: #{tpu_custom_call.1} parent=11 // pred_fallthru
          _
        // Predicated region
        $region41: #{tpu_custom_call.1} parent=11 // pred_check
          %p382 = pneg %p232
        $region42: #{tpu_custom_call.1} parent=11 // pred_check_branch
          %384 = sbr.rel (%p382) target = $region44
        $region43: #{tpu_custom_call.1} parent=11 // pred_region
          _
        $region44: #{tpu_custom_call.1} parent=11 // pred_fallthru
          _
        // Predicated region
        $region45: #{tpu_custom_call.1} parent=11 // pred_check
          %p385 = pneg %p253
        $region46: #{tpu_custom_call.1} parent=11 // pred_check_branch
          %387 = sbr.rel (%p385) target = $region48
        $region47: #{tpu_custom_call.1} parent=11 // pred_region
          %389 = vsyncadd [#allocation15], 0
          %s390 = sshll.u32 %s9, 4
          %s391 = int_to_ptr.hbm [resolvable:$true] %s390
          %s392 = sshll.u32 [#allocation14], 4
          %s393 = int_to_ptr.vmem [resolvable:$true] %s392
          %398 = dma.hbm_to_vmem [thread:$0]  %s391, 8192, %s393, [#allocation15], 512, 512, 32
        $region48: #{tpu_custom_call.1} parent=11 // pred_fallthru
          _
        // Predicated region
        $region49: #{tpu_custom_call.1} parent=11 // pred_check
          %p399 = pneg %p274
        $region50: #{tpu_custom_call.1} parent=11 // pred_check_branch
          %401 = sbr.rel (%p399) target = $region52
        $region51: #{tpu_custom_call.1} parent=11 // pred_region
          _
        $region52: #{tpu_custom_call.1} parent=11 // pred_fallthru
          _
      $region12: #{tpu_custom_call.1} parent=5 // pred_fallthru
        _
      %p402 = scmp.lt.s32.totalorder %s26, 4
      // Predicated region
      $region53: #{tpu_custom_call.1} parent=5 // pred_check
        %p403 = pneg %p402
      $region54: #{tpu_custom_call.1} parent=5 // pred_check_branch
        %405 = sbr.rel (%p403) target = $region56
      $region55: #{tpu_custom_call.1} parent=5 // pred_region
        // Predicated region
        $region57: #{tpu_custom_call.1} parent=55 // pred_check
          %p406 = pneg %p58
        $region58: #{tpu_custom_call.1} parent=55 // pred_check_branch
          %408 = sbr.rel (%p406) target = $region60
        $region59: #{tpu_custom_call.1} parent=55 // pred_region
          %s409 = sand.u32 %s48, 1
          %s410 = scalar_lea.sflag [#allocation6], %s409
          %s411 = sand.u32 %s48, 1
          %s412 = smul.addr %s411, 64
          %s413 = scalar_lea.vmem [#allocation5], %s412
          %415 = vsyncadd %s410, 0
          %s416 = smul.addr %s33, 16
          %s417 = smul.addr %s416, 4
          %s418 = scalar_lea.hbm %s0, %s417
          %s419 = sshll.u32 %s418, 4
          %s420 = int_to_ptr.hbm [resolvable:$true] %s419
          %s421 = sshll.u32 %s413, 4
          %s422 = int_to_ptr.vmem [resolvable:$true] %s421
          %427 = dma.hbm_to_vmem [thread:$0]  %s420, 1024, %s422, %s410, 64, 64, 4
        $region60: #{tpu_custom_call.1} parent=55 // pred_fallthru
          _
      $region56: #{tpu_custom_call.1} parent=5 // pred_fallthru
        _
      %p428 = scmp.le.s32.totalorder 1, %s26
      %p429 = scmp.lt.s32.totalorder %s26, 5
      %p430 = pnand %p428, %p429
      %p431 = pneg %p430
      // Predicated region
      $region61: #{tpu_custom_call.1} parent=5 // pred_check
        _
      $region62: #{tpu_custom_call.1} parent=5 // pred_check_branch
        %433 = sbr.rel (%p430) target = $region64
      $region63: #{tpu_custom_call.1} parent=5 // pred_region
        %s434 = ssub.s32 %s26, 1
        %s435 = sand.u32 %s51, 1
        %s436 = scalar_lea.sflag [#allocation6], %s435
        %s437 = sand.u32 %s51, 1
        %s438 = smul.addr %s437, 64
        %s439 = scalar_lea.vmem [#allocation5], %s438
        // Predicated region
        $region65: #{tpu_custom_call.1} parent=63 // pred_check
          %p440 = pneg %p64
        $region66: #{tpu_custom_call.1} parent=63 // pred_check_branch
          %442 = sbr.rel (%p440) target = $region68
        $region67: #{tpu_custom_call.1} parent=63 // pred_region
          %444 = dma.done %s436, 1024
        $region68: #{tpu_custom_call.1} parent=63 // pred_fallthru
          _
        // Predicated region
        $region69: #{tpu_custom_call.1} parent=63 // pred_check
          %p445 = pneg %p127
        $region70: #{tpu_custom_call.1} parent=63 // pred_check_branch
          %447 = sbr.rel (%p445) target = $region72
        $region71: #{tpu_custom_call.1} parent=63 // pred_region
          %449 = dma.done [#allocation9], 1024
        $region72: #{tpu_custom_call.1} parent=63 // pred_fallthru
          _
        // Predicated region
        $region73: #{tpu_custom_call.1} parent=63 // pred_check
          %p450 = pneg %p148
        $region74: #{tpu_custom_call.1} parent=63 // pred_check_branch
          %452 = sbr.rel (%p450) target = $region76
        $region75: #{tpu_custom_call.1} parent=63 // pred_region
          %454 = dma.done [#allocation9], 1024
        $region76: #{tpu_custom_call.1} parent=63 // pred_fallthru
          _
        // Predicated region
        $region77: #{tpu_custom_call.1} parent=63 // pred_check
          %p455 = pneg %p169
        $region78: #{tpu_custom_call.1} parent=63 // pred_check_branch
          %457 = sbr.rel (%p455) target = $region80
        $region79: #{tpu_custom_call.1} parent=63 // pred_region
          %459 = dma.done [#allocation12], 1024
        $region80: #{tpu_custom_call.1} parent=63 // pred_fallthru
          _
        // Predicated region
        $region81: #{tpu_custom_call.1} parent=63 // pred_check
          %p460 = pneg %p190
        $region82: #{tpu_custom_call.1} parent=63 // pred_check_branch
          %462 = sbr.rel (%p460) target = $region84
        $region83: #{tpu_custom_call.1} parent=63 // pred_region
          %464 = dma.done [#allocation12], 1024
        $region84: #{tpu_custom_call.1} parent=63 // pred_fallthru
          _
        // Predicated region
        $region85: #{tpu_custom_call.1} parent=63 // pred_check
          %p465 = pneg %p253
        $region86: #{tpu_custom_call.1} parent=63 // pred_check_branch
          %467 = sbr.rel (%p465) target = $region88
        $region87: #{tpu_custom_call.1} parent=63 // pred_region
          %469 = dma.done [#allocation15], 8192
        $region88: #{tpu_custom_call.1} parent=63 // pred_fallthru
          _
        %s470 = sand.u32 %s51, 1
        %s471 = scalar_lea.sflag [#allocation6], %s470
        %s472 = sand.u32 %s51, 1
        %s473 = smul.addr %s472, 64
        %s474 = scalar_lea.vmem [#allocation5], %s473
        %p475 = pneg %p64
        %p476 = pneg %p61
        %p477 = pneg %p85
        %p478 = pneg %p82
        %p479 = pneg %p106
        %p480 = pneg %p103
        %p481 = pneg %p127
        %p482 = pneg %p124
        %p483 = pneg %p148
        %p484 = pneg %p145
        %p485 = pneg %p169
        %p486 = pneg %p166
        %p487 = pneg %p190
        %p488 = pneg %p187
        %p489 = pneg %p211
        %p490 = pneg %p208
        %p491 = pneg %p232
        %p492 = pneg %p229
        %p493 = pneg %p253
        %p494 = pneg %p250
        %p495 = pneg %p274
        %p496 = pneg %p271
        %p497 = pneg %p302
        %p498 = pneg %p299
        %s499 = sand.u32 %s289, 1
        %s500 = scalar_lea.sflag [#allocation7], %s499
        %s501 = sand.u32 %s289, 1
        %s502 = smul.addr %s501, 32
        %s503 = scalar_lea.vmem [#allocation16], %s502
        %s504 = smul.u32 8, %s36
        %s506 = smul.u32 %s36, 64
        %p507 = scmp.eq.s32.totalorder %s36, 0
        // Predicated region
        $region89: #{tpu_custom_call.1} parent=63 // pred_check
          %p508 = pneg %p507
        $region90: #{tpu_custom_call.1} parent=63 // pred_check_branch
          %510 = sbr.rel (%p508) target = $region92
        $region91: #{tpu_custom_call.1} parent=63 // pred_region
          %v511 = vld [vmem:[%s439] sm:$0xf]
          %v512 = vld [vmem:[%s439 + $0x4] sm:$0xf]
          %v513 = vld [vmem:[%s439 + $0x8] sm:$0xf]
          %v514 = vld [vmem:[%s439 + $0xc] sm:$0xf]
          %v515 = vld [vmem:[%s439 + $0x10] sm:$0xf]
          %v516 = vld [vmem:[%s439 + $0x14] sm:$0xf]
          %v517 = vld [vmem:[%s439 + $0x18] sm:$0xf]
          %v518 = vld [vmem:[%s439 + $0x1c] sm:$0xf]
          %v519 = vld [vmem:[%s439 + $0x20] sm:$0xf]
          %v520 = vld [vmem:[%s439 + $0x24] sm:$0xf]
          %v521 = vld [vmem:[%s439 + $0x28] sm:$0xf]
          %v522 = vld [vmem:[%s439 + $0x2c] sm:$0xf]
          %v523 = vld [vmem:[%s439 + $0x30] sm:$0xf]
          %v524 = vld [vmem:[%s439 + $0x34] sm:$0xf]
          %v525 = vld [vmem:[%s439 + $0x38] sm:$0xf]
          %v526 = vld [vmem:[%s439 + $0x3c] sm:$0xf]
          %v527 = vunpack.c.l.bf16 %v511
          %v528 = vunpack.c.l.bf16 %v512
          %v529 = vunpack.c.l.bf16 %v513
          %v530 = vunpack.c.l.bf16 %v514
          %v531 = vunpack.c.l.bf16 %v515
          %v532 = vunpack.c.l.bf16 %v516
          %v533 = vunpack.c.l.bf16 %v517
          %v534 = vunpack.c.l.bf16 %v518
          %v535 = vunpack.c.l.bf16 %v519
          %v536 = vunpack.c.l.bf16 %v520
          %v537 = vunpack.c.l.bf16 %v521
          %v538 = vunpack.c.l.bf16 %v522
          %v539 = vunpack.c.l.bf16 %v523
          %v540 = vunpack.c.l.bf16 %v524
          %v541 = vunpack.c.l.bf16 %v525
          %v542 = vunpack.c.l.bf16 %v526
          %v543 = vld [vmem:[%s7] sm:$0x1]
          %v544 = vmul.f32 %v527, %v527
          %v545 = vmul.f32 %v528, %v528
          %v546 = vmul.f32 %v529, %v529
          %v547 = vmul.f32 %v530, %v530
          %v548 = vmul.f32 %v531, %v531
          %v549 = vmul.f32 %v532, %v532
          %v550 = vmul.f32 %v533, %v533
          %v551 = vmul.f32 %v534, %v534
          %v552 = vmul.f32 %v535, %v535
          %v553 = vmul.f32 %v536, %v536
          %v554 = vmul.f32 %v537, %v537
          %v555 = vmul.f32 %v538, %v538
          %v556 = vmul.f32 %v539, %v539
          %v557 = vmul.f32 %v540, %v540
          %v558 = vmul.f32 %v541, %v541
          %v559 = vmul.f32 %v542, %v542
          %560 = vadd.xlane.f32.xlu0 %v544
          %v561 = vpop.xlane.xlu0 %560
          %562 = vadd.xlane.f32.xlu0 %v545
          %v563 = vpop.xlane.xlu0 %562
          %564 = vadd.xlane.f32.xlu0 %v546
          %v565 = vpop.xlane.xlu0 %564
          %566 = vadd.xlane.f32.xlu0 %v547
          %v567 = vpop.xlane.xlu0 %566
          %568 = vadd.xlane.f32.xlu0 %v548
          %v569 = vpop.xlane.xlu0 %568
          %570 = vadd.xlane.f32.xlu0 %v549
          %v571 = vpop.xlane.xlu0 %570
          %572 = vadd.xlane.f32.xlu0 %v550
          %v573 = vpop.xlane.xlu0 %572
          %574 = vadd.xlane.f32.xlu0 %v551
          %v575 = vpop.xlane.xlu0 %574
          %576 = vadd.xlane.f32.xlu0 %v552
          %v577 = vpop.xlane.xlu0 %576
          %578 = vadd.xlane.f32.xlu0 %v553
          %v579 = vpop.xlane.xlu0 %578
          %580 = vadd.xlane.f32.xlu0 %v554
          %v581 = vpop.xlane.xlu0 %580
          %582 = vadd.xlane.f32.xlu0 %v555
          %v583 = vpop.xlane.xlu0 %582
          %584 = vadd.xlane.f32.xlu0 %v556
          %v585 = vpop.xlane.xlu0 %584
          %586 = vadd.xlane.f32.xlu0 %v557
          %v587 = vpop.xlane.xlu0 %586
          %588 = vadd.xlane.f32.xlu0 %v558
          %v589 = vpop.xlane.xlu0 %588
          %590 = vadd.xlane.f32.xlu0 %v559
          %v591 = vpop.xlane.xlu0 %590
          %v592 = vrcp.pop 128.0
          %v593 = vmul.f32 128.0, %v592
          %v594 = vsub.f32 1.0, %v593
          %v595 = vmul.f32 %v592, %v594
          %v596 = vadd.f32 %v592, %v595
          %vm597 = vweird.f32 %v592
          %v598 = vsel %vm597, %v592, %v596
          %v599 = vmul.f32 %v561, %v598
          %v600 = vmul.f32 %v563, %v598
          %v601 = vmul.f32 %v565, %v598
          %v602 = vmul.f32 %v567, %v598
          %v603 = vmul.f32 %v569, %v598
          %v604 = vmul.f32 %v571, %v598
          %v605 = vmul.f32 %v573, %v598
          %v606 = vmul.f32 %v575, %v598
          %v607 = vmul.f32 %v577, %v598
          %v608 = vmul.f32 %v579, %v598
          %v609 = vmul.f32 %v581, %v598
          %v610 = vmul.f32 %v583, %v598
          %v611 = vmul.f32 %v585, %v598
          %v612 = vmul.f32 %v587, %v598
          %v613 = vmul.f32 %v589, %v598
          %v614 = vmul.f32 %v591, %v598
          %v616 = vperm.slane %v543, 0
          %v618 = vmul.f32 %v616, %v527
          %v619 = vmul.f32 %v616, %v528
          %v620 = vmul.f32 %v616, %v529
          %v621 = vmul.f32 %v616, %v530
          %v622 = vmul.f32 %v616, %v531
          %v623 = vmul.f32 %v616, %v532
          %v624 = vmul.f32 %v616, %v533
          %v625 = vmul.f32 %v616, %v534
          %v626 = vmul.f32 %v616, %v535
          %v627 = vmul.f32 %v616, %v536
          %v628 = vmul.f32 %v616, %v537
          %v629 = vmul.f32 %v616, %v538
          %v630 = vmul.f32 %v616, %v539
          %v631 = vmul.f32 %v616, %v540
          %v632 = vmul.f32 %v616, %v541
          %v633 = vmul.f32 %v616, %v542
          %v634 = vadd.f32 %v599, 1e-06
          %v635 = vadd.f32 %v600, 1e-06
          %v636 = vadd.f32 %v601, 1e-06
          %v637 = vadd.f32 %v602, 1e-06
          %v638 = vadd.f32 %v603, 1e-06
          %v639 = vadd.f32 %v604, 1e-06
          %v640 = vadd.f32 %v605, 1e-06
          %v641 = vadd.f32 %v606, 1e-06
          %v642 = vadd.f32 %v607, 1e-06
          %v643 = vadd.f32 %v608, 1e-06
          %v644 = vadd.f32 %v609, 1e-06
          %v645 = vadd.f32 %v610, 1e-06
          %v646 = vadd.f32 %v611, 1e-06
          %v647 = vadd.f32 %v612, 1e-06
          %v648 = vadd.f32 %v613, 1e-06
          %v649 = vadd.f32 %v614, 1e-06
          %v650 = vrsqrt.pop %v634
          %v651 = vmul.f32 %v650, %v634
          %v652 = vmul.f32 %v651, %v650
          %v653 = vmul.f32 0.5, %v652
          %v654 = vsub.f32 1.5, %v653
          %v655 = vmul.f32 %v650, %v654
          %vm656 = vweird.f32 %v634
          %vm657 = vweird.f32 %v650
          %vm658 = vmor %vm656, %vm657
          %v659 = vsel %vm658, %v650, %v655
          %v660 = vrsqrt.pop %v635
          %v661 = vmul.f32 %v660, %v635
          %v662 = vmul.f32 %v661, %v660
          %v663 = vmul.f32 0.5, %v662
          %v664 = vsub.f32 1.5, %v663
          %v665 = vmul.f32 %v660, %v664
          %vm666 = vweird.f32 %v635
          %vm667 = vweird.f32 %v660
          %vm668 = vmor %vm666, %vm667
          %v669 = vsel %vm668, %v660, %v665
          %v670 = vrsqrt.pop %v636
          %v671 = vmul.f32 %v670, %v636
          %v672 = vmul.f32 %v671, %v670
          %v673 = vmul.f32 0.5, %v672
          %v674 = vsub.f32 1.5, %v673
          %v675 = vmul.f32 %v670, %v674
          %vm676 = vweird.f32 %v636
          %vm677 = vweird.f32 %v670
          %vm678 = vmor %vm676, %vm677
          %v679 = vsel %vm678, %v670, %v675
          %v680 = vrsqrt.pop %v637
          %v681 = vmul.f32 %v680, %v637
          %v682 = vmul.f32 %v681, %v680
          %v683 = vmul.f32 0.5, %v682
          %v684 = vsub.f32 1.5, %v683
          %v685 = vmul.f32 %v680, %v684
          %vm686 = vweird.f32 %v637
          %vm687 = vweird.f32 %v680
          %vm688 = vmor %vm686, %vm687
          %v689 = vsel %vm688, %v680, %v685
          %v690 = vrsqrt.pop %v638
          %v691 = vmul.f32 %v690, %v638
          %v692 = vmul.f32 %v691, %v690
          %v693 = vmul.f32 0.5, %v692
          %v694 = vsub.f32 1.5, %v693
          %v695 = vmul.f32 %v690, %v694
          %vm696 = vweird.f32 %v638
          %vm697 = vweird.f32 %v690
          %vm698 = vmor %vm696, %vm697
          %v699 = vsel %vm698, %v690, %v695
          %v700 = vrsqrt.pop %v639
          %v701 = vmul.f32 %v700, %v639
          %v702 = vmul.f32 %v701, %v700
          %v703 = vmul.f32 0.5, %v702
          %v704 = vsub.f32 1.5, %v703
          %v705 = vmul.f32 %v700, %v704
          %vm706 = vweird.f32 %v639
          %vm707 = vweird.f32 %v700
          %vm708 = vmor %vm706, %vm707
          %v709 = vsel %vm708, %v700, %v705
          %v710 = vrsqrt.pop %v640
          %v711 = vmul.f32 %v710, %v640
          %v712 = vmul.f32 %v711, %v710
          %v713 = vmul.f32 0.5, %v712
          %v714 = vsub.f32 1.5, %v713
          %v715 = vmul.f32 %v710, %v714
          %vm716 = vweird.f32 %v640
          %vm717 = vweird.f32 %v710
          %vm718 = vmor %vm716, %vm717
          %v719 = vsel %vm718, %v710, %v715
          %v720 = vrsqrt.pop %v641
          %v721 = vmul.f32 %v720, %v641
          %v722 = vmul.f32 %v721, %v720
          %v723 = vmul.f32 0.5, %v722
          %v724 = vsub.f32 1.5, %v723
          %v725 = vmul.f32 %v720, %v724
          %vm726 = vweird.f32 %v641
          %vm727 = vweird.f32 %v720
          %vm728 = vmor %vm726, %vm727
          %v729 = vsel %vm728, %v720, %v725
          %v730 = vrsqrt.pop %v642
          %v731 = vmul.f32 %v730, %v642
          %v732 = vmul.f32 %v731, %v730
          %v733 = vmul.f32 0.5, %v732
          %v734 = vsub.f32 1.5, %v733
          %v735 = vmul.f32 %v730, %v734
          %vm736 = vweird.f32 %v642
          %vm737 = vweird.f32 %v730
          %vm738 = vmor %vm736, %vm737
          %v739 = vsel %vm738, %v730, %v735
          %v740 = vrsqrt.pop %v643
          %v741 = vmul.f32 %v740, %v643
          %v742 = vmul.f32 %v741, %v740
          %v743 = vmul.f32 0.5, %v742
          %v744 = vsub.f32 1.5, %v743
          %v745 = vmul.f32 %v740, %v744
          %vm746 = vweird.f32 %v643
          %vm747 = vweird.f32 %v740
          %vm748 = vmor %vm746, %vm747
          %v749 = vsel %vm748, %v740, %v745
          %v750 = vrsqrt.pop %v644
          %v751 = vmul.f32 %v750, %v644
          %v752 = vmul.f32 %v751, %v750
          %v753 = vmul.f32 0.5, %v752
          %v754 = vsub.f32 1.5, %v753
          %v755 = vmul.f32 %v750, %v754
          %vm756 = vweird.f32 %v644
          %vm757 = vweird.f32 %v750
          %vm758 = vmor %vm756, %vm757
          %v759 = vsel %vm758, %v750, %v755
          %v760 = vrsqrt.pop %v645
          %v761 = vmul.f32 %v760, %v645
          %v762 = vmul.f32 %v761, %v760
          %v763 = vmul.f32 0.5, %v762
          %v764 = vsub.f32 1.5, %v763
          %v765 = vmul.f32 %v760, %v764
          %vm766 = vweird.f32 %v645
          %vm767 = vweird.f32 %v760
          %vm768 = vmor %vm766, %vm767
          %v769 = vsel %vm768, %v760, %v765
          %v770 = vrsqrt.pop %v646
          %v771 = vmul.f32 %v770, %v646
          %v772 = vmul.f32 %v771, %v770
          %v773 = vmul.f32 0.5, %v772
          %v774 = vsub.f32 1.5, %v773
          %v775 = vmul.f32 %v770, %v774
          %vm776 = vweird.f32 %v646
          %vm777 = vweird.f32 %v770
          %vm778 = vmor %vm776, %vm777
          %v779 = vsel %vm778, %v770, %v775
          %v780 = vrsqrt.pop %v647
          %v781 = vmul.f32 %v780, %v647
          %v782 = vmul.f32 %v781, %v780
          %v783 = vmul.f32 0.5, %v782
          %v784 = vsub.f32 1.5, %v783
          %v785 = vmul.f32 %v780, %v784
          %vm786 = vweird.f32 %v647
          %vm787 = vweird.f32 %v780
          %vm788 = vmor %vm786, %vm787
          %v789 = vsel %vm788, %v780, %v785
          %v790 = vrsqrt.pop %v648
          %v791 = vmul.f32 %v790, %v648
          %v792 = vmul.f32 %v791, %v790
          %v793 = vmul.f32 0.5, %v792
          %v794 = vsub.f32 1.5, %v793
          %v795 = vmul.f32 %v790, %v794
          %vm796 = vweird.f32 %v648
          %vm797 = vweird.f32 %v790
          %vm798 = vmor %vm796, %vm797
          %v799 = vsel %vm798, %v790, %v795
          %v800 = vrsqrt.pop %v649
          %v801 = vmul.f32 %v800, %v649
          %v802 = vmul.f32 %v801, %v800
          %v803 = vmul.f32 0.5, %v802
          %v804 = vsub.f32 1.5, %v803
          %v805 = vmul.f32 %v800, %v804
          %vm806 = vweird.f32 %v649
          %vm807 = vweird.f32 %v800
          %vm808 = vmor %vm806, %vm807
          %v809 = vsel %vm808, %v800, %v805
          %v810 = vmul.f32 %v618, %v659
          %v811 = vmul.f32 %v619, %v669
          %v812 = vmul.f32 %v620, %v679
          %v813 = vmul.f32 %v621, %v689
          %v814 = vmul.f32 %v622, %v699
          %v815 = vmul.f32 %v623, %v709
          %v816 = vmul.f32 %v624, %v719
          %v817 = vmul.f32 %v625, %v729
          %v818 = vmul.f32 %v626, %v739
          %v819 = vmul.f32 %v627, %v749
          %v820 = vmul.f32 %v628, %v759
          %v821 = vmul.f32 %v629, %v769
          %v822 = vmul.f32 %v630, %v779
          %v823 = vmul.f32 %v631, %v789
          %v824 = vmul.f32 %v632, %v799
          %v825 = vmul.f32 %v633, %v809
          %v826 = vpack.c.bf16 %v810, %v810
          %v827 = vpack.c.bf16 %v811, %v811
          %v828 = vpack.c.bf16 %v812, %v812
          %v829 = vpack.c.bf16 %v813, %v813
          %v830 = vpack.c.bf16 %v814, %v814
          %v831 = vpack.c.bf16 %v815, %v815
          %v832 = vpack.c.bf16 %v816, %v816
          %v833 = vpack.c.bf16 %v817, %v817
          %v834 = vpack.c.bf16 %v818, %v818
          %v835 = vpack.c.bf16 %v819, %v819
          %v836 = vpack.c.bf16 %v820, %v820
          %v837 = vpack.c.bf16 %v821, %v821
          %v838 = vpack.c.bf16 %v822, %v822
          %v839 = vpack.c.bf16 %v823, %v823
          %v840 = vpack.c.bf16 %v824, %v824
          %v841 = vpack.c.bf16 %v825, %v825
          %842 = vst [vmem:[#allocation2] sm:$0xf] %v826
          %843 = vst [vmem:[#allocation2 + $0x4] sm:$0xf] %v827
          %844 = vst [vmem:[#allocation2 + $0x8] sm:$0xf] %v828
          %845 = vst [vmem:[#allocation2 + $0xc] sm:$0xf] %v829
          %846 = vst [vmem:[#allocation2 + $0x10] sm:$0xf] %v830
          %847 = vst [vmem:[#allocation2 + $0x14] sm:$0xf] %v831
          %848 = vst [vmem:[#allocation2 + $0x18] sm:$0xf] %v832
          %849 = vst [vmem:[#allocation2 + $0x1c] sm:$0xf] %v833
          %850 = vst [vmem:[#allocation2 + $0x20] sm:$0xf] %v834
          %851 = vst [vmem:[#allocation2 + $0x24] sm:$0xf] %v835
          %852 = vst [vmem:[#allocation2 + $0x28] sm:$0xf] %v836
          %853 = vst [vmem:[#allocation2 + $0x2c] sm:$0xf] %v837
          %854 = vst [vmem:[#allocation2 + $0x30] sm:$0xf] %v838
          %855 = vst [vmem:[#allocation2 + $0x34] sm:$0xf] %v839
          %856 = vst [vmem:[#allocation2 + $0x38] sm:$0xf] %v840
          %857 = vst [vmem:[#allocation2 + $0x3c] sm:$0xf] %v841
          %v858 = vld [vmem:[#allocation10] sm:$0xf]
          %v859 = vld [vmem:[#allocation10 + $0x4] sm:$0xf]
          %v860 = vld [vmem:[#allocation10 + $0x8] sm:$0xf]
          %v861 = vld [vmem:[#allocation10 + $0xc] sm:$0xf]
          %v862 = vld [vmem:[#allocation10 + $0x10] sm:$0xf]
          %v863 = vld [vmem:[#allocation10 + $0x14] sm:$0xf]
          %v864 = vld [vmem:[#allocation10 + $0x18] sm:$0xf]
          %v865 = vld [vmem:[#allocation10 + $0x1c] sm:$0xf]
          %v866 = vld [vmem:[#allocation10 + $0x20] sm:$0xf]
          %v867 = vld [vmem:[#allocation10 + $0x24] sm:$0xf]
          %v868 = vld [vmem:[#allocation10 + $0x28] sm:$0xf]
          %v869 = vld [vmem:[#allocation10 + $0x2c] sm:$0xf]
          %v870 = vld [vmem:[#allocation10 + $0x30] sm:$0xf]
          %v871 = vld [vmem:[#allocation10 + $0x34] sm:$0xf]
          %v872 = vld [vmem:[#allocation10 + $0x38] sm:$0xf]
          %v873 = vld [vmem:[#allocation10 + $0x3c] sm:$0xf]
          %v890 = vunpack.c.l.b16 %v826
          %v891 = vunpack.c.l.b16 %v827
          %v892 = vunpack.c.l.b16 %v828
          %v893 = vunpack.c.l.b16 %v829
          %v894 = vunpack.c.l.b16 %v830
          %v895 = vunpack.c.l.b16 %v831
          %v896 = vunpack.c.l.b16 %v832
          %v897 = vunpack.c.l.b16 %v833
          %v898 = vunpack.c.l.b16 %v834
          %v899 = vunpack.c.l.b16 %v835
          %v900 = vunpack.c.l.b16 %v836
          %v901 = vunpack.c.l.b16 %v837
          %v902 = vunpack.c.l.b16 %v838
          %v903 = vunpack.c.l.b16 %v839
          %v904 = vunpack.c.l.b16 %v840
          %v905 = vunpack.c.l.b16 %v841
          %v906 = vpack.c.b16 %v891, %v890
          %v907 = vpack.c.b16 %v893, %v892
          %v908 = vpack.c.b16 %v895, %v894
          %v909 = vpack.c.b16 %v897, %v896
          %v910 = vpack.c.b16 %v899, %v898
          %v911 = vpack.c.b16 %v901, %v900
          %v912 = vpack.c.b16 %v903, %v902
          %v913 = vpack.c.b16 %v905, %v904
          %v938 = vunpack.c.l.b16 %v858
          %v939 = vunpack.c.l.b16 %v859
          %v940 = vunpack.c.l.b16 %v860
          %v941 = vunpack.c.l.b16 %v861
          %v942 = vunpack.c.l.b16 %v862
          %v943 = vunpack.c.l.b16 %v863
          %v944 = vunpack.c.l.b16 %v864
          %v945 = vunpack.c.l.b16 %v865
          %v946 = vunpack.c.l.b16 %v866
          %v947 = vunpack.c.l.b16 %v867
          %v948 = vunpack.c.l.b16 %v868
          %v949 = vunpack.c.l.b16 %v869
          %v950 = vunpack.c.l.b16 %v870
          %v951 = vunpack.c.l.b16 %v871
          %v952 = vunpack.c.l.b16 %v872
          %v953 = vunpack.c.l.b16 %v873
          %v954 = vpack.c.b16 %v939, %v938
          %v955 = vpack.c.b16 %v941, %v940
          %v956 = vpack.c.b16 %v943, %v942
          %v957 = vpack.c.b16 %v945, %v944
          %v958 = vpack.c.b16 %v947, %v946
          %v959 = vpack.c.b16 %v949, %v948
          %v960 = vpack.c.b16 %v951, %v950
          %v961 = vpack.c.b16 %v953, %v952
          %970 = vmatpush.bf16.msra.mxu0 %v961
          %971 = vmatpush.bf16.msra.mxu0 %v960
          %972 = vmatpush.bf16.msra.mxu0 %v959
          %973 = vmatpush.bf16.msra.mxu0 %v958
          %974 = vmatpush.bf16.msra.mxu0 %v957
          %975 = vmatpush.bf16.msra.mxu0 %v956
          %976 = vmatpush.bf16.msra.mxu0 %v955
          %977 = vmatpush.bf16.msra.mxu0 %v954
          %978 = vmatmul.bf16.gmra.mxu0 %v906
          %v979 = vpop.f32.mrf.mxu0
          %v980 = vadd.f32 0.0, %v979
          %v981 = vpop.f32.mrf.mxu0
          %v982 = vadd.f32 0.0, %v981
          %983 = vmatmul.bf16.gmra.mxu0 %v907
          %v984 = vpop.f32.mrf.mxu0
          %v985 = vadd.f32 0.0, %v984
          %v986 = vpop.f32.mrf.mxu0
          %v987 = vadd.f32 0.0, %v986
          %988 = vmatmul.bf16.gmra.mxu0 %v908
          %v989 = vpop.f32.mrf.mxu0
          %v990 = vadd.f32 0.0, %v989
          %v991 = vpop.f32.mrf.mxu0
          %v992 = vadd.f32 0.0, %v991
          %993 = vmatmul.bf16.gmra.mxu0 %v909
          %v994 = vpop.f32.mrf.mxu0
          %v995 = vadd.f32 0.0, %v994
          %v996 = vpop.f32.mrf.mxu0
          %v997 = vadd.f32 0.0, %v996
          %998 = vmatmul.bf16.gmra.mxu0 %v910
          %v999 = vpop.f32.mrf.mxu0
          %v1000 = vadd.f32 0.0, %v999
          %v1001 = vpop.f32.mrf.mxu0
          %v1002 = vadd.f32 0.0, %v1001
          %1003 = vmatmul.bf16.gmra.mxu0 %v911
          %v1004 = vpop.f32.mrf.mxu0
          %v1005 = vadd.f32 0.0, %v1004
          %v1006 = vpop.f32.mrf.mxu0
          %v1007 = vadd.f32 0.0, %v1006
          %1008 = vmatmul.bf16.gmra.mxu0 %v912
          %v1009 = vpop.f32.mrf.mxu0
          %v1010 = vadd.f32 0.0, %v1009
          %v1011 = vpop.f32.mrf.mxu0
          %v1012 = vadd.f32 0.0, %v1011
          %1013 = vmatmul.bf16.gmra.mxu0 %v913
          %v1014 = vpop.f32.mrf.mxu0
          %v1015 = vadd.f32 0.0, %v1014
          %v1016 = vpop.f32.mrf.mxu0
          %v1017 = vadd.f32 0.0, %v1016
          %1018 = vdwg.mxu0
          %v1019 = vld [vmem:[#allocation11] sm:$0xf]
          %v1020 = vld [vmem:[#allocation11 + $0x4] sm:$0xf]
          %v1021 = vld [vmem:[#allocation11 + $0x8] sm:$0xf]
          %v1022 = vld [vmem:[#allocation11 + $0xc] sm:$0xf]
          %v1023 = vld [vmem:[#allocation11 + $0x10] sm:$0xf]
          %v1024 = vld [vmem:[#allocation11 + $0x14] sm:$0xf]
          %v1025 = vld [vmem:[#allocation11 + $0x18] sm:$0xf]
          %v1026 = vld [vmem:[#allocation11 + $0x1c] sm:$0xf]
          %v1027 = vld [vmem:[#allocation11 + $0x20] sm:$0xf]
          %v1028 = vld [vmem:[#allocation11 + $0x24] sm:$0xf]
          %v1029 = vld [vmem:[#allocation11 + $0x28] sm:$0xf]
          %v1030 = vld [vmem:[#allocation11 + $0x2c] sm:$0xf]
          %v1031 = vld [vmem:[#allocation11 + $0x30] sm:$0xf]
          %v1032 = vld [vmem:[#allocation11 + $0x34] sm:$0xf]
          %v1033 = vld [vmem:[#allocation11 + $0x38] sm:$0xf]
          %v1034 = vld [vmem:[#allocation11 + $0x3c] sm:$0xf]
          %v1051 = vunpack.c.l.b16 %v1019
          %v1052 = vunpack.c.l.b16 %v1020
          %v1053 = vunpack.c.l.b16 %v1021
          %v1054 = vunpack.c.l.b16 %v1022
          %v1055 = vunpack.c.l.b16 %v1023
          %v1056 = vunpack.c.l.b16 %v1024
          %v1057 = vunpack.c.l.b16 %v1025
          %v1058 = vunpack.c.l.b16 %v1026
          %v1059 = vunpack.c.l.b16 %v1027
          %v1060 = vunpack.c.l.b16 %v1028
          %v1061 = vunpack.c.l.b16 %v1029
          %v1062 = vunpack.c.l.b16 %v1030
          %v1063 = vunpack.c.l.b16 %v1031
          %v1064 = vunpack.c.l.b16 %v1032
          %v1065 = vunpack.c.l.b16 %v1033
          %v1066 = vunpack.c.l.b16 %v1034
          %v1067 = vpack.c.b16 %v1052, %v1051
          %v1068 = vpack.c.b16 %v1054, %v1053
          %v1069 = vpack.c.b16 %v1056, %v1055
          %v1070 = vpack.c.b16 %v1058, %v1057
          %v1071 = vpack.c.b16 %v1060, %v1059
          %v1072 = vpack.c.b16 %v1062, %v1061
          %v1073 = vpack.c.b16 %v1064, %v1063
          %v1074 = vpack.c.b16 %v1066, %v1065
          %1083 = vmatpush.bf16.msra.mxu0 %v1074
          %1084 = vmatpush.bf16.msra.mxu0 %v1073
          %1085 = vmatpush.bf16.msra.mxu0 %v1072
          %1086 = vmatpush.bf16.msra.mxu0 %v1071
          %1087 = vmatpush.bf16.msra.mxu0 %v1070
          %1088 = vmatpush.bf16.msra.mxu0 %v1069
          %1089 = vmatpush.bf16.msra.mxu0 %v1068
          %1090 = vmatpush.bf16.msra.mxu0 %v1067
          %1091 = vmatmul.bf16.gmra.mxu0 %v906
          %v1092 = vpop.f32.mrf.mxu0
          %v1093 = vadd.f32 0.0, %v1092
          %v1094 = vpop.f32.mrf.mxu0
          %v1095 = vadd.f32 0.0, %v1094
          %1096 = vmatmul.bf16.gmra.mxu0 %v907
          %v1097 = vpop.f32.mrf.mxu0
          %v1098 = vadd.f32 0.0, %v1097
          %v1099 = vpop.f32.mrf.mxu0
          %v1100 = vadd.f32 0.0, %v1099
          %1101 = vmatmul.bf16.gmra.mxu0 %v908
          %v1102 = vpop.f32.mrf.mxu0
          %v1103 = vadd.f32 0.0, %v1102
          %v1104 = vpop.f32.mrf.mxu0
          %v1105 = vadd.f32 0.0, %v1104
          %1106 = vmatmul.bf16.gmra.mxu0 %v909
          %v1107 = vpop.f32.mrf.mxu0
          %v1108 = vadd.f32 0.0, %v1107
          %v1109 = vpop.f32.mrf.mxu0
          %v1110 = vadd.f32 0.0, %v1109
          %1111 = vmatmul.bf16.gmra.mxu0 %v910
          %v1112 = vpop.f32.mrf.mxu0
          %v1113 = vadd.f32 0.0, %v1112
          %v1114 = vpop.f32.mrf.mxu0
          %v1115 = vadd.f32 0.0, %v1114
          %1116 = vmatmul.bf16.gmra.mxu0 %v911
          %v1117 = vpop.f32.mrf.mxu0
          %v1118 = vadd.f32 0.0, %v1117
          %v1119 = vpop.f32.mrf.mxu0
          %v1120 = vadd.f32 0.0, %v1119
          %1121 = vmatmul.bf16.gmra.mxu0 %v912
          %v1122 = vpop.f32.mrf.mxu0
          %v1123 = vadd.f32 0.0, %v1122
          %v1124 = vpop.f32.mrf.mxu0
          %v1125 = vadd.f32 0.0, %v1124
          %1126 = vmatmul.bf16.gmra.mxu0 %v913
          %v1127 = vpop.f32.mrf.mxu0
          %v1128 = vadd.f32 0.0, %v1127
          %v1129 = vpop.f32.mrf.mxu0
          %v1130 = vadd.f32 0.0, %v1129
          %1131 = vdwg.mxu0
          %v1132 = vld [vmem:[%s1] sm:$0xff]
          %v1133 = vld [vmem:[%s1 + $0x8] sm:$0xff]
          %v1134 = vld [vmem:[%s1 + $0x10] sm:$0xff]
          %v1135 = vld [vmem:[%s1 + $0x18] sm:$0xff]
          %v1136 = vld [vmem:[%s1 + $0x20] sm:$0xff]
          %v1137 = vld [vmem:[%s1 + $0x28] sm:$0xff]
          %v1138 = vld [vmem:[%s1 + $0x30] sm:$0xff]
          %v1139 = vld [vmem:[%s1 + $0x38] sm:$0xff]
          %v1140 = vld [vmem:[%s1 + $0x40] sm:$0xff]
          %v1141 = vld [vmem:[%s1 + $0x48] sm:$0xff]
          %v1142 = vld [vmem:[%s1 + $0x50] sm:$0xff]
          %v1143 = vld [vmem:[%s1 + $0x58] sm:$0xff]
          %v1144 = vld [vmem:[%s1 + $0x60] sm:$0xff]
          %v1145 = vld [vmem:[%s1 + $0x68] sm:$0xff]
          %v1146 = vld [vmem:[%s1 + $0x70] sm:$0xff]
          %v1147 = vld [vmem:[%s1 + $0x78] sm:$0xff]
          %v1148 = vld [vmem:[%s2] sm:$0xff]
          %v1149 = vld [vmem:[%s2 + $0x8] sm:$0xff]
          %v1150 = vld [vmem:[%s2 + $0x10] sm:$0xff]
          %v1151 = vld [vmem:[%s2 + $0x18] sm:$0xff]
          %v1152 = vld [vmem:[%s2 + $0x20] sm:$0xff]
          %v1153 = vld [vmem:[%s2 + $0x28] sm:$0xff]
          %v1154 = vld [vmem:[%s2 + $0x30] sm:$0xff]
          %v1155 = vld [vmem:[%s2 + $0x38] sm:$0xff]
          %v1156 = vld [vmem:[%s2 + $0x40] sm:$0xff]
          %v1157 = vld [vmem:[%s2 + $0x48] sm:$0xff]
          %v1158 = vld [vmem:[%s2 + $0x50] sm:$0xff]
          %v1159 = vld [vmem:[%s2 + $0x58] sm:$0xff]
          %v1160 = vld [vmem:[%s2 + $0x60] sm:$0xff]
          %v1161 = vld [vmem:[%s2 + $0x68] sm:$0xff]
          %v1162 = vld [vmem:[%s2 + $0x70] sm:$0xff]
          %v1163 = vld [vmem:[%s2 + $0x78] sm:$0xff]
          %v1164 = vmul.f32 %v980, %v1132
          %v1165 = vmul.f32 %v982, %v1133
          %v1166 = vmul.f32 %v985, %v1134
          %v1167 = vmul.f32 %v987, %v1135
          %v1168 = vmul.f32 %v990, %v1136
          %v1169 = vmul.f32 %v992, %v1137
          %v1170 = vmul.f32 %v995, %v1138
          %v1171 = vmul.f32 %v997, %v1139
          %v1172 = vmul.f32 %v1000, %v1140
          %v1173 = vmul.f32 %v1002, %v1141
          %v1174 = vmul.f32 %v1005, %v1142
          %v1175 = vmul.f32 %v1007, %v1143
          %v1176 = vmul.f32 %v1010, %v1144
          %v1177 = vmul.f32 %v1012, %v1145
          %v1178 = vmul.f32 %v1015, %v1146
          %v1179 = vmul.f32 %v1017, %v1147
          %1196 = vrot.lane.b32.xlu0 %v1148, 16
          %v1197 = vpop.permute.xlu0 %1196
          %1198 = vrot.lane.b32.xlu0 %v1149, 16
          %v1199 = vpop.permute.xlu0 %1198
          %1200 = vrot.lane.b32.xlu0 %v1150, 16
          %v1201 = vpop.permute.xlu0 %1200
          %1202 = vrot.lane.b32.xlu0 %v1151, 16
          %v1203 = vpop.permute.xlu0 %1202
          %1204 = vrot.lane.b32.xlu0 %v1152, 16
          %v1205 = vpop.permute.xlu0 %1204
          %1206 = vrot.lane.b32.xlu0 %v1153, 16
          %v1207 = vpop.permute.xlu0 %1206
          %1208 = vrot.lane.b32.xlu0 %v1154, 16
          %v1209 = vpop.permute.xlu0 %1208
          %1210 = vrot.lane.b32.xlu0 %v1155, 16
          %v1211 = vpop.permute.xlu0 %1210
          %1212 = vrot.lane.b32.xlu0 %v1156, 16
          %v1213 = vpop.permute.xlu0 %1212
          %1214 = vrot.lane.b32.xlu0 %v1157, 16
          %v1215 = vpop.permute.xlu0 %1214
          %1216 = vrot.lane.b32.xlu0 %v1158, 16
          %v1217 = vpop.permute.xlu0 %1216
          %1218 = vrot.lane.b32.xlu0 %v1159, 16
          %v1219 = vpop.permute.xlu0 %1218
          %1220 = vrot.lane.b32.xlu0 %v1160, 16
          %v1221 = vpop.permute.xlu0 %1220
          %1222 = vrot.lane.b32.xlu0 %v1161, 16
          %v1223 = vpop.permute.xlu0 %1222
          %1224 = vrot.lane.b32.xlu0 %v1162, 16
          %v1225 = vpop.permute.xlu0 %1224
          %1226 = vrot.lane.b32.xlu0 %v1163, 16
          %v1227 = vpop.permute.xlu0 %1226
          %v1244 = vmul.f32 %v980, %v1197
          %v1245 = vmul.f32 %v982, %v1199
          %v1246 = vmul.f32 %v985, %v1201
          %v1247 = vmul.f32 %v987, %v1203
          %v1248 = vmul.f32 %v990, %v1205
          %v1249 = vmul.f32 %v992, %v1207
          %v1250 = vmul.f32 %v995, %v1209
          %v1251 = vmul.f32 %v997, %v1211
          %v1252 = vmul.f32 %v1000, %v1213
          %v1253 = vmul.f32 %v1002, %v1215
          %v1254 = vmul.f32 %v1005, %v1217
          %v1255 = vmul.f32 %v1007, %v1219
          %v1256 = vmul.f32 %v1010, %v1221
          %v1257 = vmul.f32 %v1012, %v1223
          %v1258 = vmul.f32 %v1015, %v1225
          %v1259 = vmul.f32 %v1017, %v1227
          %1276 = vrot.lane.b32.xlu0 %v1244, 112
          %v1277 = vpop.permute.xlu0 %1276
          %1278 = vrot.lane.b32.xlu0 %v1245, 112
          %v1279 = vpop.permute.xlu0 %1278
          %1280 = vrot.lane.b32.xlu0 %v1246, 112
          %v1281 = vpop.permute.xlu0 %1280
          %1282 = vrot.lane.b32.xlu0 %v1247, 112
          %v1283 = vpop.permute.xlu0 %1282
          %1284 = vrot.lane.b32.xlu0 %v1248, 112
          %v1285 = vpop.permute.xlu0 %1284
          %1286 = vrot.lane.b32.xlu0 %v1249, 112
          %v1287 = vpop.permute.xlu0 %1286
          %1288 = vrot.lane.b32.xlu0 %v1250, 112
          %v1289 = vpop.permute.xlu0 %1288
          %1290 = vrot.lane.b32.xlu0 %v1251, 112
          %v1291 = vpop.permute.xlu0 %1290
          %1292 = vrot.lane.b32.xlu0 %v1252, 112
          %v1293 = vpop.permute.xlu0 %1292
          %1294 = vrot.lane.b32.xlu0 %v1253, 112
          %v1295 = vpop.permute.xlu0 %1294
          %1296 = vrot.lane.b32.xlu0 %v1254, 112
          %v1297 = vpop.permute.xlu0 %1296
          %1298 = vrot.lane.b32.xlu0 %v1255, 112
          %v1299 = vpop.permute.xlu0 %1298
          %1300 = vrot.lane.b32.xlu0 %v1256, 112
          %v1301 = vpop.permute.xlu0 %1300
          %1302 = vrot.lane.b32.xlu0 %v1257, 112
          %v1303 = vpop.permute.xlu0 %1302
          %1304 = vrot.lane.b32.xlu0 %v1258, 112
          %v1305 = vpop.permute.xlu0 %1304
          %1306 = vrot.lane.b32.xlu0 %v1259, 112
          %v1307 = vpop.permute.xlu0 %1306
          %v1324 = vsub.f32 %v1164, %v1277
          %v1325 = vsub.f32 %v1165, %v1279
          %v1326 = vsub.f32 %v1166, %v1281
          %v1327 = vsub.f32 %v1167, %v1283
          %v1328 = vsub.f32 %v1168, %v1285
          %v1329 = vsub.f32 %v1169, %v1287
          %v1330 = vsub.f32 %v1170, %v1289
          %v1331 = vsub.f32 %v1171, %v1291
          %v1332 = vsub.f32 %v1172, %v1293
          %v1333 = vsub.f32 %v1173, %v1295
          %v1334 = vsub.f32 %v1174, %v1297
          %v1335 = vsub.f32 %v1175, %v1299
          %v1336 = vsub.f32 %v1176, %v1301
          %v1337 = vsub.f32 %v1177, %v1303
          %v1338 = vsub.f32 %v1178, %v1305
          %v1339 = vsub.f32 %v1179, %v1307
          %v1340 = vmul.f32 %v980, %v1148
          %v1341 = vmul.f32 %v982, %v1149
          %v1342 = vmul.f32 %v985, %v1150
          %v1343 = vmul.f32 %v987, %v1151
          %v1344 = vmul.f32 %v990, %v1152
          %v1345 = vmul.f32 %v992, %v1153
          %v1346 = vmul.f32 %v995, %v1154
          %v1347 = vmul.f32 %v997, %v1155
          %v1348 = vmul.f32 %v1000, %v1156
          %v1349 = vmul.f32 %v1002, %v1157
          %v1350 = vmul.f32 %v1005, %v1158
          %v1351 = vmul.f32 %v1007, %v1159
          %v1352 = vmul.f32 %v1010, %v1160
          %v1353 = vmul.f32 %v1012, %v1161
          %v1354 = vmul.f32 %v1015, %v1162
          %v1355 = vmul.f32 %v1017, %v1163
          %1372 = vrot.lane.b32.xlu0 %v1132, 16
          %v1373 = vpop.permute.xlu0 %1372
          %1374 = vrot.lane.b32.xlu0 %v1133, 16
          %v1375 = vpop.permute.xlu0 %1374
          %1376 = vrot.lane.b32.xlu0 %v1134, 16
          %v1377 = vpop.permute.xlu0 %1376
          %1378 = vrot.lane.b32.xlu0 %v1135, 16
          %v1379 = vpop.permute.xlu0 %1378
          %1380 = vrot.lane.b32.xlu0 %v1136, 16
          %v1381 = vpop.permute.xlu0 %1380
          %1382 = vrot.lane.b32.xlu0 %v1137, 16
          %v1383 = vpop.permute.xlu0 %1382
          %1384 = vrot.lane.b32.xlu0 %v1138, 16
          %v1385 = vpop.permute.xlu0 %1384
          %1386 = vrot.lane.b32.xlu0 %v1139, 16
          %v1387 = vpop.permute.xlu0 %1386
          %1388 = vrot.lane.b32.xlu0 %v1140, 16
          %v1389 = vpop.permute.xlu0 %1388
          %1390 = vrot.lane.b32.xlu0 %v1141, 16
          %v1391 = vpop.permute.xlu0 %1390
          %1392 = vrot.lane.b32.xlu0 %v1142, 16
          %v1393 = vpop.permute.xlu0 %1392
          %1394 = vrot.lane.b32.xlu0 %v1143, 16
          %v1395 = vpop.permute.xlu0 %1394
          %1396 = vrot.lane.b32.xlu0 %v1144, 16
          %v1397 = vpop.permute.xlu0 %1396
          %1398 = vrot.lane.b32.xlu0 %v1145, 16
          %v1399 = vpop.permute.xlu0 %1398
          %1400 = vrot.lane.b32.xlu0 %v1146, 16
          %v1401 = vpop.permute.xlu0 %1400
          %1402 = vrot.lane.b32.xlu0 %v1147, 16
          %v1403 = vpop.permute.xlu0 %1402
          %v1420 = vmul.f32 %v980, %v1373
          %v1421 = vmul.f32 %v982, %v1375
          %v1422 = vmul.f32 %v985, %v1377
          %v1423 = vmul.f32 %v987, %v1379
          %v1424 = vmul.f32 %v990, %v1381
          %v1425 = vmul.f32 %v992, %v1383
          %v1426 = vmul.f32 %v995, %v1385
          %v1427 = vmul.f32 %v997, %v1387
          %v1428 = vmul.f32 %v1000, %v1389
          %v1429 = vmul.f32 %v1002, %v1391
          %v1430 = vmul.f32 %v1005, %v1393
          %v1431 = vmul.f32 %v1007, %v1395
          %v1432 = vmul.f32 %v1010, %v1397
          %v1433 = vmul.f32 %v1012, %v1399
          %v1434 = vmul.f32 %v1015, %v1401
          %v1435 = vmul.f32 %v1017, %v1403
          %1452 = vrot.lane.b32.xlu0 %v1420, 112
          %v1453 = vpop.permute.xlu0 %1452
          %1454 = vrot.lane.b32.xlu0 %v1421, 112
          %v1455 = vpop.permute.xlu0 %1454
          %1456 = vrot.lane.b32.xlu0 %v1422, 112
          %v1457 = vpop.permute.xlu0 %1456
          %1458 = vrot.lane.b32.xlu0 %v1423, 112
          %v1459 = vpop.permute.xlu0 %1458
          %1460 = vrot.lane.b32.xlu0 %v1424, 112
          %v1461 = vpop.permute.xlu0 %1460
          %1462 = vrot.lane.b32.xlu0 %v1425, 112
          %v1463 = vpop.permute.xlu0 %1462
          %1464 = vrot.lane.b32.xlu0 %v1426, 112
          %v1465 = vpop.permute.xlu0 %1464
          %1466 = vrot.lane.b32.xlu0 %v1427, 112
          %v1467 = vpop.permute.xlu0 %1466
          %1468 = vrot.lane.b32.xlu0 %v1428, 112
          %v1469 = vpop.permute.xlu0 %1468
          %1470 = vrot.lane.b32.xlu0 %v1429, 112
          %v1471 = vpop.permute.xlu0 %1470
          %1472 = vrot.lane.b32.xlu0 %v1430, 112
          %v1473 = vpop.permute.xlu0 %1472
          %1474 = vrot.lane.b32.xlu0 %v1431, 112
          %v1475 = vpop.permute.xlu0 %1474
          %1476 = vrot.lane.b32.xlu0 %v1432, 112
          %v1477 = vpop.permute.xlu0 %1476
          %1478 = vrot.lane.b32.xlu0 %v1433, 112
          %v1479 = vpop.permute.xlu0 %1478
          %1480 = vrot.lane.b32.xlu0 %v1434, 112
          %v1481 = vpop.permute.xlu0 %1480
          %1482 = vrot.lane.b32.xlu0 %v1435, 112
          %v1483 = vpop.permute.xlu0 %1482
          %v1500 = vadd.f32 %v1340, %v1453
          %v1501 = vadd.f32 %v1341, %v1455
          %v1502 = vadd.f32 %v1342, %v1457
          %v1503 = vadd.f32 %v1343, %v1459
          %v1504 = vadd.f32 %v1344, %v1461
          %v1505 = vadd.f32 %v1345, %v1463
          %v1506 = vadd.f32 %v1346, %v1465
          %v1507 = vadd.f32 %v1347, %v1467
          %v1508 = vadd.f32 %v1348, %v1469
          %v1509 = vadd.f32 %v1349, %v1471
          %v1510 = vadd.f32 %v1350, %v1473
          %v1511 = vadd.f32 %v1351, %v1475
          %v1512 = vadd.f32 %v1352, %v1477
          %v1513 = vadd.f32 %v1353, %v1479
          %v1514 = vadd.f32 %v1354, %v1481
          %v1515 = vadd.f32 %v1355, %v1483
          %1532 = vrot.lane.b32.xlu0 %v1500, 16
          %v1533 = vpop.permute.xlu0 %1532
          %1534 = vrot.lane.b32.xlu0 %v1501, 16
          %v1535 = vpop.permute.xlu0 %1534
          %1536 = vrot.lane.b32.xlu0 %v1502, 16
          %v1537 = vpop.permute.xlu0 %1536
          %1538 = vrot.lane.b32.xlu0 %v1503, 16
          %v1539 = vpop.permute.xlu0 %1538
          %1540 = vrot.lane.b32.xlu0 %v1504, 16
          %v1541 = vpop.permute.xlu0 %1540
          %1542 = vrot.lane.b32.xlu0 %v1505, 16
          %v1543 = vpop.permute.xlu0 %1542
          %1544 = vrot.lane.b32.xlu0 %v1506, 16
          %v1545 = vpop.permute.xlu0 %1544
          %1546 = vrot.lane.b32.xlu0 %v1507, 16
          %v1547 = vpop.permute.xlu0 %1546
          %1548 = vrot.lane.b32.xlu0 %v1508, 16
          %v1549 = vpop.permute.xlu0 %1548
          %1550 = vrot.lane.b32.xlu0 %v1509, 16
          %v1551 = vpop.permute.xlu0 %1550
          %1552 = vrot.lane.b32.xlu0 %v1510, 16
          %v1553 = vpop.permute.xlu0 %1552
          %1554 = vrot.lane.b32.xlu0 %v1511, 16
          %v1555 = vpop.permute.xlu0 %1554
          %1556 = vrot.lane.b32.xlu0 %v1512, 16
          %v1557 = vpop.permute.xlu0 %1556
          %1558 = vrot.lane.b32.xlu0 %v1513, 16
          %v1559 = vpop.permute.xlu0 %1558
          %1560 = vrot.lane.b32.xlu0 %v1514, 16
          %v1561 = vpop.permute.xlu0 %1560
          %1562 = vrot.lane.b32.xlu0 %v1515, 16
          %v1563 = vpop.permute.xlu0 %1562
          %vm1580 = vcmask 130048
          %v1581 = vsel %vm1580, %v1324, %v1533
          %v1582 = vsel %vm1580, %v1325, %v1535
          %v1583 = vsel %vm1580, %v1326, %v1537
          %v1584 = vsel %vm1580, %v1327, %v1539
          %v1585 = vsel %vm1580, %v1328, %v1541
          %v1586 = vsel %vm1580, %v1329, %v1543
          %v1587 = vsel %vm1580, %v1330, %v1545
          %v1588 = vsel %vm1580, %v1331, %v1547
          %v1589 = vsel %vm1580, %v1332, %v1549
          %v1590 = vsel %vm1580, %v1333, %v1551
          %v1591 = vsel %vm1580, %v1334, %v1553
          %v1592 = vsel %vm1580, %v1335, %v1555
          %v1593 = vsel %vm1580, %v1336, %v1557
          %v1594 = vsel %vm1580, %v1337, %v1559
          %v1595 = vsel %vm1580, %v1338, %v1561
          %v1596 = vsel %vm1580, %v1339, %v1563
          %1597 = vrot.lane.b32.xlu0 %v1132, 32
          %v1598 = vpop.permute.xlu0 %1597
          %1599 = vrot.lane.b32.xlu0 %v1133, 32
          %v1600 = vpop.permute.xlu0 %1599
          %1601 = vrot.lane.b32.xlu0 %v1134, 32
          %v1602 = vpop.permute.xlu0 %1601
          %1603 = vrot.lane.b32.xlu0 %v1135, 32
          %v1604 = vpop.permute.xlu0 %1603
          %1605 = vrot.lane.b32.xlu0 %v1136, 32
          %v1606 = vpop.permute.xlu0 %1605
          %1607 = vrot.lane.b32.xlu0 %v1137, 32
          %v1608 = vpop.permute.xlu0 %1607
          %1609 = vrot.lane.b32.xlu0 %v1138, 32
          %v1610 = vpop.permute.xlu0 %1609
          %1611 = vrot.lane.b32.xlu0 %v1139, 32
          %v1612 = vpop.permute.xlu0 %1611
          %1613 = vrot.lane.b32.xlu0 %v1140, 32
          %v1614 = vpop.permute.xlu0 %1613
          %1615 = vrot.lane.b32.xlu0 %v1141, 32
          %v1616 = vpop.permute.xlu0 %1615
          %1617 = vrot.lane.b32.xlu0 %v1142, 32
          %v1618 = vpop.permute.xlu0 %1617
          %1619 = vrot.lane.b32.xlu0 %v1143, 32
          %v1620 = vpop.permute.xlu0 %1619
          %1621 = vrot.lane.b32.xlu0 %v1144, 32
          %v1622 = vpop.permute.xlu0 %1621
          %1623 = vrot.lane.b32.xlu0 %v1145, 32
          %v1624 = vpop.permute.xlu0 %1623
          %1625 = vrot.lane.b32.xlu0 %v1146, 32
          %v1626 = vpop.permute.xlu0 %1625
          %1627 = vrot.lane.b32.xlu0 %v1147, 32
          %v1628 = vpop.permute.xlu0 %1627
          %v1645 = vmul.f32 %v980, %v1598
          %v1646 = vmul.f32 %v982, %v1600
          %v1647 = vmul.f32 %v985, %v1602
          %v1648 = vmul.f32 %v987, %v1604
          %v1649 = vmul.f32 %v990, %v1606
          %v1650 = vmul.f32 %v992, %v1608
          %v1651 = vmul.f32 %v995, %v1610
          %v1652 = vmul.f32 %v997, %v1612
          %v1653 = vmul.f32 %v1000, %v1614
          %v1654 = vmul.f32 %v1002, %v1616
          %v1655 = vmul.f32 %v1005, %v1618
          %v1656 = vmul.f32 %v1007, %v1620
          %v1657 = vmul.f32 %v1010, %v1622
          %v1658 = vmul.f32 %v1012, %v1624
          %v1659 = vmul.f32 %v1015, %v1626
          %v1660 = vmul.f32 %v1017, %v1628
          %1661 = vrot.lane.b32.xlu0 %v1148, 48
          %v1662 = vpop.permute.xlu0 %1661
          %1663 = vrot.lane.b32.xlu0 %v1149, 48
          %v1664 = vpop.permute.xlu0 %1663
          %1665 = vrot.lane.b32.xlu0 %v1150, 48
          %v1666 = vpop.permute.xlu0 %1665
          %1667 = vrot.lane.b32.xlu0 %v1151, 48
          %v1668 = vpop.permute.xlu0 %1667
          %1669 = vrot.lane.b32.xlu0 %v1152, 48
          %v1670 = vpop.permute.xlu0 %1669
          %1671 = vrot.lane.b32.xlu0 %v1153, 48
          %v1672 = vpop.permute.xlu0 %1671
          %1673 = vrot.lane.b32.xlu0 %v1154, 48
          %v1674 = vpop.permute.xlu0 %1673
          %1675 = vrot.lane.b32.xlu0 %v1155, 48
          %v1676 = vpop.permute.xlu0 %1675
          %1677 = vrot.lane.b32.xlu0 %v1156, 48
          %v1678 = vpop.permute.xlu0 %1677
          %1679 = vrot.lane.b32.xlu0 %v1157, 48
          %v1680 = vpop.permute.xlu0 %1679
          %1681 = vrot.lane.b32.xlu0 %v1158, 48
          %v1682 = vpop.permute.xlu0 %1681
          %1683 = vrot.lane.b32.xlu0 %v1159, 48
          %v1684 = vpop.permute.xlu0 %1683
          %1685 = vrot.lane.b32.xlu0 %v1160, 48
          %v1686 = vpop.permute.xlu0 %1685
          %1687 = vrot.lane.b32.xlu0 %v1161, 48
          %v1688 = vpop.permute.xlu0 %1687
          %1689 = vrot.lane.b32.xlu0 %v1162, 48
          %v1690 = vpop.permute.xlu0 %1689
          %1691 = vrot.lane.b32.xlu0 %v1163, 48
          %v1692 = vpop.permute.xlu0 %1691
          %v1709 = vmul.f32 %v980, %v1662
          %v1710 = vmul.f32 %v982, %v1664
          %v1711 = vmul.f32 %v985, %v1666
          %v1712 = vmul.f32 %v987, %v1668
          %v1713 = vmul.f32 %v990, %v1670
          %v1714 = vmul.f32 %v992, %v1672
          %v1715 = vmul.f32 %v995, %v1674
          %v1716 = vmul.f32 %v997, %v1676
          %v1717 = vmul.f32 %v1000, %v1678
          %v1718 = vmul.f32 %v1002, %v1680
          %v1719 = vmul.f32 %v1005, %v1682
          %v1720 = vmul.f32 %v1007, %v1684
          %v1721 = vmul.f32 %v1010, %v1686
          %v1722 = vmul.f32 %v1012, %v1688
          %v1723 = vmul.f32 %v1015, %v1690
          %v1724 = vmul.f32 %v1017, %v1692
          %1741 = vrot.lane.b32.xlu0 %v1709, 112
          %v1742 = vpop.permute.xlu0 %1741
          %1743 = vrot.lane.b32.xlu0 %v1710, 112
          %v1744 = vpop.permute.xlu0 %1743
          %1745 = vrot.lane.b32.xlu0 %v1711, 112
          %v1746 = vpop.permute.xlu0 %1745
          %1747 = vrot.lane.b32.xlu0 %v1712, 112
          %v1748 = vpop.permute.xlu0 %1747
          %1749 = vrot.lane.b32.xlu0 %v1713, 112
          %v1750 = vpop.permute.xlu0 %1749
          %1751 = vrot.lane.b32.xlu0 %v1714, 112
          %v1752 = vpop.permute.xlu0 %1751
          %1753 = vrot.lane.b32.xlu0 %v1715, 112
          %v1754 = vpop.permute.xlu0 %1753
          %1755 = vrot.lane.b32.xlu0 %v1716, 112
          %v1756 = vpop.permute.xlu0 %1755
          %1757 = vrot.lane.b32.xlu0 %v1717, 112
          %v1758 = vpop.permute.xlu0 %1757
          %1759 = vrot.lane.b32.xlu0 %v1718, 112
          %v1760 = vpop.permute.xlu0 %1759
          %1761 = vrot.lane.b32.xlu0 %v1719, 112
          %v1762 = vpop.permute.xlu0 %1761
          %1763 = vrot.lane.b32.xlu0 %v1720, 112
          %v1764 = vpop.permute.xlu0 %1763
          %1765 = vrot.lane.b32.xlu0 %v1721, 112
          %v1766 = vpop.permute.xlu0 %1765
          %1767 = vrot.lane.b32.xlu0 %v1722, 112
          %v1768 = vpop.permute.xlu0 %1767
          %1769 = vrot.lane.b32.xlu0 %v1723, 112
          %v1770 = vpop.permute.xlu0 %1769
          %1771 = vrot.lane.b32.xlu0 %v1724, 112
          %v1772 = vpop.permute.xlu0 %1771
          %v1789 = vsub.f32 %v1645, %v1742
          %v1790 = vsub.f32 %v1646, %v1744
          %v1791 = vsub.f32 %v1647, %v1746
          %v1792 = vsub.f32 %v1648, %v1748
          %v1793 = vsub.f32 %v1649, %v1750
          %v1794 = vsub.f32 %v1650, %v1752
          %v1795 = vsub.f32 %v1651, %v1754
          %v1796 = vsub.f32 %v1652, %v1756
          %v1797 = vsub.f32 %v1653, %v1758
          %v1798 = vsub.f32 %v1654, %v1760
          %v1799 = vsub.f32 %v1655, %v1762
          %v1800 = vsub.f32 %v1656, %v1764
          %v1801 = vsub.f32 %v1657, %v1766
          %v1802 = vsub.f32 %v1658, %v1768
          %v1803 = vsub.f32 %v1659, %v1770
          %v1804 = vsub.f32 %v1660, %v1772
          %1805 = vrot.lane.b32.xlu0 %v1148, 32
          %v1806 = vpop.permute.xlu0 %1805
          %1807 = vrot.lane.b32.xlu0 %v1149, 32
          %v1808 = vpop.permute.xlu0 %1807
          %1809 = vrot.lane.b32.xlu0 %v1150, 32
          %v1810 = vpop.permute.xlu0 %1809
          %1811 = vrot.lane.b32.xlu0 %v1151, 32
          %v1812 = vpop.permute.xlu0 %1811
          %1813 = vrot.lane.b32.xlu0 %v1152, 32
          %v1814 = vpop.permute.xlu0 %1813
          %1815 = vrot.lane.b32.xlu0 %v1153, 32
          %v1816 = vpop.permute.xlu0 %1815
          %1817 = vrot.lane.b32.xlu0 %v1154, 32
          %v1818 = vpop.permute.xlu0 %1817
          %1819 = vrot.lane.b32.xlu0 %v1155, 32
          %v1820 = vpop.permute.xlu0 %1819
          %1821 = vrot.lane.b32.xlu0 %v1156, 32
          %v1822 = vpop.permute.xlu0 %1821
          %1823 = vrot.lane.b32.xlu0 %v1157, 32
          %v1824 = vpop.permute.xlu0 %1823
          %1825 = vrot.lane.b32.xlu0 %v1158, 32
          %v1826 = vpop.permute.xlu0 %1825
          %1827 = vrot.lane.b32.xlu0 %v1159, 32
          %v1828 = vpop.permute.xlu0 %1827
          %1829 = vrot.lane.b32.xlu0 %v1160, 32
          %v1830 = vpop.permute.xlu0 %1829
          %1831 = vrot.lane.b32.xlu0 %v1161, 32
          %v1832 = vpop.permute.xlu0 %1831
          %1833 = vrot.lane.b32.xlu0 %v1162, 32
          %v1834 = vpop.permute.xlu0 %1833
          %1835 = vrot.lane.b32.xlu0 %v1163, 32
          %v1836 = vpop.permute.xlu0 %1835
          %v1853 = vmul.f32 %v980, %v1806
          %v1854 = vmul.f32 %v982, %v1808
          %v1855 = vmul.f32 %v985, %v1810
          %v1856 = vmul.f32 %v987, %v1812
          %v1857 = vmul.f32 %v990, %v1814
          %v1858 = vmul.f32 %v992, %v1816
          %v1859 = vmul.f32 %v995, %v1818
          %v1860 = vmul.f32 %v997, %v1820
          %v1861 = vmul.f32 %v1000, %v1822
          %v1862 = vmul.f32 %v1002, %v1824
          %v1863 = vmul.f32 %v1005, %v1826
          %v1864 = vmul.f32 %v1007, %v1828
          %v1865 = vmul.f32 %v1010, %v1830
          %v1866 = vmul.f32 %v1012, %v1832
          %v1867 = vmul.f32 %v1015, %v1834
          %v1868 = vmul.f32 %v1017, %v1836
          %1869 = vrot.lane.b32.xlu0 %v1132, 48
          %v1870 = vpop.permute.xlu0 %1869
          %1871 = vrot.lane.b32.xlu0 %v1133, 48
          %v1872 = vpop.permute.xlu0 %1871
          %1873 = vrot.lane.b32.xlu0 %v1134, 48
          %v1874 = vpop.permute.xlu0 %1873
          %1875 = vrot.lane.b32.xlu0 %v1135, 48
          %v1876 = vpop.permute.xlu0 %1875
          %1877 = vrot.lane.b32.xlu0 %v1136, 48
          %v1878 = vpop.permute.xlu0 %1877
          %1879 = vrot.lane.b32.xlu0 %v1137, 48
          %v1880 = vpop.permute.xlu0 %1879
          %1881 = vrot.lane.b32.xlu0 %v1138, 48
          %v1882 = vpop.permute.xlu0 %1881
          %1883 = vrot.lane.b32.xlu0 %v1139, 48
          %v1884 = vpop.permute.xlu0 %1883
          %1885 = vrot.lane.b32.xlu0 %v1140, 48
          %v1886 = vpop.permute.xlu0 %1885
          %1887 = vrot.lane.b32.xlu0 %v1141, 48
          %v1888 = vpop.permute.xlu0 %1887
          %1889 = vrot.lane.b32.xlu0 %v1142, 48
          %v1890 = vpop.permute.xlu0 %1889
          %1891 = vrot.lane.b32.xlu0 %v1143, 48
          %v1892 = vpop.permute.xlu0 %1891
          %1893 = vrot.lane.b32.xlu0 %v1144, 48
          %v1894 = vpop.permute.xlu0 %1893
          %1895 = vrot.lane.b32.xlu0 %v1145, 48
          %v1896 = vpop.permute.xlu0 %1895
          %1897 = vrot.lane.b32.xlu0 %v1146, 48
          %v1898 = vpop.permute.xlu0 %1897
          %1899 = vrot.lane.b32.xlu0 %v1147, 48
          %v1900 = vpop.permute.xlu0 %1899
          %v1917 = vmul.f32 %v980, %v1870
          %v1918 = vmul.f32 %v982, %v1872
          %v1919 = vmul.f32 %v985, %v1874
          %v1920 = vmul.f32 %v987, %v1876
          %v1921 = vmul.f32 %v990, %v1878
          %v1922 = vmul.f32 %v992, %v1880
          %v1923 = vmul.f32 %v995, %v1882
          %v1924 = vmul.f32 %v997, %v1884
          %v1925 = vmul.f32 %v1000, %v1886
          %v1926 = vmul.f32 %v1002, %v1888
          %v1927 = vmul.f32 %v1005, %v1890
          %v1928 = vmul.f32 %v1007, %v1892
          %v1929 = vmul.f32 %v1010, %v1894
          %v1930 = vmul.f32 %v1012, %v1896
          %v1931 = vmul.f32 %v1015, %v1898
          %v1932 = vmul.f32 %v1017, %v1900
          %1949 = vrot.lane.b32.xlu0 %v1917, 112
          %v1950 = vpop.permute.xlu0 %1949
          %1951 = vrot.lane.b32.xlu0 %v1918, 112
          %v1952 = vpop.permute.xlu0 %1951
          %1953 = vrot.lane.b32.xlu0 %v1919, 112
          %v1954 = vpop.permute.xlu0 %1953
          %1955 = vrot.lane.b32.xlu0 %v1920, 112
          %v1956 = vpop.permute.xlu0 %1955
          %1957 = vrot.lane.b32.xlu0 %v1921, 112
          %v1958 = vpop.permute.xlu0 %1957
          %1959 = vrot.lane.b32.xlu0 %v1922, 112
          %v1960 = vpop.permute.xlu0 %1959
          %1961 = vrot.lane.b32.xlu0 %v1923, 112
          %v1962 = vpop.permute.xlu0 %1961
          %1963 = vrot.lane.b32.xlu0 %v1924, 112
          %v1964 = vpop.permute.xlu0 %1963
          %1965 = vrot.lane.b32.xlu0 %v1925, 112
          %v1966 = vpop.permute.xlu0 %1965
          %1967 = vrot.lane.b32.xlu0 %v1926, 112
          %v1968 = vpop.permute.xlu0 %1967
          %1969 = vrot.lane.b32.xlu0 %v1927, 112
          %v1970 = vpop.permute.xlu0 %1969
          %1971 = vrot.lane.b32.xlu0 %v1928, 112
          %v1972 = vpop.permute.xlu0 %1971
          %1973 = vrot.lane.b32.xlu0 %v1929, 112
          %v1974 = vpop.permute.xlu0 %1973
          %1975 = vrot.lane.b32.xlu0 %v1930, 112
          %v1976 = vpop.permute.xlu0 %1975
          %1977 = vrot.lane.b32.xlu0 %v1931, 112
          %v1978 = vpop.permute.xlu0 %1977
          %1979 = vrot.lane.b32.xlu0 %v1932, 112
          %v1980 = vpop.permute.xlu0 %1979
          %v1997 = vadd.f32 %v1853, %v1950
          %v1998 = vadd.f32 %v1854, %v1952
          %v1999 = vadd.f32 %v1855, %v1954
          %v2000 = vadd.f32 %v1856, %v1956
          %v2001 = vadd.f32 %v1857, %v1958
          %v2002 = vadd.f32 %v1858, %v1960
          %v2003 = vadd.f32 %v1859, %v1962
          %v2004 = vadd.f32 %v1860, %v1964
          %v2005 = vadd.f32 %v1861, %v1966
          %v2006 = vadd.f32 %v1862, %v1968
          %v2007 = vadd.f32 %v1863, %v1970
          %v2008 = vadd.f32 %v1864, %v1972
          %v2009 = vadd.f32 %v1865, %v1974
          %v2010 = vadd.f32 %v1866, %v1976
          %v2011 = vadd.f32 %v1867, %v1978
          %v2012 = vadd.f32 %v1868, %v1980
          %2029 = vrot.lane.b32.xlu0 %v1789, 96
          %v2030 = vpop.permute.xlu0 %2029
          %2031 = vrot.lane.b32.xlu0 %v1790, 96
          %v2032 = vpop.permute.xlu0 %2031
          %2033 = vrot.lane.b32.xlu0 %v1791, 96
          %v2034 = vpop.permute.xlu0 %2033
          %2035 = vrot.lane.b32.xlu0 %v1792, 96
          %v2036 = vpop.permute.xlu0 %2035
          %2037 = vrot.lane.b32.xlu0 %v1793, 96
          %v2038 = vpop.permute.xlu0 %2037
          %2039 = vrot.lane.b32.xlu0 %v1794, 96
          %v2040 = vpop.permute.xlu0 %2039
          %2041 = vrot.lane.b32.xlu0 %v1795, 96
          %v2042 = vpop.permute.xlu0 %2041
          %2043 = vrot.lane.b32.xlu0 %v1796, 96
          %v2044 = vpop.permute.xlu0 %2043
          %2045 = vrot.lane.b32.xlu0 %v1797, 96
          %v2046 = vpop.permute.xlu0 %2045
          %2047 = vrot.lane.b32.xlu0 %v1798, 96
          %v2048 = vpop.permute.xlu0 %2047
          %2049 = vrot.lane.b32.xlu0 %v1799, 96
          %v2050 = vpop.permute.xlu0 %2049
          %2051 = vrot.lane.b32.xlu0 %v1800, 96
          %v2052 = vpop.permute.xlu0 %2051
          %2053 = vrot.lane.b32.xlu0 %v1801, 96
          %v2054 = vpop.permute.xlu0 %2053
          %2055 = vrot.lane.b32.xlu0 %v1802, 96
          %v2056 = vpop.permute.xlu0 %2055
          %2057 = vrot.lane.b32.xlu0 %v1803, 96
          %v2058 = vpop.permute.xlu0 %2057
          %2059 = vrot.lane.b32.xlu0 %v1804, 96
          %v2060 = vpop.permute.xlu0 %2059
          %2093 = vrot.lane.b32.xlu0 %v1997, 112
          %v2094 = vpop.permute.xlu0 %2093
          %2095 = vrot.lane.b32.xlu0 %v1998, 112
          %v2096 = vpop.permute.xlu0 %2095
          %2097 = vrot.lane.b32.xlu0 %v1999, 112
          %v2098 = vpop.permute.xlu0 %2097
          %2099 = vrot.lane.b32.xlu0 %v2000, 112
          %v2100 = vpop.permute.xlu0 %2099
          %2101 = vrot.lane.b32.xlu0 %v2001, 112
          %v2102 = vpop.permute.xlu0 %2101
          %2103 = vrot.lane.b32.xlu0 %v2002, 112
          %v2104 = vpop.permute.xlu0 %2103
          %2105 = vrot.lane.b32.xlu0 %v2003, 112
          %v2106 = vpop.permute.xlu0 %2105
          %2107 = vrot.lane.b32.xlu0 %v2004, 112
          %v2108 = vpop.permute.xlu0 %2107
          %2109 = vrot.lane.b32.xlu0 %v2005, 112
          %v2110 = vpop.permute.xlu0 %2109
          %2111 = vrot.lane.b32.xlu0 %v2006, 112
          %v2112 = vpop.permute.xlu0 %2111
          %2113 = vrot.lane.b32.xlu0 %v2007, 112
          %v2114 = vpop.permute.xlu0 %2113
          %2115 = vrot.lane.b32.xlu0 %v2008, 112
          %v2116 = vpop.permute.xlu0 %2115
          %2117 = vrot.lane.b32.xlu0 %v2009, 112
          %v2118 = vpop.permute.xlu0 %2117
          %2119 = vrot.lane.b32.xlu0 %v2010, 112
          %v2120 = vpop.permute.xlu0 %2119
          %2121 = vrot.lane.b32.xlu0 %v2011, 112
          %v2122 = vpop.permute.xlu0 %2121
          %2123 = vrot.lane.b32.xlu0 %v2012, 112
          %v2124 = vpop.permute.xlu0 %2123
          %v2141 = vsel %vm1580, %v2030, %v2094
          %v2142 = vsel %vm1580, %v2032, %v2096
          %v2143 = vsel %vm1580, %v2034, %v2098
          %v2144 = vsel %vm1580, %v2036, %v2100
          %v2145 = vsel %vm1580, %v2038, %v2102
          %v2146 = vsel %vm1580, %v2040, %v2104
          %v2147 = vsel %vm1580, %v2042, %v2106
          %v2148 = vsel %vm1580, %v2044, %v2108
          %v2149 = vsel %vm1580, %v2046, %v2110
          %v2150 = vsel %vm1580, %v2048, %v2112
          %v2151 = vsel %vm1580, %v2050, %v2114
          %v2152 = vsel %vm1580, %v2052, %v2116
          %v2153 = vsel %vm1580, %v2054, %v2118
          %v2154 = vsel %vm1580, %v2056, %v2120
          %v2155 = vsel %vm1580, %v2058, %v2122
          %v2156 = vsel %vm1580, %v2060, %v2124
          %2157 = vrot.lane.b32.xlu0 %v1132, 64
          %v2158 = vpop.permute.xlu0 %2157
          %2159 = vrot.lane.b32.xlu0 %v1133, 64
          %v2160 = vpop.permute.xlu0 %2159
          %2161 = vrot.lane.b32.xlu0 %v1134, 64
          %v2162 = vpop.permute.xlu0 %2161
          %2163 = vrot.lane.b32.xlu0 %v1135, 64
          %v2164 = vpop.permute.xlu0 %2163
          %2165 = vrot.lane.b32.xlu0 %v1136, 64
          %v2166 = vpop.permute.xlu0 %2165
          %2167 = vrot.lane.b32.xlu0 %v1137, 64
          %v2168 = vpop.permute.xlu0 %2167
          %2169 = vrot.lane.b32.xlu0 %v1138, 64
          %v2170 = vpop.permute.xlu0 %2169
          %2171 = vrot.lane.b32.xlu0 %v1139, 64
          %v2172 = vpop.permute.xlu0 %2171
          %2173 = vrot.lane.b32.xlu0 %v1140, 64
          %v2174 = vpop.permute.xlu0 %2173
          %2175 = vrot.lane.b32.xlu0 %v1141, 64
          %v2176 = vpop.permute.xlu0 %2175
          %2177 = vrot.lane.b32.xlu0 %v1142, 64
          %v2178 = vpop.permute.xlu0 %2177
          %2179 = vrot.lane.b32.xlu0 %v1143, 64
          %v2180 = vpop.permute.xlu0 %2179
          %2181 = vrot.lane.b32.xlu0 %v1144, 64
          %v2182 = vpop.permute.xlu0 %2181
          %2183 = vrot.lane.b32.xlu0 %v1145, 64
          %v2184 = vpop.permute.xlu0 %2183
          %2185 = vrot.lane.b32.xlu0 %v1146, 64
          %v2186 = vpop.permute.xlu0 %2185
          %2187 = vrot.lane.b32.xlu0 %v1147, 64
          %v2188 = vpop.permute.xlu0 %2187
          %v2205 = vmul.f32 %v980, %v2158
          %v2206 = vmul.f32 %v982, %v2160
          %v2207 = vmul.f32 %v985, %v2162
          %v2208 = vmul.f32 %v987, %v2164
          %v2209 = vmul.f32 %v990, %v2166
          %v2210 = vmul.f32 %v992, %v2168
          %v2211 = vmul.f32 %v995, %v2170
          %v2212 = vmul.f32 %v997, %v2172
          %v2213 = vmul.f32 %v1000, %v2174
          %v2214 = vmul.f32 %v1002, %v2176
          %v2215 = vmul.f32 %v1005, %v2178
          %v2216 = vmul.f32 %v1007, %v2180
          %v2217 = vmul.f32 %v1010, %v2182
          %v2218 = vmul.f32 %v1012, %v2184
          %v2219 = vmul.f32 %v1015, %v2186
          %v2220 = vmul.f32 %v1017, %v2188
          %2221 = vrot.lane.b32.xlu0 %v1148, 80
          %v2222 = vpop.permute.xlu0 %2221
          %2223 = vrot.lane.b32.xlu0 %v1149, 80
          %v2224 = vpop.permute.xlu0 %2223
          %2225 = vrot.lane.b32.xlu0 %v1150, 80
          %v2226 = vpop.permute.xlu0 %2225
          %2227 = vrot.lane.b32.xlu0 %v1151, 80
          %v2228 = vpop.permute.xlu0 %2227
          %2229 = vrot.lane.b32.xlu0 %v1152, 80
          %v2230 = vpop.permute.xlu0 %2229
          %2231 = vrot.lane.b32.xlu0 %v1153, 80
          %v2232 = vpop.permute.xlu0 %2231
          %2233 = vrot.lane.b32.xlu0 %v1154, 80
          %v2234 = vpop.permute.xlu0 %2233
          %2235 = vrot.lane.b32.xlu0 %v1155, 80
          %v2236 = vpop.permute.xlu0 %2235
          %2237 = vrot.lane.b32.xlu0 %v1156, 80
          %v2238 = vpop.permute.xlu0 %2237
          %2239 = vrot.lane.b32.xlu0 %v1157, 80
          %v2240 = vpop.permute.xlu0 %2239
          %2241 = vrot.lane.b32.xlu0 %v1158, 80
          %v2242 = vpop.permute.xlu0 %2241
          %2243 = vrot.lane.b32.xlu0 %v1159, 80
          %v2244 = vpop.permute.xlu0 %2243
          %2245 = vrot.lane.b32.xlu0 %v1160, 80
          %v2246 = vpop.permute.xlu0 %2245
          %2247 = vrot.lane.b32.xlu0 %v1161, 80
          %v2248 = vpop.permute.xlu0 %2247
          %2249 = vrot.lane.b32.xlu0 %v1162, 80
          %v2250 = vpop.permute.xlu0 %2249
          %2251 = vrot.lane.b32.xlu0 %v1163, 80
          %v2252 = vpop.permute.xlu0 %2251
          %v2269 = vmul.f32 %v980, %v2222
          %v2270 = vmul.f32 %v982, %v2224
          %v2271 = vmul.f32 %v985, %v2226
          %v2272 = vmul.f32 %v987, %v2228
          %v2273 = vmul.f32 %v990, %v2230
          %v2274 = vmul.f32 %v992, %v2232
          %v2275 = vmul.f32 %v995, %v2234
          %v2276 = vmul.f32 %v997, %v2236
          %v2277 = vmul.f32 %v1000, %v2238
          %v2278 = vmul.f32 %v1002, %v2240
          %v2279 = vmul.f32 %v1005, %v2242
          %v2280 = vmul.f32 %v1007, %v2244
          %v2281 = vmul.f32 %v1010, %v2246
          %v2282 = vmul.f32 %v1012, %v2248
          %v2283 = vmul.f32 %v1015, %v2250
          %v2284 = vmul.f32 %v1017, %v2252
          %2301 = vrot.lane.b32.xlu0 %v2269, 112
          %v2302 = vpop.permute.xlu0 %2301
          %2303 = vrot.lane.b32.xlu0 %v2270, 112
          %v2304 = vpop.permute.xlu0 %2303
          %2305 = vrot.lane.b32.xlu0 %v2271, 112
          %v2306 = vpop.permute.xlu0 %2305
          %2307 = vrot.lane.b32.xlu0 %v2272, 112
          %v2308 = vpop.permute.xlu0 %2307
          %2309 = vrot.lane.b32.xlu0 %v2273, 112
          %v2310 = vpop.permute.xlu0 %2309
          %2311 = vrot.lane.b32.xlu0 %v2274, 112
          %v2312 = vpop.permute.xlu0 %2311
          %2313 = vrot.lane.b32.xlu0 %v2275, 112
          %v2314 = vpop.permute.xlu0 %2313
          %2315 = vrot.lane.b32.xlu0 %v2276, 112
          %v2316 = vpop.permute.xlu0 %2315
          %2317 = vrot.lane.b32.xlu0 %v2277, 112
          %v2318 = vpop.permute.xlu0 %2317
          %2319 = vrot.lane.b32.xlu0 %v2278, 112
          %v2320 = vpop.permute.xlu0 %2319
          %2321 = vrot.lane.b32.xlu0 %v2279, 112
          %v2322 = vpop.permute.xlu0 %2321
          %2323 = vrot.lane.b32.xlu0 %v2280, 112
          %v2324 = vpop.permute.xlu0 %2323
          %2325 = vrot.lane.b32.xlu0 %v2281, 112
          %v2326 = vpop.permute.xlu0 %2325
          %2327 = vrot.lane.b32.xlu0 %v2282, 112
          %v2328 = vpop.permute.xlu0 %2327
          %2329 = vrot.lane.b32.xlu0 %v2283, 112
          %v2330 = vpop.permute.xlu0 %2329
          %2331 = vrot.lane.b32.xlu0 %v2284, 112
          %v2332 = vpop.permute.xlu0 %2331
          %v2349 = vsub.f32 %v2205, %v2302
          %v2350 = vsub.f32 %v2206, %v2304
          %v2351 = vsub.f32 %v2207, %v2306
          %v2352 = vsub.f32 %v2208, %v2308
          %v2353 = vsub.f32 %v2209, %v2310
          %v2354 = vsub.f32 %v2210, %v2312
          %v2355 = vsub.f32 %v2211, %v2314
          %v2356 = vsub.f32 %v2212, %v2316
          %v2357 = vsub.f32 %v2213, %v2318
          %v2358 = vsub.f32 %v2214, %v2320
          %v2359 = vsub.f32 %v2215, %v2322
          %v2360 = vsub.f32 %v2216, %v2324
          %v2361 = vsub.f32 %v2217, %v2326
          %v2362 = vsub.f32 %v2218, %v2328
          %v2363 = vsub.f32 %v2219, %v2330
          %v2364 = vsub.f32 %v2220, %v2332
          %2365 = vrot.lane.b32.xlu0 %v1148, 64
          %v2366 = vpop.permute.xlu0 %2365
          %2367 = vrot.lane.b32.xlu0 %v1149, 64
          %v2368 = vpop.permute.xlu0 %2367
          %2369 = vrot.lane.b32.xlu0 %v1150, 64
          %v2370 = vpop.permute.xlu0 %2369
          %2371 = vrot.lane.b32.xlu0 %v1151, 64
          %v2372 = vpop.permute.xlu0 %2371
          %2373 = vrot.lane.b32.xlu0 %v1152, 64
          %v2374 = vpop.permute.xlu0 %2373
          %2375 = vrot.lane.b32.xlu0 %v1153, 64
          %v2376 = vpop.permute.xlu0 %2375
          %2377 = vrot.lane.b32.xlu0 %v1154, 64
          %v2378 = vpop.permute.xlu0 %2377
          %2379 = vrot.lane.b32.xlu0 %v1155, 64
          %v2380 = vpop.permute.xlu0 %2379
          %2381 = vrot.lane.b32.xlu0 %v1156, 64
          %v2382 = vpop.permute.xlu0 %2381
          %2383 = vrot.lane.b32.xlu0 %v1157, 64
          %v2384 = vpop.permute.xlu0 %2383
          %2385 = vrot.lane.b32.xlu0 %v1158, 64
          %v2386 = vpop.permute.xlu0 %2385
          %2387 = vrot.lane.b32.xlu0 %v1159, 64
          %v2388 = vpop.permute.xlu0 %2387
          %2389 = vrot.lane.b32.xlu0 %v1160, 64
          %v2390 = vpop.permute.xlu0 %2389
          %2391 = vrot.lane.b32.xlu0 %v1161, 64
          %v2392 = vpop.permute.xlu0 %2391
          %2393 = vrot.lane.b32.xlu0 %v1162, 64
          %v2394 = vpop.permute.xlu0 %2393
          %2395 = vrot.lane.b32.xlu0 %v1163, 64
          %v2396 = vpop.permute.xlu0 %2395
          %v2413 = vmul.f32 %v980, %v2366
          %v2414 = vmul.f32 %v982, %v2368
          %v2415 = vmul.f32 %v985, %v2370
          %v2416 = vmul.f32 %v987, %v2372
          %v2417 = vmul.f32 %v990, %v2374
          %v2418 = vmul.f32 %v992, %v2376
          %v2419 = vmul.f32 %v995, %v2378
          %v2420 = vmul.f32 %v997, %v2380
          %v2421 = vmul.f32 %v1000, %v2382
          %v2422 = vmul.f32 %v1002, %v2384
          %v2423 = vmul.f32 %v1005, %v2386
          %v2424 = vmul.f32 %v1007, %v2388
          %v2425 = vmul.f32 %v1010, %v2390
          %v2426 = vmul.f32 %v1012, %v2392
          %v2427 = vmul.f32 %v1015, %v2394
          %v2428 = vmul.f32 %v1017, %v2396
          %2429 = vrot.lane.b32.xlu0 %v1132, 80
          %v2430 = vpop.permute.xlu0 %2429
          %2431 = vrot.lane.b32.xlu0 %v1133, 80
          %v2432 = vpop.permute.xlu0 %2431
          %2433 = vrot.lane.b32.xlu0 %v1134, 80
          %v2434 = vpop.permute.xlu0 %2433
          %2435 = vrot.lane.b32.xlu0 %v1135, 80
          %v2436 = vpop.permute.xlu0 %2435
          %2437 = vrot.lane.b32.xlu0 %v1136, 80
          %v2438 = vpop.permute.xlu0 %2437
          %2439 = vrot.lane.b32.xlu0 %v1137, 80
          %v2440 = vpop.permute.xlu0 %2439
          %2441 = vrot.lane.b32.xlu0 %v1138, 80
          %v2442 = vpop.permute.xlu0 %2441
          %2443 = vrot.lane.b32.xlu0 %v1139, 80
          %v2444 = vpop.permute.xlu0 %2443
          %2445 = vrot.lane.b32.xlu0 %v1140, 80
          %v2446 = vpop.permute.xlu0 %2445
          %2447 = vrot.lane.b32.xlu0 %v1141, 80
          %v2448 = vpop.permute.xlu0 %2447
          %2449 = vrot.lane.b32.xlu0 %v1142, 80
          %v2450 = vpop.permute.xlu0 %2449
          %2451 = vrot.lane.b32.xlu0 %v1143, 80
          %v2452 = vpop.permute.xlu0 %2451
          %2453 = vrot.lane.b32.xlu0 %v1144, 80
          %v2454 = vpop.permute.xlu0 %2453
          %2455 = vrot.lane.b32.xlu0 %v1145, 80
          %v2456 = vpop.permute.xlu0 %2455
          %2457 = vrot.lane.b32.xlu0 %v1146, 80
          %v2458 = vpop.permute.xlu0 %2457
          %2459 = vrot.lane.b32.xlu0 %v1147, 80
          %v2460 = vpop.permute.xlu0 %2459
          %v2477 = vmul.f32 %v980, %v2430
          %v2478 = vmul.f32 %v982, %v2432
          %v2479 = vmul.f32 %v985, %v2434
          %v2480 = vmul.f32 %v987, %v2436
          %v2481 = vmul.f32 %v990, %v2438
          %v2482 = vmul.f32 %v992, %v2440
          %v2483 = vmul.f32 %v995, %v2442
          %v2484 = vmul.f32 %v997, %v2444
          %v2485 = vmul.f32 %v1000, %v2446
          %v2486 = vmul.f32 %v1002, %v2448
          %v2487 = vmul.f32 %v1005, %v2450
          %v2488 = vmul.f32 %v1007, %v2452
          %v2489 = vmul.f32 %v1010, %v2454
          %v2490 = vmul.f32 %v1012, %v2456
          %v2491 = vmul.f32 %v1015, %v2458
          %v2492 = vmul.f32 %v1017, %v2460
          %2509 = vrot.lane.b32.xlu0 %v2477, 112
          %v2510 = vpop.permute.xlu0 %2509
          %2511 = vrot.lane.b32.xlu0 %v2478, 112
          %v2512 = vpop.permute.xlu0 %2511
          %2513 = vrot.lane.b32.xlu0 %v2479, 112
          %v2514 = vpop.permute.xlu0 %2513
          %2515 = vrot.lane.b32.xlu0 %v2480, 112
          %v2516 = vpop.permute.xlu0 %2515
          %2517 = vrot.lane.b32.xlu0 %v2481, 112
          %v2518 = vpop.permute.xlu0 %2517
          %2519 = vrot.lane.b32.xlu0 %v2482, 112
          %v2520 = vpop.permute.xlu0 %2519
          %2521 = vrot.lane.b32.xlu0 %v2483, 112
          %v2522 = vpop.permute.xlu0 %2521
          %2523 = vrot.lane.b32.xlu0 %v2484, 112
          %v2524 = vpop.permute.xlu0 %2523
          %2525 = vrot.lane.b32.xlu0 %v2485, 112
          %v2526 = vpop.permute.xlu0 %2525
          %2527 = vrot.lane.b32.xlu0 %v2486, 112
          %v2528 = vpop.permute.xlu0 %2527
          %2529 = vrot.lane.b32.xlu0 %v2487, 112
          %v2530 = vpop.permute.xlu0 %2529
          %2531 = vrot.lane.b32.xlu0 %v2488, 112
          %v2532 = vpop.permute.xlu0 %2531
          %2533 = vrot.lane.b32.xlu0 %v2489, 112
          %v2534 = vpop.permute.xlu0 %2533
          %2535 = vrot.lane.b32.xlu0 %v2490, 112
          %v2536 = vpop.permute.xlu0 %2535
          %2537 = vrot.lane.b32.xlu0 %v2491, 112
          %v2538 = vpop.permute.xlu0 %2537
          %2539 = vrot.lane.b32.xlu0 %v2492, 112
          %v2540 = vpop.permute.xlu0 %2539
          %v2557 = vadd.f32 %v2413, %v2510
          %v2558 = vadd.f32 %v2414, %v2512
          %v2559 = vadd.f32 %v2415, %v2514
          %v2560 = vadd.f32 %v2416, %v2516
          %v2561 = vadd.f32 %v2417, %v2518
          %v2562 = vadd.f32 %v2418, %v2520
          %v2563 = vadd.f32 %v2419, %v2522
          %v2564 = vadd.f32 %v2420, %v2524
          %v2565 = vadd.f32 %v2421, %v2526
          %v2566 = vadd.f32 %v2422, %v2528
          %v2567 = vadd.f32 %v2423, %v2530
          %v2568 = vadd.f32 %v2424, %v2532
          %v2569 = vadd.f32 %v2425, %v2534
          %v2570 = vadd.f32 %v2426, %v2536
          %v2571 = vadd.f32 %v2427, %v2538
          %v2572 = vadd.f32 %v2428, %v2540
          %2589 = vrot.lane.b32.xlu0 %v2349, 64
          %v2590 = vpop.permute.xlu0 %2589
          %2591 = vrot.lane.b32.xlu0 %v2350, 64
          %v2592 = vpop.permute.xlu0 %2591
          %2593 = vrot.lane.b32.xlu0 %v2351, 64
          %v2594 = vpop.permute.xlu0 %2593
          %2595 = vrot.lane.b32.xlu0 %v2352, 64
          %v2596 = vpop.permute.xlu0 %2595
          %2597 = vrot.lane.b32.xlu0 %v2353, 64
          %v2598 = vpop.permute.xlu0 %2597
          %2599 = vrot.lane.b32.xlu0 %v2354, 64
          %v2600 = vpop.permute.xlu0 %2599
          %2601 = vrot.lane.b32.xlu0 %v2355, 64
          %v2602 = vpop.permute.xlu0 %2601
          %2603 = vrot.lane.b32.xlu0 %v2356, 64
          %v2604 = vpop.permute.xlu0 %2603
          %2605 = vrot.lane.b32.xlu0 %v2357, 64
          %v2606 = vpop.permute.xlu0 %2605
          %2607 = vrot.lane.b32.xlu0 %v2358, 64
          %v2608 = vpop.permute.xlu0 %2607
          %2609 = vrot.lane.b32.xlu0 %v2359, 64
          %v2610 = vpop.permute.xlu0 %2609
          %2611 = vrot.lane.b32.xlu0 %v2360, 64
          %v2612 = vpop.permute.xlu0 %2611
          %2613 = vrot.lane.b32.xlu0 %v2361, 64
          %v2614 = vpop.permute.xlu0 %2613
          %2615 = vrot.lane.b32.xlu0 %v2362, 64
          %v2616 = vpop.permute.xlu0 %2615
          %2617 = vrot.lane.b32.xlu0 %v2363, 64
          %v2618 = vpop.permute.xlu0 %2617
          %2619 = vrot.lane.b32.xlu0 %v2364, 64
          %v2620 = vpop.permute.xlu0 %2619
          %2653 = vrot.lane.b32.xlu0 %v2557, 80
          %v2654 = vpop.permute.xlu0 %2653
          %2655 = vrot.lane.b32.xlu0 %v2558, 80
          %v2656 = vpop.permute.xlu0 %2655
          %2657 = vrot.lane.b32.xlu0 %v2559, 80
          %v2658 = vpop.permute.xlu0 %2657
          %2659 = vrot.lane.b32.xlu0 %v2560, 80
          %v2660 = vpop.permute.xlu0 %2659
          %2661 = vrot.lane.b32.xlu0 %v2561, 80
          %v2662 = vpop.permute.xlu0 %2661
          %2663 = vrot.lane.b32.xlu0 %v2562, 80
          %v2664 = vpop.permute.xlu0 %2663
          %2665 = vrot.lane.b32.xlu0 %v2563, 80
          %v2666 = vpop.permute.xlu0 %2665
          %2667 = vrot.lane.b32.xlu0 %v2564, 80
          %v2668 = vpop.permute.xlu0 %2667
          %2669 = vrot.lane.b32.xlu0 %v2565, 80
          %v2670 = vpop.permute.xlu0 %2669
          %2671 = vrot.lane.b32.xlu0 %v2566, 80
          %v2672 = vpop.permute.xlu0 %2671
          %2673 = vrot.lane.b32.xlu0 %v2567, 80
          %v2674 = vpop.permute.xlu0 %2673
          %2675 = vrot.lane.b32.xlu0 %v2568, 80
          %v2676 = vpop.permute.xlu0 %2675
          %2677 = vrot.lane.b32.xlu0 %v2569, 80
          %v2678 = vpop.permute.xlu0 %2677
          %2679 = vrot.lane.b32.xlu0 %v2570, 80
          %v2680 = vpop.permute.xlu0 %2679
          %2681 = vrot.lane.b32.xlu0 %v2571, 80
          %v2682 = vpop.permute.xlu0 %2681
          %2683 = vrot.lane.b32.xlu0 %v2572, 80
          %v2684 = vpop.permute.xlu0 %2683
          %v2701 = vsel %vm1580, %v2590, %v2654
          %v2702 = vsel %vm1580, %v2592, %v2656
          %v2703 = vsel %vm1580, %v2594, %v2658
          %v2704 = vsel %vm1580, %v2596, %v2660
          %v2705 = vsel %vm1580, %v2598, %v2662
          %v2706 = vsel %vm1580, %v2600, %v2664
          %v2707 = vsel %vm1580, %v2602, %v2666
          %v2708 = vsel %vm1580, %v2604, %v2668
          %v2709 = vsel %vm1580, %v2606, %v2670
          %v2710 = vsel %vm1580, %v2608, %v2672
          %v2711 = vsel %vm1580, %v2610, %v2674
          %v2712 = vsel %vm1580, %v2612, %v2676
          %v2713 = vsel %vm1580, %v2614, %v2678
          %v2714 = vsel %vm1580, %v2616, %v2680
          %v2715 = vsel %vm1580, %v2618, %v2682
          %v2716 = vsel %vm1580, %v2620, %v2684
          %2717 = vrot.lane.b32.xlu0 %v1132, 96
          %v2718 = vpop.permute.xlu0 %2717
          %2719 = vrot.lane.b32.xlu0 %v1133, 96
          %v2720 = vpop.permute.xlu0 %2719
          %2721 = vrot.lane.b32.xlu0 %v1134, 96
          %v2722 = vpop.permute.xlu0 %2721
          %2723 = vrot.lane.b32.xlu0 %v1135, 96
          %v2724 = vpop.permute.xlu0 %2723
          %2725 = vrot.lane.b32.xlu0 %v1136, 96
          %v2726 = vpop.permute.xlu0 %2725
          %2727 = vrot.lane.b32.xlu0 %v1137, 96
          %v2728 = vpop.permute.xlu0 %2727
          %2729 = vrot.lane.b32.xlu0 %v1138, 96
          %v2730 = vpop.permute.xlu0 %2729
          %2731 = vrot.lane.b32.xlu0 %v1139, 96
          %v2732 = vpop.permute.xlu0 %2731
          %2733 = vrot.lane.b32.xlu0 %v1140, 96
          %v2734 = vpop.permute.xlu0 %2733
          %2735 = vrot.lane.b32.xlu0 %v1141, 96
          %v2736 = vpop.permute.xlu0 %2735
          %2737 = vrot.lane.b32.xlu0 %v1142, 96
          %v2738 = vpop.permute.xlu0 %2737
          %2739 = vrot.lane.b32.xlu0 %v1143, 96
          %v2740 = vpop.permute.xlu0 %2739
          %2741 = vrot.lane.b32.xlu0 %v1144, 96
          %v2742 = vpop.permute.xlu0 %2741
          %2743 = vrot.lane.b32.xlu0 %v1145, 96
          %v2744 = vpop.permute.xlu0 %2743
          %2745 = vrot.lane.b32.xlu0 %v1146, 96
          %v2746 = vpop.permute.xlu0 %2745
          %2747 = vrot.lane.b32.xlu0 %v1147, 96
          %v2748 = vpop.permute.xlu0 %2747
          %v2765 = vmul.f32 %v980, %v2718
          %v2766 = vmul.f32 %v982, %v2720
          %v2767 = vmul.f32 %v985, %v2722
          %v2768 = vmul.f32 %v987, %v2724
          %v2769 = vmul.f32 %v990, %v2726
          %v2770 = vmul.f32 %v992, %v2728
          %v2771 = vmul.f32 %v995, %v2730
          %v2772 = vmul.f32 %v997, %v2732
          %v2773 = vmul.f32 %v1000, %v2734
          %v2774 = vmul.f32 %v1002, %v2736
          %v2775 = vmul.f32 %v1005, %v2738
          %v2776 = vmul.f32 %v1007, %v2740
          %v2777 = vmul.f32 %v1010, %v2742
          %v2778 = vmul.f32 %v1012, %v2744
          %v2779 = vmul.f32 %v1015, %v2746
          %v2780 = vmul.f32 %v1017, %v2748
          %2781 = vrot.lane.b32.xlu0 %v1148, 112
          %v2782 = vpop.permute.xlu0 %2781
          %2783 = vrot.lane.b32.xlu0 %v1149, 112
          %v2784 = vpop.permute.xlu0 %2783
          %2785 = vrot.lane.b32.xlu0 %v1150, 112
          %v2786 = vpop.permute.xlu0 %2785
          %2787 = vrot.lane.b32.xlu0 %v1151, 112
          %v2788 = vpop.permute.xlu0 %2787
          %2789 = vrot.lane.b32.xlu0 %v1152, 112
          %v2790 = vpop.permute.xlu0 %2789
          %2791 = vrot.lane.b32.xlu0 %v1153, 112
          %v2792 = vpop.permute.xlu0 %2791
          %2793 = vrot.lane.b32.xlu0 %v1154, 112
          %v2794 = vpop.permute.xlu0 %2793
          %2795 = vrot.lane.b32.xlu0 %v1155, 112
          %v2796 = vpop.permute.xlu0 %2795
          %2797 = vrot.lane.b32.xlu0 %v1156, 112
          %v2798 = vpop.permute.xlu0 %2797
          %2799 = vrot.lane.b32.xlu0 %v1157, 112
          %v2800 = vpop.permute.xlu0 %2799
          %2801 = vrot.lane.b32.xlu0 %v1158, 112
          %v2802 = vpop.permute.xlu0 %2801
          %2803 = vrot.lane.b32.xlu0 %v1159, 112
          %v2804 = vpop.permute.xlu0 %2803
          %2805 = vrot.lane.b32.xlu0 %v1160, 112
          %v2806 = vpop.permute.xlu0 %2805
          %2807 = vrot.lane.b32.xlu0 %v1161, 112
          %v2808 = vpop.permute.xlu0 %2807
          %2809 = vrot.lane.b32.xlu0 %v1162, 112
          %v2810 = vpop.permute.xlu0 %2809
          %2811 = vrot.lane.b32.xlu0 %v1163, 112
          %v2812 = vpop.permute.xlu0 %2811
          %v2829 = vmul.f32 %v980, %v2782
          %v2830 = vmul.f32 %v982, %v2784
          %v2831 = vmul.f32 %v985, %v2786
          %v2832 = vmul.f32 %v987, %v2788
          %v2833 = vmul.f32 %v990, %v2790
          %v2834 = vmul.f32 %v992, %v2792
          %v2835 = vmul.f32 %v995, %v2794
          %v2836 = vmul.f32 %v997, %v2796
          %v2837 = vmul.f32 %v1000, %v2798
          %v2838 = vmul.f32 %v1002, %v2800
          %v2839 = vmul.f32 %v1005, %v2802
          %v2840 = vmul.f32 %v1007, %v2804
          %v2841 = vmul.f32 %v1010, %v2806
          %v2842 = vmul.f32 %v1012, %v2808
          %v2843 = vmul.f32 %v1015, %v2810
          %v2844 = vmul.f32 %v1017, %v2812
          %2861 = vrot.lane.b32.xlu0 %v2829, 112
          %v2862 = vpop.permute.xlu0 %2861
          %2863 = vrot.lane.b32.xlu0 %v2830, 112
          %v2864 = vpop.permute.xlu0 %2863
          %2865 = vrot.lane.b32.xlu0 %v2831, 112
          %v2866 = vpop.permute.xlu0 %2865
          %2867 = vrot.lane.b32.xlu0 %v2832, 112
          %v2868 = vpop.permute.xlu0 %2867
          %2869 = vrot.lane.b32.xlu0 %v2833, 112
          %v2870 = vpop.permute.xlu0 %2869
          %2871 = vrot.lane.b32.xlu0 %v2834, 112
          %v2872 = vpop.permute.xlu0 %2871
          %2873 = vrot.lane.b32.xlu0 %v2835, 112
          %v2874 = vpop.permute.xlu0 %2873
          %2875 = vrot.lane.b32.xlu0 %v2836, 112
          %v2876 = vpop.permute.xlu0 %2875
          %2877 = vrot.lane.b32.xlu0 %v2837, 112
          %v2878 = vpop.permute.xlu0 %2877
          %2879 = vrot.lane.b32.xlu0 %v2838, 112
          %v2880 = vpop.permute.xlu0 %2879
          %2881 = vrot.lane.b32.xlu0 %v2839, 112
          %v2882 = vpop.permute.xlu0 %2881
          %2883 = vrot.lane.b32.xlu0 %v2840, 112
          %v2884 = vpop.permute.xlu0 %2883
          %2885 = vrot.lane.b32.xlu0 %v2841, 112
          %v2886 = vpop.permute.xlu0 %2885
          %2887 = vrot.lane.b32.xlu0 %v2842, 112
          %v2888 = vpop.permute.xlu0 %2887
          %2889 = vrot.lane.b32.xlu0 %v2843, 112
          %v2890 = vpop.permute.xlu0 %2889
          %2891 = vrot.lane.b32.xlu0 %v2844, 112
          %v2892 = vpop.permute.xlu0 %2891
          %v2909 = vsub.f32 %v2765, %v2862
          %v2910 = vsub.f32 %v2766, %v2864
          %v2911 = vsub.f32 %v2767, %v2866
          %v2912 = vsub.f32 %v2768, %v2868
          %v2913 = vsub.f32 %v2769, %v2870
          %v2914 = vsub.f32 %v2770, %v2872
          %v2915 = vsub.f32 %v2771, %v2874
          %v2916 = vsub.f32 %v2772, %v2876
          %v2917 = vsub.f32 %v2773, %v2878
          %v2918 = vsub.f32 %v2774, %v2880
          %v2919 = vsub.f32 %v2775, %v2882
          %v2920 = vsub.f32 %v2776, %v2884
          %v2921 = vsub.f32 %v2777, %v2886
          %v2922 = vsub.f32 %v2778, %v2888
          %v2923 = vsub.f32 %v2779, %v2890
          %v2924 = vsub.f32 %v2780, %v2892
          %2925 = vrot.lane.b32.xlu0 %v1148, 96
          %v2926 = vpop.permute.xlu0 %2925
          %2927 = vrot.lane.b32.xlu0 %v1149, 96
          %v2928 = vpop.permute.xlu0 %2927
          %2929 = vrot.lane.b32.xlu0 %v1150, 96
          %v2930 = vpop.permute.xlu0 %2929
          %2931 = vrot.lane.b32.xlu0 %v1151, 96
          %v2932 = vpop.permute.xlu0 %2931
          %2933 = vrot.lane.b32.xlu0 %v1152, 96
          %v2934 = vpop.permute.xlu0 %2933
          %2935 = vrot.lane.b32.xlu0 %v1153, 96
          %v2936 = vpop.permute.xlu0 %2935
          %2937 = vrot.lane.b32.xlu0 %v1154, 96
          %v2938 = vpop.permute.xlu0 %2937
          %2939 = vrot.lane.b32.xlu0 %v1155, 96
          %v2940 = vpop.permute.xlu0 %2939
          %2941 = vrot.lane.b32.xlu0 %v1156, 96
          %v2942 = vpop.permute.xlu0 %2941
          %2943 = vrot.lane.b32.xlu0 %v1157, 96
          %v2944 = vpop.permute.xlu0 %2943
          %2945 = vrot.lane.b32.xlu0 %v1158, 96
          %v2946 = vpop.permute.xlu0 %2945
          %2947 = vrot.lane.b32.xlu0 %v1159, 96
          %v2948 = vpop.permute.xlu0 %2947
          %2949 = vrot.lane.b32.xlu0 %v1160, 96
          %v2950 = vpop.permute.xlu0 %2949
          %2951 = vrot.lane.b32.xlu0 %v1161, 96
          %v2952 = vpop.permute.xlu0 %2951
          %2953 = vrot.lane.b32.xlu0 %v1162, 96
          %v2954 = vpop.permute.xlu0 %2953
          %2955 = vrot.lane.b32.xlu0 %v1163, 96
          %v2956 = vpop.permute.xlu0 %2955
          %v2973 = vmul.f32 %v980, %v2926
          %v2974 = vmul.f32 %v982, %v2928
          %v2975 = vmul.f32 %v985, %v2930
          %v2976 = vmul.f32 %v987, %v2932
          %v2977 = vmul.f32 %v990, %v2934
          %v2978 = vmul.f32 %v992, %v2936
          %v2979 = vmul.f32 %v995, %v2938
          %v2980 = vmul.f32 %v997, %v2940
          %v2981 = vmul.f32 %v1000, %v2942
          %v2982 = vmul.f32 %v1002, %v2944
          %v2983 = vmul.f32 %v1005, %v2946
          %v2984 = vmul.f32 %v1007, %v2948
          %v2985 = vmul.f32 %v1010, %v2950
          %v2986 = vmul.f32 %v1012, %v2952
          %v2987 = vmul.f32 %v1015, %v2954
          %v2988 = vmul.f32 %v1017, %v2956
          %2989 = vrot.lane.b32.xlu0 %v1132, 112
          %v2990 = vpop.permute.xlu0 %2989
          %2991 = vrot.lane.b32.xlu0 %v1133, 112
          %v2992 = vpop.permute.xlu0 %2991
          %2993 = vrot.lane.b32.xlu0 %v1134, 112
          %v2994 = vpop.permute.xlu0 %2993
          %2995 = vrot.lane.b32.xlu0 %v1135, 112
          %v2996 = vpop.permute.xlu0 %2995
          %2997 = vrot.lane.b32.xlu0 %v1136, 112
          %v2998 = vpop.permute.xlu0 %2997
          %2999 = vrot.lane.b32.xlu0 %v1137, 112
          %v3000 = vpop.permute.xlu0 %2999
          %3001 = vrot.lane.b32.xlu0 %v1138, 112
          %v3002 = vpop.permute.xlu0 %3001
          %3003 = vrot.lane.b32.xlu0 %v1139, 112
          %v3004 = vpop.permute.xlu0 %3003
          %3005 = vrot.lane.b32.xlu0 %v1140, 112
          %v3006 = vpop.permute.xlu0 %3005
          %3007 = vrot.lane.b32.xlu0 %v1141, 112
          %v3008 = vpop.permute.xlu0 %3007
          %3009 = vrot.lane.b32.xlu0 %v1142, 112
          %v3010 = vpop.permute.xlu0 %3009
          %3011 = vrot.lane.b32.xlu0 %v1143, 112
          %v3012 = vpop.permute.xlu0 %3011
          %3013 = vrot.lane.b32.xlu0 %v1144, 112
          %v3014 = vpop.permute.xlu0 %3013
          %3015 = vrot.lane.b32.xlu0 %v1145, 112
          %v3016 = vpop.permute.xlu0 %3015
          %3017 = vrot.lane.b32.xlu0 %v1146, 112
          %v3018 = vpop.permute.xlu0 %3017
          %3019 = vrot.lane.b32.xlu0 %v1147, 112
          %v3020 = vpop.permute.xlu0 %3019
          %v3037 = vmul.f32 %v980, %v2990
          %v3038 = vmul.f32 %v982, %v2992
          %v3039 = vmul.f32 %v985, %v2994
          %v3040 = vmul.f32 %v987, %v2996
          %v3041 = vmul.f32 %v990, %v2998
          %v3042 = vmul.f32 %v992, %v3000
          %v3043 = vmul.f32 %v995, %v3002
          %v3044 = vmul.f32 %v997, %v3004
          %v3045 = vmul.f32 %v1000, %v3006
          %v3046 = vmul.f32 %v1002, %v3008
          %v3047 = vmul.f32 %v1005, %v3010
          %v3048 = vmul.f32 %v1007, %v3012
          %v3049 = vmul.f32 %v1010, %v3014
          %v3050 = vmul.f32 %v1012, %v3016
          %v3051 = vmul.f32 %v1015, %v3018
          %v3052 = vmul.f32 %v1017, %v3020
          %3069 = vrot.lane.b32.xlu0 %v3037, 112
          %v3070 = vpop.permute.xlu0 %3069
          %3071 = vrot.lane.b32.xlu0 %v3038, 112
          %v3072 = vpop.permute.xlu0 %3071
          %3073 = vrot.lane.b32.xlu0 %v3039, 112
          %v3074 = vpop.permute.xlu0 %3073
          %3075 = vrot.lane.b32.xlu0 %v3040, 112
          %v3076 = vpop.permute.xlu0 %3075
          %3077 = vrot.lane.b32.xlu0 %v3041, 112
          %v3078 = vpop.permute.xlu0 %3077
          %3079 = vrot.lane.b32.xlu0 %v3042, 112
          %v3080 = vpop.permute.xlu0 %3079
          %3081 = vrot.lane.b32.xlu0 %v3043, 112
          %v3082 = vpop.permute.xlu0 %3081
          %3083 = vrot.lane.b32.xlu0 %v3044, 112
          %v3084 = vpop.permute.xlu0 %3083
          %3085 = vrot.lane.b32.xlu0 %v3045, 112
          %v3086 = vpop.permute.xlu0 %3085
          %3087 = vrot.lane.b32.xlu0 %v3046, 112
          %v3088 = vpop.permute.xlu0 %3087
          %3089 = vrot.lane.b32.xlu0 %v3047, 112
          %v3090 = vpop.permute.xlu0 %3089
          %3091 = vrot.lane.b32.xlu0 %v3048, 112
          %v3092 = vpop.permute.xlu0 %3091
          %3093 = vrot.lane.b32.xlu0 %v3049, 112
          %v3094 = vpop.permute.xlu0 %3093
          %3095 = vrot.lane.b32.xlu0 %v3050, 112
          %v3096 = vpop.permute.xlu0 %3095
          %3097 = vrot.lane.b32.xlu0 %v3051, 112
          %v3098 = vpop.permute.xlu0 %3097
          %3099 = vrot.lane.b32.xlu0 %v3052, 112
          %v3100 = vpop.permute.xlu0 %3099
          %v3117 = vadd.f32 %v2973, %v3070
          %v3118 = vadd.f32 %v2974, %v3072
          %v3119 = vadd.f32 %v2975, %v3074
          %v3120 = vadd.f32 %v2976, %v3076
          %v3121 = vadd.f32 %v2977, %v3078
          %v3122 = vadd.f32 %v2978, %v3080
          %v3123 = vadd.f32 %v2979, %v3082
          %v3124 = vadd.f32 %v2980, %v3084
          %v3125 = vadd.f32 %v2981, %v3086
          %v3126 = vadd.f32 %v2982, %v3088
          %v3127 = vadd.f32 %v2983, %v3090
          %v3128 = vadd.f32 %v2984, %v3092
          %v3129 = vadd.f32 %v2985, %v3094
          %v3130 = vadd.f32 %v2986, %v3096
          %v3131 = vadd.f32 %v2987, %v3098
          %v3132 = vadd.f32 %v2988, %v3100
          %3149 = vrot.lane.b32.xlu0 %v2909, 32
          %v3150 = vpop.permute.xlu0 %3149
          %3151 = vrot.lane.b32.xlu0 %v2910, 32
          %v3152 = vpop.permute.xlu0 %3151
          %3153 = vrot.lane.b32.xlu0 %v2911, 32
          %v3154 = vpop.permute.xlu0 %3153
          %3155 = vrot.lane.b32.xlu0 %v2912, 32
          %v3156 = vpop.permute.xlu0 %3155
          %3157 = vrot.lane.b32.xlu0 %v2913, 32
          %v3158 = vpop.permute.xlu0 %3157
          %3159 = vrot.lane.b32.xlu0 %v2914, 32
          %v3160 = vpop.permute.xlu0 %3159
          %3161 = vrot.lane.b32.xlu0 %v2915, 32
          %v3162 = vpop.permute.xlu0 %3161
          %3163 = vrot.lane.b32.xlu0 %v2916, 32
          %v3164 = vpop.permute.xlu0 %3163
          %3165 = vrot.lane.b32.xlu0 %v2917, 32
          %v3166 = vpop.permute.xlu0 %3165
          %3167 = vrot.lane.b32.xlu0 %v2918, 32
          %v3168 = vpop.permute.xlu0 %3167
          %3169 = vrot.lane.b32.xlu0 %v2919, 32
          %v3170 = vpop.permute.xlu0 %3169
          %3171 = vrot.lane.b32.xlu0 %v2920, 32
          %v3172 = vpop.permute.xlu0 %3171
          %3173 = vrot.lane.b32.xlu0 %v2921, 32
          %v3174 = vpop.permute.xlu0 %3173
          %3175 = vrot.lane.b32.xlu0 %v2922, 32
          %v3176 = vpop.permute.xlu0 %3175
          %3177 = vrot.lane.b32.xlu0 %v2923, 32
          %v3178 = vpop.permute.xlu0 %3177
          %3179 = vrot.lane.b32.xlu0 %v2924, 32
          %v3180 = vpop.permute.xlu0 %3179
          %3213 = vrot.lane.b32.xlu0 %v3117, 48
          %v3214 = vpop.permute.xlu0 %3213
          %3215 = vrot.lane.b32.xlu0 %v3118, 48
          %v3216 = vpop.permute.xlu0 %3215
          %3217 = vrot.lane.b32.xlu0 %v3119, 48
          %v3218 = vpop.permute.xlu0 %3217
          %3219 = vrot.lane.b32.xlu0 %v3120, 48
          %v3220 = vpop.permute.xlu0 %3219
          %3221 = vrot.lane.b32.xlu0 %v3121, 48
          %v3222 = vpop.permute.xlu0 %3221
          %3223 = vrot.lane.b32.xlu0 %v3122, 48
          %v3224 = vpop.permute.xlu0 %3223
          %3225 = vrot.lane.b32.xlu0 %v3123, 48
          %v3226 = vpop.permute.xlu0 %3225
          %3227 = vrot.lane.b32.xlu0 %v3124, 48
          %v3228 = vpop.permute.xlu0 %3227
          %3229 = vrot.lane.b32.xlu0 %v3125, 48
          %v3230 = vpop.permute.xlu0 %3229
          %3231 = vrot.lane.b32.xlu0 %v3126, 48
          %v3232 = vpop.permute.xlu0 %3231
          %3233 = vrot.lane.b32.xlu0 %v3127, 48
          %v3234 = vpop.permute.xlu0 %3233
          %3235 = vrot.lane.b32.xlu0 %v3128, 48
          %v3236 = vpop.permute.xlu0 %3235
          %3237 = vrot.lane.b32.xlu0 %v3129, 48
          %v3238 = vpop.permute.xlu0 %3237
          %3239 = vrot.lane.b32.xlu0 %v3130, 48
          %v3240 = vpop.permute.xlu0 %3239
          %3241 = vrot.lane.b32.xlu0 %v3131, 48
          %v3242 = vpop.permute.xlu0 %3241
          %3243 = vrot.lane.b32.xlu0 %v3132, 48
          %v3244 = vpop.permute.xlu0 %3243
          %v3261 = vsel %vm1580, %v3150, %v3214
          %v3262 = vsel %vm1580, %v3152, %v3216
          %v3263 = vsel %vm1580, %v3154, %v3218
          %v3264 = vsel %vm1580, %v3156, %v3220
          %v3265 = vsel %vm1580, %v3158, %v3222
          %v3266 = vsel %vm1580, %v3160, %v3224
          %v3267 = vsel %vm1580, %v3162, %v3226
          %v3268 = vsel %vm1580, %v3164, %v3228
          %v3269 = vsel %vm1580, %v3166, %v3230
          %v3270 = vsel %vm1580, %v3168, %v3232
          %v3271 = vsel %vm1580, %v3170, %v3234
          %v3272 = vsel %vm1580, %v3172, %v3236
          %v3273 = vsel %vm1580, %v3174, %v3238
          %v3274 = vsel %vm1580, %v3176, %v3240
          %v3275 = vsel %vm1580, %v3178, %v3242
          %v3276 = vsel %vm1580, %v3180, %v3244
          %v3277 = vpack.c.bf16 %v1581, %v1581
          %v3278 = vpack.c.bf16 %v1582, %v1582
          %v3279 = vpack.c.bf16 %v1583, %v1583
          %v3280 = vpack.c.bf16 %v1584, %v1584
          %v3281 = vpack.c.bf16 %v1585, %v1585
          %v3282 = vpack.c.bf16 %v1586, %v1586
          %v3283 = vpack.c.bf16 %v1587, %v1587
          %v3284 = vpack.c.bf16 %v1588, %v1588
          %v3285 = vpack.c.bf16 %v1589, %v1589
          %v3286 = vpack.c.bf16 %v1590, %v1590
          %v3287 = vpack.c.bf16 %v1591, %v1591
          %v3288 = vpack.c.bf16 %v1592, %v1592
          %v3289 = vpack.c.bf16 %v1593, %v1593
          %v3290 = vpack.c.bf16 %v1594, %v1594
          %v3291 = vpack.c.bf16 %v1595, %v1595
          %v3292 = vpack.c.bf16 %v1596, %v1596
          %v3293 = vpack.c.bf16 %v2141, %v2141
          %v3294 = vpack.c.bf16 %v2142, %v2142
          %v3295 = vpack.c.bf16 %v2143, %v2143
          %v3296 = vpack.c.bf16 %v2144, %v2144
          %v3297 = vpack.c.bf16 %v2145, %v2145
          %v3298 = vpack.c.bf16 %v2146, %v2146
          %v3299 = vpack.c.bf16 %v2147, %v2147
          %v3300 = vpack.c.bf16 %v2148, %v2148
          %v3301 = vpack.c.bf16 %v2149, %v2149
          %v3302 = vpack.c.bf16 %v2150, %v2150
          %v3303 = vpack.c.bf16 %v2151, %v2151
          %v3304 = vpack.c.bf16 %v2152, %v2152
          %v3305 = vpack.c.bf16 %v2153, %v2153
          %v3306 = vpack.c.bf16 %v2154, %v2154
          %v3307 = vpack.c.bf16 %v2155, %v2155
          %v3308 = vpack.c.bf16 %v2156, %v2156
          %v3309 = vpack.c.bf16 %v2701, %v2701
          %v3310 = vpack.c.bf16 %v2702, %v2702
          %v3311 = vpack.c.bf16 %v2703, %v2703
          %v3312 = vpack.c.bf16 %v2704, %v2704
          %v3313 = vpack.c.bf16 %v2705, %v2705
          %v3314 = vpack.c.bf16 %v2706, %v2706
          %v3315 = vpack.c.bf16 %v2707, %v2707
          %v3316 = vpack.c.bf16 %v2708, %v2708
          %v3317 = vpack.c.bf16 %v2709, %v2709
          %v3318 = vpack.c.bf16 %v2710, %v2710
          %v3319 = vpack.c.bf16 %v2711, %v2711
          %v3320 = vpack.c.bf16 %v2712, %v2712
          %v3321 = vpack.c.bf16 %v2713, %v2713
          %v3322 = vpack.c.bf16 %v2714, %v2714
          %v3323 = vpack.c.bf16 %v2715, %v2715
          %v3324 = vpack.c.bf16 %v2716, %v2716
          %v3325 = vpack.c.bf16 %v3261, %v3261
          %v3326 = vpack.c.bf16 %v3262, %v3262
          %v3327 = vpack.c.bf16 %v3263, %v3263
          %v3328 = vpack.c.bf16 %v3264, %v3264
          %v3329 = vpack.c.bf16 %v3265, %v3265
          %v3330 = vpack.c.bf16 %v3266, %v3266
          %v3331 = vpack.c.bf16 %v3267, %v3267
          %v3332 = vpack.c.bf16 %v3268, %v3268
          %v3333 = vpack.c.bf16 %v3269, %v3269
          %v3334 = vpack.c.bf16 %v3270, %v3270
          %v3335 = vpack.c.bf16 %v3271, %v3271
          %v3336 = vpack.c.bf16 %v3272, %v3272
          %v3337 = vpack.c.bf16 %v3273, %v3273
          %v3338 = vpack.c.bf16 %v3274, %v3274
          %v3339 = vpack.c.bf16 %v3275, %v3275
          %v3340 = vpack.c.bf16 %v3276, %v3276
          %vm3341 = vcmask 257024
          %3342 = vst.msk [vmem:[#allocation3] sm:$0xf] %vm3341, %v3277
          %3343 = vst.msk [vmem:[#allocation3 + $0x4] sm:$0xf] %vm3341, %v3278
          %3344 = vst.msk [vmem:[#allocation3 + $0x8] sm:$0xf] %vm3341, %v3279
          %3345 = vst.msk [vmem:[#allocation3 + $0xc] sm:$0xf] %vm3341, %v3280
          %3346 = vst.msk [vmem:[#allocation3 + $0x10] sm:$0xf] %vm3341, %v3281
          %3347 = vst.msk [vmem:[#allocation3 + $0x14] sm:$0xf] %vm3341, %v3282
          %3348 = vst.msk [vmem:[#allocation3 + $0x18] sm:$0xf] %vm3341, %v3283
          %3349 = vst.msk [vmem:[#allocation3 + $0x1c] sm:$0xf] %vm3341, %v3284
          %3350 = vst.msk [vmem:[#allocation3 + $0x20] sm:$0xf] %vm3341, %v3285
          %3351 = vst.msk [vmem:[#allocation3 + $0x24] sm:$0xf] %vm3341, %v3286
          %3352 = vst.msk [vmem:[#allocation3 + $0x28] sm:$0xf] %vm3341, %v3287
          %3353 = vst.msk [vmem:[#allocation3 + $0x2c] sm:$0xf] %vm3341, %v3288
          %3354 = vst.msk [vmem:[#allocation3 + $0x30] sm:$0xf] %vm3341, %v3289
          %3355 = vst.msk [vmem:[#allocation3 + $0x34] sm:$0xf] %vm3341, %v3290
          %3356 = vst.msk [vmem:[#allocation3 + $0x38] sm:$0xf] %vm3341, %v3291
          %3357 = vst.msk [vmem:[#allocation3 + $0x3c] sm:$0xf] %vm3341, %v3292
          %3358 = vst.msk [vmem:[#allocation3 + $0x40] sm:$0xf] %vm3341, %v3293
          %3359 = vst.msk [vmem:[#allocation3 + $0x44] sm:$0xf] %vm3341, %v3294
          %3360 = vst.msk [vmem:[#allocation3 + $0x48] sm:$0xf] %vm3341, %v3295
          %3361 = vst.msk [vmem:[#allocation3 + $0x4c] sm:$0xf] %vm3341, %v3296
          %3362 = vst.msk [vmem:[#allocation3 + $0x50] sm:$0xf] %vm3341, %v3297
          %3363 = vst.msk [vmem:[#allocation3 + $0x54] sm:$0xf] %vm3341, %v3298
          %3364 = vst.msk [vmem:[#allocation3 + $0x58] sm:$0xf] %vm3341, %v3299
          %3365 = vst.msk [vmem:[#allocation3 + $0x5c] sm:$0xf] %vm3341, %v3300
          %3366 = vst.msk [vmem:[#allocation3 + $0x60] sm:$0xf] %vm3341, %v3301
          %3367 = vst.msk [vmem:[#allocation3 + $0x64] sm:$0xf] %vm3341, %v3302
          %3368 = vst.msk [vmem:[#allocation3 + $0x68] sm:$0xf] %vm3341, %v3303
          %3369 = vst.msk [vmem:[#allocation3 + $0x6c] sm:$0xf] %vm3341, %v3304
          %3370 = vst.msk [vmem:[#allocation3 + $0x70] sm:$0xf] %vm3341, %v3305
          %3371 = vst.msk [vmem:[#allocation3 + $0x74] sm:$0xf] %vm3341, %v3306
          %3372 = vst.msk [vmem:[#allocation3 + $0x78] sm:$0xf] %vm3341, %v3307
          %3373 = vst.msk [vmem:[#allocation3 + $0x7c] sm:$0xf] %vm3341, %v3308
          %3374 = vst.msk [vmem:[#allocation3 + $0x80] sm:$0xf] %vm3341, %v3309
          %3375 = vst.msk [vmem:[#allocation3 + $0x84] sm:$0xf] %vm3341, %v3310
          %3376 = vst.msk [vmem:[#allocation3 + $0x88] sm:$0xf] %vm3341, %v3311
          %3377 = vst.msk [vmem:[#allocation3 + $0x8c] sm:$0xf] %vm3341, %v3312
          %3378 = vst.msk [vmem:[#allocation3 + $0x90] sm:$0xf] %vm3341, %v3313
          %3379 = vst.msk [vmem:[#allocation3 + $0x94] sm:$0xf] %vm3341, %v3314
          %3380 = vst.msk [vmem:[#allocation3 + $0x98] sm:$0xf] %vm3341, %v3315
          %3381 = vst.msk [vmem:[#allocation3 + $0x9c] sm:$0xf] %vm3341, %v3316
          %3382 = vst.msk [vmem:[#allocation3 + $0xa0] sm:$0xf] %vm3341, %v3317
          %3383 = vst.msk [vmem:[#allocation3 + $0xa4] sm:$0xf] %vm3341, %v3318
          %3384 = vst.msk [vmem:[#allocation3 + $0xa8] sm:$0xf] %vm3341, %v3319
          %3385 = vst.msk [vmem:[#allocation3 + $0xac] sm:$0xf] %vm3341, %v3320
          %3386 = vst.msk [vmem:[#allocation3 + $0xb0] sm:$0xf] %vm3341, %v3321
          %3387 = vst.msk [vmem:[#allocation3 + $0xb4] sm:$0xf] %vm3341, %v3322
          %3388 = vst.msk [vmem:[#allocation3 + $0xb8] sm:$0xf] %vm3341, %v3323
          %3389 = vst.msk [vmem:[#allocation3 + $0xbc] sm:$0xf] %vm3341, %v3324
          %3390 = vst.msk [vmem:[#allocation3 + $0xc0] sm:$0xf] %vm3341, %v3325
          %3391 = vst.msk [vmem:[#allocation3 + $0xc4] sm:$0xf] %vm3341, %v3326
          %3392 = vst.msk [vmem:[#allocation3 + $0xc8] sm:$0xf] %vm3341, %v3327
          %3393 = vst.msk [vmem:[#allocation3 + $0xcc] sm:$0xf] %vm3341, %v3328
          %3394 = vst.msk [vmem:[#allocation3 + $0xd0] sm:$0xf] %vm3341, %v3329
          %3395 = vst.msk [vmem:[#allocation3 + $0xd4] sm:$0xf] %vm3341, %v3330
          %3396 = vst.msk [vmem:[#allocation3 + $0xd8] sm:$0xf] %vm3341, %v3331
          %3397 = vst.msk [vmem:[#allocation3 + $0xdc] sm:$0xf] %vm3341, %v3332
          %3398 = vst.msk [vmem:[#allocation3 + $0xe0] sm:$0xf] %vm3341, %v3333
          %3399 = vst.msk [vmem:[#allocation3 + $0xe4] sm:$0xf] %vm3341, %v3334
          %3400 = vst.msk [vmem:[#allocation3 + $0xe8] sm:$0xf] %vm3341, %v3335
          %3401 = vst.msk [vmem:[#allocation3 + $0xec] sm:$0xf] %vm3341, %v3336
          %3402 = vst.msk [vmem:[#allocation3 + $0xf0] sm:$0xf] %vm3341, %v3337
          %3403 = vst.msk [vmem:[#allocation3 + $0xf4] sm:$0xf] %vm3341, %v3338
          %3404 = vst.msk [vmem:[#allocation3 + $0xf8] sm:$0xf] %vm3341, %v3339
          %3405 = vst.msk [vmem:[#allocation3 + $0xfc] sm:$0xf] %vm3341, %v3340
          %3422 = vrot.lane.b32.xlu0 %v1093, 96
          %v3423 = vpop.permute.xlu0 %3422
          %3424 = vrot.lane.b32.xlu0 %v1095, 96
          %v3425 = vpop.permute.xlu0 %3424
          %3426 = vrot.lane.b32.xlu0 %v1098, 96
          %v3427 = vpop.permute.xlu0 %3426
          %3428 = vrot.lane.b32.xlu0 %v1100, 96
          %v3429 = vpop.permute.xlu0 %3428
          %3430 = vrot.lane.b32.xlu0 %v1103, 96
          %v3431 = vpop.permute.xlu0 %3430
          %3432 = vrot.lane.b32.xlu0 %v1105, 96
          %v3433 = vpop.permute.xlu0 %3432
          %3434 = vrot.lane.b32.xlu0 %v1108, 96
          %v3435 = vpop.permute.xlu0 %3434
          %3436 = vrot.lane.b32.xlu0 %v1110, 96
          %v3437 = vpop.permute.xlu0 %3436
          %3438 = vrot.lane.b32.xlu0 %v1113, 96
          %v3439 = vpop.permute.xlu0 %3438
          %3440 = vrot.lane.b32.xlu0 %v1115, 96
          %v3441 = vpop.permute.xlu0 %3440
          %3442 = vrot.lane.b32.xlu0 %v1118, 96
          %v3443 = vpop.permute.xlu0 %3442
          %3444 = vrot.lane.b32.xlu0 %v1120, 96
          %v3445 = vpop.permute.xlu0 %3444
          %3446 = vrot.lane.b32.xlu0 %v1123, 96
          %v3447 = vpop.permute.xlu0 %3446
          %3448 = vrot.lane.b32.xlu0 %v1125, 96
          %v3449 = vpop.permute.xlu0 %3448
          %3450 = vrot.lane.b32.xlu0 %v1128, 96
          %v3451 = vpop.permute.xlu0 %3450
          %3452 = vrot.lane.b32.xlu0 %v1130, 96
          %v3453 = vpop.permute.xlu0 %3452
          %3470 = vrot.lane.b32.xlu0 %v1093, 64
          %v3471 = vpop.permute.xlu0 %3470
          %3472 = vrot.lane.b32.xlu0 %v1095, 64
          %v3473 = vpop.permute.xlu0 %3472
          %3474 = vrot.lane.b32.xlu0 %v1098, 64
          %v3475 = vpop.permute.xlu0 %3474
          %3476 = vrot.lane.b32.xlu0 %v1100, 64
          %v3477 = vpop.permute.xlu0 %3476
          %3478 = vrot.lane.b32.xlu0 %v1103, 64
          %v3479 = vpop.permute.xlu0 %3478
          %3480 = vrot.lane.b32.xlu0 %v1105, 64
          %v3481 = vpop.permute.xlu0 %3480
          %3482 = vrot.lane.b32.xlu0 %v1108, 64
          %v3483 = vpop.permute.xlu0 %3482
          %3484 = vrot.lane.b32.xlu0 %v1110, 64
          %v3485 = vpop.permute.xlu0 %3484
          %3486 = vrot.lane.b32.xlu0 %v1113, 64
          %v3487 = vpop.permute.xlu0 %3486
          %3488 = vrot.lane.b32.xlu0 %v1115, 64
          %v3489 = vpop.permute.xlu0 %3488
          %3490 = vrot.lane.b32.xlu0 %v1118, 64
          %v3491 = vpop.permute.xlu0 %3490
          %3492 = vrot.lane.b32.xlu0 %v1120, 64
          %v3493 = vpop.permute.xlu0 %3492
          %3494 = vrot.lane.b32.xlu0 %v1123, 64
          %v3495 = vpop.permute.xlu0 %3494
          %3496 = vrot.lane.b32.xlu0 %v1125, 64
          %v3497 = vpop.permute.xlu0 %3496
          %3498 = vrot.lane.b32.xlu0 %v1128, 64
          %v3499 = vpop.permute.xlu0 %3498
          %3500 = vrot.lane.b32.xlu0 %v1130, 64
          %v3501 = vpop.permute.xlu0 %3500
          %3518 = vrot.lane.b32.xlu0 %v1093, 32
          %v3519 = vpop.permute.xlu0 %3518
          %3520 = vrot.lane.b32.xlu0 %v1095, 32
          %v3521 = vpop.permute.xlu0 %3520
          %3522 = vrot.lane.b32.xlu0 %v1098, 32
          %v3523 = vpop.permute.xlu0 %3522
          %3524 = vrot.lane.b32.xlu0 %v1100, 32
          %v3525 = vpop.permute.xlu0 %3524
          %3526 = vrot.lane.b32.xlu0 %v1103, 32
          %v3527 = vpop.permute.xlu0 %3526
          %3528 = vrot.lane.b32.xlu0 %v1105, 32
          %v3529 = vpop.permute.xlu0 %3528
          %3530 = vrot.lane.b32.xlu0 %v1108, 32
          %v3531 = vpop.permute.xlu0 %3530
          %3532 = vrot.lane.b32.xlu0 %v1110, 32
          %v3533 = vpop.permute.xlu0 %3532
          %3534 = vrot.lane.b32.xlu0 %v1113, 32
          %v3535 = vpop.permute.xlu0 %3534
          %3536 = vrot.lane.b32.xlu0 %v1115, 32
          %v3537 = vpop.permute.xlu0 %3536
          %3538 = vrot.lane.b32.xlu0 %v1118, 32
          %v3539 = vpop.permute.xlu0 %3538
          %3540 = vrot.lane.b32.xlu0 %v1120, 32
          %v3541 = vpop.permute.xlu0 %3540
          %3542 = vrot.lane.b32.xlu0 %v1123, 32
          %v3543 = vpop.permute.xlu0 %3542
          %3544 = vrot.lane.b32.xlu0 %v1125, 32
          %v3545 = vpop.permute.xlu0 %3544
          %3546 = vrot.lane.b32.xlu0 %v1128, 32
          %v3547 = vpop.permute.xlu0 %3546
          %3548 = vrot.lane.b32.xlu0 %v1130, 32
          %v3549 = vpop.permute.xlu0 %3548
          %v3566 = vpack.c.bf16 %v1093, %v1093
          %v3567 = vpack.c.bf16 %v1095, %v1095
          %v3568 = vpack.c.bf16 %v1098, %v1098
          %v3569 = vpack.c.bf16 %v1100, %v1100
          %v3570 = vpack.c.bf16 %v1103, %v1103
          %v3571 = vpack.c.bf16 %v1105, %v1105
          %v3572 = vpack.c.bf16 %v1108, %v1108
          %v3573 = vpack.c.bf16 %v1110, %v1110
          %v3574 = vpack.c.bf16 %v1113, %v1113
          %v3575 = vpack.c.bf16 %v1115, %v1115
          %v3576 = vpack.c.bf16 %v1118, %v1118
          %v3577 = vpack.c.bf16 %v1120, %v1120
          %v3578 = vpack.c.bf16 %v1123, %v1123
          %v3579 = vpack.c.bf16 %v1125, %v1125
          %v3580 = vpack.c.bf16 %v1128, %v1128
          %v3581 = vpack.c.bf16 %v1130, %v1130
          %v3582 = vpack.c.bf16 %v3423, %v3423
          %v3583 = vpack.c.bf16 %v3425, %v3425
          %v3584 = vpack.c.bf16 %v3427, %v3427
          %v3585 = vpack.c.bf16 %v3429, %v3429
          %v3586 = vpack.c.bf16 %v3431, %v3431
          %v3587 = vpack.c.bf16 %v3433, %v3433
          %v3588 = vpack.c.bf16 %v3435, %v3435
          %v3589 = vpack.c.bf16 %v3437, %v3437
          %v3590 = vpack.c.bf16 %v3439, %v3439
          %v3591 = vpack.c.bf16 %v3441, %v3441
          %v3592 = vpack.c.bf16 %v3443, %v3443
          %v3593 = vpack.c.bf16 %v3445, %v3445
          %v3594 = vpack.c.bf16 %v3447, %v3447
          %v3595 = vpack.c.bf16 %v3449, %v3449
          %v3596 = vpack.c.bf16 %v3451, %v3451
          %v3597 = vpack.c.bf16 %v3453, %v3453
          %v3598 = vpack.c.bf16 %v3471, %v3471
          %v3599 = vpack.c.bf16 %v3473, %v3473
          %v3600 = vpack.c.bf16 %v3475, %v3475
          %v3601 = vpack.c.bf16 %v3477, %v3477
          %v3602 = vpack.c.bf16 %v3479, %v3479
          %v3603 = vpack.c.bf16 %v3481, %v3481
          %v3604 = vpack.c.bf16 %v3483, %v3483
          %v3605 = vpack.c.bf16 %v3485, %v3485
          %v3606 = vpack.c.bf16 %v3487, %v3487
          %v3607 = vpack.c.bf16 %v3489, %v3489
          %v3608 = vpack.c.bf16 %v3491, %v3491
          %v3609 = vpack.c.bf16 %v3493, %v3493
          %v3610 = vpack.c.bf16 %v3495, %v3495
          %v3611 = vpack.c.bf16 %v3497, %v3497
          %v3612 = vpack.c.bf16 %v3499, %v3499
          %v3613 = vpack.c.bf16 %v3501, %v3501
          %v3614 = vpack.c.bf16 %v3519, %v3519
          %v3615 = vpack.c.bf16 %v3521, %v3521
          %v3616 = vpack.c.bf16 %v3523, %v3523
          %v3617 = vpack.c.bf16 %v3525, %v3525
          %v3618 = vpack.c.bf16 %v3527, %v3527
          %v3619 = vpack.c.bf16 %v3529, %v3529
          %v3620 = vpack.c.bf16 %v3531, %v3531
          %v3621 = vpack.c.bf16 %v3533, %v3533
          %v3622 = vpack.c.bf16 %v3535, %v3535
          %v3623 = vpack.c.bf16 %v3537, %v3537
          %v3624 = vpack.c.bf16 %v3539, %v3539
          %v3625 = vpack.c.bf16 %v3541, %v3541
          %v3626 = vpack.c.bf16 %v3543, %v3543
          %v3627 = vpack.c.bf16 %v3545, %v3545
          %v3628 = vpack.c.bf16 %v3547, %v3547
          %v3629 = vpack.c.bf16 %v3549, %v3549
          %3630 = vst.msk [vmem:[#allocation4] sm:$0xf] %vm3341, %v3566
          %3631 = vst.msk [vmem:[#allocation4 + $0x4] sm:$0xf] %vm3341, %v3567
          %3632 = vst.msk [vmem:[#allocation4 + $0x8] sm:$0xf] %vm3341, %v3568
          %3633 = vst.msk [vmem:[#allocation4 + $0xc] sm:$0xf] %vm3341, %v3569
          %3634 = vst.msk [vmem:[#allocation4 + $0x10] sm:$0xf] %vm3341, %v3570
          %3635 = vst.msk [vmem:[#allocation4 + $0x14] sm:$0xf] %vm3341, %v3571
          %3636 = vst.msk [vmem:[#allocation4 + $0x18] sm:$0xf] %vm3341, %v3572
          %3637 = vst.msk [vmem:[#allocation4 + $0x1c] sm:$0xf] %vm3341, %v3573
          %3638 = vst.msk [vmem:[#allocation4 + $0x20] sm:$0xf] %vm3341, %v3574
          %3639 = vst.msk [vmem:[#allocation4 + $0x24] sm:$0xf] %vm3341, %v3575
          %3640 = vst.msk [vmem:[#allocation4 + $0x28] sm:$0xf] %vm3341, %v3576
          %3641 = vst.msk [vmem:[#allocation4 + $0x2c] sm:$0xf] %vm3341, %v3577
          %3642 = vst.msk [vmem:[#allocation4 + $0x30] sm:$0xf] %vm3341, %v3578
          %3643 = vst.msk [vmem:[#allocation4 + $0x34] sm:$0xf] %vm3341, %v3579
          %3644 = vst.msk [vmem:[#allocation4 + $0x38] sm:$0xf] %vm3341, %v3580
          %3645 = vst.msk [vmem:[#allocation4 + $0x3c] sm:$0xf] %vm3341, %v3581
          %3646 = vst.msk [vmem:[#allocation4 + $0x40] sm:$0xf] %vm3341, %v3582
          %3647 = vst.msk [vmem:[#allocation4 + $0x44] sm:$0xf] %vm3341, %v3583
          %3648 = vst.msk [vmem:[#allocation4 + $0x48] sm:$0xf] %vm3341, %v3584
          %3649 = vst.msk [vmem:[#allocation4 + $0x4c] sm:$0xf] %vm3341, %v3585
          %3650 = vst.msk [vmem:[#allocation4 + $0x50] sm:$0xf] %vm3341, %v3586
          %3651 = vst.msk [vmem:[#allocation4 + $0x54] sm:$0xf] %vm3341, %v3587
          %3652 = vst.msk [vmem:[#allocation4 + $0x58] sm:$0xf] %vm3341, %v3588
          %3653 = vst.msk [vmem:[#allocation4 + $0x5c] sm:$0xf] %vm3341, %v3589
          %3654 = vst.msk [vmem:[#allocation4 + $0x60] sm:$0xf] %vm3341, %v3590
          %3655 = vst.msk [vmem:[#allocation4 + $0x64] sm:$0xf] %vm3341, %v3591
          %3656 = vst.msk [vmem:[#allocation4 + $0x68] sm:$0xf] %vm3341, %v3592
          %3657 = vst.msk [vmem:[#allocation4 + $0x6c] sm:$0xf] %vm3341, %v3593
          %3658 = vst.msk [vmem:[#allocation4 + $0x70] sm:$0xf] %vm3341, %v3594
          %3659 = vst.msk [vmem:[#allocation4 + $0x74] sm:$0xf] %vm3341, %v3595
          %3660 = vst.msk [vmem:[#allocation4 + $0x78] sm:$0xf] %vm3341, %v3596
          %3661 = vst.msk [vmem:[#allocation4 + $0x7c] sm:$0xf] %vm3341, %v3597
          %3662 = vst.msk [vmem:[#allocation4 + $0x80] sm:$0xf] %vm3341, %v3598
          %3663 = vst.msk [vmem:[#allocation4 + $0x84] sm:$0xf] %vm3341, %v3599
          %3664 = vst.msk [vmem:[#allocation4 + $0x88] sm:$0xf] %vm3341, %v3600
          %3665 = vst.msk [vmem:[#allocation4 + $0x8c] sm:$0xf] %vm3341, %v3601
          %3666 = vst.msk [vmem:[#allocation4 + $0x90] sm:$0xf] %vm3341, %v3602
          %3667 = vst.msk [vmem:[#allocation4 + $0x94] sm:$0xf] %vm3341, %v3603
          %3668 = vst.msk [vmem:[#allocation4 + $0x98] sm:$0xf] %vm3341, %v3604
          %3669 = vst.msk [vmem:[#allocation4 + $0x9c] sm:$0xf] %vm3341, %v3605
          %3670 = vst.msk [vmem:[#allocation4 + $0xa0] sm:$0xf] %vm3341, %v3606
          %3671 = vst.msk [vmem:[#allocation4 + $0xa4] sm:$0xf] %vm3341, %v3607
          %3672 = vst.msk [vmem:[#allocation4 + $0xa8] sm:$0xf] %vm3341, %v3608
          %3673 = vst.msk [vmem:[#allocation4 + $0xac] sm:$0xf] %vm3341, %v3609
          %3674 = vst.msk [vmem:[#allocation4 + $0xb0] sm:$0xf] %vm3341, %v3610
          %3675 = vst.msk [vmem:[#allocation4 + $0xb4] sm:$0xf] %vm3341, %v3611
          %3676 = vst.msk [vmem:[#allocation4 + $0xb8] sm:$0xf] %vm3341, %v3612
          %3677 = vst.msk [vmem:[#allocation4 + $0xbc] sm:$0xf] %vm3341, %v3613
          %3678 = vst.msk [vmem:[#allocation4 + $0xc0] sm:$0xf] %vm3341, %v3614
          %3679 = vst.msk [vmem:[#allocation4 + $0xc4] sm:$0xf] %vm3341, %v3615
          %3680 = vst.msk [vmem:[#allocation4 + $0xc8] sm:$0xf] %vm3341, %v3616
          %3681 = vst.msk [vmem:[#allocation4 + $0xcc] sm:$0xf] %vm3341, %v3617
          %3682 = vst.msk [vmem:[#allocation4 + $0xd0] sm:$0xf] %vm3341, %v3618
          %3683 = vst.msk [vmem:[#allocation4 + $0xd4] sm:$0xf] %vm3341, %v3619
          %3684 = vst.msk [vmem:[#allocation4 + $0xd8] sm:$0xf] %vm3341, %v3620
          %3685 = vst.msk [vmem:[#allocation4 + $0xdc] sm:$0xf] %vm3341, %v3621
          %3686 = vst.msk [vmem:[#allocation4 + $0xe0] sm:$0xf] %vm3341, %v3622
          %3687 = vst.msk [vmem:[#allocation4 + $0xe4] sm:$0xf] %vm3341, %v3623
          %3688 = vst.msk [vmem:[#allocation4 + $0xe8] sm:$0xf] %vm3341, %v3624
          %3689 = vst.msk [vmem:[#allocation4 + $0xec] sm:$0xf] %vm3341, %v3625
          %3690 = vst.msk [vmem:[#allocation4 + $0xf0] sm:$0xf] %vm3341, %v3626
          %3691 = vst.msk [vmem:[#allocation4 + $0xf4] sm:$0xf] %vm3341, %v3627
          %3692 = vst.msk [vmem:[#allocation4 + $0xf8] sm:$0xf] %vm3341, %v3628
          %3693 = vst.msk [vmem:[#allocation4 + $0xfc] sm:$0xf] %vm3341, %v3629
        $region92: #{tpu_custom_call.1} parent=63 // pred_fallthru
          _
        %s3694 = sshra.s32 %s506, 3
        %s3695 = sand.u32 %s506, 7
        %s3696 = smul.addr %s3694, 4
        %s3697 = scalar_lea.vmem [#allocation2], %s3696
        %v3698 = vld [vmem:[%s3697] sm:$0xf]
        %v3699 = vld [vmem:[%s3697 + $0x4] sm:$0xf]
        %v3700 = vld [vmem:[%s3697 + $0x8] sm:$0xf]
        %v3701 = vld [vmem:[%s3697 + $0xc] sm:$0xf]
        %v3702 = vld [vmem:[%s3697 + $0x10] sm:$0xf]
        %v3703 = vld [vmem:[%s3697 + $0x14] sm:$0xf]
        %v3704 = vld [vmem:[%s3697 + $0x18] sm:$0xf]
        %v3705 = vld [vmem:[%s3697 + $0x1c] sm:$0xf]
        %v3706 = vld [vmem:[#allocation8] sm:$0xf]
        %v3707 = vld [vmem:[#allocation8 + $0x4] sm:$0xf]
        %v3708 = vld [vmem:[#allocation8 + $0x8] sm:$0xf]
        %v3709 = vld [vmem:[#allocation8 + $0xc] sm:$0xf]
        %v3710 = vld [vmem:[#allocation8 + $0x10] sm:$0xf]
        %v3711 = vld [vmem:[#allocation8 + $0x14] sm:$0xf]
        %v3712 = vld [vmem:[#allocation8 + $0x18] sm:$0xf]
        %v3713 = vld [vmem:[#allocation8 + $0x1c] sm:$0xf]
        %v3714 = vld [vmem:[#allocation8 + $0x20] sm:$0xf]
        %v3715 = vld [vmem:[#allocation8 + $0x24] sm:$0xf]
        %v3716 = vld [vmem:[#allocation8 + $0x28] sm:$0xf]
        %v3717 = vld [vmem:[#allocation8 + $0x2c] sm:$0xf]
        %v3718 = vld [vmem:[#allocation8 + $0x30] sm:$0xf]
        %v3719 = vld [vmem:[#allocation8 + $0x34] sm:$0xf]
        %v3720 = vld [vmem:[#allocation8 + $0x38] sm:$0xf]
        %v3721 = vld [vmem:[#allocation8 + $0x3c] sm:$0xf]
        %v3730 = vunpack.c.l.b16 %v3698
        %v3731 = vunpack.c.l.b16 %v3699
        %v3732 = vunpack.c.l.b16 %v3700
        %v3733 = vunpack.c.l.b16 %v3701
        %v3734 = vunpack.c.l.b16 %v3702
        %v3735 = vunpack.c.l.b16 %v3703
        %v3736 = vunpack.c.l.b16 %v3704
        %v3737 = vunpack.c.l.b16 %v3705
        %v3738 = vpack.c.b16 %v3731, %v3730
        %v3739 = vpack.c.b16 %v3733, %v3732
        %v3740 = vpack.c.b16 %v3735, %v3734
        %v3741 = vpack.c.b16 %v3737, %v3736
        %v3762 = vunpack.c.l.b16 %v3706
        %v3763 = vunpack.c.l.b16 %v3707
        %v3764 = vunpack.c.l.b16 %v3708
        %v3765 = vunpack.c.l.b16 %v3709
        %v3766 = vunpack.c.l.b16 %v3710
        %v3767 = vunpack.c.l.b16 %v3711
        %v3768 = vunpack.c.l.b16 %v3712
        %v3769 = vunpack.c.l.b16 %v3713
        %v3770 = vunpack.c.l.b16 %v3714
        %v3771 = vunpack.c.l.b16 %v3715
        %v3772 = vunpack.c.l.b16 %v3716
        %v3773 = vunpack.c.l.b16 %v3717
        %v3774 = vunpack.c.l.b16 %v3718
        %v3775 = vunpack.c.l.b16 %v3719
        %v3776 = vunpack.c.l.b16 %v3720
        %v3777 = vunpack.c.l.b16 %v3721
        %v3778 = vpack.c.b16 %v3763, %v3762
        %v3779 = vpack.c.b16 %v3765, %v3764
        %v3780 = vpack.c.b16 %v3767, %v3766
        %v3781 = vpack.c.b16 %v3769, %v3768
        %v3782 = vpack.c.b16 %v3771, %v3770
        %v3783 = vpack.c.b16 %v3773, %v3772
        %v3784 = vpack.c.b16 %v3775, %v3774
        %v3785 = vpack.c.b16 %v3777, %v3776
        %3794 = vmatpush.bf16.msra.mxu0 %v3785
        %3795 = vmatpush.bf16.msra.mxu0 %v3784
        %3796 = vmatpush.bf16.msra.mxu0 %v3783
        %3797 = vmatpush.bf16.msra.mxu0 %v3782
        %3798 = vmatpush.bf16.msra.mxu0 %v3781
        %3799 = vmatpush.bf16.msra.mxu0 %v3780
        %3800 = vmatpush.bf16.msra.mxu0 %v3779
        %3801 = vmatpush.bf16.msra.mxu0 %v3778
        %3802 = vmatmul.bf16.gmra.mxu0 %v3738
        %v3803 = vpop.f32.mrf.mxu0
        %v3804 = vadd.f32 0.0, %v3803
        %v3805 = vpop.f32.mrf.mxu0
        %v3806 = vadd.f32 0.0, %v3805
        %3807 = vmatmul.bf16.gmra.mxu0 %v3739
        %v3808 = vpop.f32.mrf.mxu0
        %v3809 = vadd.f32 0.0, %v3808
        %v3810 = vpop.f32.mrf.mxu0
        %v3811 = vadd.f32 0.0, %v3810
        %3812 = vmatmul.bf16.gmra.mxu0 %v3740
        %v3813 = vpop.f32.mrf.mxu0
        %v3814 = vadd.f32 0.0, %v3813
        %v3815 = vpop.f32.mrf.mxu0
        %v3816 = vadd.f32 0.0, %v3815
        %3817 = vmatmul.bf16.gmra.mxu0 %v3741
        %v3818 = vpop.f32.mrf.mxu0
        %v3819 = vadd.f32 0.0, %v3818
        %v3820 = vpop.f32.mrf.mxu0
        %v3821 = vadd.f32 0.0, %v3820
        %3822 = vdwg.mxu0
        %s3823 = scalar_lea.vmem %s1, %s506
        %v3824 = vld [vmem:[%s3823] sm:$0xff]
        %v3825 = vld [vmem:[%s3823 + $0x8] sm:$0xff]
        %v3826 = vld [vmem:[%s3823 + $0x10] sm:$0xff]
        %v3827 = vld [vmem:[%s3823 + $0x18] sm:$0xff]
        %v3828 = vld [vmem:[%s3823 + $0x20] sm:$0xff]
        %v3829 = vld [vmem:[%s3823 + $0x28] sm:$0xff]
        %v3830 = vld [vmem:[%s3823 + $0x30] sm:$0xff]
        %v3831 = vld [vmem:[%s3823 + $0x38] sm:$0xff]
        %s3832 = scalar_lea.vmem %s2, %s506
        %v3833 = vld [vmem:[%s3832] sm:$0xff]
        %v3834 = vld [vmem:[%s3832 + $0x8] sm:$0xff]
        %v3835 = vld [vmem:[%s3832 + $0x10] sm:$0xff]
        %v3836 = vld [vmem:[%s3832 + $0x18] sm:$0xff]
        %v3837 = vld [vmem:[%s3832 + $0x20] sm:$0xff]
        %v3838 = vld [vmem:[%s3832 + $0x28] sm:$0xff]
        %v3839 = vld [vmem:[%s3832 + $0x30] sm:$0xff]
        %v3840 = vld [vmem:[%s3832 + $0x38] sm:$0xff]
        %v3841 = vmul.f32 %v3804, %v3824
        %v3842 = vmul.f32 %v3806, %v3825
        %v3843 = vmul.f32 %v3809, %v3826
        %v3844 = vmul.f32 %v3811, %v3827
        %v3845 = vmul.f32 %v3814, %v3828
        %v3846 = vmul.f32 %v3816, %v3829
        %v3847 = vmul.f32 %v3819, %v3830
        %v3848 = vmul.f32 %v3821, %v3831
        %3857 = vrot.lane.b32.xlu0 %v3833, 16
        %v3858 = vpop.permute.xlu0 %3857
        %3859 = vrot.lane.b32.xlu0 %v3834, 16
        %v3860 = vpop.permute.xlu0 %3859
        %3861 = vrot.lane.b32.xlu0 %v3835, 16
        %v3862 = vpop.permute.xlu0 %3861
        %3863 = vrot.lane.b32.xlu0 %v3836, 16
        %v3864 = vpop.permute.xlu0 %3863
        %3865 = vrot.lane.b32.xlu0 %v3837, 16
        %v3866 = vpop.permute.xlu0 %3865
        %3867 = vrot.lane.b32.xlu0 %v3838, 16
        %v3868 = vpop.permute.xlu0 %3867
        %3869 = vrot.lane.b32.xlu0 %v3839, 16
        %v3870 = vpop.permute.xlu0 %3869
        %3871 = vrot.lane.b32.xlu0 %v3840, 16
        %v3872 = vpop.permute.xlu0 %3871
        %v3881 = vmul.f32 %v3804, %v3858
        %v3882 = vmul.f32 %v3806, %v3860
        %v3883 = vmul.f32 %v3809, %v3862
        %v3884 = vmul.f32 %v3811, %v3864
        %v3885 = vmul.f32 %v3814, %v3866
        %v3886 = vmul.f32 %v3816, %v3868
        %v3887 = vmul.f32 %v3819, %v3870
        %v3888 = vmul.f32 %v3821, %v3872
        %3897 = vrot.lane.b32.xlu0 %v3881, 112
        %v3898 = vpop.permute.xlu0 %3897
        %3899 = vrot.lane.b32.xlu0 %v3882, 112
        %v3900 = vpop.permute.xlu0 %3899
        %3901 = vrot.lane.b32.xlu0 %v3883, 112
        %v3902 = vpop.permute.xlu0 %3901
        %3903 = vrot.lane.b32.xlu0 %v3884, 112
        %v3904 = vpop.permute.xlu0 %3903
        %3905 = vrot.lane.b32.xlu0 %v3885, 112
        %v3906 = vpop.permute.xlu0 %3905
        %3907 = vrot.lane.b32.xlu0 %v3886, 112
        %v3908 = vpop.permute.xlu0 %3907
        %3909 = vrot.lane.b32.xlu0 %v3887, 112
        %v3910 = vpop.permute.xlu0 %3909
        %3911 = vrot.lane.b32.xlu0 %v3888, 112
        %v3912 = vpop.permute.xlu0 %3911
        %v3921 = vsub.f32 %v3841, %v3898
        %v3922 = vsub.f32 %v3842, %v3900
        %v3923 = vsub.f32 %v3843, %v3902
        %v3924 = vsub.f32 %v3844, %v3904
        %v3925 = vsub.f32 %v3845, %v3906
        %v3926 = vsub.f32 %v3846, %v3908
        %v3927 = vsub.f32 %v3847, %v3910
        %v3928 = vsub.f32 %v3848, %v3912
        %v3929 = vmul.f32 %v3804, %v3833
        %v3930 = vmul.f32 %v3806, %v3834
        %v3931 = vmul.f32 %v3809, %v3835
        %v3932 = vmul.f32 %v3811, %v3836
        %v3933 = vmul.f32 %v3814, %v3837
        %v3934 = vmul.f32 %v3816, %v3838
        %v3935 = vmul.f32 %v3819, %v3839
        %v3936 = vmul.f32 %v3821, %v3840
        %3945 = vrot.lane.b32.xlu0 %v3824, 16
        %v3946 = vpop.permute.xlu0 %3945
        %3947 = vrot.lane.b32.xlu0 %v3825, 16
        %v3948 = vpop.permute.xlu0 %3947
        %3949 = vrot.lane.b32.xlu0 %v3826, 16
        %v3950 = vpop.permute.xlu0 %3949
        %3951 = vrot.lane.b32.xlu0 %v3827, 16
        %v3952 = vpop.permute.xlu0 %3951
        %3953 = vrot.lane.b32.xlu0 %v3828, 16
        %v3954 = vpop.permute.xlu0 %3953
        %3955 = vrot.lane.b32.xlu0 %v3829, 16
        %v3956 = vpop.permute.xlu0 %3955
        %3957 = vrot.lane.b32.xlu0 %v3830, 16
        %v3958 = vpop.permute.xlu0 %3957
        %3959 = vrot.lane.b32.xlu0 %v3831, 16
        %v3960 = vpop.permute.xlu0 %3959
        %v3969 = vmul.f32 %v3804, %v3946
        %v3970 = vmul.f32 %v3806, %v3948
        %v3971 = vmul.f32 %v3809, %v3950
        %v3972 = vmul.f32 %v3811, %v3952
        %v3973 = vmul.f32 %v3814, %v3954
        %v3974 = vmul.f32 %v3816, %v3956
        %v3975 = vmul.f32 %v3819, %v3958
        %v3976 = vmul.f32 %v3821, %v3960
        %3985 = vrot.lane.b32.xlu0 %v3969, 112
        %v3986 = vpop.permute.xlu0 %3985
        %3987 = vrot.lane.b32.xlu0 %v3970, 112
        %v3988 = vpop.permute.xlu0 %3987
        %3989 = vrot.lane.b32.xlu0 %v3971, 112
        %v3990 = vpop.permute.xlu0 %3989
        %3991 = vrot.lane.b32.xlu0 %v3972, 112
        %v3992 = vpop.permute.xlu0 %3991
        %3993 = vrot.lane.b32.xlu0 %v3973, 112
        %v3994 = vpop.permute.xlu0 %3993
        %3995 = vrot.lane.b32.xlu0 %v3974, 112
        %v3996 = vpop.permute.xlu0 %3995
        %3997 = vrot.lane.b32.xlu0 %v3975, 112
        %v3998 = vpop.permute.xlu0 %3997
        %3999 = vrot.lane.b32.xlu0 %v3976, 112
        %v4000 = vpop.permute.xlu0 %3999
        %v4009 = vadd.f32 %v3929, %v3986
        %v4010 = vadd.f32 %v3930, %v3988
        %v4011 = vadd.f32 %v3931, %v3990
        %v4012 = vadd.f32 %v3932, %v3992
        %v4013 = vadd.f32 %v3933, %v3994
        %v4014 = vadd.f32 %v3934, %v3996
        %v4015 = vadd.f32 %v3935, %v3998
        %v4016 = vadd.f32 %v3936, %v4000
        %4025 = vrot.lane.b32.xlu0 %v4009, 16
        %v4026 = vpop.permute.xlu0 %4025
        %4027 = vrot.lane.b32.xlu0 %v4010, 16
        %v4028 = vpop.permute.xlu0 %4027
        %4029 = vrot.lane.b32.xlu0 %v4011, 16
        %v4030 = vpop.permute.xlu0 %4029
        %4031 = vrot.lane.b32.xlu0 %v4012, 16
        %v4032 = vpop.permute.xlu0 %4031
        %4033 = vrot.lane.b32.xlu0 %v4013, 16
        %v4034 = vpop.permute.xlu0 %4033
        %4035 = vrot.lane.b32.xlu0 %v4014, 16
        %v4036 = vpop.permute.xlu0 %4035
        %4037 = vrot.lane.b32.xlu0 %v4015, 16
        %v4038 = vpop.permute.xlu0 %4037
        %4039 = vrot.lane.b32.xlu0 %v4016, 16
        %v4040 = vpop.permute.xlu0 %4039
        %vm4049 = vcmask 130048
        %v4050 = vsel %vm4049, %v3921, %v4026
        %v4051 = vsel %vm4049, %v3922, %v4028
        %v4052 = vsel %vm4049, %v3923, %v4030
        %v4053 = vsel %vm4049, %v3924, %v4032
        %v4054 = vsel %vm4049, %v3925, %v4034
        %v4055 = vsel %vm4049, %v3926, %v4036
        %v4056 = vsel %vm4049, %v3927, %v4038
        %v4057 = vsel %vm4049, %v3928, %v4040
        %4058 = vrot.lane.b32.xlu0 %v3824, 32
        %v4059 = vpop.permute.xlu0 %4058
        %4060 = vrot.lane.b32.xlu0 %v3825, 32
        %v4061 = vpop.permute.xlu0 %4060
        %4062 = vrot.lane.b32.xlu0 %v3826, 32
        %v4063 = vpop.permute.xlu0 %4062
        %4064 = vrot.lane.b32.xlu0 %v3827, 32
        %v4065 = vpop.permute.xlu0 %4064
        %4066 = vrot.lane.b32.xlu0 %v3828, 32
        %v4067 = vpop.permute.xlu0 %4066
        %4068 = vrot.lane.b32.xlu0 %v3829, 32
        %v4069 = vpop.permute.xlu0 %4068
        %4070 = vrot.lane.b32.xlu0 %v3830, 32
        %v4071 = vpop.permute.xlu0 %4070
        %4072 = vrot.lane.b32.xlu0 %v3831, 32
        %v4073 = vpop.permute.xlu0 %4072
        %v4082 = vmul.f32 %v3804, %v4059
        %v4083 = vmul.f32 %v3806, %v4061
        %v4084 = vmul.f32 %v3809, %v4063
        %v4085 = vmul.f32 %v3811, %v4065
        %v4086 = vmul.f32 %v3814, %v4067
        %v4087 = vmul.f32 %v3816, %v4069
        %v4088 = vmul.f32 %v3819, %v4071
        %v4089 = vmul.f32 %v3821, %v4073
        %4090 = vrot.lane.b32.xlu0 %v3833, 48
        %v4091 = vpop.permute.xlu0 %4090
        %4092 = vrot.lane.b32.xlu0 %v3834, 48
        %v4093 = vpop.permute.xlu0 %4092
        %4094 = vrot.lane.b32.xlu0 %v3835, 48
        %v4095 = vpop.permute.xlu0 %4094
        %4096 = vrot.lane.b32.xlu0 %v3836, 48
        %v4097 = vpop.permute.xlu0 %4096
        %4098 = vrot.lane.b32.xlu0 %v3837, 48
        %v4099 = vpop.permute.xlu0 %4098
        %4100 = vrot.lane.b32.xlu0 %v3838, 48
        %v4101 = vpop.permute.xlu0 %4100
        %4102 = vrot.lane.b32.xlu0 %v3839, 48
        %v4103 = vpop.permute.xlu0 %4102
        %4104 = vrot.lane.b32.xlu0 %v3840, 48
        %v4105 = vpop.permute.xlu0 %4104
        %v4114 = vmul.f32 %v3804, %v4091
        %v4115 = vmul.f32 %v3806, %v4093
        %v4116 = vmul.f32 %v3809, %v4095
        %v4117 = vmul.f32 %v3811, %v4097
        %v4118 = vmul.f32 %v3814, %v4099
        %v4119 = vmul.f32 %v3816, %v4101
        %v4120 = vmul.f32 %v3819, %v4103
        %v4121 = vmul.f32 %v3821, %v4105
        %4130 = vrot.lane.b32.xlu0 %v4114, 112
        %v4131 = vpop.permute.xlu0 %4130
        %4132 = vrot.lane.b32.xlu0 %v4115, 112
        %v4133 = vpop.permute.xlu0 %4132
        %4134 = vrot.lane.b32.xlu0 %v4116, 112
        %v4135 = vpop.permute.xlu0 %4134
        %4136 = vrot.lane.b32.xlu0 %v4117, 112
        %v4137 = vpop.permute.xlu0 %4136
        %4138 = vrot.lane.b32.xlu0 %v4118, 112
        %v4139 = vpop.permute.xlu0 %4138
        %4140 = vrot.lane.b32.xlu0 %v4119, 112
        %v4141 = vpop.permute.xlu0 %4140
        %4142 = vrot.lane.b32.xlu0 %v4120, 112
        %v4143 = vpop.permute.xlu0 %4142
        %4144 = vrot.lane.b32.xlu0 %v4121, 112
        %v4145 = vpop.permute.xlu0 %4144
        %v4154 = vsub.f32 %v4082, %v4131
        %v4155 = vsub.f32 %v4083, %v4133
        %v4156 = vsub.f32 %v4084, %v4135
        %v4157 = vsub.f32 %v4085, %v4137
        %v4158 = vsub.f32 %v4086, %v4139
        %v4159 = vsub.f32 %v4087, %v4141
        %v4160 = vsub.f32 %v4088, %v4143
        %v4161 = vsub.f32 %v4089, %v4145
        %4162 = vrot.lane.b32.xlu0 %v3833, 32
        %v4163 = vpop.permute.xlu0 %4162
        %4164 = vrot.lane.b32.xlu0 %v3834, 32
        %v4165 = vpop.permute.xlu0 %4164
        %4166 = vrot.lane.b32.xlu0 %v3835, 32
        %v4167 = vpop.permute.xlu0 %4166
        %4168 = vrot.lane.b32.xlu0 %v3836, 32
        %v4169 = vpop.permute.xlu0 %4168
        %4170 = vrot.lane.b32.xlu0 %v3837, 32
        %v4171 = vpop.permute.xlu0 %4170
        %4172 = vrot.lane.b32.xlu0 %v3838, 32
        %v4173 = vpop.permute.xlu0 %4172
        %4174 = vrot.lane.b32.xlu0 %v3839, 32
        %v4175 = vpop.permute.xlu0 %4174
        %4176 = vrot.lane.b32.xlu0 %v3840, 32
        %v4177 = vpop.permute.xlu0 %4176
        %v4186 = vmul.f32 %v3804, %v4163
        %v4187 = vmul.f32 %v3806, %v4165
        %v4188 = vmul.f32 %v3809, %v4167
        %v4189 = vmul.f32 %v3811, %v4169
        %v4190 = vmul.f32 %v3814, %v4171
        %v4191 = vmul.f32 %v3816, %v4173
        %v4192 = vmul.f32 %v3819, %v4175
        %v4193 = vmul.f32 %v3821, %v4177
        %4194 = vrot.lane.b32.xlu0 %v3824, 48
        %v4195 = vpop.permute.xlu0 %4194
        %4196 = vrot.lane.b32.xlu0 %v3825, 48
        %v4197 = vpop.permute.xlu0 %4196
        %4198 = vrot.lane.b32.xlu0 %v3826, 48
        %v4199 = vpop.permute.xlu0 %4198
        %4200 = vrot.lane.b32.xlu0 %v3827, 48
        %v4201 = vpop.permute.xlu0 %4200
        %4202 = vrot.lane.b32.xlu0 %v3828, 48
        %v4203 = vpop.permute.xlu0 %4202
        %4204 = vrot.lane.b32.xlu0 %v3829, 48
        %v4205 = vpop.permute.xlu0 %4204
        %4206 = vrot.lane.b32.xlu0 %v3830, 48
        %v4207 = vpop.permute.xlu0 %4206
        %4208 = vrot.lane.b32.xlu0 %v3831, 48
        %v4209 = vpop.permute.xlu0 %4208
        %v4218 = vmul.f32 %v3804, %v4195
        %v4219 = vmul.f32 %v3806, %v4197
        %v4220 = vmul.f32 %v3809, %v4199
        %v4221 = vmul.f32 %v3811, %v4201
        %v4222 = vmul.f32 %v3814, %v4203
        %v4223 = vmul.f32 %v3816, %v4205
        %v4224 = vmul.f32 %v3819, %v4207
        %v4225 = vmul.f32 %v3821, %v4209
        %4234 = vrot.lane.b32.xlu0 %v4218, 112
        %v4235 = vpop.permute.xlu0 %4234
        %4236 = vrot.lane.b32.xlu0 %v4219, 112
        %v4237 = vpop.permute.xlu0 %4236
        %4238 = vrot.lane.b32.xlu0 %v4220, 112
        %v4239 = vpop.permute.xlu0 %4238
        %4240 = vrot.lane.b32.xlu0 %v4221, 112
        %v4241 = vpop.permute.xlu0 %4240
        %4242 = vrot.lane.b32.xlu0 %v4222, 112
        %v4243 = vpop.permute.xlu0 %4242
        %4244 = vrot.lane.b32.xlu0 %v4223, 112
        %v4245 = vpop.permute.xlu0 %4244
        %4246 = vrot.lane.b32.xlu0 %v4224, 112
        %v4247 = vpop.permute.xlu0 %4246
        %4248 = vrot.lane.b32.xlu0 %v4225, 112
        %v4249 = vpop.permute.xlu0 %4248
        %v4258 = vadd.f32 %v4186, %v4235
        %v4259 = vadd.f32 %v4187, %v4237
        %v4260 = vadd.f32 %v4188, %v4239
        %v4261 = vadd.f32 %v4189, %v4241
        %v4262 = vadd.f32 %v4190, %v4243
        %v4263 = vadd.f32 %v4191, %v4245
        %v4264 = vadd.f32 %v4192, %v4247
        %v4265 = vadd.f32 %v4193, %v4249
        %4274 = vrot.lane.b32.xlu0 %v4154, 96
        %v4275 = vpop.permute.xlu0 %4274
        %4276 = vrot.lane.b32.xlu0 %v4155, 96
        %v4277 = vpop.permute.xlu0 %4276
        %4278 = vrot.lane.b32.xlu0 %v4156, 96
        %v4279 = vpop.permute.xlu0 %4278
        %4280 = vrot.lane.b32.xlu0 %v4157, 96
        %v4281 = vpop.permute.xlu0 %4280
        %4282 = vrot.lane.b32.xlu0 %v4158, 96
        %v4283 = vpop.permute.xlu0 %4282
        %4284 = vrot.lane.b32.xlu0 %v4159, 96
        %v4285 = vpop.permute.xlu0 %4284
        %4286 = vrot.lane.b32.xlu0 %v4160, 96
        %v4287 = vpop.permute.xlu0 %4286
        %4288 = vrot.lane.b32.xlu0 %v4161, 96
        %v4289 = vpop.permute.xlu0 %4288
        %4306 = vrot.lane.b32.xlu0 %v4258, 112
        %v4307 = vpop.permute.xlu0 %4306
        %4308 = vrot.lane.b32.xlu0 %v4259, 112
        %v4309 = vpop.permute.xlu0 %4308
        %4310 = vrot.lane.b32.xlu0 %v4260, 112
        %v4311 = vpop.permute.xlu0 %4310
        %4312 = vrot.lane.b32.xlu0 %v4261, 112
        %v4313 = vpop.permute.xlu0 %4312
        %4314 = vrot.lane.b32.xlu0 %v4262, 112
        %v4315 = vpop.permute.xlu0 %4314
        %4316 = vrot.lane.b32.xlu0 %v4263, 112
        %v4317 = vpop.permute.xlu0 %4316
        %4318 = vrot.lane.b32.xlu0 %v4264, 112
        %v4319 = vpop.permute.xlu0 %4318
        %4320 = vrot.lane.b32.xlu0 %v4265, 112
        %v4321 = vpop.permute.xlu0 %4320
        %v4330 = vsel %vm4049, %v4275, %v4307
        %v4331 = vsel %vm4049, %v4277, %v4309
        %v4332 = vsel %vm4049, %v4279, %v4311
        %v4333 = vsel %vm4049, %v4281, %v4313
        %v4334 = vsel %vm4049, %v4283, %v4315
        %v4335 = vsel %vm4049, %v4285, %v4317
        %v4336 = vsel %vm4049, %v4287, %v4319
        %v4337 = vsel %vm4049, %v4289, %v4321
        %4338 = vrot.lane.b32.xlu0 %v3824, 64
        %v4339 = vpop.permute.xlu0 %4338
        %4340 = vrot.lane.b32.xlu0 %v3825, 64
        %v4341 = vpop.permute.xlu0 %4340
        %4342 = vrot.lane.b32.xlu0 %v3826, 64
        %v4343 = vpop.permute.xlu0 %4342
        %4344 = vrot.lane.b32.xlu0 %v3827, 64
        %v4345 = vpop.permute.xlu0 %4344
        %4346 = vrot.lane.b32.xlu0 %v3828, 64
        %v4347 = vpop.permute.xlu0 %4346
        %4348 = vrot.lane.b32.xlu0 %v3829, 64
        %v4349 = vpop.permute.xlu0 %4348
        %4350 = vrot.lane.b32.xlu0 %v3830, 64
        %v4351 = vpop.permute.xlu0 %4350
        %4352 = vrot.lane.b32.xlu0 %v3831, 64
        %v4353 = vpop.permute.xlu0 %4352
        %v4362 = vmul.f32 %v3804, %v4339
        %v4363 = vmul.f32 %v3806, %v4341
        %v4364 = vmul.f32 %v3809, %v4343
        %v4365 = vmul.f32 %v3811, %v4345
        %v4366 = vmul.f32 %v3814, %v4347
        %v4367 = vmul.f32 %v3816, %v4349
        %v4368 = vmul.f32 %v3819, %v4351
        %v4369 = vmul.f32 %v3821, %v4353
        %4370 = vrot.lane.b32.xlu0 %v3833, 80
        %v4371 = vpop.permute.xlu0 %4370
        %4372 = vrot.lane.b32.xlu0 %v3834, 80
        %v4373 = vpop.permute.xlu0 %4372
        %4374 = vrot.lane.b32.xlu0 %v3835, 80
        %v4375 = vpop.permute.xlu0 %4374
        %4376 = vrot.lane.b32.xlu0 %v3836, 80
        %v4377 = vpop.permute.xlu0 %4376
        %4378 = vrot.lane.b32.xlu0 %v3837, 80
        %v4379 = vpop.permute.xlu0 %4378
        %4380 = vrot.lane.b32.xlu0 %v3838, 80
        %v4381 = vpop.permute.xlu0 %4380
        %4382 = vrot.lane.b32.xlu0 %v3839, 80
        %v4383 = vpop.permute.xlu0 %4382
        %4384 = vrot.lane.b32.xlu0 %v3840, 80
        %v4385 = vpop.permute.xlu0 %4384
        %v4394 = vmul.f32 %v3804, %v4371
        %v4395 = vmul.f32 %v3806, %v4373
        %v4396 = vmul.f32 %v3809, %v4375
        %v4397 = vmul.f32 %v3811, %v4377
        %v4398 = vmul.f32 %v3814, %v4379
        %v4399 = vmul.f32 %v3816, %v4381
        %v4400 = vmul.f32 %v3819, %v4383
        %v4401 = vmul.f32 %v3821, %v4385
        %4410 = vrot.lane.b32.xlu0 %v4394, 112
        %v4411 = vpop.permute.xlu0 %4410
        %4412 = vrot.lane.b32.xlu0 %v4395, 112
        %v4413 = vpop.permute.xlu0 %4412
        %4414 = vrot.lane.b32.xlu0 %v4396, 112
        %v4415 = vpop.permute.xlu0 %4414
        %4416 = vrot.lane.b32.xlu0 %v4397, 112
        %v4417 = vpop.permute.xlu0 %4416
        %4418 = vrot.lane.b32.xlu0 %v4398, 112
        %v4419 = vpop.permute.xlu0 %4418
        %4420 = vrot.lane.b32.xlu0 %v4399, 112
        %v4421 = vpop.permute.xlu0 %4420
        %4422 = vrot.lane.b32.xlu0 %v4400, 112
        %v4423 = vpop.permute.xlu0 %4422
        %4424 = vrot.lane.b32.xlu0 %v4401, 112
        %v4425 = vpop.permute.xlu0 %4424
        %v4434 = vsub.f32 %v4362, %v4411
        %v4435 = vsub.f32 %v4363, %v4413
        %v4436 = vsub.f32 %v4364, %v4415
        %v4437 = vsub.f32 %v4365, %v4417
        %v4438 = vsub.f32 %v4366, %v4419
        %v4439 = vsub.f32 %v4367, %v4421
        %v4440 = vsub.f32 %v4368, %v4423
        %v4441 = vsub.f32 %v4369, %v4425
        %4442 = vrot.lane.b32.xlu0 %v3833, 64
        %v4443 = vpop.permute.xlu0 %4442
        %4444 = vrot.lane.b32.xlu0 %v3834, 64
        %v4445 = vpop.permute.xlu0 %4444
        %4446 = vrot.lane.b32.xlu0 %v3835, 64
        %v4447 = vpop.permute.xlu0 %4446
        %4448 = vrot.lane.b32.xlu0 %v3836, 64
        %v4449 = vpop.permute.xlu0 %4448
        %4450 = vrot.lane.b32.xlu0 %v3837, 64
        %v4451 = vpop.permute.xlu0 %4450
        %4452 = vrot.lane.b32.xlu0 %v3838, 64
        %v4453 = vpop.permute.xlu0 %4452
        %4454 = vrot.lane.b32.xlu0 %v3839, 64
        %v4455 = vpop.permute.xlu0 %4454
        %4456 = vrot.lane.b32.xlu0 %v3840, 64
        %v4457 = vpop.permute.xlu0 %4456
        %v4466 = vmul.f32 %v3804, %v4443
        %v4467 = vmul.f32 %v3806, %v4445
        %v4468 = vmul.f32 %v3809, %v4447
        %v4469 = vmul.f32 %v3811, %v4449
        %v4470 = vmul.f32 %v3814, %v4451
        %v4471 = vmul.f32 %v3816, %v4453
        %v4472 = vmul.f32 %v3819, %v4455
        %v4473 = vmul.f32 %v3821, %v4457
        %4474 = vrot.lane.b32.xlu0 %v3824, 80
        %v4475 = vpop.permute.xlu0 %4474
        %4476 = vrot.lane.b32.xlu0 %v3825, 80
        %v4477 = vpop.permute.xlu0 %4476
        %4478 = vrot.lane.b32.xlu0 %v3826, 80
        %v4479 = vpop.permute.xlu0 %4478
        %4480 = vrot.lane.b32.xlu0 %v3827, 80
        %v4481 = vpop.permute.xlu0 %4480
        %4482 = vrot.lane.b32.xlu0 %v3828, 80
        %v4483 = vpop.permute.xlu0 %4482
        %4484 = vrot.lane.b32.xlu0 %v3829, 80
        %v4485 = vpop.permute.xlu0 %4484
        %4486 = vrot.lane.b32.xlu0 %v3830, 80
        %v4487 = vpop.permute.xlu0 %4486
        %4488 = vrot.lane.b32.xlu0 %v3831, 80
        %v4489 = vpop.permute.xlu0 %4488
        %v4498 = vmul.f32 %v3804, %v4475
        %v4499 = vmul.f32 %v3806, %v4477
        %v4500 = vmul.f32 %v3809, %v4479
        %v4501 = vmul.f32 %v3811, %v4481
        %v4502 = vmul.f32 %v3814, %v4483
        %v4503 = vmul.f32 %v3816, %v4485
        %v4504 = vmul.f32 %v3819, %v4487
        %v4505 = vmul.f32 %v3821, %v4489
        %4514 = vrot.lane.b32.xlu0 %v4498, 112
        %v4515 = vpop.permute.xlu0 %4514
        %4516 = vrot.lane.b32.xlu0 %v4499, 112
        %v4517 = vpop.permute.xlu0 %4516
        %4518 = vrot.lane.b32.xlu0 %v4500, 112
        %v4519 = vpop.permute.xlu0 %4518
        %4520 = vrot.lane.b32.xlu0 %v4501, 112
        %v4521 = vpop.permute.xlu0 %4520
        %4522 = vrot.lane.b32.xlu0 %v4502, 112
        %v4523 = vpop.permute.xlu0 %4522
        %4524 = vrot.lane.b32.xlu0 %v4503, 112
        %v4525 = vpop.permute.xlu0 %4524
        %4526 = vrot.lane.b32.xlu0 %v4504, 112
        %v4527 = vpop.permute.xlu0 %4526
        %4528 = vrot.lane.b32.xlu0 %v4505, 112
        %v4529 = vpop.permute.xlu0 %4528
        %v4538 = vadd.f32 %v4466, %v4515
        %v4539 = vadd.f32 %v4467, %v4517
        %v4540 = vadd.f32 %v4468, %v4519
        %v4541 = vadd.f32 %v4469, %v4521
        %v4542 = vadd.f32 %v4470, %v4523
        %v4543 = vadd.f32 %v4471, %v4525
        %v4544 = vadd.f32 %v4472, %v4527
        %v4545 = vadd.f32 %v4473, %v4529
        %4554 = vrot.lane.b32.xlu0 %v4434, 64
        %v4555 = vpop.permute.xlu0 %4554
        %4556 = vrot.lane.b32.xlu0 %v4435, 64
        %v4557 = vpop.permute.xlu0 %4556
        %4558 = vrot.lane.b32.xlu0 %v4436, 64
        %v4559 = vpop.permute.xlu0 %4558
        %4560 = vrot.lane.b32.xlu0 %v4437, 64
        %v4561 = vpop.permute.xlu0 %4560
        %4562 = vrot.lane.b32.xlu0 %v4438, 64
        %v4563 = vpop.permute.xlu0 %4562
        %4564 = vrot.lane.b32.xlu0 %v4439, 64
        %v4565 = vpop.permute.xlu0 %4564
        %4566 = vrot.lane.b32.xlu0 %v4440, 64
        %v4567 = vpop.permute.xlu0 %4566
        %4568 = vrot.lane.b32.xlu0 %v4441, 64
        %v4569 = vpop.permute.xlu0 %4568
        %4586 = vrot.lane.b32.xlu0 %v4538, 80
        %v4587 = vpop.permute.xlu0 %4586
        %4588 = vrot.lane.b32.xlu0 %v4539, 80
        %v4589 = vpop.permute.xlu0 %4588
        %4590 = vrot.lane.b32.xlu0 %v4540, 80
        %v4591 = vpop.permute.xlu0 %4590
        %4592 = vrot.lane.b32.xlu0 %v4541, 80
        %v4593 = vpop.permute.xlu0 %4592
        %4594 = vrot.lane.b32.xlu0 %v4542, 80
        %v4595 = vpop.permute.xlu0 %4594
        %4596 = vrot.lane.b32.xlu0 %v4543, 80
        %v4597 = vpop.permute.xlu0 %4596
        %4598 = vrot.lane.b32.xlu0 %v4544, 80
        %v4599 = vpop.permute.xlu0 %4598
        %4600 = vrot.lane.b32.xlu0 %v4545, 80
        %v4601 = vpop.permute.xlu0 %4600
        %v4610 = vsel %vm4049, %v4555, %v4587
        %v4611 = vsel %vm4049, %v4557, %v4589
        %v4612 = vsel %vm4049, %v4559, %v4591
        %v4613 = vsel %vm4049, %v4561, %v4593
        %v4614 = vsel %vm4049, %v4563, %v4595
        %v4615 = vsel %vm4049, %v4565, %v4597
        %v4616 = vsel %vm4049, %v4567, %v4599
        %v4617 = vsel %vm4049, %v4569, %v4601
        %4618 = vrot.lane.b32.xlu0 %v3824, 96
        %v4619 = vpop.permute.xlu0 %4618
        %4620 = vrot.lane.b32.xlu0 %v3825, 96
        %v4621 = vpop.permute.xlu0 %4620
        %4622 = vrot.lane.b32.xlu0 %v3826, 96
        %v4623 = vpop.permute.xlu0 %4622
        %4624 = vrot.lane.b32.xlu0 %v3827, 96
        %v4625 = vpop.permute.xlu0 %4624
        %4626 = vrot.lane.b32.xlu0 %v3828, 96
        %v4627 = vpop.permute.xlu0 %4626
        %4628 = vrot.lane.b32.xlu0 %v3829, 96
        %v4629 = vpop.permute.xlu0 %4628
        %4630 = vrot.lane.b32.xlu0 %v3830, 96
        %v4631 = vpop.permute.xlu0 %4630
        %4632 = vrot.lane.b32.xlu0 %v3831, 96
        %v4633 = vpop.permute.xlu0 %4632
        %v4642 = vmul.f32 %v3804, %v4619
        %v4643 = vmul.f32 %v3806, %v4621
        %v4644 = vmul.f32 %v3809, %v4623
        %v4645 = vmul.f32 %v3811, %v4625
        %v4646 = vmul.f32 %v3814, %v4627
        %v4647 = vmul.f32 %v3816, %v4629
        %v4648 = vmul.f32 %v3819, %v4631
        %v4649 = vmul.f32 %v3821, %v4633
        %4650 = vrot.lane.b32.xlu0 %v3833, 112
        %v4651 = vpop.permute.xlu0 %4650
        %4652 = vrot.lane.b32.xlu0 %v3834, 112
        %v4653 = vpop.permute.xlu0 %4652
        %4654 = vrot.lane.b32.xlu0 %v3835, 112
        %v4655 = vpop.permute.xlu0 %4654
        %4656 = vrot.lane.b32.xlu0 %v3836, 112
        %v4657 = vpop.permute.xlu0 %4656
        %4658 = vrot.lane.b32.xlu0 %v3837, 112
        %v4659 = vpop.permute.xlu0 %4658
        %4660 = vrot.lane.b32.xlu0 %v3838, 112
        %v4661 = vpop.permute.xlu0 %4660
        %4662 = vrot.lane.b32.xlu0 %v3839, 112
        %v4663 = vpop.permute.xlu0 %4662
        %4664 = vrot.lane.b32.xlu0 %v3840, 112
        %v4665 = vpop.permute.xlu0 %4664
        %v4674 = vmul.f32 %v3804, %v4651
        %v4675 = vmul.f32 %v3806, %v4653
        %v4676 = vmul.f32 %v3809, %v4655
        %v4677 = vmul.f32 %v3811, %v4657
        %v4678 = vmul.f32 %v3814, %v4659
        %v4679 = vmul.f32 %v3816, %v4661
        %v4680 = vmul.f32 %v3819, %v4663
        %v4681 = vmul.f32 %v3821, %v4665
        %4690 = vrot.lane.b32.xlu0 %v4674, 112
        %v4691 = vpop.permute.xlu0 %4690
        %4692 = vrot.lane.b32.xlu0 %v4675, 112
        %v4693 = vpop.permute.xlu0 %4692
        %4694 = vrot.lane.b32.xlu0 %v4676, 112
        %v4695 = vpop.permute.xlu0 %4694
        %4696 = vrot.lane.b32.xlu0 %v4677, 112
        %v4697 = vpop.permute.xlu0 %4696
        %4698 = vrot.lane.b32.xlu0 %v4678, 112
        %v4699 = vpop.permute.xlu0 %4698
        %4700 = vrot.lane.b32.xlu0 %v4679, 112
        %v4701 = vpop.permute.xlu0 %4700
        %4702 = vrot.lane.b32.xlu0 %v4680, 112
        %v4703 = vpop.permute.xlu0 %4702
        %4704 = vrot.lane.b32.xlu0 %v4681, 112
        %v4705 = vpop.permute.xlu0 %4704
        %v4714 = vsub.f32 %v4642, %v4691
        %v4715 = vsub.f32 %v4643, %v4693
        %v4716 = vsub.f32 %v4644, %v4695
        %v4717 = vsub.f32 %v4645, %v4697
        %v4718 = vsub.f32 %v4646, %v4699
        %v4719 = vsub.f32 %v4647, %v4701
        %v4720 = vsub.f32 %v4648, %v4703
        %v4721 = vsub.f32 %v4649, %v4705
        %4722 = vrot.lane.b32.xlu0 %v3833, 96
        %v4723 = vpop.permute.xlu0 %4722
        %4724 = vrot.lane.b32.xlu0 %v3834, 96
        %v4725 = vpop.permute.xlu0 %4724
        %4726 = vrot.lane.b32.xlu0 %v3835, 96
        %v4727 = vpop.permute.xlu0 %4726
        %4728 = vrot.lane.b32.xlu0 %v3836, 96
        %v4729 = vpop.permute.xlu0 %4728
        %4730 = vrot.lane.b32.xlu0 %v3837, 96
        %v4731 = vpop.permute.xlu0 %4730
        %4732 = vrot.lane.b32.xlu0 %v3838, 96
        %v4733 = vpop.permute.xlu0 %4732
        %4734 = vrot.lane.b32.xlu0 %v3839, 96
        %v4735 = vpop.permute.xlu0 %4734
        %4736 = vrot.lane.b32.xlu0 %v3840, 96
        %v4737 = vpop.permute.xlu0 %4736
        %v4746 = vmul.f32 %v3804, %v4723
        %v4747 = vmul.f32 %v3806, %v4725
        %v4748 = vmul.f32 %v3809, %v4727
        %v4749 = vmul.f32 %v3811, %v4729
        %v4750 = vmul.f32 %v3814, %v4731
        %v4751 = vmul.f32 %v3816, %v4733
        %v4752 = vmul.f32 %v3819, %v4735
        %v4753 = vmul.f32 %v3821, %v4737
        %4754 = vrot.lane.b32.xlu0 %v3824, 112
        %v4755 = vpop.permute.xlu0 %4754
        %4756 = vrot.lane.b32.xlu0 %v3825, 112
        %v4757 = vpop.permute.xlu0 %4756
        %4758 = vrot.lane.b32.xlu0 %v3826, 112
        %v4759 = vpop.permute.xlu0 %4758
        %4760 = vrot.lane.b32.xlu0 %v3827, 112
        %v4761 = vpop.permute.xlu0 %4760
        %4762 = vrot.lane.b32.xlu0 %v3828, 112
        %v4763 = vpop.permute.xlu0 %4762
        %4764 = vrot.lane.b32.xlu0 %v3829, 112
        %v4765 = vpop.permute.xlu0 %4764
        %4766 = vrot.lane.b32.xlu0 %v3830, 112
        %v4767 = vpop.permute.xlu0 %4766
        %4768 = vrot.lane.b32.xlu0 %v3831, 112
        %v4769 = vpop.permute.xlu0 %4768
        %v4778 = vmul.f32 %v3804, %v4755
        %v4779 = vmul.f32 %v3806, %v4757
        %v4780 = vmul.f32 %v3809, %v4759
        %v4781 = vmul.f32 %v3811, %v4761
        %v4782 = vmul.f32 %v3814, %v4763
        %v4783 = vmul.f32 %v3816, %v4765
        %v4784 = vmul.f32 %v3819, %v4767
        %v4785 = vmul.f32 %v3821, %v4769
        %4794 = vrot.lane.b32.xlu0 %v4778, 112
        %v4795 = vpop.permute.xlu0 %4794
        %4796 = vrot.lane.b32.xlu0 %v4779, 112
        %v4797 = vpop.permute.xlu0 %4796
        %4798 = vrot.lane.b32.xlu0 %v4780, 112
        %v4799 = vpop.permute.xlu0 %4798
        %4800 = vrot.lane.b32.xlu0 %v4781, 112
        %v4801 = vpop.permute.xlu0 %4800
        %4802 = vrot.lane.b32.xlu0 %v4782, 112
        %v4803 = vpop.permute.xlu0 %4802
        %4804 = vrot.lane.b32.xlu0 %v4783, 112
        %v4805 = vpop.permute.xlu0 %4804
        %4806 = vrot.lane.b32.xlu0 %v4784, 112
        %v4807 = vpop.permute.xlu0 %4806
        %4808 = vrot.lane.b32.xlu0 %v4785, 112
        %v4809 = vpop.permute.xlu0 %4808
        %v4818 = vadd.f32 %v4746, %v4795
        %v4819 = vadd.f32 %v4747, %v4797
        %v4820 = vadd.f32 %v4748, %v4799
        %v4821 = vadd.f32 %v4749, %v4801
        %v4822 = vadd.f32 %v4750, %v4803
        %v4823 = vadd.f32 %v4751, %v4805
        %v4824 = vadd.f32 %v4752, %v4807
        %v4825 = vadd.f32 %v4753, %v4809
        %4834 = vrot.lane.b32.xlu0 %v4714, 32
        %v4835 = vpop.permute.xlu0 %4834
        %4836 = vrot.lane.b32.xlu0 %v4715, 32
        %v4837 = vpop.permute.xlu0 %4836
        %4838 = vrot.lane.b32.xlu0 %v4716, 32
        %v4839 = vpop.permute.xlu0 %4838
        %4840 = vrot.lane.b32.xlu0 %v4717, 32
        %v4841 = vpop.permute.xlu0 %4840
        %4842 = vrot.lane.b32.xlu0 %v4718, 32
        %v4843 = vpop.permute.xlu0 %4842
        %4844 = vrot.lane.b32.xlu0 %v4719, 32
        %v4845 = vpop.permute.xlu0 %4844
        %4846 = vrot.lane.b32.xlu0 %v4720, 32
        %v4847 = vpop.permute.xlu0 %4846
        %4848 = vrot.lane.b32.xlu0 %v4721, 32
        %v4849 = vpop.permute.xlu0 %4848
        %4866 = vrot.lane.b32.xlu0 %v4818, 48
        %v4867 = vpop.permute.xlu0 %4866
        %4868 = vrot.lane.b32.xlu0 %v4819, 48
        %v4869 = vpop.permute.xlu0 %4868
        %4870 = vrot.lane.b32.xlu0 %v4820, 48
        %v4871 = vpop.permute.xlu0 %4870
        %4872 = vrot.lane.b32.xlu0 %v4821, 48
        %v4873 = vpop.permute.xlu0 %4872
        %4874 = vrot.lane.b32.xlu0 %v4822, 48
        %v4875 = vpop.permute.xlu0 %4874
        %4876 = vrot.lane.b32.xlu0 %v4823, 48
        %v4877 = vpop.permute.xlu0 %4876
        %4878 = vrot.lane.b32.xlu0 %v4824, 48
        %v4879 = vpop.permute.xlu0 %4878
        %4880 = vrot.lane.b32.xlu0 %v4825, 48
        %v4881 = vpop.permute.xlu0 %4880
        %v4890 = vsel %vm4049, %v4835, %v4867
        %v4891 = vsel %vm4049, %v4837, %v4869
        %v4892 = vsel %vm4049, %v4839, %v4871
        %v4893 = vsel %vm4049, %v4841, %v4873
        %v4894 = vsel %vm4049, %v4843, %v4875
        %v4895 = vsel %vm4049, %v4845, %v4877
        %v4896 = vsel %vm4049, %v4847, %v4879
        %v4897 = vsel %vm4049, %v4849, %v4881
        %v4898 = vpack.c.bf16 %v4050, %v4050
        %v4899 = vpack.c.bf16 %v4051, %v4051
        %v4900 = vpack.c.bf16 %v4052, %v4052
        %v4901 = vpack.c.bf16 %v4053, %v4053
        %v4902 = vpack.c.bf16 %v4054, %v4054
        %v4903 = vpack.c.bf16 %v4055, %v4055
        %v4904 = vpack.c.bf16 %v4056, %v4056
        %v4905 = vpack.c.bf16 %v4057, %v4057
        %v4906 = vpack.c.bf16 %v4330, %v4330
        %v4907 = vpack.c.bf16 %v4331, %v4331
        %v4908 = vpack.c.bf16 %v4332, %v4332
        %v4909 = vpack.c.bf16 %v4333, %v4333
        %v4910 = vpack.c.bf16 %v4334, %v4334
        %v4911 = vpack.c.bf16 %v4335, %v4335
        %v4912 = vpack.c.bf16 %v4336, %v4336
        %v4913 = vpack.c.bf16 %v4337, %v4337
        %v4914 = vpack.c.bf16 %v4610, %v4610
        %v4915 = vpack.c.bf16 %v4611, %v4611
        %v4916 = vpack.c.bf16 %v4612, %v4612
        %v4917 = vpack.c.bf16 %v4613, %v4613
        %v4918 = vpack.c.bf16 %v4614, %v4614
        %v4919 = vpack.c.bf16 %v4615, %v4615
        %v4920 = vpack.c.bf16 %v4616, %v4616
        %v4921 = vpack.c.bf16 %v4617, %v4617
        %v4922 = vpack.c.bf16 %v4890, %v4890
        %v4923 = vpack.c.bf16 %v4891, %v4891
        %v4924 = vpack.c.bf16 %v4892, %v4892
        %v4925 = vpack.c.bf16 %v4893, %v4893
        %v4926 = vpack.c.bf16 %v4894, %v4894
        %v4927 = vpack.c.bf16 %v4895, %v4895
        %v4928 = vpack.c.bf16 %v4896, %v4896
        %v4929 = vpack.c.bf16 %v4897, %v4897
        // While loop
        $region93: #{tpu_custom_call.1} parent=63 // loop_pre_header
          _
        $region94: #{tpu_custom_call.1} parent=63 // loop_header
          %s4931 = sphi 0, %s4933
          %p4932 = scmp.ge.s32.totalorder %s4931, %s36
          %v4936 = vphi -1e+30, %v5573
          %v4937 = vphi -1e+30, %v5574
          %v4938 = vphi -1e+30, %v5575
          %v4939 = vphi -1e+30, %v5576
          %v4940 = vphi -1e+30, %v5577
          %v4941 = vphi -1e+30, %v5578
          %v4942 = vphi -1e+30, %v5579
          %v4943 = vphi -1e+30, %v5580
          %v4944 = vphi -1e+30, %v5581
          %v4945 = vphi -1e+30, %v5582
          %v4946 = vphi -1e+30, %v5583
          %v4947 = vphi -1e+30, %v5584
          %v4948 = vphi -1e+30, %v5585
          %v4949 = vphi -1e+30, %v5586
          %v4950 = vphi -1e+30, %v5587
          %v4951 = vphi -1e+30, %v5588
          %v4952 = vphi -1e+30, %v5589
          %v4953 = vphi -1e+30, %v5590
          %v4954 = vphi -1e+30, %v5591
          %v4955 = vphi -1e+30, %v5592
          %v4956 = vphi -1e+30, %v5593
          %v4957 = vphi -1e+30, %v5594
          %v4958 = vphi -1e+30, %v5595
          %v4959 = vphi -1e+30, %v5596
          %v4960 = vphi -1e+30, %v5597
          %v4961 = vphi -1e+30, %v5598
          %v4962 = vphi -1e+30, %v5599
          %v4963 = vphi -1e+30, %v5600
          %v4964 = vphi -1e+30, %v5601
          %v4965 = vphi -1e+30, %v5602
          %v4966 = vphi -1e+30, %v5603
          %v4967 = vphi -1e+30, %v5604
          %v4968 = vphi 0.0, %v5925
          %v4969 = vphi 0.0, %v5926
          %v4970 = vphi 0.0, %v5927
          %v4971 = vphi 0.0, %v5928
          %v4972 = vphi 0.0, %v5929
          %v4973 = vphi 0.0, %v5930
          %v4974 = vphi 0.0, %v5931
          %v4975 = vphi 0.0, %v5932
          %v4976 = vphi 0.0, %v5933
          %v4977 = vphi 0.0, %v5934
          %v4978 = vphi 0.0, %v5935
          %v4979 = vphi 0.0, %v5936
          %v4980 = vphi 0.0, %v5937
          %v4981 = vphi 0.0, %v5938
          %v4982 = vphi 0.0, %v5939
          %v4983 = vphi 0.0, %v5940
          %v4984 = vphi 0.0, %v5941
          %v4985 = vphi 0.0, %v5942
          %v4986 = vphi 0.0, %v5943
          %v4987 = vphi 0.0, %v5944
          %v4988 = vphi 0.0, %v5945
          %v4989 = vphi 0.0, %v5946
          %v4990 = vphi 0.0, %v5947
          %v4991 = vphi 0.0, %v5948
          %v4992 = vphi 0.0, %v5949
          %v4993 = vphi 0.0, %v5950
          %v4994 = vphi 0.0, %v5951
          %v4995 = vphi 0.0, %v5952
          %v4996 = vphi 0.0, %v5953
          %v4997 = vphi 0.0, %v5954
          %v4998 = vphi 0.0, %v5955
          %v4999 = vphi 0.0, %v5956
          %v5000 = vphi 0.0, %v6361
          %v5001 = vphi 0.0, %v6362
          %v5002 = vphi 0.0, %v6363
          %v5003 = vphi 0.0, %v6364
          %v5004 = vphi 0.0, %v6365
          %v5005 = vphi 0.0, %v6366
          %v5006 = vphi 0.0, %v6367
          %v5007 = vphi 0.0, %v6368
          %v5008 = vphi 0.0, %v6369
          %v5009 = vphi 0.0, %v6370
          %v5010 = vphi 0.0, %v6371
          %v5011 = vphi 0.0, %v6372
          %v5012 = vphi 0.0, %v6373
          %v5013 = vphi 0.0, %v6374
          %v5014 = vphi 0.0, %v6375
          %v5015 = vphi 0.0, %v6376
          %v5016 = vphi 0.0, %v6377
          %v5017 = vphi 0.0, %v6378
          %v5018 = vphi 0.0, %v6379
          %v5019 = vphi 0.0, %v6380
          %v5020 = vphi 0.0, %v6381
          %v5021 = vphi 0.0, %v6382
          %v5022 = vphi 0.0, %v6383
          %v5023 = vphi 0.0, %v6384
          %v5024 = vphi 0.0, %v6385
          %v5025 = vphi 0.0, %v6386
          %v5026 = vphi 0.0, %v6387
          %v5027 = vphi 0.0, %v6388
          %v5028 = vphi 0.0, %v6389
          %v5029 = vphi 0.0, %v6390
          %v5030 = vphi 0.0, %v6391
          %v5031 = vphi 0.0, %v6392
        $region95: #{tpu_custom_call.1} parent=63 // loop_header_branch
          %4935 = sbr.rel (%p4932) target = $region99
        $region96: #{tpu_custom_call.1} parent=63 // loop_body
          %s5032 = smul.u32 %s4931, 64
          %s5033 = sshra.s32 %s5032, 3
          %s5034 = sand.u32 %s5032, 7
          %s5035 = smul.addr %s5033, 4
          %s5036 = scalar_lea.vmem [#allocation3], %s5035
          %v5037 = vld [vmem:[%s5036] sm:$0xf]
          %v5038 = vld [vmem:[%s5036 + $0x4] sm:$0xf]
          %v5039 = vld [vmem:[%s5036 + $0x8] sm:$0xf]
          %v5040 = vld [vmem:[%s5036 + $0xc] sm:$0xf]
          %v5041 = vld [vmem:[%s5036 + $0x10] sm:$0xf]
          %v5042 = vld [vmem:[%s5036 + $0x14] sm:$0xf]
          %v5043 = vld [vmem:[%s5036 + $0x18] sm:$0xf]
          %v5044 = vld [vmem:[%s5036 + $0x1c] sm:$0xf]
          %v5045 = vld [vmem:[%s5036 + $0x40] sm:$0xf]
          %v5046 = vld [vmem:[%s5036 + $0x44] sm:$0xf]
          %v5047 = vld [vmem:[%s5036 + $0x48] sm:$0xf]
          %v5048 = vld [vmem:[%s5036 + $0x4c] sm:$0xf]
          %v5049 = vld [vmem:[%s5036 + $0x50] sm:$0xf]
          %v5050 = vld [vmem:[%s5036 + $0x54] sm:$0xf]
          %v5051 = vld [vmem:[%s5036 + $0x58] sm:$0xf]
          %v5052 = vld [vmem:[%s5036 + $0x5c] sm:$0xf]
          %v5053 = vld [vmem:[%s5036 + $0x80] sm:$0xf]
          %v5054 = vld [vmem:[%s5036 + $0x84] sm:$0xf]
          %v5055 = vld [vmem:[%s5036 + $0x88] sm:$0xf]
          %v5056 = vld [vmem:[%s5036 + $0x8c] sm:$0xf]
          %v5057 = vld [vmem:[%s5036 + $0x90] sm:$0xf]
          %v5058 = vld [vmem:[%s5036 + $0x94] sm:$0xf]
          %v5059 = vld [vmem:[%s5036 + $0x98] sm:$0xf]
          %v5060 = vld [vmem:[%s5036 + $0x9c] sm:$0xf]
          %v5061 = vld [vmem:[%s5036 + $0xc0] sm:$0xf]
          %v5062 = vld [vmem:[%s5036 + $0xc4] sm:$0xf]
          %v5063 = vld [vmem:[%s5036 + $0xc8] sm:$0xf]
          %v5064 = vld [vmem:[%s5036 + $0xcc] sm:$0xf]
          %v5065 = vld [vmem:[%s5036 + $0xd0] sm:$0xf]
          %v5066 = vld [vmem:[%s5036 + $0xd4] sm:$0xf]
          %v5067 = vld [vmem:[%s5036 + $0xd8] sm:$0xf]
          %v5068 = vld [vmem:[%s5036 + $0xdc] sm:$0xf]
          %s5069 = smul.addr %s5033, 4
          %s5070 = scalar_lea.vmem [#allocation4], %s5069
          %v5071 = vld [vmem:[%s5070] sm:$0xf]
          %v5072 = vld [vmem:[%s5070 + $0x4] sm:$0xf]
          %v5073 = vld [vmem:[%s5070 + $0x8] sm:$0xf]
          %v5074 = vld [vmem:[%s5070 + $0xc] sm:$0xf]
          %v5075 = vld [vmem:[%s5070 + $0x10] sm:$0xf]
          %v5076 = vld [vmem:[%s5070 + $0x14] sm:$0xf]
          %v5077 = vld [vmem:[%s5070 + $0x18] sm:$0xf]
          %v5078 = vld [vmem:[%s5070 + $0x1c] sm:$0xf]
          %v5079 = vld [vmem:[%s5070 + $0x40] sm:$0xf]
          %v5080 = vld [vmem:[%s5070 + $0x44] sm:$0xf]
          %v5081 = vld [vmem:[%s5070 + $0x48] sm:$0xf]
          %v5082 = vld [vmem:[%s5070 + $0x4c] sm:$0xf]
          %v5083 = vld [vmem:[%s5070 + $0x50] sm:$0xf]
          %v5084 = vld [vmem:[%s5070 + $0x54] sm:$0xf]
          %v5085 = vld [vmem:[%s5070 + $0x58] sm:$0xf]
          %v5086 = vld [vmem:[%s5070 + $0x5c] sm:$0xf]
          %v5087 = vld [vmem:[%s5070 + $0x80] sm:$0xf]
          %v5088 = vld [vmem:[%s5070 + $0x84] sm:$0xf]
          %v5089 = vld [vmem:[%s5070 + $0x88] sm:$0xf]
          %v5090 = vld [vmem:[%s5070 + $0x8c] sm:$0xf]
          %v5091 = vld [vmem:[%s5070 + $0x90] sm:$0xf]
          %v5092 = vld [vmem:[%s5070 + $0x94] sm:$0xf]
          %v5093 = vld [vmem:[%s5070 + $0x98] sm:$0xf]
          %v5094 = vld [vmem:[%s5070 + $0x9c] sm:$0xf]
          %v5095 = vld [vmem:[%s5070 + $0xc0] sm:$0xf]
          %v5096 = vld [vmem:[%s5070 + $0xc4] sm:$0xf]
          %v5097 = vld [vmem:[%s5070 + $0xc8] sm:$0xf]
          %v5098 = vld [vmem:[%s5070 + $0xcc] sm:$0xf]
          %v5099 = vld [vmem:[%s5070 + $0xd0] sm:$0xf]
          %v5100 = vld [vmem:[%s5070 + $0xd4] sm:$0xf]
          %v5101 = vld [vmem:[%s5070 + $0xd8] sm:$0xf]
          %v5102 = vld [vmem:[%s5070 + $0xdc] sm:$0xf]
          %v5111 = vunpack.c.l.b16 %v4898
          %v5112 = vunpack.c.l.b16 %v4899
          %v5113 = vunpack.c.l.b16 %v4900
          %v5114 = vunpack.c.l.b16 %v4901
          %v5115 = vunpack.c.l.b16 %v4902
          %v5116 = vunpack.c.l.b16 %v4903
          %v5117 = vunpack.c.l.b16 %v4904
          %v5118 = vunpack.c.l.b16 %v4905
          %v5119 = vpack.c.b16 %v5112, %v5111
          %v5120 = vpack.c.b16 %v5114, %v5113
          %v5121 = vpack.c.b16 %v5116, %v5115
          %v5122 = vpack.c.b16 %v5118, %v5117
          %v5131 = vunpack.c.l.b16 %v5037
          %v5132 = vunpack.c.l.b16 %v5038
          %v5133 = vunpack.c.l.b16 %v5039
          %v5134 = vunpack.c.l.b16 %v5040
          %v5135 = vunpack.c.l.b16 %v5041
          %v5136 = vunpack.c.l.b16 %v5042
          %v5137 = vunpack.c.l.b16 %v5043
          %v5138 = vunpack.c.l.b16 %v5044
          %v5139 = vpack.c.b16 %v5132, %v5131
          %v5140 = vpack.c.b16 %v5134, %v5133
          %v5141 = vpack.c.b16 %v5136, %v5135
          %v5142 = vpack.c.b16 %v5138, %v5137
          %vm5143 = vcmask 261120
          %v5145 = vsel %vm5143, %v5119, 0
          %v5148 = vsel %vm5143, %v5120, 0
          %v5151 = vsel %vm5143, %v5121, 0
          %v5154 = vsel %vm5143, %v5122, 0
          %v5157 = vsel %vm5143, %v5139, 0
          %v5160 = vsel %vm5143, %v5140, 0
          %v5163 = vsel %vm5143, %v5141, 0
          %v5166 = vsel %vm5143, %v5142, 0
          %5168 = vmatpush.bf16.xpose.msra.mxu0 0
          %5169 = vmatpush.bf16.xpose.msra.mxu0 0
          %5170 = vmatpush.bf16.xpose.msra.mxu0 0
          %5171 = vmatpush.bf16.xpose.msra.mxu0 0
          %5172 = vmatpush.bf16.xpose.msra.mxu0 %v5166
          %5173 = vmatpush.bf16.xpose.msra.mxu0 %v5163
          %5174 = vmatpush.bf16.xpose.msra.mxu0 %v5160
          %5175 = vmatpush.bf16.xpose.msra.mxu0 %v5157
          %5176 = vmatmul.bf16.gmra.mxu0 %v5145
          %v5177 = vpop.f32.mrf.mxu0
          %v5178 = vadd.f32 0.0, %v5177
          %v5179 = vpop.f32.mrf.mxu0
          %v5180 = vadd.f32 0.0, %v5179
          %5181 = vmatmul.bf16.gmra.mxu0 %v5148
          %v5182 = vpop.f32.mrf.mxu0
          %v5183 = vadd.f32 0.0, %v5182
          %v5184 = vpop.f32.mrf.mxu0
          %v5185 = vadd.f32 0.0, %v5184
          %5186 = vmatmul.bf16.gmra.mxu0 %v5151
          %v5187 = vpop.f32.mrf.mxu0
          %v5188 = vadd.f32 0.0, %v5187
          %v5189 = vpop.f32.mrf.mxu0
          %v5190 = vadd.f32 0.0, %v5189
          %5191 = vmatmul.bf16.gmra.mxu0 %v5154
          %v5192 = vpop.f32.mrf.mxu0
          %v5193 = vadd.f32 0.0, %v5192
          %v5194 = vpop.f32.mrf.mxu0
          %v5195 = vadd.f32 0.0, %v5194
          %5196 = vdwg.mxu0
          %v5205 = vunpack.c.l.b16 %v4906
          %v5206 = vunpack.c.l.b16 %v4907
          %v5207 = vunpack.c.l.b16 %v4908
          %v5208 = vunpack.c.l.b16 %v4909
          %v5209 = vunpack.c.l.b16 %v4910
          %v5210 = vunpack.c.l.b16 %v4911
          %v5211 = vunpack.c.l.b16 %v4912
          %v5212 = vunpack.c.l.b16 %v4913
          %v5213 = vpack.c.b16 %v5206, %v5205
          %v5214 = vpack.c.b16 %v5208, %v5207
          %v5215 = vpack.c.b16 %v5210, %v5209
          %v5216 = vpack.c.b16 %v5212, %v5211
          %v5225 = vunpack.c.l.b16 %v5045
          %v5226 = vunpack.c.l.b16 %v5046
          %v5227 = vunpack.c.l.b16 %v5047
          %v5228 = vunpack.c.l.b16 %v5048
          %v5229 = vunpack.c.l.b16 %v5049
          %v5230 = vunpack.c.l.b16 %v5050
          %v5231 = vunpack.c.l.b16 %v5051
          %v5232 = vunpack.c.l.b16 %v5052
          %v5233 = vpack.c.b16 %v5226, %v5225
          %v5234 = vpack.c.b16 %v5228, %v5227
          %v5235 = vpack.c.b16 %v5230, %v5229
          %v5236 = vpack.c.b16 %v5232, %v5231
          %v5238 = vsel %vm5143, %v5213, 0
          %v5241 = vsel %vm5143, %v5214, 0
          %v5244 = vsel %vm5143, %v5215, 0
          %v5247 = vsel %vm5143, %v5216, 0
          %v5250 = vsel %vm5143, %v5233, 0
          %v5253 = vsel %vm5143, %v5234, 0
          %v5256 = vsel %vm5143, %v5235, 0
          %v5259 = vsel %vm5143, %v5236, 0
          %5261 = vmatpush.bf16.xpose.msra.mxu0 0
          %5262 = vmatpush.bf16.xpose.msra.mxu0 0
          %5263 = vmatpush.bf16.xpose.msra.mxu0 0
          %5264 = vmatpush.bf16.xpose.msra.mxu0 0
          %5265 = vmatpush.bf16.xpose.msra.mxu0 %v5259
          %5266 = vmatpush.bf16.xpose.msra.mxu0 %v5256
          %5267 = vmatpush.bf16.xpose.msra.mxu0 %v5253
          %5268 = vmatpush.bf16.xpose.msra.mxu0 %v5250
          %5269 = vmatmul.bf16.gmra.mxu0 %v5238
          %v5270 = vpop.f32.mrf.mxu0
          %v5271 = vadd.f32 0.0, %v5270
          %v5272 = vpop.f32.mrf.mxu0
          %v5273 = vadd.f32 0.0, %v5272
          %5274 = vmatmul.bf16.gmra.mxu0 %v5241
          %v5275 = vpop.f32.mrf.mxu0
          %v5276 = vadd.f32 0.0, %v5275
          %v5277 = vpop.f32.mrf.mxu0
          %v5278 = vadd.f32 0.0, %v5277
          %5279 = vmatmul.bf16.gmra.mxu0 %v5244
          %v5280 = vpop.f32.mrf.mxu0
          %v5281 = vadd.f32 0.0, %v5280
          %v5282 = vpop.f32.mrf.mxu0
          %v5283 = vadd.f32 0.0, %v5282
          %5284 = vmatmul.bf16.gmra.mxu0 %v5247
          %v5285 = vpop.f32.mrf.mxu0
          %v5286 = vadd.f32 0.0, %v5285
          %v5287 = vpop.f32.mrf.mxu0
          %v5288 = vadd.f32 0.0, %v5287
          %5289 = vdwg.mxu0
          %v5298 = vunpack.c.l.b16 %v4914
          %v5299 = vunpack.c.l.b16 %v4915
          %v5300 = vunpack.c.l.b16 %v4916
          %v5301 = vunpack.c.l.b16 %v4917
          %v5302 = vunpack.c.l.b16 %v4918
          %v5303 = vunpack.c.l.b16 %v4919
          %v5304 = vunpack.c.l.b16 %v4920
          %v5305 = vunpack.c.l.b16 %v4921
          %v5306 = vpack.c.b16 %v5299, %v5298
          %v5307 = vpack.c.b16 %v5301, %v5300
          %v5308 = vpack.c.b16 %v5303, %v5302
          %v5309 = vpack.c.b16 %v5305, %v5304
          %v5318 = vunpack.c.l.b16 %v5053
          %v5319 = vunpack.c.l.b16 %v5054
          %v5320 = vunpack.c.l.b16 %v5055
          %v5321 = vunpack.c.l.b16 %v5056
          %v5322 = vunpack.c.l.b16 %v5057
          %v5323 = vunpack.c.l.b16 %v5058
          %v5324 = vunpack.c.l.b16 %v5059
          %v5325 = vunpack.c.l.b16 %v5060
          %v5326 = vpack.c.b16 %v5319, %v5318
          %v5327 = vpack.c.b16 %v5321, %v5320
          %v5328 = vpack.c.b16 %v5323, %v5322
          %v5329 = vpack.c.b16 %v5325, %v5324
          %v5331 = vsel %vm5143, %v5306, 0
          %v5334 = vsel %vm5143, %v5307, 0
          %v5337 = vsel %vm5143, %v5308, 0
          %v5340 = vsel %vm5143, %v5309, 0
          %v5343 = vsel %vm5143, %v5326, 0
          %v5346 = vsel %vm5143, %v5327, 0
          %v5349 = vsel %vm5143, %v5328, 0
          %v5352 = vsel %vm5143, %v5329, 0
          %5354 = vmatpush.bf16.xpose.msra.mxu0 0
          %5355 = vmatpush.bf16.xpose.msra.mxu0 0
          %5356 = vmatpush.bf16.xpose.msra.mxu0 0
          %5357 = vmatpush.bf16.xpose.msra.mxu0 0
          %5358 = vmatpush.bf16.xpose.msra.mxu0 %v5352
          %5359 = vmatpush.bf16.xpose.msra.mxu0 %v5349
          %5360 = vmatpush.bf16.xpose.msra.mxu0 %v5346
          %5361 = vmatpush.bf16.xpose.msra.mxu0 %v5343
          %5362 = vmatmul.bf16.gmra.mxu0 %v5331
          %v5363 = vpop.f32.mrf.mxu0
          %v5364 = vadd.f32 0.0, %v5363
          %v5365 = vpop.f32.mrf.mxu0
          %v5366 = vadd.f32 0.0, %v5365
          %5367 = vmatmul.bf16.gmra.mxu0 %v5334
          %v5368 = vpop.f32.mrf.mxu0
          %v5369 = vadd.f32 0.0, %v5368
          %v5370 = vpop.f32.mrf.mxu0
          %v5371 = vadd.f32 0.0, %v5370
          %5372 = vmatmul.bf16.gmra.mxu0 %v5337
          %v5373 = vpop.f32.mrf.mxu0
          %v5374 = vadd.f32 0.0, %v5373
          %v5375 = vpop.f32.mrf.mxu0
          %v5376 = vadd.f32 0.0, %v5375
          %5377 = vmatmul.bf16.gmra.mxu0 %v5340
          %v5378 = vpop.f32.mrf.mxu0
          %v5379 = vadd.f32 0.0, %v5378
          %v5380 = vpop.f32.mrf.mxu0
          %v5381 = vadd.f32 0.0, %v5380
          %5382 = vdwg.mxu0
          %v5391 = vunpack.c.l.b16 %v4922
          %v5392 = vunpack.c.l.b16 %v4923
          %v5393 = vunpack.c.l.b16 %v4924
          %v5394 = vunpack.c.l.b16 %v4925
          %v5395 = vunpack.c.l.b16 %v4926
          %v5396 = vunpack.c.l.b16 %v4927
          %v5397 = vunpack.c.l.b16 %v4928
          %v5398 = vunpack.c.l.b16 %v4929
          %v5399 = vpack.c.b16 %v5392, %v5391
          %v5400 = vpack.c.b16 %v5394, %v5393
          %v5401 = vpack.c.b16 %v5396, %v5395
          %v5402 = vpack.c.b16 %v5398, %v5397
          %v5411 = vunpack.c.l.b16 %v5061
          %v5412 = vunpack.c.l.b16 %v5062
          %v5413 = vunpack.c.l.b16 %v5063
          %v5414 = vunpack.c.l.b16 %v5064
          %v5415 = vunpack.c.l.b16 %v5065
          %v5416 = vunpack.c.l.b16 %v5066
          %v5417 = vunpack.c.l.b16 %v5067
          %v5418 = vunpack.c.l.b16 %v5068
          %v5419 = vpack.c.b16 %v5412, %v5411
          %v5420 = vpack.c.b16 %v5414, %v5413
          %v5421 = vpack.c.b16 %v5416, %v5415
          %v5422 = vpack.c.b16 %v5418, %v5417
          %v5424 = vsel %vm5143, %v5399, 0
          %v5427 = vsel %vm5143, %v5400, 0
          %v5430 = vsel %vm5143, %v5401, 0
          %v5433 = vsel %vm5143, %v5402, 0
          %v5436 = vsel %vm5143, %v5419, 0
          %v5439 = vsel %vm5143, %v5420, 0
          %v5442 = vsel %vm5143, %v5421, 0
          %v5445 = vsel %vm5143, %v5422, 0
          %5447 = vmatpush.bf16.xpose.msra.mxu0 0
          %5448 = vmatpush.bf16.xpose.msra.mxu0 0
          %5449 = vmatpush.bf16.xpose.msra.mxu0 0
          %5450 = vmatpush.bf16.xpose.msra.mxu0 0
          %5451 = vmatpush.bf16.xpose.msra.mxu0 %v5445
          %5452 = vmatpush.bf16.xpose.msra.mxu0 %v5442
          %5453 = vmatpush.bf16.xpose.msra.mxu0 %v5439
          %5454 = vmatpush.bf16.xpose.msra.mxu0 %v5436
          %5455 = vmatmul.bf16.gmra.mxu0 %v5424
          %v5456 = vpop.f32.mrf.mxu0
          %v5457 = vadd.f32 0.0, %v5456
          %v5458 = vpop.f32.mrf.mxu0
          %v5459 = vadd.f32 0.0, %v5458
          %5460 = vmatmul.bf16.gmra.mxu0 %v5427
          %v5461 = vpop.f32.mrf.mxu0
          %v5462 = vadd.f32 0.0, %v5461
          %v5463 = vpop.f32.mrf.mxu0
          %v5464 = vadd.f32 0.0, %v5463
          %5465 = vmatmul.bf16.gmra.mxu0 %v5430
          %v5466 = vpop.f32.mrf.mxu0
          %v5467 = vadd.f32 0.0, %v5466
          %v5468 = vpop.f32.mrf.mxu0
          %v5469 = vadd.f32 0.0, %v5468
          %5470 = vmatmul.bf16.gmra.mxu0 %v5433
          %v5471 = vpop.f32.mrf.mxu0
          %v5472 = vadd.f32 0.0, %v5471
          %v5473 = vpop.f32.mrf.mxu0
          %v5474 = vadd.f32 0.0, %v5473
          %5475 = vdwg.mxu0
          %vm5476 = vcmask 523264
          %v5477 = vsel %vm5476, %v5178, -inf
          %5478 = vmax.xlane.f32.xlu0 %v5477
          %v5479 = vpop.xlane.xlu0 %5478
          %v5480 = vsel %vm5476, %v5180, -inf
          %5481 = vmax.xlane.f32.xlu0 %v5480
          %v5482 = vpop.xlane.xlu0 %5481
          %v5483 = vsel %vm5476, %v5183, -inf
          %5484 = vmax.xlane.f32.xlu0 %v5483
          %v5485 = vpop.xlane.xlu0 %5484
          %v5486 = vsel %vm5476, %v5185, -inf
          %5487 = vmax.xlane.f32.xlu0 %v5486
          %v5488 = vpop.xlane.xlu0 %5487
          %v5489 = vsel %vm5476, %v5188, -inf
          %5490 = vmax.xlane.f32.xlu0 %v5489
          %v5491 = vpop.xlane.xlu0 %5490
          %v5492 = vsel %vm5476, %v5190, -inf
          %5493 = vmax.xlane.f32.xlu0 %v5492
          %v5494 = vpop.xlane.xlu0 %5493
          %v5495 = vsel %vm5476, %v5193, -inf
          %5496 = vmax.xlane.f32.xlu0 %v5495
          %v5497 = vpop.xlane.xlu0 %5496
          %v5498 = vsel %vm5476, %v5195, -inf
          %5499 = vmax.xlane.f32.xlu0 %v5498
          %v5500 = vpop.xlane.xlu0 %5499
          %v5501 = vsel %vm5476, %v5271, -inf
          %5502 = vmax.xlane.f32.xlu0 %v5501
          %v5503 = vpop.xlane.xlu0 %5502
          %v5504 = vsel %vm5476, %v5273, -inf
          %5505 = vmax.xlane.f32.xlu0 %v5504
          %v5506 = vpop.xlane.xlu0 %5505
          %v5507 = vsel %vm5476, %v5276, -inf
          %5508 = vmax.xlane.f32.xlu0 %v5507
          %v5509 = vpop.xlane.xlu0 %5508
          %v5510 = vsel %vm5476, %v5278, -inf
          %5511 = vmax.xlane.f32.xlu0 %v5510
          %v5512 = vpop.xlane.xlu0 %5511
          %v5513 = vsel %vm5476, %v5281, -inf
          %5514 = vmax.xlane.f32.xlu0 %v5513
          %v5515 = vpop.xlane.xlu0 %5514
          %v5516 = vsel %vm5476, %v5283, -inf
          %5517 = vmax.xlane.f32.xlu0 %v5516
          %v5518 = vpop.xlane.xlu0 %5517
          %v5519 = vsel %vm5476, %v5286, -inf
          %5520 = vmax.xlane.f32.xlu0 %v5519
          %v5521 = vpop.xlane.xlu0 %5520
          %v5522 = vsel %vm5476, %v5288, -inf
          %5523 = vmax.xlane.f32.xlu0 %v5522
          %v5524 = vpop.xlane.xlu0 %5523
          %v5525 = vsel %vm5476, %v5364, -inf
          %5526 = vmax.xlane.f32.xlu0 %v5525
          %v5527 = vpop.xlane.xlu0 %5526
          %v5528 = vsel %vm5476, %v5366, -inf
          %5529 = vmax.xlane.f32.xlu0 %v5528
          %v5530 = vpop.xlane.xlu0 %5529
          %v5531 = vsel %vm5476, %v5369, -inf
          %5532 = vmax.xlane.f32.xlu0 %v5531
          %v5533 = vpop.xlane.xlu0 %5532
          %v5534 = vsel %vm5476, %v5371, -inf
          %5535 = vmax.xlane.f32.xlu0 %v5534
          %v5536 = vpop.xlane.xlu0 %5535
          %v5537 = vsel %vm5476, %v5374, -inf
          %5538 = vmax.xlane.f32.xlu0 %v5537
          %v5539 = vpop.xlane.xlu0 %5538
          %v5540 = vsel %vm5476, %v5376, -inf
          %5541 = vmax.xlane.f32.xlu0 %v5540
          %v5542 = vpop.xlane.xlu0 %5541
          %v5543 = vsel %vm5476, %v5379, -inf
          %5544 = vmax.xlane.f32.xlu0 %v5543
          %v5545 = vpop.xlane.xlu0 %5544
          %v5546 = vsel %vm5476, %v5381, -inf
          %5547 = vmax.xlane.f32.xlu0 %v5546
          %v5548 = vpop.xlane.xlu0 %5547
          %v5549 = vsel %vm5476, %v5457, -inf
          %5550 = vmax.xlane.f32.xlu0 %v5549
          %v5551 = vpop.xlane.xlu0 %5550
          %v5552 = vsel %vm5476, %v5459, -inf
          %5553 = vmax.xlane.f32.xlu0 %v5552
          %v5554 = vpop.xlane.xlu0 %5553
          %v5555 = vsel %vm5476, %v5462, -inf
          %5556 = vmax.xlane.f32.xlu0 %v5555
          %v5557 = vpop.xlane.xlu0 %5556
          %v5558 = vsel %vm5476, %v5464, -inf
          %5559 = vmax.xlane.f32.xlu0 %v5558
          %v5560 = vpop.xlane.xlu0 %5559
          %v5561 = vsel %vm5476, %v5467, -inf
          %5562 = vmax.xlane.f32.xlu0 %v5561
          %v5563 = vpop.xlane.xlu0 %5562
          %v5564 = vsel %vm5476, %v5469, -inf
          %5565 = vmax.xlane.f32.xlu0 %v5564
          %v5566 = vpop.xlane.xlu0 %5565
          %v5567 = vsel %vm5476, %v5472, -inf
          %5568 = vmax.xlane.f32.xlu0 %v5567
          %v5569 = vpop.xlane.xlu0 %5568
          %v5570 = vsel %vm5476, %v5474, -inf
          %5571 = vmax.xlane.f32.xlu0 %v5570
          %v5572 = vpop.xlane.xlu0 %5571
          %v5573 = vmax.f32 %v4936, %v5479
          %v5574 = vmax.f32 %v4937, %v5482
          %v5575 = vmax.f32 %v4938, %v5485
          %v5576 = vmax.f32 %v4939, %v5488
          %v5577 = vmax.f32 %v4940, %v5491
          %v5578 = vmax.f32 %v4941, %v5494
          %v5579 = vmax.f32 %v4942, %v5497
          %v5580 = vmax.f32 %v4943, %v5500
          %v5581 = vmax.f32 %v4944, %v5503
          %v5582 = vmax.f32 %v4945, %v5506
          %v5583 = vmax.f32 %v4946, %v5509
          %v5584 = vmax.f32 %v4947, %v5512
          %v5585 = vmax.f32 %v4948, %v5515
          %v5586 = vmax.f32 %v4949, %v5518
          %v5587 = vmax.f32 %v4950, %v5521
          %v5588 = vmax.f32 %v4951, %v5524
          %v5589 = vmax.f32 %v4952, %v5527
          %v5590 = vmax.f32 %v4953, %v5530
          %v5591 = vmax.f32 %v4954, %v5533
          %v5592 = vmax.f32 %v4955, %v5536
          %v5593 = vmax.f32 %v4956, %v5539
          %v5594 = vmax.f32 %v4957, %v5542
          %v5595 = vmax.f32 %v4958, %v5545
          %v5596 = vmax.f32 %v4959, %v5548
          %v5597 = vmax.f32 %v4960, %v5551
          %v5598 = vmax.f32 %v4961, %v5554
          %v5599 = vmax.f32 %v4962, %v5557
          %v5600 = vmax.f32 %v4963, %v5560
          %v5601 = vmax.f32 %v4964, %v5563
          %v5602 = vmax.f32 %v4965, %v5566
          %v5603 = vmax.f32 %v4966, %v5569
          %v5604 = vmax.f32 %v4967, %v5572
          %v5605 = vsub.f32 %v4936, %v5573
          %v5606 = vsub.f32 %v4937, %v5574
          %v5607 = vsub.f32 %v4938, %v5575
          %v5608 = vsub.f32 %v4939, %v5576
          %v5609 = vsub.f32 %v4940, %v5577
          %v5610 = vsub.f32 %v4941, %v5578
          %v5611 = vsub.f32 %v4942, %v5579
          %v5612 = vsub.f32 %v4943, %v5580
          %v5613 = vsub.f32 %v4944, %v5581
          %v5614 = vsub.f32 %v4945, %v5582
          %v5615 = vsub.f32 %v4946, %v5583
          %v5616 = vsub.f32 %v4947, %v5584
          %v5617 = vsub.f32 %v4948, %v5585
          %v5618 = vsub.f32 %v4949, %v5586
          %v5619 = vsub.f32 %v4950, %v5587
          %v5620 = vsub.f32 %v4951, %v5588
          %v5621 = vsub.f32 %v4952, %v5589
          %v5622 = vsub.f32 %v4953, %v5590
          %v5623 = vsub.f32 %v4954, %v5591
          %v5624 = vsub.f32 %v4955, %v5592
          %v5625 = vsub.f32 %v4956, %v5593
          %v5626 = vsub.f32 %v4957, %v5594
          %v5627 = vsub.f32 %v4958, %v5595
          %v5628 = vsub.f32 %v4959, %v5596
          %v5629 = vsub.f32 %v4960, %v5597
          %v5630 = vsub.f32 %v4961, %v5598
          %v5631 = vsub.f32 %v4962, %v5599
          %v5632 = vsub.f32 %v4963, %v5600
          %v5633 = vsub.f32 %v4964, %v5601
          %v5634 = vsub.f32 %v4965, %v5602
          %v5635 = vsub.f32 %v4966, %v5603
          %v5636 = vsub.f32 %v4967, %v5604
          %v5637 = vmul.f32 %v5605, 1.442695
          %v5638 = vpow.pop %v5637
          %v5639 = vmul.f32 %v5606, 1.442695
          %v5640 = vpow.pop %v5639
          %v5641 = vmul.f32 %v5607, 1.442695
          %v5642 = vpow.pop %v5641
          %v5643 = vmul.f32 %v5608, 1.442695
          %v5644 = vpow.pop %v5643
          %v5645 = vmul.f32 %v5609, 1.442695
          %v5646 = vpow.pop %v5645
          %v5647 = vmul.f32 %v5610, 1.442695
          %v5648 = vpow.pop %v5647
          %v5649 = vmul.f32 %v5611, 1.442695
          %v5650 = vpow.pop %v5649
          %v5651 = vmul.f32 %v5612, 1.442695
          %v5652 = vpow.pop %v5651
          %v5653 = vmul.f32 %v5613, 1.442695
          %v5654 = vpow.pop %v5653
          %v5655 = vmul.f32 %v5614, 1.442695
          %v5656 = vpow.pop %v5655
          %v5657 = vmul.f32 %v5615, 1.442695
          %v5658 = vpow.pop %v5657
          %v5659 = vmul.f32 %v5616, 1.442695
          %v5660 = vpow.pop %v5659
          %v5661 = vmul.f32 %v5617, 1.442695
          %v5662 = vpow.pop %v5661
          %v5663 = vmul.f32 %v5618, 1.442695
          %v5664 = vpow.pop %v5663
          %v5665 = vmul.f32 %v5619, 1.442695
          %v5666 = vpow.pop %v5665
          %v5667 = vmul.f32 %v5620, 1.442695
          %v5668 = vpow.pop %v5667
          %v5669 = vmul.f32 %v5621, 1.442695
          %v5670 = vpow.pop %v5669
          %v5671 = vmul.f32 %v5622, 1.442695
          %v5672 = vpow.pop %v5671
          %v5673 = vmul.f32 %v5623, 1.442695
          %v5674 = vpow.pop %v5673
          %v5675 = vmul.f32 %v5624, 1.442695
          %v5676 = vpow.pop %v5675
          %v5677 = vmul.f32 %v5625, 1.442695
          %v5678 = vpow.pop %v5677
          %v5679 = vmul.f32 %v5626, 1.442695
          %v5680 = vpow.pop %v5679
          %v5681 = vmul.f32 %v5627, 1.442695
          %v5682 = vpow.pop %v5681
          %v5683 = vmul.f32 %v5628, 1.442695
          %v5684 = vpow.pop %v5683
          %v5685 = vmul.f32 %v5629, 1.442695
          %v5686 = vpow.pop %v5685
          %v5687 = vmul.f32 %v5630, 1.442695
          %v5688 = vpow.pop %v5687
          %v5689 = vmul.f32 %v5631, 1.442695
          %v5690 = vpow.pop %v5689
          %v5691 = vmul.f32 %v5632, 1.442695
          %v5692 = vpow.pop %v5691
          %v5693 = vmul.f32 %v5633, 1.442695
          %v5694 = vpow.pop %v5693
          %v5695 = vmul.f32 %v5634, 1.442695
          %v5696 = vpow.pop %v5695
          %v5697 = vmul.f32 %v5635, 1.442695
          %v5698 = vpow.pop %v5697
          %v5699 = vmul.f32 %v5636, 1.442695
          %v5700 = vpow.pop %v5699
          %v5701 = vsub.f32 %v5178, %v5573
          %v5702 = vsub.f32 %v5180, %v5574
          %v5703 = vsub.f32 %v5183, %v5575
          %v5704 = vsub.f32 %v5185, %v5576
          %v5705 = vsub.f32 %v5188, %v5577
          %v5706 = vsub.f32 %v5190, %v5578
          %v5707 = vsub.f32 %v5193, %v5579
          %v5708 = vsub.f32 %v5195, %v5580
          %v5709 = vsub.f32 %v5271, %v5581
          %v5710 = vsub.f32 %v5273, %v5582
          %v5711 = vsub.f32 %v5276, %v5583
          %v5712 = vsub.f32 %v5278, %v5584
          %v5713 = vsub.f32 %v5281, %v5585
          %v5714 = vsub.f32 %v5283, %v5586
          %v5715 = vsub.f32 %v5286, %v5587
          %v5716 = vsub.f32 %v5288, %v5588
          %v5717 = vsub.f32 %v5364, %v5589
          %v5718 = vsub.f32 %v5366, %v5590
          %v5719 = vsub.f32 %v5369, %v5591
          %v5720 = vsub.f32 %v5371, %v5592
          %v5721 = vsub.f32 %v5374, %v5593
          %v5722 = vsub.f32 %v5376, %v5594
          %v5723 = vsub.f32 %v5379, %v5595
          %v5724 = vsub.f32 %v5381, %v5596
          %v5725 = vsub.f32 %v5457, %v5597
          %v5726 = vsub.f32 %v5459, %v5598
          %v5727 = vsub.f32 %v5462, %v5599
          %v5728 = vsub.f32 %v5464, %v5600
          %v5729 = vsub.f32 %v5467, %v5601
          %v5730 = vsub.f32 %v5469, %v5602
          %v5731 = vsub.f32 %v5472, %v5603
          %v5732 = vsub.f32 %v5474, %v5604
          %v5733 = vmul.f32 %v5701, 1.442695
          %v5734 = vpow.pop %v5733
          %v5735 = vmul.f32 %v5702, 1.442695
          %v5736 = vpow.pop %v5735
          %v5737 = vmul.f32 %v5703, 1.442695
          %v5738 = vpow.pop %v5737
          %v5739 = vmul.f32 %v5704, 1.442695
          %v5740 = vpow.pop %v5739
          %v5741 = vmul.f32 %v5705, 1.442695
          %v5742 = vpow.pop %v5741
          %v5743 = vmul.f32 %v5706, 1.442695
          %v5744 = vpow.pop %v5743
          %v5745 = vmul.f32 %v5707, 1.442695
          %v5746 = vpow.pop %v5745
          %v5747 = vmul.f32 %v5708, 1.442695
          %v5748 = vpow.pop %v5747
          %v5749 = vmul.f32 %v5709, 1.442695
          %v5750 = vpow.pop %v5749
          %v5751 = vmul.f32 %v5710, 1.442695
          %v5752 = vpow.pop %v5751
          %v5753 = vmul.f32 %v5711, 1.442695
          %v5754 = vpow.pop %v5753
          %v5755 = vmul.f32 %v5712, 1.442695
          %v5756 = vpow.pop %v5755
          %v5757 = vmul.f32 %v5713, 1.442695
          %v5758 = vpow.pop %v5757
          %v5759 = vmul.f32 %v5714, 1.442695
          %v5760 = vpow.pop %v5759
          %v5761 = vmul.f32 %v5715, 1.442695
          %v5762 = vpow.pop %v5761
          %v5763 = vmul.f32 %v5716, 1.442695
          %v5764 = vpow.pop %v5763
          %v5765 = vmul.f32 %v5717, 1.442695
          %v5766 = vpow.pop %v5765
          %v5767 = vmul.f32 %v5718, 1.442695
          %v5768 = vpow.pop %v5767
          %v5769 = vmul.f32 %v5719, 1.442695
          %v5770 = vpow.pop %v5769
          %v5771 = vmul.f32 %v5720, 1.442695
          %v5772 = vpow.pop %v5771
          %v5773 = vmul.f32 %v5721, 1.442695
          %v5774 = vpow.pop %v5773
          %v5775 = vmul.f32 %v5722, 1.442695
          %v5776 = vpow.pop %v5775
          %v5777 = vmul.f32 %v5723, 1.442695
          %v5778 = vpow.pop %v5777
          %v5779 = vmul.f32 %v5724, 1.442695
          %v5780 = vpow.pop %v5779
          %v5781 = vmul.f32 %v5725, 1.442695
          %v5782 = vpow.pop %v5781
          %v5783 = vmul.f32 %v5726, 1.442695
          %v5784 = vpow.pop %v5783
          %v5785 = vmul.f32 %v5727, 1.442695
          %v5786 = vpow.pop %v5785
          %v5787 = vmul.f32 %v5728, 1.442695
          %v5788 = vpow.pop %v5787
          %v5789 = vmul.f32 %v5729, 1.442695
          %v5790 = vpow.pop %v5789
          %v5791 = vmul.f32 %v5730, 1.442695
          %v5792 = vpow.pop %v5791
          %v5793 = vmul.f32 %v5731, 1.442695
          %v5794 = vpow.pop %v5793
          %v5795 = vmul.f32 %v5732, 1.442695
          %v5796 = vpow.pop %v5795
          %v5797 = vmul.f32 %v5638, %v4968
          %v5798 = vmul.f32 %v5640, %v4969
          %v5799 = vmul.f32 %v5642, %v4970
          %v5800 = vmul.f32 %v5644, %v4971
          %v5801 = vmul.f32 %v5646, %v4972
          %v5802 = vmul.f32 %v5648, %v4973
          %v5803 = vmul.f32 %v5650, %v4974
          %v5804 = vmul.f32 %v5652, %v4975
          %v5805 = vmul.f32 %v5654, %v4976
          %v5806 = vmul.f32 %v5656, %v4977
          %v5807 = vmul.f32 %v5658, %v4978
          %v5808 = vmul.f32 %v5660, %v4979
          %v5809 = vmul.f32 %v5662, %v4980
          %v5810 = vmul.f32 %v5664, %v4981
          %v5811 = vmul.f32 %v5666, %v4982
          %v5812 = vmul.f32 %v5668, %v4983
          %v5813 = vmul.f32 %v5670, %v4984
          %v5814 = vmul.f32 %v5672, %v4985
          %v5815 = vmul.f32 %v5674, %v4986
          %v5816 = vmul.f32 %v5676, %v4987
          %v5817 = vmul.f32 %v5678, %v4988
          %v5818 = vmul.f32 %v5680, %v4989
          %v5819 = vmul.f32 %v5682, %v4990
          %v5820 = vmul.f32 %v5684, %v4991
          %v5821 = vmul.f32 %v5686, %v4992
          %v5822 = vmul.f32 %v5688, %v4993
          %v5823 = vmul.f32 %v5690, %v4994
          %v5824 = vmul.f32 %v5692, %v4995
          %v5825 = vmul.f32 %v5694, %v4996
          %v5826 = vmul.f32 %v5696, %v4997
          %v5827 = vmul.f32 %v5698, %v4998
          %v5828 = vmul.f32 %v5700, %v4999
          %v5829 = vsel %vm5476, %v5734, 0.0
          %5830 = vadd.xlane.f32.xlu0 %v5829
          %v5831 = vpop.xlane.xlu0 %5830
          %v5832 = vsel %vm5476, %v5736, 0.0
          %5833 = vadd.xlane.f32.xlu0 %v5832
          %v5834 = vpop.xlane.xlu0 %5833
          %v5835 = vsel %vm5476, %v5738, 0.0
          %5836 = vadd.xlane.f32.xlu0 %v5835
          %v5837 = vpop.xlane.xlu0 %5836
          %v5838 = vsel %vm5476, %v5740, 0.0
          %5839 = vadd.xlane.f32.xlu0 %v5838
          %v5840 = vpop.xlane.xlu0 %5839
          %v5841 = vsel %vm5476, %v5742, 0.0
          %5842 = vadd.xlane.f32.xlu0 %v5841
          %v5843 = vpop.xlane.xlu0 %5842
          %v5844 = vsel %vm5476, %v5744, 0.0
          %5845 = vadd.xlane.f32.xlu0 %v5844
          %v5846 = vpop.xlane.xlu0 %5845
          %v5847 = vsel %vm5476, %v5746, 0.0
          %5848 = vadd.xlane.f32.xlu0 %v5847
          %v5849 = vpop.xlane.xlu0 %5848
          %v5850 = vsel %vm5476, %v5748, 0.0
          %5851 = vadd.xlane.f32.xlu0 %v5850
          %v5852 = vpop.xlane.xlu0 %5851
          %v5853 = vsel %vm5476, %v5750, 0.0
          %5854 = vadd.xlane.f32.xlu0 %v5853
          %v5855 = vpop.xlane.xlu0 %5854
          %v5856 = vsel %vm5476, %v5752, 0.0
          %5857 = vadd.xlane.f32.xlu0 %v5856
          %v5858 = vpop.xlane.xlu0 %5857
          %v5859 = vsel %vm5476, %v5754, 0.0
          %5860 = vadd.xlane.f32.xlu0 %v5859
          %v5861 = vpop.xlane.xlu0 %5860
          %v5862 = vsel %vm5476, %v5756, 0.0
          %5863 = vadd.xlane.f32.xlu0 %v5862
          %v5864 = vpop.xlane.xlu0 %5863
          %v5865 = vsel %vm5476, %v5758, 0.0
          %5866 = vadd.xlane.f32.xlu0 %v5865
          %v5867 = vpop.xlane.xlu0 %5866
          %v5868 = vsel %vm5476, %v5760, 0.0
          %5869 = vadd.xlane.f32.xlu0 %v5868
          %v5870 = vpop.xlane.xlu0 %5869
          %v5871 = vsel %vm5476, %v5762, 0.0
          %5872 = vadd.xlane.f32.xlu0 %v5871
          %v5873 = vpop.xlane.xlu0 %5872
          %v5874 = vsel %vm5476, %v5764, 0.0
          %5875 = vadd.xlane.f32.xlu0 %v5874
          %v5876 = vpop.xlane.xlu0 %5875
          %v5877 = vsel %vm5476, %v5766, 0.0
          %5878 = vadd.xlane.f32.xlu0 %v5877
          %v5879 = vpop.xlane.xlu0 %5878
          %v5880 = vsel %vm5476, %v5768, 0.0
          %5881 = vadd.xlane.f32.xlu0 %v5880
          %v5882 = vpop.xlane.xlu0 %5881
          %v5883 = vsel %vm5476, %v5770, 0.0
          %5884 = vadd.xlane.f32.xlu0 %v5883
          %v5885 = vpop.xlane.xlu0 %5884
          %v5886 = vsel %vm5476, %v5772, 0.0
          %5887 = vadd.xlane.f32.xlu0 %v5886
          %v5888 = vpop.xlane.xlu0 %5887
          %v5889 = vsel %vm5476, %v5774, 0.0
          %5890 = vadd.xlane.f32.xlu0 %v5889
          %v5891 = vpop.xlane.xlu0 %5890
          %v5892 = vsel %vm5476, %v5776, 0.0
          %5893 = vadd.xlane.f32.xlu0 %v5892
          %v5894 = vpop.xlane.xlu0 %5893
          %v5895 = vsel %vm5476, %v5778, 0.0
          %5896 = vadd.xlane.f32.xlu0 %v5895
          %v5897 = vpop.xlane.xlu0 %5896
          %v5898 = vsel %vm5476, %v5780, 0.0
          %5899 = vadd.xlane.f32.xlu0 %v5898
          %v5900 = vpop.xlane.xlu0 %5899
          %v5901 = vsel %vm5476, %v5782, 0.0
          %5902 = vadd.xlane.f32.xlu0 %v5901
          %v5903 = vpop.xlane.xlu0 %5902
          %v5904 = vsel %vm5476, %v5784, 0.0
          %5905 = vadd.xlane.f32.xlu0 %v5904
          %v5906 = vpop.xlane.xlu0 %5905
          %v5907 = vsel %vm5476, %v5786, 0.0
          %5908 = vadd.xlane.f32.xlu0 %v5907
          %v5909 = vpop.xlane.xlu0 %5908
          %v5910 = vsel %vm5476, %v5788, 0.0
          %5911 = vadd.xlane.f32.xlu0 %v5910
          %v5912 = vpop.xlane.xlu0 %5911
          %v5913 = vsel %vm5476, %v5790, 0.0
          %5914 = vadd.xlane.f32.xlu0 %v5913
          %v5915 = vpop.xlane.xlu0 %5914
          %v5916 = vsel %vm5476, %v5792, 0.0
          %5917 = vadd.xlane.f32.xlu0 %v5916
          %v5918 = vpop.xlane.xlu0 %5917
          %v5919 = vsel %vm5476, %v5794, 0.0
          %5920 = vadd.xlane.f32.xlu0 %v5919
          %v5921 = vpop.xlane.xlu0 %5920
          %v5922 = vsel %vm5476, %v5796, 0.0
          %5923 = vadd.xlane.f32.xlu0 %v5922
          %v5924 = vpop.xlane.xlu0 %5923
          %v5925 = vadd.f32 %v5797, %v5831
          %v5926 = vadd.f32 %v5798, %v5834
          %v5927 = vadd.f32 %v5799, %v5837
          %v5928 = vadd.f32 %v5800, %v5840
          %v5929 = vadd.f32 %v5801, %v5843
          %v5930 = vadd.f32 %v5802, %v5846
          %v5931 = vadd.f32 %v5803, %v5849
          %v5932 = vadd.f32 %v5804, %v5852
          %v5933 = vadd.f32 %v5805, %v5855
          %v5934 = vadd.f32 %v5806, %v5858
          %v5935 = vadd.f32 %v5807, %v5861
          %v5936 = vadd.f32 %v5808, %v5864
          %v5937 = vadd.f32 %v5809, %v5867
          %v5938 = vadd.f32 %v5810, %v5870
          %v5939 = vadd.f32 %v5811, %v5873
          %v5940 = vadd.f32 %v5812, %v5876
          %v5941 = vadd.f32 %v5813, %v5879
          %v5942 = vadd.f32 %v5814, %v5882
          %v5943 = vadd.f32 %v5815, %v5885
          %v5944 = vadd.f32 %v5816, %v5888
          %v5945 = vadd.f32 %v5817, %v5891
          %v5946 = vadd.f32 %v5818, %v5894
          %v5947 = vadd.f32 %v5819, %v5897
          %v5948 = vadd.f32 %v5820, %v5900
          %v5949 = vadd.f32 %v5821, %v5903
          %v5950 = vadd.f32 %v5822, %v5906
          %v5951 = vadd.f32 %v5823, %v5909
          %v5952 = vadd.f32 %v5824, %v5912
          %v5953 = vadd.f32 %v5825, %v5915
          %v5954 = vadd.f32 %v5826, %v5918
          %v5955 = vadd.f32 %v5827, %v5921
          %v5956 = vadd.f32 %v5828, %v5924
          %v5957 = vpack.c.bf16 %v5734, %v5734
          %v5958 = vpack.c.bf16 %v5736, %v5736
          %v5959 = vpack.c.bf16 %v5738, %v5738
          %v5960 = vpack.c.bf16 %v5740, %v5740
          %v5961 = vpack.c.bf16 %v5742, %v5742
          %v5962 = vpack.c.bf16 %v5744, %v5744
          %v5963 = vpack.c.bf16 %v5746, %v5746
          %v5964 = vpack.c.bf16 %v5748, %v5748
          %v5965 = vpack.c.bf16 %v5750, %v5750
          %v5966 = vpack.c.bf16 %v5752, %v5752
          %v5967 = vpack.c.bf16 %v5754, %v5754
          %v5968 = vpack.c.bf16 %v5756, %v5756
          %v5969 = vpack.c.bf16 %v5758, %v5758
          %v5970 = vpack.c.bf16 %v5760, %v5760
          %v5971 = vpack.c.bf16 %v5762, %v5762
          %v5972 = vpack.c.bf16 %v5764, %v5764
          %v5973 = vpack.c.bf16 %v5766, %v5766
          %v5974 = vpack.c.bf16 %v5768, %v5768
          %v5975 = vpack.c.bf16 %v5770, %v5770
          %v5976 = vpack.c.bf16 %v5772, %v5772
          %v5977 = vpack.c.bf16 %v5774, %v5774
          %v5978 = vpack.c.bf16 %v5776, %v5776
          %v5979 = vpack.c.bf16 %v5778, %v5778
          %v5980 = vpack.c.bf16 %v5780, %v5780
          %v5981 = vpack.c.bf16 %v5782, %v5782
          %v5982 = vpack.c.bf16 %v5784, %v5784
          %v5983 = vpack.c.bf16 %v5786, %v5786
          %v5984 = vpack.c.bf16 %v5788, %v5788
          %v5985 = vpack.c.bf16 %v5790, %v5790
          %v5986 = vpack.c.bf16 %v5792, %v5792
          %v5987 = vpack.c.bf16 %v5794, %v5794
          %v5988 = vpack.c.bf16 %v5796, %v5796
          %v5997 = vunpack.c.l.b16 %v5957
          %v5998 = vunpack.c.l.b16 %v5958
          %v5999 = vunpack.c.l.b16 %v5959
          %v6000 = vunpack.c.l.b16 %v5960
          %v6001 = vunpack.c.l.b16 %v5961
          %v6002 = vunpack.c.l.b16 %v5962
          %v6003 = vunpack.c.l.b16 %v5963
          %v6004 = vunpack.c.l.b16 %v5964
          %v6005 = vpack.c.b16 %v5998, %v5997
          %v6006 = vpack.c.b16 %v6000, %v5999
          %v6007 = vpack.c.b16 %v6002, %v6001
          %v6008 = vpack.c.b16 %v6004, %v6003
          %v6017 = vunpack.c.l.b16 %v5071
          %v6018 = vunpack.c.l.b16 %v5072
          %v6019 = vunpack.c.l.b16 %v5073
          %v6020 = vunpack.c.l.b16 %v5074
          %v6021 = vunpack.c.l.b16 %v5075
          %v6022 = vunpack.c.l.b16 %v5076
          %v6023 = vunpack.c.l.b16 %v5077
          %v6024 = vunpack.c.l.b16 %v5078
          %v6025 = vpack.c.b16 %v6018, %v6017
          %v6026 = vpack.c.b16 %v6020, %v6019
          %v6027 = vpack.c.b16 %v6022, %v6021
          %v6028 = vpack.c.b16 %v6024, %v6023
          %v6034 = vsel %vm5476, %v6005, 0
          %v6037 = vsel %vm5476, %v6006, 0
          %v6040 = vsel %vm5476, %v6007, 0
          %v6043 = vsel %vm5476, %v6008, 0
          %6045 = vmatpush.bf16.msra.mxu0 0
          %6046 = vmatpush.bf16.msra.mxu0 0
          %6047 = vmatpush.bf16.msra.mxu0 0
          %6048 = vmatpush.bf16.msra.mxu0 0
          %6049 = vmatpush.bf16.msra.mxu0 %v6028
          %6050 = vmatpush.bf16.msra.mxu0 %v6027
          %6051 = vmatpush.bf16.msra.mxu0 %v6026
          %6052 = vmatpush.bf16.msra.mxu0 %v6025
          %6053 = vmatmul.bf16.gmra.mxu0 %v6034
          %v6054 = vpop.f32.mrf.mxu0
          %v6055 = vadd.f32 0.0, %v6054
          %v6056 = vpop.f32.mrf.mxu0
          %v6057 = vadd.f32 0.0, %v6056
          %6058 = vmatmul.bf16.gmra.mxu0 %v6037
          %v6059 = vpop.f32.mrf.mxu0
          %v6060 = vadd.f32 0.0, %v6059
          %v6061 = vpop.f32.mrf.mxu0
          %v6062 = vadd.f32 0.0, %v6061
          %6063 = vmatmul.bf16.gmra.mxu0 %v6040
          %v6064 = vpop.f32.mrf.mxu0
          %v6065 = vadd.f32 0.0, %v6064
          %v6066 = vpop.f32.mrf.mxu0
          %v6067 = vadd.f32 0.0, %v6066
          %6068 = vmatmul.bf16.gmra.mxu0 %v6043
          %v6069 = vpop.f32.mrf.mxu0
          %v6070 = vadd.f32 0.0, %v6069
          %v6071 = vpop.f32.mrf.mxu0
          %v6072 = vadd.f32 0.0, %v6071
          %6073 = vdwg.mxu0
          %v6082 = vunpack.c.l.b16 %v5965
          %v6083 = vunpack.c.l.b16 %v5966
          %v6084 = vunpack.c.l.b16 %v5967
          %v6085 = vunpack.c.l.b16 %v5968
          %v6086 = vunpack.c.l.b16 %v5969
          %v6087 = vunpack.c.l.b16 %v5970
          %v6088 = vunpack.c.l.b16 %v5971
          %v6089 = vunpack.c.l.b16 %v5972
          %v6090 = vpack.c.b16 %v6083, %v6082
          %v6091 = vpack.c.b16 %v6085, %v6084
          %v6092 = vpack.c.b16 %v6087, %v6086
          %v6093 = vpack.c.b16 %v6089, %v6088
          %v6102 = vunpack.c.l.b16 %v5079
          %v6103 = vunpack.c.l.b16 %v5080
          %v6104 = vunpack.c.l.b16 %v5081
          %v6105 = vunpack.c.l.b16 %v5082
          %v6106 = vunpack.c.l.b16 %v5083
          %v6107 = vunpack.c.l.b16 %v5084
          %v6108 = vunpack.c.l.b16 %v5085
          %v6109 = vunpack.c.l.b16 %v5086
          %v6110 = vpack.c.b16 %v6103, %v6102
          %v6111 = vpack.c.b16 %v6105, %v6104
          %v6112 = vpack.c.b16 %v6107, %v6106
          %v6113 = vpack.c.b16 %v6109, %v6108
          %v6119 = vsel %vm5476, %v6090, 0
          %v6122 = vsel %vm5476, %v6091, 0
          %v6125 = vsel %vm5476, %v6092, 0
          %v6128 = vsel %vm5476, %v6093, 0
          %6130 = vmatpush.bf16.msra.mxu0 0
          %6131 = vmatpush.bf16.msra.mxu0 0
          %6132 = vmatpush.bf16.msra.mxu0 0
          %6133 = vmatpush.bf16.msra.mxu0 0
          %6134 = vmatpush.bf16.msra.mxu0 %v6113
          %6135 = vmatpush.bf16.msra.mxu0 %v6112
          %6136 = vmatpush.bf16.msra.mxu0 %v6111
          %6137 = vmatpush.bf16.msra.mxu0 %v6110
          %6138 = vmatmul.bf16.gmra.mxu0 %v6119
          %v6139 = vpop.f32.mrf.mxu0
          %v6140 = vadd.f32 0.0, %v6139
          %v6141 = vpop.f32.mrf.mxu0
          %v6142 = vadd.f32 0.0, %v6141
          %6143 = vmatmul.bf16.gmra.mxu0 %v6122
          %v6144 = vpop.f32.mrf.mxu0
          %v6145 = vadd.f32 0.0, %v6144
          %v6146 = vpop.f32.mrf.mxu0
          %v6147 = vadd.f32 0.0, %v6146
          %6148 = vmatmul.bf16.gmra.mxu0 %v6125
          %v6149 = vpop.f32.mrf.mxu0
          %v6150 = vadd.f32 0.0, %v6149
          %v6151 = vpop.f32.mrf.mxu0
          %v6152 = vadd.f32 0.0, %v6151
          %6153 = vmatmul.bf16.gmra.mxu0 %v6128
          %v6154 = vpop.f32.mrf.mxu0
          %v6155 = vadd.f32 0.0, %v6154
          %v6156 = vpop.f32.mrf.mxu0
          %v6157 = vadd.f32 0.0, %v6156
          %6158 = vdwg.mxu0
          %v6167 = vunpack.c.l.b16 %v5973
          %v6168 = vunpack.c.l.b16 %v5974
          %v6169 = vunpack.c.l.b16 %v5975
          %v6170 = vunpack.c.l.b16 %v5976
          %v6171 = vunpack.c.l.b16 %v5977
          %v6172 = vunpack.c.l.b16 %v5978
          %v6173 = vunpack.c.l.b16 %v5979
          %v6174 = vunpack.c.l.b16 %v5980
          %v6175 = vpack.c.b16 %v6168, %v6167
          %v6176 = vpack.c.b16 %v6170, %v6169
          %v6177 = vpack.c.b16 %v6172, %v6171
          %v6178 = vpack.c.b16 %v6174, %v6173
          %v6187 = vunpack.c.l.b16 %v5087
          %v6188 = vunpack.c.l.b16 %v5088
          %v6189 = vunpack.c.l.b16 %v5089
          %v6190 = vunpack.c.l.b16 %v5090
          %v6191 = vunpack.c.l.b16 %v5091
          %v6192 = vunpack.c.l.b16 %v5092
          %v6193 = vunpack.c.l.b16 %v5093
          %v6194 = vunpack.c.l.b16 %v5094
          %v6195 = vpack.c.b16 %v6188, %v6187
          %v6196 = vpack.c.b16 %v6190, %v6189
          %v6197 = vpack.c.b16 %v6192, %v6191
          %v6198 = vpack.c.b16 %v6194, %v6193
          %v6204 = vsel %vm5476, %v6175, 0
          %v6207 = vsel %vm5476, %v6176, 0
          %v6210 = vsel %vm5476, %v6177, 0
          %v6213 = vsel %vm5476, %v6178, 0
          %6215 = vmatpush.bf16.msra.mxu0 0
          %6216 = vmatpush.bf16.msra.mxu0 0
          %6217 = vmatpush.bf16.msra.mxu0 0
          %6218 = vmatpush.bf16.msra.mxu0 0
          %6219 = vmatpush.bf16.msra.mxu0 %v6198
          %6220 = vmatpush.bf16.msra.mxu0 %v6197
          %6221 = vmatpush.bf16.msra.mxu0 %v6196
          %6222 = vmatpush.bf16.msra.mxu0 %v6195
          %6223 = vmatmul.bf16.gmra.mxu0 %v6204
          %v6224 = vpop.f32.mrf.mxu0
          %v6225 = vadd.f32 0.0, %v6224
          %v6226 = vpop.f32.mrf.mxu0
          %v6227 = vadd.f32 0.0, %v6226
          %6228 = vmatmul.bf16.gmra.mxu0 %v6207
          %v6229 = vpop.f32.mrf.mxu0
          %v6230 = vadd.f32 0.0, %v6229
          %v6231 = vpop.f32.mrf.mxu0
          %v6232 = vadd.f32 0.0, %v6231
          %6233 = vmatmul.bf16.gmra.mxu0 %v6210
          %v6234 = vpop.f32.mrf.mxu0
          %v6235 = vadd.f32 0.0, %v6234
          %v6236 = vpop.f32.mrf.mxu0
          %v6237 = vadd.f32 0.0, %v6236
          %6238 = vmatmul.bf16.gmra.mxu0 %v6213
          %v6239 = vpop.f32.mrf.mxu0
          %v6240 = vadd.f32 0.0, %v6239
          %v6241 = vpop.f32.mrf.mxu0
          %v6242 = vadd.f32 0.0, %v6241
          %6243 = vdwg.mxu0
          %v6252 = vunpack.c.l.b16 %v5981
          %v6253 = vunpack.c.l.b16 %v5982
          %v6254 = vunpack.c.l.b16 %v5983
          %v6255 = vunpack.c.l.b16 %v5984
          %v6256 = vunpack.c.l.b16 %v5985
          %v6257 = vunpack.c.l.b16 %v5986
          %v6258 = vunpack.c.l.b16 %v5987
          %v6259 = vunpack.c.l.b16 %v5988
          %v6260 = vpack.c.b16 %v6253, %v6252
          %v6261 = vpack.c.b16 %v6255, %v6254
          %v6262 = vpack.c.b16 %v6257, %v6256
          %v6263 = vpack.c.b16 %v6259, %v6258
          %v6272 = vunpack.c.l.b16 %v5095
          %v6273 = vunpack.c.l.b16 %v5096
          %v6274 = vunpack.c.l.b16 %v5097
          %v6275 = vunpack.c.l.b16 %v5098
          %v6276 = vunpack.c.l.b16 %v5099
          %v6277 = vunpack.c.l.b16 %v5100
          %v6278 = vunpack.c.l.b16 %v5101
          %v6279 = vunpack.c.l.b16 %v5102
          %v6280 = vpack.c.b16 %v6273, %v6272
          %v6281 = vpack.c.b16 %v6275, %v6274
          %v6282 = vpack.c.b16 %v6277, %v6276
          %v6283 = vpack.c.b16 %v6279, %v6278
          %v6289 = vsel %vm5476, %v6260, 0
          %v6292 = vsel %vm5476, %v6261, 0
          %v6295 = vsel %vm5476, %v6262, 0
          %v6298 = vsel %vm5476, %v6263, 0
          %6300 = vmatpush.bf16.msra.mxu0 0
          %6301 = vmatpush.bf16.msra.mxu0 0
          %6302 = vmatpush.bf16.msra.mxu0 0
          %6303 = vmatpush.bf16.msra.mxu0 0
          %6304 = vmatpush.bf16.msra.mxu0 %v6283
          %6305 = vmatpush.bf16.msra.mxu0 %v6282
          %6306 = vmatpush.bf16.msra.mxu0 %v6281
          %6307 = vmatpush.bf16.msra.mxu0 %v6280
          %6308 = vmatmul.bf16.gmra.mxu0 %v6289
          %v6309 = vpop.f32.mrf.mxu0
          %v6310 = vadd.f32 0.0, %v6309
          %v6311 = vpop.f32.mrf.mxu0
          %v6312 = vadd.f32 0.0, %v6311
          %6313 = vmatmul.bf16.gmra.mxu0 %v6292
          %v6314 = vpop.f32.mrf.mxu0
          %v6315 = vadd.f32 0.0, %v6314
          %v6316 = vpop.f32.mrf.mxu0
          %v6317 = vadd.f32 0.0, %v6316
          %6318 = vmatmul.bf16.gmra.mxu0 %v6295
          %v6319 = vpop.f32.mrf.mxu0
          %v6320 = vadd.f32 0.0, %v6319
          %v6321 = vpop.f32.mrf.mxu0
          %v6322 = vadd.f32 0.0, %v6321
          %6323 = vmatmul.bf16.gmra.mxu0 %v6298
          %v6324 = vpop.f32.mrf.mxu0
          %v6325 = vadd.f32 0.0, %v6324
          %v6326 = vpop.f32.mrf.mxu0
          %v6327 = vadd.f32 0.0, %v6326
          %6328 = vdwg.mxu0
          %v6329 = vmul.f32 %v5638, %v5000
          %v6330 = vmul.f32 %v5640, %v5001
          %v6331 = vmul.f32 %v5642, %v5002
          %v6332 = vmul.f32 %v5644, %v5003
          %v6333 = vmul.f32 %v5646, %v5004
          %v6334 = vmul.f32 %v5648, %v5005
          %v6335 = vmul.f32 %v5650, %v5006
          %v6336 = vmul.f32 %v5652, %v5007
          %v6337 = vmul.f32 %v5654, %v5008
          %v6338 = vmul.f32 %v5656, %v5009
          %v6339 = vmul.f32 %v5658, %v5010
          %v6340 = vmul.f32 %v5660, %v5011
          %v6341 = vmul.f32 %v5662, %v5012
          %v6342 = vmul.f32 %v5664, %v5013
          %v6343 = vmul.f32 %v5666, %v5014
          %v6344 = vmul.f32 %v5668, %v5015
          %v6345 = vmul.f32 %v5670, %v5016
          %v6346 = vmul.f32 %v5672, %v5017
          %v6347 = vmul.f32 %v5674, %v5018
          %v6348 = vmul.f32 %v5676, %v5019
          %v6349 = vmul.f32 %v5678, %v5020
          %v6350 = vmul.f32 %v5680, %v5021
          %v6351 = vmul.f32 %v5682, %v5022
          %v6352 = vmul.f32 %v5684, %v5023
          %v6353 = vmul.f32 %v5686, %v5024
          %v6354 = vmul.f32 %v5688, %v5025
          %v6355 = vmul.f32 %v5690, %v5026
          %v6356 = vmul.f32 %v5692, %v5027
          %v6357 = vmul.f32 %v5694, %v5028
          %v6358 = vmul.f32 %v5696, %v5029
          %v6359 = vmul.f32 %v5698, %v5030
          %v6360 = vmul.f32 %v5700, %v5031
          %v6361 = vadd.f32 %v6329, %v6055
          %v6362 = vadd.f32 %v6330, %v6057
          %v6363 = vadd.f32 %v6331, %v6060
          %v6364 = vadd.f32 %v6332, %v6062
          %v6365 = vadd.f32 %v6333, %v6065
          %v6366 = vadd.f32 %v6334, %v6067
          %v6367 = vadd.f32 %v6335, %v6070
          %v6368 = vadd.f32 %v6336, %v6072
          %v6369 = vadd.f32 %v6337, %v6140
          %v6370 = vadd.f32 %v6338, %v6142
          %v6371 = vadd.f32 %v6339, %v6145
          %v6372 = vadd.f32 %v6340, %v6147
          %v6373 = vadd.f32 %v6341, %v6150
          %v6374 = vadd.f32 %v6342, %v6152
          %v6375 = vadd.f32 %v6343, %v6155
          %v6376 = vadd.f32 %v6344, %v6157
          %v6377 = vadd.f32 %v6345, %v6225
          %v6378 = vadd.f32 %v6346, %v6227
          %v6379 = vadd.f32 %v6347, %v6230
          %v6380 = vadd.f32 %v6348, %v6232
          %v6381 = vadd.f32 %v6349, %v6235
          %v6382 = vadd.f32 %v6350, %v6237
          %v6383 = vadd.f32 %v6351, %v6240
          %v6384 = vadd.f32 %v6352, %v6242
          %v6385 = vadd.f32 %v6353, %v6310
          %v6386 = vadd.f32 %v6354, %v6312
          %v6387 = vadd.f32 %v6355, %v6315
          %v6388 = vadd.f32 %v6356, %v6317
          %v6389 = vadd.f32 %v6357, %v6320
          %v6390 = vadd.f32 %v6358, %v6322
          %v6391 = vadd.f32 %v6359, %v6325
          %v6392 = vadd.f32 %v6360, %v6327
        $region97: #{tpu_custom_call.1} parent=63 // loop_footer
          %s4933 = sadd.s32 %s4931, 1
        $region98: #{tpu_custom_call.1} parent=63 // loop_footer_branch
          %4930 = sbr.rel target = $region94
        $region99: #{tpu_custom_call.1} parent=63 // loop_exit
          _
        %v6393 = vlaneseq
        %v6394 = vshrl.u32 %v6393, 7
        %v6395 = vadd.s32 %v6394, 8
        %v6396 = vadd.s32 %v6394, 16
        %v6397 = vadd.s32 %v6394, 24
        %v6398 = vadd.s32 %v6394, 32
        %v6399 = vadd.s32 %v6394, 40
        %v6400 = vadd.s32 %v6394, 48
        %v6401 = vadd.s32 %v6394, 56
        %v6402 = vlaneseq
        %v6403 = vand.u32 %v6402, 127
        %vm6404 = vcmp.ge.s32.totalorder %v6394, %v6403
        %vm6405 = vcmp.ge.s32.totalorder %v6395, %v6403
        %vm6406 = vcmp.ge.s32.totalorder %v6396, %v6403
        %vm6407 = vcmp.ge.s32.totalorder %v6397, %v6403
        %vm6408 = vcmp.ge.s32.totalorder %v6398, %v6403
        %vm6409 = vcmp.ge.s32.totalorder %v6399, %v6403
        %vm6410 = vcmp.ge.s32.totalorder %v6400, %v6403
        %vm6411 = vcmp.ge.s32.totalorder %v6401, %v6403
        %s6412 = sshra.s32 %s506, 3
        %s6413 = sand.u32 %s506, 7
        %s6414 = smul.addr %s6412, 4
        %s6415 = scalar_lea.vmem [#allocation3], %s6414
        %v6416 = vld [vmem:[%s6415] sm:$0xf]
        %v6417 = vld [vmem:[%s6415 + $0x4] sm:$0xf]
        %v6418 = vld [vmem:[%s6415 + $0x8] sm:$0xf]
        %v6419 = vld [vmem:[%s6415 + $0xc] sm:$0xf]
        %v6420 = vld [vmem:[%s6415 + $0x10] sm:$0xf]
        %v6421 = vld [vmem:[%s6415 + $0x14] sm:$0xf]
        %v6422 = vld [vmem:[%s6415 + $0x18] sm:$0xf]
        %v6423 = vld [vmem:[%s6415 + $0x1c] sm:$0xf]
        %v6424 = vld [vmem:[%s6415 + $0x40] sm:$0xf]
        %v6425 = vld [vmem:[%s6415 + $0x44] sm:$0xf]
        %v6426 = vld [vmem:[%s6415 + $0x48] sm:$0xf]
        %v6427 = vld [vmem:[%s6415 + $0x4c] sm:$0xf]
        %v6428 = vld [vmem:[%s6415 + $0x50] sm:$0xf]
        %v6429 = vld [vmem:[%s6415 + $0x54] sm:$0xf]
        %v6430 = vld [vmem:[%s6415 + $0x58] sm:$0xf]
        %v6431 = vld [vmem:[%s6415 + $0x5c] sm:$0xf]
        %v6432 = vld [vmem:[%s6415 + $0x80] sm:$0xf]
        %v6433 = vld [vmem:[%s6415 + $0x84] sm:$0xf]
        %v6434 = vld [vmem:[%s6415 + $0x88] sm:$0xf]
        %v6435 = vld [vmem:[%s6415 + $0x8c] sm:$0xf]
        %v6436 = vld [vmem:[%s6415 + $0x90] sm:$0xf]
        %v6437 = vld [vmem:[%s6415 + $0x94] sm:$0xf]
        %v6438 = vld [vmem:[%s6415 + $0x98] sm:$0xf]
        %v6439 = vld [vmem:[%s6415 + $0x9c] sm:$0xf]
        %v6440 = vld [vmem:[%s6415 + $0xc0] sm:$0xf]
        %v6441 = vld [vmem:[%s6415 + $0xc4] sm:$0xf]
        %v6442 = vld [vmem:[%s6415 + $0xc8] sm:$0xf]
        %v6443 = vld [vmem:[%s6415 + $0xcc] sm:$0xf]
        %v6444 = vld [vmem:[%s6415 + $0xd0] sm:$0xf]
        %v6445 = vld [vmem:[%s6415 + $0xd4] sm:$0xf]
        %v6446 = vld [vmem:[%s6415 + $0xd8] sm:$0xf]
        %v6447 = vld [vmem:[%s6415 + $0xdc] sm:$0xf]
        %s6448 = smul.addr %s6412, 4
        %s6449 = scalar_lea.vmem [#allocation4], %s6448
        %v6450 = vld [vmem:[%s6449] sm:$0xf]
        %v6451 = vld [vmem:[%s6449 + $0x4] sm:$0xf]
        %v6452 = vld [vmem:[%s6449 + $0x8] sm:$0xf]
        %v6453 = vld [vmem:[%s6449 + $0xc] sm:$0xf]
        %v6454 = vld [vmem:[%s6449 + $0x10] sm:$0xf]
        %v6455 = vld [vmem:[%s6449 + $0x14] sm:$0xf]
        %v6456 = vld [vmem:[%s6449 + $0x18] sm:$0xf]
        %v6457 = vld [vmem:[%s6449 + $0x1c] sm:$0xf]
        %v6458 = vld [vmem:[%s6449 + $0x40] sm:$0xf]
        %v6459 = vld [vmem:[%s6449 + $0x44] sm:$0xf]
        %v6460 = vld [vmem:[%s6449 + $0x48] sm:$0xf]
        %v6461 = vld [vmem:[%s6449 + $0x4c] sm:$0xf]
        %v6462 = vld [vmem:[%s6449 + $0x50] sm:$0xf]
        %v6463 = vld [vmem:[%s6449 + $0x54] sm:$0xf]
        %v6464 = vld [vmem:[%s6449 + $0x58] sm:$0xf]
        %v6465 = vld [vmem:[%s6449 + $0x5c] sm:$0xf]
        %v6466 = vld [vmem:[%s6449 + $0x80] sm:$0xf]
        %v6467 = vld [vmem:[%s6449 + $0x84] sm:$0xf]
        %v6468 = vld [vmem:[%s6449 + $0x88] sm:$0xf]
        %v6469 = vld [vmem:[%s6449 + $0x8c] sm:$0xf]
        %v6470 = vld [vmem:[%s6449 + $0x90] sm:$0xf]
        %v6471 = vld [vmem:[%s6449 + $0x94] sm:$0xf]
        %v6472 = vld [vmem:[%s6449 + $0x98] sm:$0xf]
        %v6473 = vld [vmem:[%s6449 + $0x9c] sm:$0xf]
        %v6474 = vld [vmem:[%s6449 + $0xc0] sm:$0xf]
        %v6475 = vld [vmem:[%s6449 + $0xc4] sm:$0xf]
        %v6476 = vld [vmem:[%s6449 + $0xc8] sm:$0xf]
        %v6477 = vld [vmem:[%s6449 + $0xcc] sm:$0xf]
        %v6478 = vld [vmem:[%s6449 + $0xd0] sm:$0xf]
        %v6479 = vld [vmem:[%s6449 + $0xd4] sm:$0xf]
        %v6480 = vld [vmem:[%s6449 + $0xd8] sm:$0xf]
        %v6481 = vld [vmem:[%s6449 + $0xdc] sm:$0xf]
        %v6490 = vunpack.c.l.b16 %v4898
        %v6491 = vunpack.c.l.b16 %v4899
        %v6492 = vunpack.c.l.b16 %v4900
        %v6493 = vunpack.c.l.b16 %v4901
        %v6494 = vunpack.c.l.b16 %v4902
        %v6495 = vunpack.c.l.b16 %v4903
        %v6496 = vunpack.c.l.b16 %v4904
        %v6497 = vunpack.c.l.b16 %v4905
        %v6498 = vpack.c.b16 %v6491, %v6490
        %v6499 = vpack.c.b16 %v6493, %v6492
        %v6500 = vpack.c.b16 %v6495, %v6494
        %v6501 = vpack.c.b16 %v6497, %v6496
        %v6510 = vunpack.c.l.b16 %v6416
        %v6511 = vunpack.c.l.b16 %v6417
        %v6512 = vunpack.c.l.b16 %v6418
        %v6513 = vunpack.c.l.b16 %v6419
        %v6514 = vunpack.c.l.b16 %v6420
        %v6515 = vunpack.c.l.b16 %v6421
        %v6516 = vunpack.c.l.b16 %v6422
        %v6517 = vunpack.c.l.b16 %v6423
        %v6518 = vpack.c.b16 %v6511, %v6510
        %v6519 = vpack.c.b16 %v6513, %v6512
        %v6520 = vpack.c.b16 %v6515, %v6514
        %v6521 = vpack.c.b16 %v6517, %v6516
        %vm6522 = vcmask 261120
        %v6524 = vsel %vm6522, %v6498, 0
        %v6527 = vsel %vm6522, %v6499, 0
        %v6530 = vsel %vm6522, %v6500, 0
        %v6533 = vsel %vm6522, %v6501, 0
        %v6536 = vsel %vm6522, %v6518, 0
        %v6539 = vsel %vm6522, %v6519, 0
        %v6542 = vsel %vm6522, %v6520, 0
        %v6545 = vsel %vm6522, %v6521, 0
        %6547 = vmatpush.bf16.xpose.msra.mxu0 0
        %6548 = vmatpush.bf16.xpose.msra.mxu0 0
        %6549 = vmatpush.bf16.xpose.msra.mxu0 0
        %6550 = vmatpush.bf16.xpose.msra.mxu0 0
        %6551 = vmatpush.bf16.xpose.msra.mxu0 %v6545
        %6552 = vmatpush.bf16.xpose.msra.mxu0 %v6542
        %6553 = vmatpush.bf16.xpose.msra.mxu0 %v6539
        %6554 = vmatpush.bf16.xpose.msra.mxu0 %v6536
        %6555 = vmatmul.bf16.gmra.mxu0 %v6524
        %v6556 = vpop.f32.mrf.mxu0
        %v6557 = vadd.f32 0.0, %v6556
        %v6558 = vpop.f32.mrf.mxu0
        %v6559 = vadd.f32 0.0, %v6558
        %6560 = vmatmul.bf16.gmra.mxu0 %v6527
        %v6561 = vpop.f32.mrf.mxu0
        %v6562 = vadd.f32 0.0, %v6561
        %v6563 = vpop.f32.mrf.mxu0
        %v6564 = vadd.f32 0.0, %v6563
        %6565 = vmatmul.bf16.gmra.mxu0 %v6530
        %v6566 = vpop.f32.mrf.mxu0
        %v6567 = vadd.f32 0.0, %v6566
        %v6568 = vpop.f32.mrf.mxu0
        %v6569 = vadd.f32 0.0, %v6568
        %6570 = vmatmul.bf16.gmra.mxu0 %v6533
        %v6571 = vpop.f32.mrf.mxu0
        %v6572 = vadd.f32 0.0, %v6571
        %v6573 = vpop.f32.mrf.mxu0
        %v6574 = vadd.f32 0.0, %v6573
        %6575 = vdwg.mxu0
        %v6584 = vunpack.c.l.b16 %v4906
        %v6585 = vunpack.c.l.b16 %v4907
        %v6586 = vunpack.c.l.b16 %v4908
        %v6587 = vunpack.c.l.b16 %v4909
        %v6588 = vunpack.c.l.b16 %v4910
        %v6589 = vunpack.c.l.b16 %v4911
        %v6590 = vunpack.c.l.b16 %v4912
        %v6591 = vunpack.c.l.b16 %v4913
        %v6592 = vpack.c.b16 %v6585, %v6584
        %v6593 = vpack.c.b16 %v6587, %v6586
        %v6594 = vpack.c.b16 %v6589, %v6588
        %v6595 = vpack.c.b16 %v6591, %v6590
        %v6604 = vunpack.c.l.b16 %v6424
        %v6605 = vunpack.c.l.b16 %v6425
        %v6606 = vunpack.c.l.b16 %v6426
        %v6607 = vunpack.c.l.b16 %v6427
        %v6608 = vunpack.c.l.b16 %v6428
        %v6609 = vunpack.c.l.b16 %v6429
        %v6610 = vunpack.c.l.b16 %v6430
        %v6611 = vunpack.c.l.b16 %v6431
        %v6612 = vpack.c.b16 %v6605, %v6604
        %v6613 = vpack.c.b16 %v6607, %v6606
        %v6614 = vpack.c.b16 %v6609, %v6608
        %v6615 = vpack.c.b16 %v6611, %v6610
        %v6617 = vsel %vm6522, %v6592, 0
        %v6620 = vsel %vm6522, %v6593, 0
        %v6623 = vsel %vm6522, %v6594, 0
        %v6626 = vsel %vm6522, %v6595, 0
        %v6629 = vsel %vm6522, %v6612, 0
        %v6632 = vsel %vm6522, %v6613, 0
        %v6635 = vsel %vm6522, %v6614, 0
        %v6638 = vsel %vm6522, %v6615, 0
        %6640 = vmatpush.bf16.xpose.msra.mxu0 0
        %6641 = vmatpush.bf16.xpose.msra.mxu0 0
        %6642 = vmatpush.bf16.xpose.msra.mxu0 0
        %6643 = vmatpush.bf16.xpose.msra.mxu0 0
        %6644 = vmatpush.bf16.xpose.msra.mxu0 %v6638
        %6645 = vmatpush.bf16.xpose.msra.mxu0 %v6635
        %6646 = vmatpush.bf16.xpose.msra.mxu0 %v6632
        %6647 = vmatpush.bf16.xpose.msra.mxu0 %v6629
        %6648 = vmatmul.bf16.gmra.mxu0 %v6617
        %v6649 = vpop.f32.mrf.mxu0
        %v6650 = vadd.f32 0.0, %v6649
        %v6651 = vpop.f32.mrf.mxu0
        %v6652 = vadd.f32 0.0, %v6651
        %6653 = vmatmul.bf16.gmra.mxu0 %v6620
        %v6654 = vpop.f32.mrf.mxu0
        %v6655 = vadd.f32 0.0, %v6654
        %v6656 = vpop.f32.mrf.mxu0
        %v6657 = vadd.f32 0.0, %v6656
        %6658 = vmatmul.bf16.gmra.mxu0 %v6623
        %v6659 = vpop.f32.mrf.mxu0
        %v6660 = vadd.f32 0.0, %v6659
        %v6661 = vpop.f32.mrf.mxu0
        %v6662 = vadd.f32 0.0, %v6661
        %6663 = vmatmul.bf16.gmra.mxu0 %v6626
        %v6664 = vpop.f32.mrf.mxu0
        %v6665 = vadd.f32 0.0, %v6664
        %v6666 = vpop.f32.mrf.mxu0
        %v6667 = vadd.f32 0.0, %v6666
        %6668 = vdwg.mxu0
        %v6677 = vunpack.c.l.b16 %v4914
        %v6678 = vunpack.c.l.b16 %v4915
        %v6679 = vunpack.c.l.b16 %v4916
        %v6680 = vunpack.c.l.b16 %v4917
        %v6681 = vunpack.c.l.b16 %v4918
        %v6682 = vunpack.c.l.b16 %v4919
        %v6683 = vunpack.c.l.b16 %v4920
        %v6684 = vunpack.c.l.b16 %v4921
        %v6685 = vpack.c.b16 %v6678, %v6677
        %v6686 = vpack.c.b16 %v6680, %v6679
        %v6687 = vpack.c.b16 %v6682, %v6681
        %v6688 = vpack.c.b16 %v6684, %v6683
        %v6697 = vunpack.c.l.b16 %v6432
        %v6698 = vunpack.c.l.b16 %v6433
        %v6699 = vunpack.c.l.b16 %v6434
        %v6700 = vunpack.c.l.b16 %v6435
        %v6701 = vunpack.c.l.b16 %v6436
        %v6702 = vunpack.c.l.b16 %v6437
        %v6703 = vunpack.c.l.b16 %v6438
        %v6704 = vunpack.c.l.b16 %v6439
        %v6705 = vpack.c.b16 %v6698, %v6697
        %v6706 = vpack.c.b16 %v6700, %v6699
        %v6707 = vpack.c.b16 %v6702, %v6701
        %v6708 = vpack.c.b16 %v6704, %v6703
        %v6710 = vsel %vm6522, %v6685, 0
        %v6713 = vsel %vm6522, %v6686, 0
        %v6716 = vsel %vm6522, %v6687, 0
        %v6719 = vsel %vm6522, %v6688, 0
        %v6722 = vsel %vm6522, %v6705, 0
        %v6725 = vsel %vm6522, %v6706, 0
        %v6728 = vsel %vm6522, %v6707, 0
        %v6731 = vsel %vm6522, %v6708, 0
        %6733 = vmatpush.bf16.xpose.msra.mxu0 0
        %6734 = vmatpush.bf16.xpose.msra.mxu0 0
        %6735 = vmatpush.bf16.xpose.msra.mxu0 0
        %6736 = vmatpush.bf16.xpose.msra.mxu0 0
        %6737 = vmatpush.bf16.xpose.msra.mxu0 %v6731
        %6738 = vmatpush.bf16.xpose.msra.mxu0 %v6728
        %6739 = vmatpush.bf16.xpose.msra.mxu0 %v6725
        %6740 = vmatpush.bf16.xpose.msra.mxu0 %v6722
        %6741 = vmatmul.bf16.gmra.mxu0 %v6710
        %v6742 = vpop.f32.mrf.mxu0
        %v6743 = vadd.f32 0.0, %v6742
        %v6744 = vpop.f32.mrf.mxu0
        %v6745 = vadd.f32 0.0, %v6744
        %6746 = vmatmul.bf16.gmra.mxu0 %v6713
        %v6747 = vpop.f32.mrf.mxu0
        %v6748 = vadd.f32 0.0, %v6747
        %v6749 = vpop.f32.mrf.mxu0
        %v6750 = vadd.f32 0.0, %v6749
        %6751 = vmatmul.bf16.gmra.mxu0 %v6716
        %v6752 = vpop.f32.mrf.mxu0
        %v6753 = vadd.f32 0.0, %v6752
        %v6754 = vpop.f32.mrf.mxu0
        %v6755 = vadd.f32 0.0, %v6754
        %6756 = vmatmul.bf16.gmra.mxu0 %v6719
        %v6757 = vpop.f32.mrf.mxu0
        %v6758 = vadd.f32 0.0, %v6757
        %v6759 = vpop.f32.mrf.mxu0
        %v6760 = vadd.f32 0.0, %v6759
        %6761 = vdwg.mxu0
        %v6770 = vunpack.c.l.b16 %v4922
        %v6771 = vunpack.c.l.b16 %v4923
        %v6772 = vunpack.c.l.b16 %v4924
        %v6773 = vunpack.c.l.b16 %v4925
        %v6774 = vunpack.c.l.b16 %v4926
        %v6775 = vunpack.c.l.b16 %v4927
        %v6776 = vunpack.c.l.b16 %v4928
        %v6777 = vunpack.c.l.b16 %v4929
        %v6778 = vpack.c.b16 %v6771, %v6770
        %v6779 = vpack.c.b16 %v6773, %v6772
        %v6780 = vpack.c.b16 %v6775, %v6774
        %v6781 = vpack.c.b16 %v6777, %v6776
        %v6790 = vunpack.c.l.b16 %v6440
        %v6791 = vunpack.c.l.b16 %v6441
        %v6792 = vunpack.c.l.b16 %v6442
        %v6793 = vunpack.c.l.b16 %v6443
        %v6794 = vunpack.c.l.b16 %v6444
        %v6795 = vunpack.c.l.b16 %v6445
        %v6796 = vunpack.c.l.b16 %v6446
        %v6797 = vunpack.c.l.b16 %v6447
        %v6798 = vpack.c.b16 %v6791, %v6790
        %v6799 = vpack.c.b16 %v6793, %v6792
        %v6800 = vpack.c.b16 %v6795, %v6794
        %v6801 = vpack.c.b16 %v6797, %v6796
        %v6803 = vsel %vm6522, %v6778, 0
        %v6806 = vsel %vm6522, %v6779, 0
        %v6809 = vsel %vm6522, %v6780, 0
        %v6812 = vsel %vm6522, %v6781, 0
        %v6815 = vsel %vm6522, %v6798, 0
        %v6818 = vsel %vm6522, %v6799, 0
        %v6821 = vsel %vm6522, %v6800, 0
        %v6824 = vsel %vm6522, %v6801, 0
        %6826 = vmatpush.bf16.xpose.msra.mxu0 0
        %6827 = vmatpush.bf16.xpose.msra.mxu0 0
        %6828 = vmatpush.bf16.xpose.msra.mxu0 0
        %6829 = vmatpush.bf16.xpose.msra.mxu0 0
        %6830 = vmatpush.bf16.xpose.msra.mxu0 %v6824
        %6831 = vmatpush.bf16.xpose.msra.mxu0 %v6821
        %6832 = vmatpush.bf16.xpose.msra.mxu0 %v6818
        %6833 = vmatpush.bf16.xpose.msra.mxu0 %v6815
        %6834 = vmatmul.bf16.gmra.mxu0 %v6803
        %v6835 = vpop.f32.mrf.mxu0
        %v6836 = vadd.f32 0.0, %v6835
        %v6837 = vpop.f32.mrf.mxu0
        %v6838 = vadd.f32 0.0, %v6837
        %6839 = vmatmul.bf16.gmra.mxu0 %v6806
        %v6840 = vpop.f32.mrf.mxu0
        %v6841 = vadd.f32 0.0, %v6840
        %v6842 = vpop.f32.mrf.mxu0
        %v6843 = vadd.f32 0.0, %v6842
        %6844 = vmatmul.bf16.gmra.mxu0 %v6809
        %v6845 = vpop.f32.mrf.mxu0
        %v6846 = vadd.f32 0.0, %v6845
        %v6847 = vpop.f32.mrf.mxu0
        %v6848 = vadd.f32 0.0, %v6847
        %6849 = vmatmul.bf16.gmra.mxu0 %v6812
        %v6850 = vpop.f32.mrf.mxu0
        %v6851 = vadd.f32 0.0, %v6850
        %v6852 = vpop.f32.mrf.mxu0
        %v6853 = vadd.f32 0.0, %v6852
        %6854 = vdwg.mxu0
        %v6855 = vsel %vm6404, 1, 0
        %v6856 = vsel %vm6405, 1, 0
        %v6857 = vsel %vm6406, 1, 0
        %v6858 = vsel %vm6407, 1, 0
        %v6859 = vsel %vm6408, 1, 0
        %v6860 = vsel %vm6409, 1, 0
        %v6861 = vsel %vm6410, 1, 0
        %v6862 = vsel %vm6411, 1, 0
        %vm6863 = vcmp.eq.s32.totalorder %v6855, 1
        %vm6864 = vcmp.eq.s32.totalorder %v6856, 1
        %vm6865 = vcmp.eq.s32.totalorder %v6857, 1
        %vm6866 = vcmp.eq.s32.totalorder %v6858, 1
        %vm6867 = vcmp.eq.s32.totalorder %v6859, 1
        %vm6868 = vcmp.eq.s32.totalorder %v6860, 1
        %vm6869 = vcmp.eq.s32.totalorder %v6861, 1
        %vm6870 = vcmp.eq.s32.totalorder %v6862, 1
        %v6871 = vsel %vm6863, %v6557, -1e+30
        %v6872 = vsel %vm6864, %v6559, -1e+30
        %v6873 = vsel %vm6865, %v6562, -1e+30
        %v6874 = vsel %vm6866, %v6564, -1e+30
        %v6875 = vsel %vm6867, %v6567, -1e+30
        %v6876 = vsel %vm6868, %v6569, -1e+30
        %v6877 = vsel %vm6869, %v6572, -1e+30
        %v6878 = vsel %vm6870, %v6574, -1e+30
        %v6879 = vsel %vm6863, %v6650, -1e+30
        %v6880 = vsel %vm6864, %v6652, -1e+30
        %v6881 = vsel %vm6865, %v6655, -1e+30
        %v6882 = vsel %vm6866, %v6657, -1e+30
        %v6883 = vsel %vm6867, %v6660, -1e+30
        %v6884 = vsel %vm6868, %v6662, -1e+30
        %v6885 = vsel %vm6869, %v6665, -1e+30
        %v6886 = vsel %vm6870, %v6667, -1e+30
        %v6887 = vsel %vm6863, %v6743, -1e+30
        %v6888 = vsel %vm6864, %v6745, -1e+30
        %v6889 = vsel %vm6865, %v6748, -1e+30
        %v6890 = vsel %vm6866, %v6750, -1e+30
        %v6891 = vsel %vm6867, %v6753, -1e+30
        %v6892 = vsel %vm6868, %v6755, -1e+30
        %v6893 = vsel %vm6869, %v6758, -1e+30
        %v6894 = vsel %vm6870, %v6760, -1e+30
        %v6895 = vsel %vm6863, %v6836, -1e+30
        %v6896 = vsel %vm6864, %v6838, -1e+30
        %v6897 = vsel %vm6865, %v6841, -1e+30
        %v6898 = vsel %vm6866, %v6843, -1e+30
        %v6899 = vsel %vm6867, %v6846, -1e+30
        %v6900 = vsel %vm6868, %v6848, -1e+30
        %v6901 = vsel %vm6869, %v6851, -1e+30
        %v6902 = vsel %vm6870, %v6853, -1e+30
        %vm6903 = vcmask 523264
        %v6904 = vsel %vm6903, %v6871, -inf
        %6905 = vmax.xlane.f32.xlu0 %v6904
        %v6906 = vpop.xlane.xlu0 %6905
        %v6907 = vsel %vm6903, %v6872, -inf
        %6908 = vmax.xlane.f32.xlu0 %v6907
        %v6909 = vpop.xlane.xlu0 %6908
        %v6910 = vsel %vm6903, %v6873, -inf
        %6911 = vmax.xlane.f32.xlu0 %v6910
        %v6912 = vpop.xlane.xlu0 %6911
        %v6913 = vsel %vm6903, %v6874, -inf
        %6914 = vmax.xlane.f32.xlu0 %v6913
        %v6915 = vpop.xlane.xlu0 %6914
        %v6916 = vsel %vm6903, %v6875, -inf
        %6917 = vmax.xlane.f32.xlu0 %v6916
        %v6918 = vpop.xlane.xlu0 %6917
        %v6919 = vsel %vm6903, %v6876, -inf
        %6920 = vmax.xlane.f32.xlu0 %v6919
        %v6921 = vpop.xlane.xlu0 %6920
        %v6922 = vsel %vm6903, %v6877, -inf
        %6923 = vmax.xlane.f32.xlu0 %v6922
        %v6924 = vpop.xlane.xlu0 %6923
        %v6925 = vsel %vm6903, %v6878, -inf
        %6926 = vmax.xlane.f32.xlu0 %v6925
        %v6927 = vpop.xlane.xlu0 %6926
        %v6928 = vsel %vm6903, %v6879, -inf
        %6929 = vmax.xlane.f32.xlu0 %v6928
        %v6930 = vpop.xlane.xlu0 %6929
        %v6931 = vsel %vm6903, %v6880, -inf
        %6932 = vmax.xlane.f32.xlu0 %v6931
        %v6933 = vpop.xlane.xlu0 %6932
        %v6934 = vsel %vm6903, %v6881, -inf
        %6935 = vmax.xlane.f32.xlu0 %v6934
        %v6936 = vpop.xlane.xlu0 %6935
        %v6937 = vsel %vm6903, %v6882, -inf
        %6938 = vmax.xlane.f32.xlu0 %v6937
        %v6939 = vpop.xlane.xlu0 %6938
        %v6940 = vsel %vm6903, %v6883, -inf
        %6941 = vmax.xlane.f32.xlu0 %v6940
        %v6942 = vpop.xlane.xlu0 %6941
        %v6943 = vsel %vm6903, %v6884, -inf
        %6944 = vmax.xlane.f32.xlu0 %v6943
        %v6945 = vpop.xlane.xlu0 %6944
        %v6946 = vsel %vm6903, %v6885, -inf
        %6947 = vmax.xlane.f32.xlu0 %v6946
        %v6948 = vpop.xlane.xlu0 %6947
        %v6949 = vsel %vm6903, %v6886, -inf
        %6950 = vmax.xlane.f32.xlu0 %v6949
        %v6951 = vpop.xlane.xlu0 %6950
        %v6952 = vsel %vm6903, %v6887, -inf
        %6953 = vmax.xlane.f32.xlu0 %v6952
        %v6954 = vpop.xlane.xlu0 %6953
        %v6955 = vsel %vm6903, %v6888, -inf
        %6956 = vmax.xlane.f32.xlu0 %v6955
        %v6957 = vpop.xlane.xlu0 %6956
        %v6958 = vsel %vm6903, %v6889, -inf
        %6959 = vmax.xlane.f32.xlu0 %v6958
        %v6960 = vpop.xlane.xlu0 %6959
        %v6961 = vsel %vm6903, %v6890, -inf
        %6962 = vmax.xlane.f32.xlu0 %v6961
        %v6963 = vpop.xlane.xlu0 %6962
        %v6964 = vsel %vm6903, %v6891, -inf
        %6965 = vmax.xlane.f32.xlu0 %v6964
        %v6966 = vpop.xlane.xlu0 %6965
        %v6967 = vsel %vm6903, %v6892, -inf
        %6968 = vmax.xlane.f32.xlu0 %v6967
        %v6969 = vpop.xlane.xlu0 %6968
        %v6970 = vsel %vm6903, %v6893, -inf
        %6971 = vmax.xlane.f32.xlu0 %v6970
        %v6972 = vpop.xlane.xlu0 %6971
        %v6973 = vsel %vm6903, %v6894, -inf
        %6974 = vmax.xlane.f32.xlu0 %v6973
        %v6975 = vpop.xlane.xlu0 %6974
        %v6976 = vsel %vm6903, %v6895, -inf
        %6977 = vmax.xlane.f32.xlu0 %v6976
        %v6978 = vpop.xlane.xlu0 %6977
        %v6979 = vsel %vm6903, %v6896, -inf
        %6980 = vmax.xlane.f32.xlu0 %v6979
        %v6981 = vpop.xlane.xlu0 %6980
        %v6982 = vsel %vm6903, %v6897, -inf
        %6983 = vmax.xlane.f32.xlu0 %v6982
        %v6984 = vpop.xlane.xlu0 %6983
        %v6985 = vsel %vm6903, %v6898, -inf
        %6986 = vmax.xlane.f32.xlu0 %v6985
        %v6987 = vpop.xlane.xlu0 %6986
        %v6988 = vsel %vm6903, %v6899, -inf
        %6989 = vmax.xlane.f32.xlu0 %v6988
        %v6990 = vpop.xlane.xlu0 %6989
        %v6991 = vsel %vm6903, %v6900, -inf
        %6992 = vmax.xlane.f32.xlu0 %v6991
        %v6993 = vpop.xlane.xlu0 %6992
        %v6994 = vsel %vm6903, %v6901, -inf
        %6995 = vmax.xlane.f32.xlu0 %v6994
        %v6996 = vpop.xlane.xlu0 %6995
        %v6997 = vsel %vm6903, %v6902, -inf
        %6998 = vmax.xlane.f32.xlu0 %v6997
        %v6999 = vpop.xlane.xlu0 %6998
        %v7000 = vmax.f32 %v4936, %v6906
        %v7001 = vmax.f32 %v4937, %v6909
        %v7002 = vmax.f32 %v4938, %v6912
        %v7003 = vmax.f32 %v4939, %v6915
        %v7004 = vmax.f32 %v4940, %v6918
        %v7005 = vmax.f32 %v4941, %v6921
        %v7006 = vmax.f32 %v4942, %v6924
        %v7007 = vmax.f32 %v4943, %v6927
        %v7008 = vmax.f32 %v4944, %v6930
        %v7009 = vmax.f32 %v4945, %v6933
        %v7010 = vmax.f32 %v4946, %v6936
        %v7011 = vmax.f32 %v4947, %v6939
        %v7012 = vmax.f32 %v4948, %v6942
        %v7013 = vmax.f32 %v4949, %v6945
        %v7014 = vmax.f32 %v4950, %v6948
        %v7015 = vmax.f32 %v4951, %v6951
        %v7016 = vmax.f32 %v4952, %v6954
        %v7017 = vmax.f32 %v4953, %v6957
        %v7018 = vmax.f32 %v4954, %v6960
        %v7019 = vmax.f32 %v4955, %v6963
        %v7020 = vmax.f32 %v4956, %v6966
        %v7021 = vmax.f32 %v4957, %v6969
        %v7022 = vmax.f32 %v4958, %v6972
        %v7023 = vmax.f32 %v4959, %v6975
        %v7024 = vmax.f32 %v4960, %v6978
        %v7025 = vmax.f32 %v4961, %v6981
        %v7026 = vmax.f32 %v4962, %v6984
        %v7027 = vmax.f32 %v4963, %v6987
        %v7028 = vmax.f32 %v4964, %v6990
        %v7029 = vmax.f32 %v4965, %v6993
        %v7030 = vmax.f32 %v4966, %v6996
        %v7031 = vmax.f32 %v4967, %v6999
        %v7032 = vsub.f32 %v4936, %v7000
        %v7033 = vsub.f32 %v4937, %v7001
        %v7034 = vsub.f32 %v4938, %v7002
        %v7035 = vsub.f32 %v4939, %v7003
        %v7036 = vsub.f32 %v4940, %v7004
        %v7037 = vsub.f32 %v4941, %v7005
        %v7038 = vsub.f32 %v4942, %v7006
        %v7039 = vsub.f32 %v4943, %v7007
        %v7040 = vsub.f32 %v4944, %v7008
        %v7041 = vsub.f32 %v4945, %v7009
        %v7042 = vsub.f32 %v4946, %v7010
        %v7043 = vsub.f32 %v4947, %v7011
        %v7044 = vsub.f32 %v4948, %v7012
        %v7045 = vsub.f32 %v4949, %v7013
        %v7046 = vsub.f32 %v4950, %v7014
        %v7047 = vsub.f32 %v4951, %v7015
        %v7048 = vsub.f32 %v4952, %v7016
        %v7049 = vsub.f32 %v4953, %v7017
        %v7050 = vsub.f32 %v4954, %v7018
        %v7051 = vsub.f32 %v4955, %v7019
        %v7052 = vsub.f32 %v4956, %v7020
        %v7053 = vsub.f32 %v4957, %v7021
        %v7054 = vsub.f32 %v4958, %v7022
        %v7055 = vsub.f32 %v4959, %v7023
        %v7056 = vsub.f32 %v4960, %v7024
        %v7057 = vsub.f32 %v4961, %v7025
        %v7058 = vsub.f32 %v4962, %v7026
        %v7059 = vsub.f32 %v4963, %v7027
        %v7060 = vsub.f32 %v4964, %v7028
        %v7061 = vsub.f32 %v4965, %v7029
        %v7062 = vsub.f32 %v4966, %v7030
        %v7063 = vsub.f32 %v4967, %v7031
        %v7064 = vmul.f32 %v7032, 1.442695
        %v7065 = vpow.pop %v7064
        %v7066 = vmul.f32 %v7033, 1.442695
        %v7067 = vpow.pop %v7066
        %v7068 = vmul.f32 %v7034, 1.442695
        %v7069 = vpow.pop %v7068
        %v7070 = vmul.f32 %v7035, 1.442695
        %v7071 = vpow.pop %v7070
        %v7072 = vmul.f32 %v7036, 1.442695
        %v7073 = vpow.pop %v7072
        %v7074 = vmul.f32 %v7037, 1.442695
        %v7075 = vpow.pop %v7074
        %v7076 = vmul.f32 %v7038, 1.442695
        %v7077 = vpow.pop %v7076
        %v7078 = vmul.f32 %v7039, 1.442695
        %v7079 = vpow.pop %v7078
        %v7080 = vmul.f32 %v7040, 1.442695
        %v7081 = vpow.pop %v7080
        %v7082 = vmul.f32 %v7041, 1.442695
        %v7083 = vpow.pop %v7082
        %v7084 = vmul.f32 %v7042, 1.442695
        %v7085 = vpow.pop %v7084
        %v7086 = vmul.f32 %v7043, 1.442695
        %v7087 = vpow.pop %v7086
        %v7088 = vmul.f32 %v7044, 1.442695
        %v7089 = vpow.pop %v7088
        %v7090 = vmul.f32 %v7045, 1.442695
        %v7091 = vpow.pop %v7090
        %v7092 = vmul.f32 %v7046, 1.442695
        %v7093 = vpow.pop %v7092
        %v7094 = vmul.f32 %v7047, 1.442695
        %v7095 = vpow.pop %v7094
        %v7096 = vmul.f32 %v7048, 1.442695
        %v7097 = vpow.pop %v7096
        %v7098 = vmul.f32 %v7049, 1.442695
        %v7099 = vpow.pop %v7098
        %v7100 = vmul.f32 %v7050, 1.442695
        %v7101 = vpow.pop %v7100
        %v7102 = vmul.f32 %v7051, 1.442695
        %v7103 = vpow.pop %v7102
        %v7104 = vmul.f32 %v7052, 1.442695
        %v7105 = vpow.pop %v7104
        %v7106 = vmul.f32 %v7053, 1.442695
        %v7107 = vpow.pop %v7106
        %v7108 = vmul.f32 %v7054, 1.442695
        %v7109 = vpow.pop %v7108
        %v7110 = vmul.f32 %v7055, 1.442695
        %v7111 = vpow.pop %v7110
        %v7112 = vmul.f32 %v7056, 1.442695
        %v7113 = vpow.pop %v7112
        %v7114 = vmul.f32 %v7057, 1.442695
        %v7115 = vpow.pop %v7114
        %v7116 = vmul.f32 %v7058, 1.442695
        %v7117 = vpow.pop %v7116
        %v7118 = vmul.f32 %v7059, 1.442695
        %v7119 = vpow.pop %v7118
        %v7120 = vmul.f32 %v7060, 1.442695
        %v7121 = vpow.pop %v7120
        %v7122 = vmul.f32 %v7061, 1.442695
        %v7123 = vpow.pop %v7122
        %v7124 = vmul.f32 %v7062, 1.442695
        %v7125 = vpow.pop %v7124
        %v7126 = vmul.f32 %v7063, 1.442695
        %v7127 = vpow.pop %v7126
        %v7128 = vsub.f32 %v6871, %v7000
        %v7129 = vsub.f32 %v6872, %v7001
        %v7130 = vsub.f32 %v6873, %v7002
        %v7131 = vsub.f32 %v6874, %v7003
        %v7132 = vsub.f32 %v6875, %v7004
        %v7133 = vsub.f32 %v6876, %v7005
        %v7134 = vsub.f32 %v6877, %v7006
        %v7135 = vsub.f32 %v6878, %v7007
        %v7136 = vsub.f32 %v6879, %v7008
        %v7137 = vsub.f32 %v6880, %v7009
        %v7138 = vsub.f32 %v6881, %v7010
        %v7139 = vsub.f32 %v6882, %v7011
        %v7140 = vsub.f32 %v6883, %v7012
        %v7141 = vsub.f32 %v6884, %v7013
        %v7142 = vsub.f32 %v6885, %v7014
        %v7143 = vsub.f32 %v6886, %v7015
        %v7144 = vsub.f32 %v6887, %v7016
        %v7145 = vsub.f32 %v6888, %v7017
        %v7146 = vsub.f32 %v6889, %v7018
        %v7147 = vsub.f32 %v6890, %v7019
        %v7148 = vsub.f32 %v6891, %v7020
        %v7149 = vsub.f32 %v6892, %v7021
        %v7150 = vsub.f32 %v6893, %v7022
        %v7151 = vsub.f32 %v6894, %v7023
        %v7152 = vsub.f32 %v6895, %v7024
        %v7153 = vsub.f32 %v6896, %v7025
        %v7154 = vsub.f32 %v6897, %v7026
        %v7155 = vsub.f32 %v6898, %v7027
        %v7156 = vsub.f32 %v6899, %v7028
        %v7157 = vsub.f32 %v6900, %v7029
        %v7158 = vsub.f32 %v6901, %v7030
        %v7159 = vsub.f32 %v6902, %v7031
        %v7160 = vmul.f32 %v7128, 1.442695
        %v7161 = vpow.pop %v7160
        %v7162 = vmul.f32 %v7129, 1.442695
        %v7163 = vpow.pop %v7162
        %v7164 = vmul.f32 %v7130, 1.442695
        %v7165 = vpow.pop %v7164
        %v7166 = vmul.f32 %v7131, 1.442695
        %v7167 = vpow.pop %v7166
        %v7168 = vmul.f32 %v7132, 1.442695
        %v7169 = vpow.pop %v7168
        %v7170 = vmul.f32 %v7133, 1.442695
        %v7171 = vpow.pop %v7170
        %v7172 = vmul.f32 %v7134, 1.442695
        %v7173 = vpow.pop %v7172
        %v7174 = vmul.f32 %v7135, 1.442695
        %v7175 = vpow.pop %v7174
        %v7176 = vmul.f32 %v7136, 1.442695
        %v7177 = vpow.pop %v7176
        %v7178 = vmul.f32 %v7137, 1.442695
        %v7179 = vpow.pop %v7178
        %v7180 = vmul.f32 %v7138, 1.442695
        %v7181 = vpow.pop %v7180
        %v7182 = vmul.f32 %v7139, 1.442695
        %v7183 = vpow.pop %v7182
        %v7184 = vmul.f32 %v7140, 1.442695
        %v7185 = vpow.pop %v7184
        %v7186 = vmul.f32 %v7141, 1.442695
        %v7187 = vpow.pop %v7186
        %v7188 = vmul.f32 %v7142, 1.442695
        %v7189 = vpow.pop %v7188
        %v7190 = vmul.f32 %v7143, 1.442695
        %v7191 = vpow.pop %v7190
        %v7192 = vmul.f32 %v7144, 1.442695
        %v7193 = vpow.pop %v7192
        %v7194 = vmul.f32 %v7145, 1.442695
        %v7195 = vpow.pop %v7194
        %v7196 = vmul.f32 %v7146, 1.442695
        %v7197 = vpow.pop %v7196
        %v7198 = vmul.f32 %v7147, 1.442695
        %v7199 = vpow.pop %v7198
        %v7200 = vmul.f32 %v7148, 1.442695
        %v7201 = vpow.pop %v7200
        %v7202 = vmul.f32 %v7149, 1.442695
        %v7203 = vpow.pop %v7202
        %v7204 = vmul.f32 %v7150, 1.442695
        %v7205 = vpow.pop %v7204
        %v7206 = vmul.f32 %v7151, 1.442695
        %v7207 = vpow.pop %v7206
        %v7208 = vmul.f32 %v7152, 1.442695
        %v7209 = vpow.pop %v7208
        %v7210 = vmul.f32 %v7153, 1.442695
        %v7211 = vpow.pop %v7210
        %v7212 = vmul.f32 %v7154, 1.442695
        %v7213 = vpow.pop %v7212
        %v7214 = vmul.f32 %v7155, 1.442695
        %v7215 = vpow.pop %v7214
        %v7216 = vmul.f32 %v7156, 1.442695
        %v7217 = vpow.pop %v7216
        %v7218 = vmul.f32 %v7157, 1.442695
        %v7219 = vpow.pop %v7218
        %v7220 = vmul.f32 %v7158, 1.442695
        %v7221 = vpow.pop %v7220
        %v7222 = vmul.f32 %v7159, 1.442695
        %v7223 = vpow.pop %v7222
        %v7224 = vmul.f32 %v7065, %v4968
        %v7225 = vmul.f32 %v7067, %v4969
        %v7226 = vmul.f32 %v7069, %v4970
        %v7227 = vmul.f32 %v7071, %v4971
        %v7228 = vmul.f32 %v7073, %v4972
        %v7229 = vmul.f32 %v7075, %v4973
        %v7230 = vmul.f32 %v7077, %v4974
        %v7231 = vmul.f32 %v7079, %v4975
        %v7232 = vmul.f32 %v7081, %v4976
        %v7233 = vmul.f32 %v7083, %v4977
        %v7234 = vmul.f32 %v7085, %v4978
        %v7235 = vmul.f32 %v7087, %v4979
        %v7236 = vmul.f32 %v7089, %v4980
        %v7237 = vmul.f32 %v7091, %v4981
        %v7238 = vmul.f32 %v7093, %v4982
        %v7239 = vmul.f32 %v7095, %v4983
        %v7240 = vmul.f32 %v7097, %v4984
        %v7241 = vmul.f32 %v7099, %v4985
        %v7242 = vmul.f32 %v7101, %v4986
        %v7243 = vmul.f32 %v7103, %v4987
        %v7244 = vmul.f32 %v7105, %v4988
        %v7245 = vmul.f32 %v7107, %v4989
        %v7246 = vmul.f32 %v7109, %v4990
        %v7247 = vmul.f32 %v7111, %v4991
        %v7248 = vmul.f32 %v7113, %v4992
        %v7249 = vmul.f32 %v7115, %v4993
        %v7250 = vmul.f32 %v7117, %v4994
        %v7251 = vmul.f32 %v7119, %v4995
        %v7252 = vmul.f32 %v7121, %v4996
        %v7253 = vmul.f32 %v7123, %v4997
        %v7254 = vmul.f32 %v7125, %v4998
        %v7255 = vmul.f32 %v7127, %v4999
        %v7256 = vsel %vm6903, %v7161, 0.0
        %7257 = vadd.xlane.f32.xlu0 %v7256
        %v7258 = vpop.xlane.xlu0 %7257
        %v7259 = vsel %vm6903, %v7163, 0.0
        %7260 = vadd.xlane.f32.xlu0 %v7259
        %v7261 = vpop.xlane.xlu0 %7260
        %v7262 = vsel %vm6903, %v7165, 0.0
        %7263 = vadd.xlane.f32.xlu0 %v7262
        %v7264 = vpop.xlane.xlu0 %7263
        %v7265 = vsel %vm6903, %v7167, 0.0
        %7266 = vadd.xlane.f32.xlu0 %v7265
        %v7267 = vpop.xlane.xlu0 %7266
        %v7268 = vsel %vm6903, %v7169, 0.0
        %7269 = vadd.xlane.f32.xlu0 %v7268
        %v7270 = vpop.xlane.xlu0 %7269
        %v7271 = vsel %vm6903, %v7171, 0.0
        %7272 = vadd.xlane.f32.xlu0 %v7271
        %v7273 = vpop.xlane.xlu0 %7272
        %v7274 = vsel %vm6903, %v7173, 0.0
        %7275 = vadd.xlane.f32.xlu0 %v7274
        %v7276 = vpop.xlane.xlu0 %7275
        %v7277 = vsel %vm6903, %v7175, 0.0
        %7278 = vadd.xlane.f32.xlu0 %v7277
        %v7279 = vpop.xlane.xlu0 %7278
        %v7280 = vsel %vm6903, %v7177, 0.0
        %7281 = vadd.xlane.f32.xlu0 %v7280
        %v7282 = vpop.xlane.xlu0 %7281
        %v7283 = vsel %vm6903, %v7179, 0.0
        %7284 = vadd.xlane.f32.xlu0 %v7283
        %v7285 = vpop.xlane.xlu0 %7284
        %v7286 = vsel %vm6903, %v7181, 0.0
        %7287 = vadd.xlane.f32.xlu0 %v7286
        %v7288 = vpop.xlane.xlu0 %7287
        %v7289 = vsel %vm6903, %v7183, 0.0
        %7290 = vadd.xlane.f32.xlu0 %v7289
        %v7291 = vpop.xlane.xlu0 %7290
        %v7292 = vsel %vm6903, %v7185, 0.0
        %7293 = vadd.xlane.f32.xlu0 %v7292
        %v7294 = vpop.xlane.xlu0 %7293
        %v7295 = vsel %vm6903, %v7187, 0.0
        %7296 = vadd.xlane.f32.xlu0 %v7295
        %v7297 = vpop.xlane.xlu0 %7296
        %v7298 = vsel %vm6903, %v7189, 0.0
        %7299 = vadd.xlane.f32.xlu0 %v7298
        %v7300 = vpop.xlane.xlu0 %7299
        %v7301 = vsel %vm6903, %v7191, 0.0
        %7302 = vadd.xlane.f32.xlu0 %v7301
        %v7303 = vpop.xlane.xlu0 %7302
        %v7304 = vsel %vm6903, %v7193, 0.0
        %7305 = vadd.xlane.f32.xlu0 %v7304
        %v7306 = vpop.xlane.xlu0 %7305
        %v7307 = vsel %vm6903, %v7195, 0.0
        %7308 = vadd.xlane.f32.xlu0 %v7307
        %v7309 = vpop.xlane.xlu0 %7308
        %v7310 = vsel %vm6903, %v7197, 0.0
        %7311 = vadd.xlane.f32.xlu0 %v7310
        %v7312 = vpop.xlane.xlu0 %7311
        %v7313 = vsel %vm6903, %v7199, 0.0
        %7314 = vadd.xlane.f32.xlu0 %v7313
        %v7315 = vpop.xlane.xlu0 %7314
        %v7316 = vsel %vm6903, %v7201, 0.0
        %7317 = vadd.xlane.f32.xlu0 %v7316
        %v7318 = vpop.xlane.xlu0 %7317
        %v7319 = vsel %vm6903, %v7203, 0.0
        %7320 = vadd.xlane.f32.xlu0 %v7319
        %v7321 = vpop.xlane.xlu0 %7320
        %v7322 = vsel %vm6903, %v7205, 0.0
        %7323 = vadd.xlane.f32.xlu0 %v7322
        %v7324 = vpop.xlane.xlu0 %7323
        %v7325 = vsel %vm6903, %v7207, 0.0
        %7326 = vadd.xlane.f32.xlu0 %v7325
        %v7327 = vpop.xlane.xlu0 %7326
        %v7328 = vsel %vm6903, %v7209, 0.0
        %7329 = vadd.xlane.f32.xlu0 %v7328
        %v7330 = vpop.xlane.xlu0 %7329
        %v7331 = vsel %vm6903, %v7211, 0.0
        %7332 = vadd.xlane.f32.xlu0 %v7331
        %v7333 = vpop.xlane.xlu0 %7332
        %v7334 = vsel %vm6903, %v7213, 0.0
        %7335 = vadd.xlane.f32.xlu0 %v7334
        %v7336 = vpop.xlane.xlu0 %7335
        %v7337 = vsel %vm6903, %v7215, 0.0
        %7338 = vadd.xlane.f32.xlu0 %v7337
        %v7339 = vpop.xlane.xlu0 %7338
        %v7340 = vsel %vm6903, %v7217, 0.0
        %7341 = vadd.xlane.f32.xlu0 %v7340
        %v7342 = vpop.xlane.xlu0 %7341
        %v7343 = vsel %vm6903, %v7219, 0.0
        %7344 = vadd.xlane.f32.xlu0 %v7343
        %v7345 = vpop.xlane.xlu0 %7344
        %v7346 = vsel %vm6903, %v7221, 0.0
        %7347 = vadd.xlane.f32.xlu0 %v7346
        %v7348 = vpop.xlane.xlu0 %7347
        %v7349 = vsel %vm6903, %v7223, 0.0
        %7350 = vadd.xlane.f32.xlu0 %v7349
        %v7351 = vpop.xlane.xlu0 %7350
        %v7352 = vadd.f32 %v7224, %v7258
        %v7353 = vadd.f32 %v7225, %v7261
        %v7354 = vadd.f32 %v7226, %v7264
        %v7355 = vadd.f32 %v7227, %v7267
        %v7356 = vadd.f32 %v7228, %v7270
        %v7357 = vadd.f32 %v7229, %v7273
        %v7358 = vadd.f32 %v7230, %v7276
        %v7359 = vadd.f32 %v7231, %v7279
        %v7360 = vadd.f32 %v7232, %v7282
        %v7361 = vadd.f32 %v7233, %v7285
        %v7362 = vadd.f32 %v7234, %v7288
        %v7363 = vadd.f32 %v7235, %v7291
        %v7364 = vadd.f32 %v7236, %v7294
        %v7365 = vadd.f32 %v7237, %v7297
        %v7366 = vadd.f32 %v7238, %v7300
        %v7367 = vadd.f32 %v7239, %v7303
        %v7368 = vadd.f32 %v7240, %v7306
        %v7369 = vadd.f32 %v7241, %v7309
        %v7370 = vadd.f32 %v7242, %v7312
        %v7371 = vadd.f32 %v7243, %v7315
        %v7372 = vadd.f32 %v7244, %v7318
        %v7373 = vadd.f32 %v7245, %v7321
        %v7374 = vadd.f32 %v7246, %v7324
        %v7375 = vadd.f32 %v7247, %v7327
        %v7376 = vadd.f32 %v7248, %v7330
        %v7377 = vadd.f32 %v7249, %v7333
        %v7378 = vadd.f32 %v7250, %v7336
        %v7379 = vadd.f32 %v7251, %v7339
        %v7380 = vadd.f32 %v7252, %v7342
        %v7381 = vadd.f32 %v7253, %v7345
        %v7382 = vadd.f32 %v7254, %v7348
        %v7383 = vadd.f32 %v7255, %v7351
        %v7384 = vpack.c.bf16 %v7161, %v7161
        %v7385 = vpack.c.bf16 %v7163, %v7163
        %v7386 = vpack.c.bf16 %v7165, %v7165
        %v7387 = vpack.c.bf16 %v7167, %v7167
        %v7388 = vpack.c.bf16 %v7169, %v7169
        %v7389 = vpack.c.bf16 %v7171, %v7171
        %v7390 = vpack.c.bf16 %v7173, %v7173
        %v7391 = vpack.c.bf16 %v7175, %v7175
        %v7392 = vpack.c.bf16 %v7177, %v7177
        %v7393 = vpack.c.bf16 %v7179, %v7179
        %v7394 = vpack.c.bf16 %v7181, %v7181
        %v7395 = vpack.c.bf16 %v7183, %v7183
        %v7396 = vpack.c.bf16 %v7185, %v7185
        %v7397 = vpack.c.bf16 %v7187, %v7187
        %v7398 = vpack.c.bf16 %v7189, %v7189
        %v7399 = vpack.c.bf16 %v7191, %v7191
        %v7400 = vpack.c.bf16 %v7193, %v7193
        %v7401 = vpack.c.bf16 %v7195, %v7195
        %v7402 = vpack.c.bf16 %v7197, %v7197
        %v7403 = vpack.c.bf16 %v7199, %v7199
        %v7404 = vpack.c.bf16 %v7201, %v7201
        %v7405 = vpack.c.bf16 %v7203, %v7203
        %v7406 = vpack.c.bf16 %v7205, %v7205
        %v7407 = vpack.c.bf16 %v7207, %v7207
        %v7408 = vpack.c.bf16 %v7209, %v7209
        %v7409 = vpack.c.bf16 %v7211, %v7211
        %v7410 = vpack.c.bf16 %v7213, %v7213
        %v7411 = vpack.c.bf16 %v7215, %v7215
        %v7412 = vpack.c.bf16 %v7217, %v7217
        %v7413 = vpack.c.bf16 %v7219, %v7219
        %v7414 = vpack.c.bf16 %v7221, %v7221
        %v7415 = vpack.c.bf16 %v7223, %v7223
        %v7424 = vunpack.c.l.b16 %v7384
        %v7425 = vunpack.c.l.b16 %v7385
        %v7426 = vunpack.c.l.b16 %v7386
        %v7427 = vunpack.c.l.b16 %v7387
        %v7428 = vunpack.c.l.b16 %v7388
        %v7429 = vunpack.c.l.b16 %v7389
        %v7430 = vunpack.c.l.b16 %v7390
        %v7431 = vunpack.c.l.b16 %v7391
        %v7432 = vpack.c.b16 %v7425, %v7424
        %v7433 = vpack.c.b16 %v7427, %v7426
        %v7434 = vpack.c.b16 %v7429, %v7428
        %v7435 = vpack.c.b16 %v7431, %v7430
        %v7444 = vunpack.c.l.b16 %v6450
        %v7445 = vunpack.c.l.b16 %v6451
        %v7446 = vunpack.c.l.b16 %v6452
        %v7447 = vunpack.c.l.b16 %v6453
        %v7448 = vunpack.c.l.b16 %v6454
        %v7449 = vunpack.c.l.b16 %v6455
        %v7450 = vunpack.c.l.b16 %v6456
        %v7451 = vunpack.c.l.b16 %v6457
        %v7452 = vpack.c.b16 %v7445, %v7444
        %v7453 = vpack.c.b16 %v7447, %v7446
        %v7454 = vpack.c.b16 %v7449, %v7448
        %v7455 = vpack.c.b16 %v7451, %v7450
        %v7461 = vsel %vm6903, %v7432, 0
        %v7464 = vsel %vm6903, %v7433, 0
        %v7467 = vsel %vm6903, %v7434, 0
        %v7470 = vsel %vm6903, %v7435, 0
        %7472 = vmatpush.bf16.msra.mxu0 0
        %7473 = vmatpush.bf16.msra.mxu0 0
        %7474 = vmatpush.bf16.msra.mxu0 0
        %7475 = vmatpush.bf16.msra.mxu0 0
        %7476 = vmatpush.bf16.msra.mxu0 %v7455
        %7477 = vmatpush.bf16.msra.mxu0 %v7454
        %7478 = vmatpush.bf16.msra.mxu0 %v7453
        %7479 = vmatpush.bf16.msra.mxu0 %v7452
        %7480 = vmatmul.bf16.gmra.mxu0 %v7461
        %v7481 = vpop.f32.mrf.mxu0
        %v7482 = vadd.f32 0.0, %v7481
        %v7483 = vpop.f32.mrf.mxu0
        %v7484 = vadd.f32 0.0, %v7483
        %7485 = vmatmul.bf16.gmra.mxu0 %v7464
        %v7486 = vpop.f32.mrf.mxu0
        %v7487 = vadd.f32 0.0, %v7486
        %v7488 = vpop.f32.mrf.mxu0
        %v7489 = vadd.f32 0.0, %v7488
        %7490 = vmatmul.bf16.gmra.mxu0 %v7467
        %v7491 = vpop.f32.mrf.mxu0
        %v7492 = vadd.f32 0.0, %v7491
        %v7493 = vpop.f32.mrf.mxu0
        %v7494 = vadd.f32 0.0, %v7493
        %7495 = vmatmul.bf16.gmra.mxu0 %v7470
        %v7496 = vpop.f32.mrf.mxu0
        %v7497 = vadd.f32 0.0, %v7496
        %v7498 = vpop.f32.mrf.mxu0
        %v7499 = vadd.f32 0.0, %v7498
        %7500 = vdwg.mxu0
        %v7509 = vunpack.c.l.b16 %v7392
        %v7510 = vunpack.c.l.b16 %v7393
        %v7511 = vunpack.c.l.b16 %v7394
        %v7512 = vunpack.c.l.b16 %v7395
        %v7513 = vunpack.c.l.b16 %v7396
        %v7514 = vunpack.c.l.b16 %v7397
        %v7515 = vunpack.c.l.b16 %v7398
        %v7516 = vunpack.c.l.b16 %v7399
        %v7517 = vpack.c.b16 %v7510, %v7509
        %v7518 = vpack.c.b16 %v7512, %v7511
        %v7519 = vpack.c.b16 %v7514, %v7513
        %v7520 = vpack.c.b16 %v7516, %v7515
        %v7529 = vunpack.c.l.b16 %v6458
        %v7530 = vunpack.c.l.b16 %v6459
        %v7531 = vunpack.c.l.b16 %v6460
        %v7532 = vunpack.c.l.b16 %v6461
        %v7533 = vunpack.c.l.b16 %v6462
        %v7534 = vunpack.c.l.b16 %v6463
        %v7535 = vunpack.c.l.b16 %v6464
        %v7536 = vunpack.c.l.b16 %v6465
        %v7537 = vpack.c.b16 %v7530, %v7529
        %v7538 = vpack.c.b16 %v7532, %v7531
        %v7539 = vpack.c.b16 %v7534, %v7533
        %v7540 = vpack.c.b16 %v7536, %v7535
        %v7546 = vsel %vm6903, %v7517, 0
        %v7549 = vsel %vm6903, %v7518, 0
        %v7552 = vsel %vm6903, %v7519, 0
        %v7555 = vsel %vm6903, %v7520, 0
        %7557 = vmatpush.bf16.msra.mxu0 0
        %7558 = vmatpush.bf16.msra.mxu0 0
        %7559 = vmatpush.bf16.msra.mxu0 0
        %7560 = vmatpush.bf16.msra.mxu0 0
        %7561 = vmatpush.bf16.msra.mxu0 %v7540
        %7562 = vmatpush.bf16.msra.mxu0 %v7539
        %7563 = vmatpush.bf16.msra.mxu0 %v7538
        %7564 = vmatpush.bf16.msra.mxu0 %v7537
        %7565 = vmatmul.bf16.gmra.mxu0 %v7546
        %v7566 = vpop.f32.mrf.mxu0
        %v7567 = vadd.f32 0.0, %v7566
        %v7568 = vpop.f32.mrf.mxu0
        %v7569 = vadd.f32 0.0, %v7568
        %7570 = vmatmul.bf16.gmra.mxu0 %v7549
        %v7571 = vpop.f32.mrf.mxu0
        %v7572 = vadd.f32 0.0, %v7571
        %v7573 = vpop.f32.mrf.mxu0
        %v7574 = vadd.f32 0.0, %v7573
        %7575 = vmatmul.bf16.gmra.mxu0 %v7552
        %v7576 = vpop.f32.mrf.mxu0
        %v7577 = vadd.f32 0.0, %v7576
        %v7578 = vpop.f32.mrf.mxu0
        %v7579 = vadd.f32 0.0, %v7578
        %7580 = vmatmul.bf16.gmra.mxu0 %v7555
        %v7581 = vpop.f32.mrf.mxu0
        %v7582 = vadd.f32 0.0, %v7581
        %v7583 = vpop.f32.mrf.mxu0
        %v7584 = vadd.f32 0.0, %v7583
        %7585 = vdwg.mxu0
        %v7594 = vunpack.c.l.b16 %v7400
        %v7595 = vunpack.c.l.b16 %v7401
        %v7596 = vunpack.c.l.b16 %v7402
        %v7597 = vunpack.c.l.b16 %v7403
        %v7598 = vunpack.c.l.b16 %v7404
        %v7599 = vunpack.c.l.b16 %v7405
        %v7600 = vunpack.c.l.b16 %v7406
        %v7601 = vunpack.c.l.b16 %v7407
        %v7602 = vpack.c.b16 %v7595, %v7594
        %v7603 = vpack.c.b16 %v7597, %v7596
        %v7604 = vpack.c.b16 %v7599, %v7598
        %v7605 = vpack.c.b16 %v7601, %v7600
        %v7614 = vunpack.c.l.b16 %v6466
        %v7615 = vunpack.c.l.b16 %v6467
        %v7616 = vunpack.c.l.b16 %v6468
        %v7617 = vunpack.c.l.b16 %v6469
        %v7618 = vunpack.c.l.b16 %v6470
        %v7619 = vunpack.c.l.b16 %v6471
        %v7620 = vunpack.c.l.b16 %v6472
        %v7621 = vunpack.c.l.b16 %v6473
        %v7622 = vpack.c.b16 %v7615, %v7614
        %v7623 = vpack.c.b16 %v7617, %v7616
        %v7624 = vpack.c.b16 %v7619, %v7618
        %v7625 = vpack.c.b16 %v7621, %v7620
        %v7631 = vsel %vm6903, %v7602, 0
        %v7634 = vsel %vm6903, %v7603, 0
        %v7637 = vsel %vm6903, %v7604, 0
        %v7640 = vsel %vm6903, %v7605, 0
        %7642 = vmatpush.bf16.msra.mxu0 0
        %7643 = vmatpush.bf16.msra.mxu0 0
        %7644 = vmatpush.bf16.msra.mxu0 0
        %7645 = vmatpush.bf16.msra.mxu0 0
        %7646 = vmatpush.bf16.msra.mxu0 %v7625
        %7647 = vmatpush.bf16.msra.mxu0 %v7624
        %7648 = vmatpush.bf16.msra.mxu0 %v7623
        %7649 = vmatpush.bf16.msra.mxu0 %v7622
        %7650 = vmatmul.bf16.gmra.mxu0 %v7631
        %v7651 = vpop.f32.mrf.mxu0
        %v7652 = vadd.f32 0.0, %v7651
        %v7653 = vpop.f32.mrf.mxu0
        %v7654 = vadd.f32 0.0, %v7653
        %7655 = vmatmul.bf16.gmra.mxu0 %v7634
        %v7656 = vpop.f32.mrf.mxu0
        %v7657 = vadd.f32 0.0, %v7656
        %v7658 = vpop.f32.mrf.mxu0
        %v7659 = vadd.f32 0.0, %v7658
        %7660 = vmatmul.bf16.gmra.mxu0 %v7637
        %v7661 = vpop.f32.mrf.mxu0
        %v7662 = vadd.f32 0.0, %v7661
        %v7663 = vpop.f32.mrf.mxu0
        %v7664 = vadd.f32 0.0, %v7663
        %7665 = vmatmul.bf16.gmra.mxu0 %v7640
        %v7666 = vpop.f32.mrf.mxu0
        %v7667 = vadd.f32 0.0, %v7666
        %v7668 = vpop.f32.mrf.mxu0
        %v7669 = vadd.f32 0.0, %v7668
        %7670 = vdwg.mxu0
        %v7679 = vunpack.c.l.b16 %v7408
        %v7680 = vunpack.c.l.b16 %v7409
        %v7681 = vunpack.c.l.b16 %v7410
        %v7682 = vunpack.c.l.b16 %v7411
        %v7683 = vunpack.c.l.b16 %v7412
        %v7684 = vunpack.c.l.b16 %v7413
        %v7685 = vunpack.c.l.b16 %v7414
        %v7686 = vunpack.c.l.b16 %v7415
        %v7687 = vpack.c.b16 %v7680, %v7679
        %v7688 = vpack.c.b16 %v7682, %v7681
        %v7689 = vpack.c.b16 %v7684, %v7683
        %v7690 = vpack.c.b16 %v7686, %v7685
        %v7699 = vunpack.c.l.b16 %v6474
        %v7700 = vunpack.c.l.b16 %v6475
        %v7701 = vunpack.c.l.b16 %v6476
        %v7702 = vunpack.c.l.b16 %v6477
        %v7703 = vunpack.c.l.b16 %v6478
        %v7704 = vunpack.c.l.b16 %v6479
        %v7705 = vunpack.c.l.b16 %v6480
        %v7706 = vunpack.c.l.b16 %v6481
        %v7707 = vpack.c.b16 %v7700, %v7699
        %v7708 = vpack.c.b16 %v7702, %v7701
        %v7709 = vpack.c.b16 %v7704, %v7703
        %v7710 = vpack.c.b16 %v7706, %v7705
        %v7716 = vsel %vm6903, %v7687, 0
        %v7719 = vsel %vm6903, %v7688, 0
        %v7722 = vsel %vm6903, %v7689, 0
        %v7725 = vsel %vm6903, %v7690, 0
        %7727 = vmatpush.bf16.msra.mxu0 0
        %7728 = vmatpush.bf16.msra.mxu0 0
        %7729 = vmatpush.bf16.msra.mxu0 0
        %7730 = vmatpush.bf16.msra.mxu0 0
        %7731 = vmatpush.bf16.msra.mxu0 %v7710
        %7732 = vmatpush.bf16.msra.mxu0 %v7709
        %7733 = vmatpush.bf16.msra.mxu0 %v7708
        %7734 = vmatpush.bf16.msra.mxu0 %v7707
        %7735 = vmatmul.bf16.gmra.mxu0 %v7716
        %v7736 = vpop.f32.mrf.mxu0
        %v7737 = vadd.f32 0.0, %v7736
        %v7738 = vpop.f32.mrf.mxu0
        %v7739 = vadd.f32 0.0, %v7738
        %7740 = vmatmul.bf16.gmra.mxu0 %v7719
        %v7741 = vpop.f32.mrf.mxu0
        %v7742 = vadd.f32 0.0, %v7741
        %v7743 = vpop.f32.mrf.mxu0
        %v7744 = vadd.f32 0.0, %v7743
        %7745 = vmatmul.bf16.gmra.mxu0 %v7722
        %v7746 = vpop.f32.mrf.mxu0
        %v7747 = vadd.f32 0.0, %v7746
        %v7748 = vpop.f32.mrf.mxu0
        %v7749 = vadd.f32 0.0, %v7748
        %7750 = vmatmul.bf16.gmra.mxu0 %v7725
        %v7751 = vpop.f32.mrf.mxu0
        %v7752 = vadd.f32 0.0, %v7751
        %v7753 = vpop.f32.mrf.mxu0
        %v7754 = vadd.f32 0.0, %v7753
        %7755 = vdwg.mxu0
        %v7756 = vmul.f32 %v7065, %v5000
        %v7757 = vmul.f32 %v7067, %v5001
        %v7758 = vmul.f32 %v7069, %v5002
        %v7759 = vmul.f32 %v7071, %v5003
        %v7760 = vmul.f32 %v7073, %v5004
        %v7761 = vmul.f32 %v7075, %v5005
        %v7762 = vmul.f32 %v7077, %v5006
        %v7763 = vmul.f32 %v7079, %v5007
        %v7764 = vmul.f32 %v7081, %v5008
        %v7765 = vmul.f32 %v7083, %v5009
        %v7766 = vmul.f32 %v7085, %v5010
        %v7767 = vmul.f32 %v7087, %v5011
        %v7768 = vmul.f32 %v7089, %v5012
        %v7769 = vmul.f32 %v7091, %v5013
        %v7770 = vmul.f32 %v7093, %v5014
        %v7771 = vmul.f32 %v7095, %v5015
        %v7772 = vmul.f32 %v7097, %v5016
        %v7773 = vmul.f32 %v7099, %v5017
        %v7774 = vmul.f32 %v7101, %v5018
        %v7775 = vmul.f32 %v7103, %v5019
        %v7776 = vmul.f32 %v7105, %v5020
        %v7777 = vmul.f32 %v7107, %v5021
        %v7778 = vmul.f32 %v7109, %v5022
        %v7779 = vmul.f32 %v7111, %v5023
        %v7780 = vmul.f32 %v7113, %v5024
        %v7781 = vmul.f32 %v7115, %v5025
        %v7782 = vmul.f32 %v7117, %v5026
        %v7783 = vmul.f32 %v7119, %v5027
        %v7784 = vmul.f32 %v7121, %v5028
        %v7785 = vmul.f32 %v7123, %v5029
        %v7786 = vmul.f32 %v7125, %v5030
        %v7787 = vmul.f32 %v7127, %v5031
        %v7788 = vadd.f32 %v7756, %v7482
        %v7789 = vadd.f32 %v7757, %v7484
        %v7790 = vadd.f32 %v7758, %v7487
        %v7791 = vadd.f32 %v7759, %v7489
        %v7792 = vadd.f32 %v7760, %v7492
        %v7793 = vadd.f32 %v7761, %v7494
        %v7794 = vadd.f32 %v7762, %v7497
        %v7795 = vadd.f32 %v7763, %v7499
        %v7796 = vadd.f32 %v7764, %v7567
        %v7797 = vadd.f32 %v7765, %v7569
        %v7798 = vadd.f32 %v7766, %v7572
        %v7799 = vadd.f32 %v7767, %v7574
        %v7800 = vadd.f32 %v7768, %v7577
        %v7801 = vadd.f32 %v7769, %v7579
        %v7802 = vadd.f32 %v7770, %v7582
        %v7803 = vadd.f32 %v7771, %v7584
        %v7804 = vadd.f32 %v7772, %v7652
        %v7805 = vadd.f32 %v7773, %v7654
        %v7806 = vadd.f32 %v7774, %v7657
        %v7807 = vadd.f32 %v7775, %v7659
        %v7808 = vadd.f32 %v7776, %v7662
        %v7809 = vadd.f32 %v7777, %v7664
        %v7810 = vadd.f32 %v7778, %v7667
        %v7811 = vadd.f32 %v7779, %v7669
        %v7812 = vadd.f32 %v7780, %v7737
        %v7813 = vadd.f32 %v7781, %v7739
        %v7814 = vadd.f32 %v7782, %v7742
        %v7815 = vadd.f32 %v7783, %v7744
        %v7816 = vadd.f32 %v7784, %v7747
        %v7817 = vadd.f32 %v7785, %v7749
        %v7818 = vadd.f32 %v7786, %v7752
        %v7819 = vadd.f32 %v7787, %v7754
        %v7820 = vrcp.pop %v7352
        %v7821 = vrcp.pop %v7353
        %v7822 = vrcp.pop %v7354
        %v7823 = vrcp.pop %v7355
        %v7824 = vrcp.pop %v7356
        %v7825 = vrcp.pop %v7357
        %v7826 = vrcp.pop %v7358
        %v7827 = vrcp.pop %v7359
        %v7828 = vrcp.pop %v7360
        %v7829 = vrcp.pop %v7361
        %v7830 = vrcp.pop %v7362
        %v7831 = vrcp.pop %v7363
        %v7832 = vrcp.pop %v7364
        %v7833 = vrcp.pop %v7365
        %v7834 = vrcp.pop %v7366
        %v7835 = vrcp.pop %v7367
        %v7836 = vrcp.pop %v7368
        %v7837 = vrcp.pop %v7369
        %v7838 = vrcp.pop %v7370
        %v7839 = vrcp.pop %v7371
        %v7840 = vrcp.pop %v7372
        %v7841 = vrcp.pop %v7373
        %v7842 = vrcp.pop %v7374
        %v7843 = vrcp.pop %v7375
        %v7844 = vrcp.pop %v7376
        %v7845 = vrcp.pop %v7377
        %v7846 = vrcp.pop %v7378
        %v7847 = vrcp.pop %v7379
        %v7848 = vrcp.pop %v7380
        %v7849 = vrcp.pop %v7381
        %v7850 = vrcp.pop %v7382
        %v7851 = vrcp.pop %v7383
        %v7852 = vmul.f32 %v7788, %v7820
        %v7853 = vmul.f32 %v7789, %v7821
        %v7854 = vmul.f32 %v7790, %v7822
        %v7855 = vmul.f32 %v7791, %v7823
        %v7856 = vmul.f32 %v7792, %v7824
        %v7857 = vmul.f32 %v7793, %v7825
        %v7858 = vmul.f32 %v7794, %v7826
        %v7859 = vmul.f32 %v7795, %v7827
        %v7860 = vmul.f32 %v7796, %v7828
        %v7861 = vmul.f32 %v7797, %v7829
        %v7862 = vmul.f32 %v7798, %v7830
        %v7863 = vmul.f32 %v7799, %v7831
        %v7864 = vmul.f32 %v7800, %v7832
        %v7865 = vmul.f32 %v7801, %v7833
        %v7866 = vmul.f32 %v7802, %v7834
        %v7867 = vmul.f32 %v7803, %v7835
        %v7868 = vmul.f32 %v7804, %v7836
        %v7869 = vmul.f32 %v7805, %v7837
        %v7870 = vmul.f32 %v7806, %v7838
        %v7871 = vmul.f32 %v7807, %v7839
        %v7872 = vmul.f32 %v7808, %v7840
        %v7873 = vmul.f32 %v7809, %v7841
        %v7874 = vmul.f32 %v7810, %v7842
        %v7875 = vmul.f32 %v7811, %v7843
        %v7876 = vmul.f32 %v7812, %v7844
        %v7877 = vmul.f32 %v7813, %v7845
        %v7878 = vmul.f32 %v7814, %v7846
        %v7879 = vmul.f32 %v7815, %v7847
        %v7880 = vmul.f32 %v7816, %v7848
        %v7881 = vmul.f32 %v7817, %v7849
        %v7882 = vmul.f32 %v7818, %v7850
        %v7883 = vmul.f32 %v7819, %v7851
        %v7884 = vpack.c.bf16 %v7852, %v7852
        %v7885 = vpack.c.bf16 %v7853, %v7853
        %v7886 = vpack.c.bf16 %v7854, %v7854
        %v7887 = vpack.c.bf16 %v7855, %v7855
        %v7888 = vpack.c.bf16 %v7856, %v7856
        %v7889 = vpack.c.bf16 %v7857, %v7857
        %v7890 = vpack.c.bf16 %v7858, %v7858
        %v7891 = vpack.c.bf16 %v7859, %v7859
        %v7892 = vpack.c.bf16 %v7860, %v7860
        %v7893 = vpack.c.bf16 %v7861, %v7861
        %v7894 = vpack.c.bf16 %v7862, %v7862
        %v7895 = vpack.c.bf16 %v7863, %v7863
        %v7896 = vpack.c.bf16 %v7864, %v7864
        %v7897 = vpack.c.bf16 %v7865, %v7865
        %v7898 = vpack.c.bf16 %v7866, %v7866
        %v7899 = vpack.c.bf16 %v7867, %v7867
        %v7900 = vpack.c.bf16 %v7868, %v7868
        %v7901 = vpack.c.bf16 %v7869, %v7869
        %v7902 = vpack.c.bf16 %v7870, %v7870
        %v7903 = vpack.c.bf16 %v7871, %v7871
        %v7904 = vpack.c.bf16 %v7872, %v7872
        %v7905 = vpack.c.bf16 %v7873, %v7873
        %v7906 = vpack.c.bf16 %v7874, %v7874
        %v7907 = vpack.c.bf16 %v7875, %v7875
        %v7908 = vpack.c.bf16 %v7876, %v7876
        %v7909 = vpack.c.bf16 %v7877, %v7877
        %v7910 = vpack.c.bf16 %v7878, %v7878
        %v7911 = vpack.c.bf16 %v7879, %v7879
        %v7912 = vpack.c.bf16 %v7880, %v7880
        %v7913 = vpack.c.bf16 %v7881, %v7881
        %v7914 = vpack.c.bf16 %v7882, %v7882
        %v7915 = vpack.c.bf16 %v7883, %v7883
        %v7924 = vunpack.c.l.b16 %v7884
        %v7925 = vunpack.c.l.b16 %v7885
        %v7926 = vunpack.c.l.b16 %v7886
        %v7927 = vunpack.c.l.b16 %v7887
        %v7928 = vunpack.c.l.b16 %v7888
        %v7929 = vunpack.c.l.b16 %v7889
        %v7930 = vunpack.c.l.b16 %v7890
        %v7931 = vunpack.c.l.b16 %v7891
        %v7932 = vpack.c.b16 %v7925, %v7924
        %v7933 = vpack.c.b16 %v7927, %v7926
        %v7934 = vpack.c.b16 %v7929, %v7928
        %v7935 = vpack.c.b16 %v7931, %v7930
        %v7944 = vunpack.c.l.b16 %v7892
        %v7945 = vunpack.c.l.b16 %v7893
        %v7946 = vunpack.c.l.b16 %v7894
        %v7947 = vunpack.c.l.b16 %v7895
        %v7948 = vunpack.c.l.b16 %v7896
        %v7949 = vunpack.c.l.b16 %v7897
        %v7950 = vunpack.c.l.b16 %v7898
        %v7951 = vunpack.c.l.b16 %v7899
        %v7952 = vpack.c.b16 %v7945, %v7944
        %v7953 = vpack.c.b16 %v7947, %v7946
        %v7954 = vpack.c.b16 %v7949, %v7948
        %v7955 = vpack.c.b16 %v7951, %v7950
        %7956 = vrot.lane.b32.xlu0 %v7952, 32
        %v7957 = vpop.permute.xlu0 %7956
        %7958 = vrot.lane.b32.xlu0 %v7953, 32
        %v7959 = vpop.permute.xlu0 %7958
        %7960 = vrot.lane.b32.xlu0 %v7954, 32
        %v7961 = vpop.permute.xlu0 %7960
        %7962 = vrot.lane.b32.xlu0 %v7955, 32
        %v7963 = vpop.permute.xlu0 %7962
        %v7972 = vunpack.c.l.b16 %v7900
        %v7973 = vunpack.c.l.b16 %v7901
        %v7974 = vunpack.c.l.b16 %v7902
        %v7975 = vunpack.c.l.b16 %v7903
        %v7976 = vunpack.c.l.b16 %v7904
        %v7977 = vunpack.c.l.b16 %v7905
        %v7978 = vunpack.c.l.b16 %v7906
        %v7979 = vunpack.c.l.b16 %v7907
        %v7980 = vpack.c.b16 %v7973, %v7972
        %v7981 = vpack.c.b16 %v7975, %v7974
        %v7982 = vpack.c.b16 %v7977, %v7976
        %v7983 = vpack.c.b16 %v7979, %v7978
        %7984 = vrot.lane.b32.xlu0 %v7980, 64
        %v7985 = vpop.permute.xlu0 %7984
        %7986 = vrot.lane.b32.xlu0 %v7981, 64
        %v7987 = vpop.permute.xlu0 %7986
        %7988 = vrot.lane.b32.xlu0 %v7982, 64
        %v7989 = vpop.permute.xlu0 %7988
        %7990 = vrot.lane.b32.xlu0 %v7983, 64
        %v7991 = vpop.permute.xlu0 %7990
        %v8000 = vunpack.c.l.b16 %v7908
        %v8001 = vunpack.c.l.b16 %v7909
        %v8002 = vunpack.c.l.b16 %v7910
        %v8003 = vunpack.c.l.b16 %v7911
        %v8004 = vunpack.c.l.b16 %v7912
        %v8005 = vunpack.c.l.b16 %v7913
        %v8006 = vunpack.c.l.b16 %v7914
        %v8007 = vunpack.c.l.b16 %v7915
        %v8008 = vpack.c.b16 %v8001, %v8000
        %v8009 = vpack.c.b16 %v8003, %v8002
        %v8010 = vpack.c.b16 %v8005, %v8004
        %v8011 = vpack.c.b16 %v8007, %v8006
        %8012 = vrot.lane.b32.xlu0 %v8008, 96
        %v8013 = vpop.permute.xlu0 %8012
        %8014 = vrot.lane.b32.xlu0 %v8009, 96
        %v8015 = vpop.permute.xlu0 %8014
        %8016 = vrot.lane.b32.xlu0 %v8010, 96
        %v8017 = vpop.permute.xlu0 %8016
        %8018 = vrot.lane.b32.xlu0 %v8011, 96
        %v8019 = vpop.permute.xlu0 %8018
        %v8022 = vsel %vm6522, %v7932, %v7957
        %v8025 = vsel %vm6522, %v7933, %v7959
        %v8028 = vsel %vm6522, %v7934, %v7961
        %v8031 = vsel %vm6522, %v7935, %v7963
        %v8033 = vsel %vm6903, %v8022, %v7985
        %v8035 = vsel %vm6903, %v8025, %v7987
        %v8037 = vsel %vm6903, %v8028, %v7989
        %v8039 = vsel %vm6903, %v8031, %v7991
        %vm8040 = vcmask 785408
        %v8042 = vsel %vm8040, %v8033, %v8013
        %v8045 = vsel %vm8040, %v8035, %v8015
        %v8048 = vsel %vm8040, %v8037, %v8017
        %v8051 = vsel %vm8040, %v8039, %v8019
        %s8053 = smul.addr %s3694, 4
        %s8054 = scalar_lea.vmem %s439, %s8053 [#allocation5]
        %v8055 = vld [vmem:[%s8054] sm:$0xf]
        %v8056 = vld [vmem:[%s8054 + $0x4] sm:$0xf]
        %v8057 = vld [vmem:[%s8054 + $0x8] sm:$0xf]
        %v8058 = vld [vmem:[%s8054 + $0xc] sm:$0xf]
        %v8059 = vld [vmem:[%s8054 + $0x10] sm:$0xf]
        %v8060 = vld [vmem:[%s8054 + $0x14] sm:$0xf]
        %v8061 = vld [vmem:[%s8054 + $0x18] sm:$0xf]
        %v8062 = vld [vmem:[%s8054 + $0x1c] sm:$0xf]
        %v8063 = vunpack.c.l.bf16 %v8055
        %v8064 = vunpack.c.l.bf16 %v8056
        %v8065 = vunpack.c.l.bf16 %v8057
        %v8066 = vunpack.c.l.bf16 %v8058
        %v8067 = vunpack.c.l.bf16 %v8059
        %v8068 = vunpack.c.l.bf16 %v8060
        %v8069 = vunpack.c.l.bf16 %v8061
        %v8070 = vunpack.c.l.bf16 %v8062
        %v8071 = vld [vmem:[#allocation13] sm:$0xf]
        %v8072 = vld [vmem:[#allocation13 + $0x4] sm:$0xf]
        %v8073 = vld [vmem:[#allocation13 + $0x8] sm:$0xf]
        %v8074 = vld [vmem:[#allocation13 + $0xc] sm:$0xf]
        %v8075 = vld [vmem:[#allocation13 + $0x10] sm:$0xf]
        %v8076 = vld [vmem:[#allocation13 + $0x14] sm:$0xf]
        %v8077 = vld [vmem:[#allocation13 + $0x18] sm:$0xf]
        %v8078 = vld [vmem:[#allocation13 + $0x1c] sm:$0xf]
        %v8079 = vld [vmem:[#allocation13 + $0x20] sm:$0xf]
        %v8080 = vld [vmem:[#allocation13 + $0x24] sm:$0xf]
        %v8081 = vld [vmem:[#allocation13 + $0x28] sm:$0xf]
        %v8082 = vld [vmem:[#allocation13 + $0x2c] sm:$0xf]
        %v8083 = vld [vmem:[#allocation13 + $0x30] sm:$0xf]
        %v8084 = vld [vmem:[#allocation13 + $0x34] sm:$0xf]
        %v8085 = vld [vmem:[#allocation13 + $0x38] sm:$0xf]
        %v8086 = vld [vmem:[#allocation13 + $0x3c] sm:$0xf]
        %v8103 = vunpack.c.l.b16 %v8071
        %v8104 = vunpack.c.l.b16 %v8072
        %v8105 = vunpack.c.l.b16 %v8073
        %v8106 = vunpack.c.l.b16 %v8074
        %v8107 = vunpack.c.l.b16 %v8075
        %v8108 = vunpack.c.l.b16 %v8076
        %v8109 = vunpack.c.l.b16 %v8077
        %v8110 = vunpack.c.l.b16 %v8078
        %v8111 = vunpack.c.l.b16 %v8079
        %v8112 = vunpack.c.l.b16 %v8080
        %v8113 = vunpack.c.l.b16 %v8081
        %v8114 = vunpack.c.l.b16 %v8082
        %v8115 = vunpack.c.l.b16 %v8083
        %v8116 = vunpack.c.l.b16 %v8084
        %v8117 = vunpack.c.l.b16 %v8085
        %v8118 = vunpack.c.l.b16 %v8086
        %v8119 = vpack.c.b16 %v8104, %v8103
        %v8120 = vpack.c.b16 %v8106, %v8105
        %v8121 = vpack.c.b16 %v8108, %v8107
        %v8122 = vpack.c.b16 %v8110, %v8109
        %v8123 = vpack.c.b16 %v8112, %v8111
        %v8124 = vpack.c.b16 %v8114, %v8113
        %v8125 = vpack.c.b16 %v8116, %v8115
        %v8126 = vpack.c.b16 %v8118, %v8117
        %8135 = vmatpush.bf16.msra.mxu0 %v8126
        %8136 = vmatpush.bf16.msra.mxu0 %v8125
        %8137 = vmatpush.bf16.msra.mxu0 %v8124
        %8138 = vmatpush.bf16.msra.mxu0 %v8123
        %8139 = vmatpush.bf16.msra.mxu0 %v8122
        %8140 = vmatpush.bf16.msra.mxu0 %v8121
        %8141 = vmatpush.bf16.msra.mxu0 %v8120
        %8142 = vmatpush.bf16.msra.mxu0 %v8119
        %8143 = vmatmul.bf16.gmra.mxu0 %v8042
        %v8144 = vpop.f32.mrf.mxu0
        %v8145 = vadd.f32 0.0, %v8144
        %v8146 = vpop.f32.mrf.mxu0
        %v8147 = vadd.f32 0.0, %v8146
        %8148 = vmatmul.bf16.gmra.mxu0 %v8045
        %v8149 = vpop.f32.mrf.mxu0
        %v8150 = vadd.f32 0.0, %v8149
        %v8151 = vpop.f32.mrf.mxu0
        %v8152 = vadd.f32 0.0, %v8151
        %8153 = vmatmul.bf16.gmra.mxu0 %v8048
        %v8154 = vpop.f32.mrf.mxu0
        %v8155 = vadd.f32 0.0, %v8154
        %v8156 = vpop.f32.mrf.mxu0
        %v8157 = vadd.f32 0.0, %v8156
        %8158 = vmatmul.bf16.gmra.mxu0 %v8051
        %v8159 = vpop.f32.mrf.mxu0
        %v8160 = vadd.f32 0.0, %v8159
        %v8161 = vpop.f32.mrf.mxu0
        %v8162 = vadd.f32 0.0, %v8161
        %8163 = vdwg.mxu0
        %v8164 = vadd.f32 %v8063, %v8145
        %v8165 = vadd.f32 %v8064, %v8147
        %v8166 = vadd.f32 %v8065, %v8150
        %v8167 = vadd.f32 %v8066, %v8152
        %v8168 = vadd.f32 %v8067, %v8155
        %v8169 = vadd.f32 %v8068, %v8157
        %v8170 = vadd.f32 %v8069, %v8160
        %v8171 = vadd.f32 %v8070, %v8162
        %v8172 = vld [vmem:[%s8] sm:$0x1]
        %v8173 = vmul.f32 %v8164, %v8164
        %v8174 = vmul.f32 %v8165, %v8165
        %v8175 = vmul.f32 %v8166, %v8166
        %v8176 = vmul.f32 %v8167, %v8167
        %v8177 = vmul.f32 %v8168, %v8168
        %v8178 = vmul.f32 %v8169, %v8169
        %v8179 = vmul.f32 %v8170, %v8170
        %v8180 = vmul.f32 %v8171, %v8171
        %8181 = vadd.xlane.f32.xlu0 %v8173
        %v8182 = vpop.xlane.xlu0 %8181
        %8183 = vadd.xlane.f32.xlu0 %v8174
        %v8184 = vpop.xlane.xlu0 %8183
        %8185 = vadd.xlane.f32.xlu0 %v8175
        %v8186 = vpop.xlane.xlu0 %8185
        %8187 = vadd.xlane.f32.xlu0 %v8176
        %v8188 = vpop.xlane.xlu0 %8187
        %8189 = vadd.xlane.f32.xlu0 %v8177
        %v8190 = vpop.xlane.xlu0 %8189
        %8191 = vadd.xlane.f32.xlu0 %v8178
        %v8192 = vpop.xlane.xlu0 %8191
        %8193 = vadd.xlane.f32.xlu0 %v8179
        %v8194 = vpop.xlane.xlu0 %8193
        %8195 = vadd.xlane.f32.xlu0 %v8180
        %v8196 = vpop.xlane.xlu0 %8195
        %v8197 = vrcp.pop 128.0
        %v8198 = vmul.f32 128.0, %v8197
        %v8199 = vsub.f32 1.0, %v8198
        %v8200 = vmul.f32 %v8197, %v8199
        %v8201 = vadd.f32 %v8197, %v8200
        %vm8202 = vweird.f32 %v8197
        %v8203 = vsel %vm8202, %v8197, %v8201
        %v8204 = vmul.f32 %v8182, %v8203
        %v8205 = vmul.f32 %v8184, %v8203
        %v8206 = vmul.f32 %v8186, %v8203
        %v8207 = vmul.f32 %v8188, %v8203
        %v8208 = vmul.f32 %v8190, %v8203
        %v8209 = vmul.f32 %v8192, %v8203
        %v8210 = vmul.f32 %v8194, %v8203
        %v8211 = vmul.f32 %v8196, %v8203
        %v8213 = vperm.slane %v8172, 0
        %v8215 = vmul.f32 %v8213, %v8164
        %v8216 = vmul.f32 %v8213, %v8165
        %v8217 = vmul.f32 %v8213, %v8166
        %v8218 = vmul.f32 %v8213, %v8167
        %v8219 = vmul.f32 %v8213, %v8168
        %v8220 = vmul.f32 %v8213, %v8169
        %v8221 = vmul.f32 %v8213, %v8170
        %v8222 = vmul.f32 %v8213, %v8171
        %v8223 = vadd.f32 %v8204, 1e-06
        %v8224 = vadd.f32 %v8205, 1e-06
        %v8225 = vadd.f32 %v8206, 1e-06
        %v8226 = vadd.f32 %v8207, 1e-06
        %v8227 = vadd.f32 %v8208, 1e-06
        %v8228 = vadd.f32 %v8209, 1e-06
        %v8229 = vadd.f32 %v8210, 1e-06
        %v8230 = vadd.f32 %v8211, 1e-06
        %v8231 = vrsqrt.pop %v8223
        %v8232 = vmul.f32 %v8231, %v8223
        %v8233 = vmul.f32 %v8232, %v8231
        %v8234 = vmul.f32 0.5, %v8233
        %v8235 = vsub.f32 1.5, %v8234
        %v8236 = vmul.f32 %v8231, %v8235
        %vm8237 = vweird.f32 %v8223
        %vm8238 = vweird.f32 %v8231
        %vm8239 = vmor %vm8237, %vm8238
        %v8240 = vsel %vm8239, %v8231, %v8236
        %v8241 = vrsqrt.pop %v8224
        %v8242 = vmul.f32 %v8241, %v8224
        %v8243 = vmul.f32 %v8242, %v8241
        %v8244 = vmul.f32 0.5, %v8243
        %v8245 = vsub.f32 1.5, %v8244
        %v8246 = vmul.f32 %v8241, %v8245
        %vm8247 = vweird.f32 %v8224
        %vm8248 = vweird.f32 %v8241
        %vm8249 = vmor %vm8247, %vm8248
        %v8250 = vsel %vm8249, %v8241, %v8246
        %v8251 = vrsqrt.pop %v8225
        %v8252 = vmul.f32 %v8251, %v8225
        %v8253 = vmul.f32 %v8252, %v8251
        %v8254 = vmul.f32 0.5, %v8253
        %v8255 = vsub.f32 1.5, %v8254
        %v8256 = vmul.f32 %v8251, %v8255
        %vm8257 = vweird.f32 %v8225
        %vm8258 = vweird.f32 %v8251
        %vm8259 = vmor %vm8257, %vm8258
        %v8260 = vsel %vm8259, %v8251, %v8256
        %v8261 = vrsqrt.pop %v8226
        %v8262 = vmul.f32 %v8261, %v8226
        %v8263 = vmul.f32 %v8262, %v8261
        %v8264 = vmul.f32 0.5, %v8263
        %v8265 = vsub.f32 1.5, %v8264
        %v8266 = vmul.f32 %v8261, %v8265
        %vm8267 = vweird.f32 %v8226
        %vm8268 = vweird.f32 %v8261
        %vm8269 = vmor %vm8267, %vm8268
        %v8270 = vsel %vm8269, %v8261, %v8266
        %v8271 = vrsqrt.pop %v8227
        %v8272 = vmul.f32 %v8271, %v8227
        %v8273 = vmul.f32 %v8272, %v8271
        %v8274 = vmul.f32 0.5, %v8273
        %v8275 = vsub.f32 1.5, %v8274
        %v8276 = vmul.f32 %v8271, %v8275
        %vm8277 = vweird.f32 %v8227
        %vm8278 = vweird.f32 %v8271
        %vm8279 = vmor %vm8277, %vm8278
        %v8280 = vsel %vm8279, %v8271, %v8276
        %v8281 = vrsqrt.pop %v8228
        %v8282 = vmul.f32 %v8281, %v8228
        %v8283 = vmul.f32 %v8282, %v8281
        %v8284 = vmul.f32 0.5, %v8283
        %v8285 = vsub.f32 1.5, %v8284
        %v8286 = vmul.f32 %v8281, %v8285
        %vm8287 = vweird.f32 %v8228
        %vm8288 = vweird.f32 %v8281
        %vm8289 = vmor %vm8287, %vm8288
        %v8290 = vsel %vm8289, %v8281, %v8286
        %v8291 = vrsqrt.pop %v8229
        %v8292 = vmul.f32 %v8291, %v8229
        %v8293 = vmul.f32 %v8292, %v8291
        %v8294 = vmul.f32 0.5, %v8293
        %v8295 = vsub.f32 1.5, %v8294
        %v8296 = vmul.f32 %v8291, %v8295
        %vm8297 = vweird.f32 %v8229
        %vm8298 = vweird.f32 %v8291
        %vm8299 = vmor %vm8297, %vm8298
        %v8300 = vsel %vm8299, %v8291, %v8296
        %v8301 = vrsqrt.pop %v8230
        %v8302 = vmul.f32 %v8301, %v8230
        %v8303 = vmul.f32 %v8302, %v8301
        %v8304 = vmul.f32 0.5, %v8303
        %v8305 = vsub.f32 1.5, %v8304
        %v8306 = vmul.f32 %v8301, %v8305
        %vm8307 = vweird.f32 %v8230
        %vm8308 = vweird.f32 %v8301
        %vm8309 = vmor %vm8307, %vm8308
        %v8310 = vsel %vm8309, %v8301, %v8306
        %v8311 = vmul.f32 %v8215, %v8240
        %v8312 = vmul.f32 %v8216, %v8250
        %v8313 = vmul.f32 %v8217, %v8260
        %v8314 = vmul.f32 %v8218, %v8270
        %v8315 = vmul.f32 %v8219, %v8280
        %v8316 = vmul.f32 %v8220, %v8290
        %v8317 = vmul.f32 %v8221, %v8300
        %v8318 = vmul.f32 %v8222, %v8310
        %v8319 = vpack.c.bf16 %v8312, %v8311
        %v8320 = vpack.c.bf16 %v8314, %v8313
        %v8321 = vpack.c.bf16 %v8316, %v8315
        %v8322 = vpack.c.bf16 %v8318, %v8317
        %v8323 = vld [vmem:[#allocation14] sm:$0xff]
        %v8324 = vld [vmem:[#allocation14 + $0x8] sm:$0xff]
        %v8325 = vld [vmem:[#allocation14 + $0x10] sm:$0xff]
        %v8326 = vld [vmem:[#allocation14 + $0x18] sm:$0xff]
        %v8327 = vld [vmem:[#allocation14 + $0x20] sm:$0xff]
        %v8328 = vld [vmem:[#allocation14 + $0x28] sm:$0xff]
        %v8329 = vld [vmem:[#allocation14 + $0x30] sm:$0xff]
        %v8330 = vld [vmem:[#allocation14 + $0x38] sm:$0xff]
        %v8331 = vld [vmem:[#allocation14 + $0x40] sm:$0xff]
        %v8332 = vld [vmem:[#allocation14 + $0x48] sm:$0xff]
        %v8333 = vld [vmem:[#allocation14 + $0x50] sm:$0xff]
        %v8334 = vld [vmem:[#allocation14 + $0x58] sm:$0xff]
        %v8335 = vld [vmem:[#allocation14 + $0x60] sm:$0xff]
        %v8336 = vld [vmem:[#allocation14 + $0x68] sm:$0xff]
        %v8337 = vld [vmem:[#allocation14 + $0x70] sm:$0xff]
        %v8338 = vld [vmem:[#allocation14 + $0x78] sm:$0xff]
        %v8339 = vld [vmem:[#allocation14 + $0x80] sm:$0xff]
        %v8340 = vld [vmem:[#allocation14 + $0x88] sm:$0xff]
        %v8341 = vld [vmem:[#allocation14 + $0x90] sm:$0xff]
        %v8342 = vld [vmem:[#allocation14 + $0x98] sm:$0xff]
        %v8343 = vld [vmem:[#allocation14 + $0xa0] sm:$0xff]
        %v8344 = vld [vmem:[#allocation14 + $0xa8] sm:$0xff]
        %v8345 = vld [vmem:[#allocation14 + $0xb0] sm:$0xff]
        %v8346 = vld [vmem:[#allocation14 + $0xb8] sm:$0xff]
        %v8347 = vld [vmem:[#allocation14 + $0xc0] sm:$0xff]
        %v8348 = vld [vmem:[#allocation14 + $0xc8] sm:$0xff]
        %v8349 = vld [vmem:[#allocation14 + $0xd0] sm:$0xff]
        %v8350 = vld [vmem:[#allocation14 + $0xd8] sm:$0xff]
        %v8351 = vld [vmem:[#allocation14 + $0xe0] sm:$0xff]
        %v8352 = vld [vmem:[#allocation14 + $0xe8] sm:$0xff]
        %v8353 = vld [vmem:[#allocation14 + $0xf0] sm:$0xff]
        %v8354 = vld [vmem:[#allocation14 + $0xf8] sm:$0xff]
        %v8355 = vld [vmem:[#allocation14 + $0x100] sm:$0xff]
        %v8356 = vld [vmem:[#allocation14 + $0x108] sm:$0xff]
        %v8357 = vld [vmem:[#allocation14 + $0x110] sm:$0xff]
        %v8358 = vld [vmem:[#allocation14 + $0x118] sm:$0xff]
        %v8359 = vld [vmem:[#allocation14 + $0x120] sm:$0xff]
        %v8360 = vld [vmem:[#allocation14 + $0x128] sm:$0xff]
        %v8361 = vld [vmem:[#allocation14 + $0x130] sm:$0xff]
        %v8362 = vld [vmem:[#allocation14 + $0x138] sm:$0xff]
        %v8363 = vld [vmem:[#allocation14 + $0x140] sm:$0xff]
        %v8364 = vld [vmem:[#allocation14 + $0x148] sm:$0xff]
        %v8365 = vld [vmem:[#allocation14 + $0x150] sm:$0xff]
        %v8366 = vld [vmem:[#allocation14 + $0x158] sm:$0xff]
        %v8367 = vld [vmem:[#allocation14 + $0x160] sm:$0xff]
        %v8368 = vld [vmem:[#allocation14 + $0x168] sm:$0xff]
        %v8369 = vld [vmem:[#allocation14 + $0x170] sm:$0xff]
        %v8370 = vld [vmem:[#allocation14 + $0x178] sm:$0xff]
        %v8371 = vld [vmem:[#allocation14 + $0x180] sm:$0xff]
        %v8372 = vld [vmem:[#allocation14 + $0x188] sm:$0xff]
        %v8373 = vld [vmem:[#allocation14 + $0x190] sm:$0xff]
        %v8374 = vld [vmem:[#allocation14 + $0x198] sm:$0xff]
        %v8375 = vld [vmem:[#allocation14 + $0x1a0] sm:$0xff]
        %v8376 = vld [vmem:[#allocation14 + $0x1a8] sm:$0xff]
        %v8377 = vld [vmem:[#allocation14 + $0x1b0] sm:$0xff]
        %v8378 = vld [vmem:[#allocation14 + $0x1b8] sm:$0xff]
        %v8379 = vld [vmem:[#allocation14 + $0x1c0] sm:$0xff]
        %v8380 = vld [vmem:[#allocation14 + $0x1c8] sm:$0xff]
        %v8381 = vld [vmem:[#allocation14 + $0x1d0] sm:$0xff]
        %v8382 = vld [vmem:[#allocation14 + $0x1d8] sm:$0xff]
        %v8383 = vld [vmem:[#allocation14 + $0x1e0] sm:$0xff]
        %v8384 = vld [vmem:[#allocation14 + $0x1e8] sm:$0xff]
        %v8385 = vld [vmem:[#allocation14 + $0x1f0] sm:$0xff]
        %v8386 = vld [vmem:[#allocation14 + $0x1f8] sm:$0xff]
        %v8451 = vunpack.c.l.b16 %v8323
        %v8452 = vunpack.c.h.b16 %v8323
        %v8453 = vunpack.c.l.b16 %v8324
        %v8454 = vunpack.c.h.b16 %v8324
        %v8455 = vunpack.c.l.b16 %v8325
        %v8456 = vunpack.c.h.b16 %v8325
        %v8457 = vunpack.c.l.b16 %v8326
        %v8458 = vunpack.c.h.b16 %v8326
        %v8459 = vunpack.c.l.b16 %v8327
        %v8460 = vunpack.c.h.b16 %v8327
        %v8461 = vunpack.c.l.b16 %v8328
        %v8462 = vunpack.c.h.b16 %v8328
        %v8463 = vunpack.c.l.b16 %v8329
        %v8464 = vunpack.c.h.b16 %v8329
        %v8465 = vunpack.c.l.b16 %v8330
        %v8466 = vunpack.c.h.b16 %v8330
        %v8467 = vunpack.c.l.b16 %v8331
        %v8468 = vunpack.c.h.b16 %v8331
        %v8469 = vunpack.c.l.b16 %v8332
        %v8470 = vunpack.c.h.b16 %v8332
        %v8471 = vunpack.c.l.b16 %v8333
        %v8472 = vunpack.c.h.b16 %v8333
        %v8473 = vunpack.c.l.b16 %v8334
        %v8474 = vunpack.c.h.b16 %v8334
        %v8475 = vunpack.c.l.b16 %v8335
        %v8476 = vunpack.c.h.b16 %v8335
        %v8477 = vunpack.c.l.b16 %v8336
        %v8478 = vunpack.c.h.b16 %v8336
        %v8479 = vunpack.c.l.b16 %v8337
        %v8480 = vunpack.c.h.b16 %v8337
        %v8481 = vunpack.c.l.b16 %v8338
        %v8482 = vunpack.c.h.b16 %v8338
        %v8483 = vunpack.c.l.b16 %v8339
        %v8484 = vunpack.c.h.b16 %v8339
        %v8485 = vunpack.c.l.b16 %v8340
        %v8486 = vunpack.c.h.b16 %v8340
        %v8487 = vunpack.c.l.b16 %v8341
        %v8488 = vunpack.c.h.b16 %v8341
        %v8489 = vunpack.c.l.b16 %v8342
        %v8490 = vunpack.c.h.b16 %v8342
        %v8491 = vunpack.c.l.b16 %v8343
        %v8492 = vunpack.c.h.b16 %v8343
        %v8493 = vunpack.c.l.b16 %v8344
        %v8494 = vunpack.c.h.b16 %v8344
        %v8495 = vunpack.c.l.b16 %v8345
        %v8496 = vunpack.c.h.b16 %v8345
        %v8497 = vunpack.c.l.b16 %v8346
        %v8498 = vunpack.c.h.b16 %v8346
        %v8499 = vunpack.c.l.b16 %v8347
        %v8500 = vunpack.c.h.b16 %v8347
        %v8501 = vunpack.c.l.b16 %v8348
        %v8502 = vunpack.c.h.b16 %v8348
        %v8503 = vunpack.c.l.b16 %v8349
        %v8504 = vunpack.c.h.b16 %v8349
        %v8505 = vunpack.c.l.b16 %v8350
        %v8506 = vunpack.c.h.b16 %v8350
        %v8507 = vunpack.c.l.b16 %v8351
        %v8508 = vunpack.c.h.b16 %v8351
        %v8509 = vunpack.c.l.b16 %v8352
        %v8510 = vunpack.c.h.b16 %v8352
        %v8511 = vunpack.c.l.b16 %v8353
        %v8512 = vunpack.c.h.b16 %v8353
        %v8513 = vunpack.c.l.b16 %v8354
        %v8514 = vunpack.c.h.b16 %v8354
        %v8515 = vunpack.c.l.b16 %v8355
        %v8516 = vunpack.c.h.b16 %v8355
        %v8517 = vunpack.c.l.b16 %v8356
        %v8518 = vunpack.c.h.b16 %v8356
        %v8519 = vunpack.c.l.b16 %v8357
        %v8520 = vunpack.c.h.b16 %v8357
        %v8521 = vunpack.c.l.b16 %v8358
        %v8522 = vunpack.c.h.b16 %v8358
        %v8523 = vunpack.c.l.b16 %v8359
        %v8524 = vunpack.c.h.b16 %v8359
        %v8525 = vunpack.c.l.b16 %v8360
        %v8526 = vunpack.c.h.b16 %v8360
        %v8527 = vunpack.c.l.b16 %v8361
        %v8528 = vunpack.c.h.b16 %v8361
        %v8529 = vunpack.c.l.b16 %v8362
        %v8530 = vunpack.c.h.b16 %v8362
        %v8531 = vunpack.c.l.b16 %v8363
        %v8532 = vunpack.c.h.b16 %v8363
        %v8533 = vunpack.c.l.b16 %v8364
        %v8534 = vunpack.c.h.b16 %v8364
        %v8535 = vunpack.c.l.b16 %v8365
        %v8536 = vunpack.c.h.b16 %v8365
        %v8537 = vunpack.c.l.b16 %v8366
        %v8538 = vunpack.c.h.b16 %v8366
        %v8539 = vunpack.c.l.b16 %v8367
        %v8540 = vunpack.c.h.b16 %v8367
        %v8541 = vunpack.c.l.b16 %v8368
        %v8542 = vunpack.c.h.b16 %v8368
        %v8543 = vunpack.c.l.b16 %v8369
        %v8544 = vunpack.c.h.b16 %v8369
        %v8545 = vunpack.c.l.b16 %v8370
        %v8546 = vunpack.c.h.b16 %v8370
        %v8547 = vunpack.c.l.b16 %v8371
        %v8548 = vunpack.c.h.b16 %v8371
        %v8549 = vunpack.c.l.b16 %v8372
        %v8550 = vunpack.c.h.b16 %v8372
        %v8551 = vunpack.c.l.b16 %v8373
        %v8552 = vunpack.c.h.b16 %v8373
        %v8553 = vunpack.c.l.b16 %v8374
        %v8554 = vunpack.c.h.b16 %v8374
        %v8555 = vunpack.c.l.b16 %v8375
        %v8556 = vunpack.c.h.b16 %v8375
        %v8557 = vunpack.c.l.b16 %v8376
        %v8558 = vunpack.c.h.b16 %v8376
        %v8559 = vunpack.c.l.b16 %v8377
        %v8560 = vunpack.c.h.b16 %v8377
        %v8561 = vunpack.c.l.b16 %v8378
        %v8562 = vunpack.c.h.b16 %v8378
        %v8563 = vunpack.c.l.b16 %v8379
        %v8564 = vunpack.c.h.b16 %v8379
        %v8565 = vunpack.c.l.b16 %v8380
        %v8566 = vunpack.c.h.b16 %v8380
        %v8567 = vunpack.c.l.b16 %v8381
        %v8568 = vunpack.c.h.b16 %v8381
        %v8569 = vunpack.c.l.b16 %v8382
        %v8570 = vunpack.c.h.b16 %v8382
        %v8571 = vunpack.c.l.b16 %v8383
        %v8572 = vunpack.c.h.b16 %v8383
        %v8573 = vunpack.c.l.b16 %v8384
        %v8574 = vunpack.c.h.b16 %v8384
        %v8575 = vunpack.c.l.b16 %v8385
        %v8576 = vunpack.c.h.b16 %v8385
        %v8577 = vunpack.c.l.b16 %v8386
        %v8578 = vunpack.c.h.b16 %v8386
        %v8579 = vpack.c.b16 %v8459, %v8451
        %v8580 = vpack.c.b16 %v8460, %v8452
        %v8581 = vpack.c.b16 %v8461, %v8453
        %v8582 = vpack.c.b16 %v8462, %v8454
        %v8583 = vpack.c.b16 %v8463, %v8455
        %v8584 = vpack.c.b16 %v8464, %v8456
        %v8585 = vpack.c.b16 %v8465, %v8457
        %v8586 = vpack.c.b16 %v8466, %v8458
        %v8587 = vpack.c.b16 %v8475, %v8467
        %v8588 = vpack.c.b16 %v8476, %v8468
        %v8589 = vpack.c.b16 %v8477, %v8469
        %v8590 = vpack.c.b16 %v8478, %v8470
        %v8591 = vpack.c.b16 %v8479, %v8471
        %v8592 = vpack.c.b16 %v8480, %v8472
        %v8593 = vpack.c.b16 %v8481, %v8473
        %v8594 = vpack.c.b16 %v8482, %v8474
        %v8595 = vpack.c.b16 %v8491, %v8483
        %v8596 = vpack.c.b16 %v8492, %v8484
        %v8597 = vpack.c.b16 %v8493, %v8485
        %v8598 = vpack.c.b16 %v8494, %v8486
        %v8599 = vpack.c.b16 %v8495, %v8487
        %v8600 = vpack.c.b16 %v8496, %v8488
        %v8601 = vpack.c.b16 %v8497, %v8489
        %v8602 = vpack.c.b16 %v8498, %v8490
        %v8603 = vpack.c.b16 %v8507, %v8499
        %v8604 = vpack.c.b16 %v8508, %v8500
        %v8605 = vpack.c.b16 %v8509, %v8501
        %v8606 = vpack.c.b16 %v8510, %v8502
        %v8607 = vpack.c.b16 %v8511, %v8503
        %v8608 = vpack.c.b16 %v8512, %v8504
        %v8609 = vpack.c.b16 %v8513, %v8505
        %v8610 = vpack.c.b16 %v8514, %v8506
        %v8611 = vpack.c.b16 %v8523, %v8515
        %v8612 = vpack.c.b16 %v8524, %v8516
        %v8613 = vpack.c.b16 %v8525, %v8517
        %v8614 = vpack.c.b16 %v8526, %v8518
        %v8615 = vpack.c.b16 %v8527, %v8519
        %v8616 = vpack.c.b16 %v8528, %v8520
        %v8617 = vpack.c.b16 %v8529, %v8521
        %v8618 = vpack.c.b16 %v8530, %v8522
        %v8619 = vpack.c.b16 %v8539, %v8531
        %v8620 = vpack.c.b16 %v8540, %v8532
        %v8621 = vpack.c.b16 %v8541, %v8533
        %v8622 = vpack.c.b16 %v8542, %v8534
        %v8623 = vpack.c.b16 %v8543, %v8535
        %v8624 = vpack.c.b16 %v8544, %v8536
        %v8625 = vpack.c.b16 %v8545, %v8537
        %v8626 = vpack.c.b16 %v8546, %v8538
        %v8627 = vpack.c.b16 %v8555, %v8547
        %v8628 = vpack.c.b16 %v8556, %v8548
        %v8629 = vpack.c.b16 %v8557, %v8549
        %v8630 = vpack.c.b16 %v8558, %v8550
        %v8631 = vpack.c.b16 %v8559, %v8551
        %v8632 = vpack.c.b16 %v8560, %v8552
        %v8633 = vpack.c.b16 %v8561, %v8553
        %v8634 = vpack.c.b16 %v8562, %v8554
        %v8635 = vpack.c.b16 %v8571, %v8563
        %v8636 = vpack.c.b16 %v8572, %v8564
        %v8637 = vpack.c.b16 %v8573, %v8565
        %v8638 = vpack.c.b16 %v8574, %v8566
        %v8639 = vpack.c.b16 %v8575, %v8567
        %v8640 = vpack.c.b16 %v8576, %v8568
        %v8641 = vpack.c.b16 %v8577, %v8569
        %v8642 = vpack.c.b16 %v8578, %v8570
        %8707 = vmatpush.bf16.msra.mxu0 %v8635
        %8708 = vmatpush.bf16.msra.mxu0 %v8627
        %8709 = vmatpush.bf16.msra.mxu0 %v8619
        %8710 = vmatpush.bf16.msra.mxu0 %v8611
        %8711 = vmatpush.bf16.msra.mxu0 %v8603
        %8712 = vmatpush.bf16.msra.mxu0 %v8595
        %8713 = vmatpush.bf16.msra.mxu0 %v8587
        %8714 = vmatpush.bf16.msra.mxu0 %v8579
        %8715 = vmatmul.bf16.gmra.mxu0 %v8319
        %v8716 = vpop.f32.mrf.mxu0
        %v8717 = vadd.f32 0.0, %v8716
        %v8718 = vpop.f32.mrf.mxu0
        %v8719 = vadd.f32 0.0, %v8718
        %8720 = vmatmul.bf16.gmra.mxu0 %v8320
        %v8721 = vpop.f32.mrf.mxu0
        %v8722 = vadd.f32 0.0, %v8721
        %v8723 = vpop.f32.mrf.mxu0
        %v8724 = vadd.f32 0.0, %v8723
        %8725 = vmatmul.bf16.gmra.mxu0 %v8321
        %v8726 = vpop.f32.mrf.mxu0
        %v8727 = vadd.f32 0.0, %v8726
        %v8728 = vpop.f32.mrf.mxu0
        %v8729 = vadd.f32 0.0, %v8728
        %8730 = vmatmul.bf16.gmra.mxu0 %v8322
        %v8731 = vpop.f32.mrf.mxu0
        %v8732 = vadd.f32 0.0, %v8731
        %v8733 = vpop.f32.mrf.mxu0
        %v8734 = vadd.f32 0.0, %v8733
        %8735 = vdwg.mxu0
        %8736 = vmatpush.bf16.msra.mxu0 %v8636
        %8737 = vmatpush.bf16.msra.mxu0 %v8628
        %8738 = vmatpush.bf16.msra.mxu0 %v8620
        %8739 = vmatpush.bf16.msra.mxu0 %v8612
        %8740 = vmatpush.bf16.msra.mxu0 %v8604
        %8741 = vmatpush.bf16.msra.mxu0 %v8596
        %8742 = vmatpush.bf16.msra.mxu0 %v8588
        %8743 = vmatpush.bf16.msra.mxu0 %v8580
        %8744 = vmatmul.bf16.gmra.mxu0 %v8319
        %v8745 = vpop.f32.mrf.mxu0
        %v8746 = vadd.f32 0.0, %v8745
        %v8747 = vpop.f32.mrf.mxu0
        %v8748 = vadd.f32 0.0, %v8747
        %8749 = vmatmul.bf16.gmra.mxu0 %v8320
        %v8750 = vpop.f32.mrf.mxu0
        %v8751 = vadd.f32 0.0, %v8750
        %v8752 = vpop.f32.mrf.mxu0
        %v8753 = vadd.f32 0.0, %v8752
        %8754 = vmatmul.bf16.gmra.mxu0 %v8321
        %v8755 = vpop.f32.mrf.mxu0
        %v8756 = vadd.f32 0.0, %v8755
        %v8757 = vpop.f32.mrf.mxu0
        %v8758 = vadd.f32 0.0, %v8757
        %8759 = vmatmul.bf16.gmra.mxu0 %v8322
        %v8760 = vpop.f32.mrf.mxu0
        %v8761 = vadd.f32 0.0, %v8760
        %v8762 = vpop.f32.mrf.mxu0
        %v8763 = vadd.f32 0.0, %v8762
        %8764 = vdwg.mxu0
        %8765 = vmatpush.bf16.msra.mxu0 %v8637
        %8766 = vmatpush.bf16.msra.mxu0 %v8629
        %8767 = vmatpush.bf16.msra.mxu0 %v8621
        %8768 = vmatpush.bf16.msra.mxu0 %v8613
        %8769 = vmatpush.bf16.msra.mxu0 %v8605
        %8770 = vmatpush.bf16.msra.mxu0 %v8597
        %8771 = vmatpush.bf16.msra.mxu0 %v8589
        %8772 = vmatpush.bf16.msra.mxu0 %v8581
        %8773 = vmatmul.bf16.gmra.mxu0 %v8319
        %v8774 = vpop.f32.mrf.mxu0
        %v8775 = vadd.f32 0.0, %v8774
        %v8776 = vpop.f32.mrf.mxu0
        %v8777 = vadd.f32 0.0, %v8776
        %8778 = vmatmul.bf16.gmra.mxu0 %v8320
        %v8779 = vpop.f32.mrf.mxu0
        %v8780 = vadd.f32 0.0, %v8779
        %v8781 = vpop.f32.mrf.mxu0
        %v8782 = vadd.f32 0.0, %v8781
        %8783 = vmatmul.bf16.gmra.mxu0 %v8321
        %v8784 = vpop.f32.mrf.mxu0
        %v8785 = vadd.f32 0.0, %v8784
        %v8786 = vpop.f32.mrf.mxu0
        %v8787 = vadd.f32 0.0, %v8786
        %8788 = vmatmul.bf16.gmra.mxu0 %v8322
        %v8789 = vpop.f32.mrf.mxu0
        %v8790 = vadd.f32 0.0, %v8789
        %v8791 = vpop.f32.mrf.mxu0
        %v8792 = vadd.f32 0.0, %v8791
        %8793 = vdwg.mxu0
        %8794 = vmatpush.bf16.msra.mxu0 %v8638
        %8795 = vmatpush.bf16.msra.mxu0 %v8630
        %8796 = vmatpush.bf16.msra.mxu0 %v8622
        %8797 = vmatpush.bf16.msra.mxu0 %v8614
        %8798 = vmatpush.bf16.msra.mxu0 %v8606
        %8799 = vmatpush.bf16.msra.mxu0 %v8598
        %8800 = vmatpush.bf16.msra.mxu0 %v8590
        %8801 = vmatpush.bf16.msra.mxu0 %v8582
        %8802 = vmatmul.bf16.gmra.mxu0 %v8319
        %v8803 = vpop.f32.mrf.mxu0
        %v8804 = vadd.f32 0.0, %v8803
        %v8805 = vpop.f32.mrf.mxu0
        %v8806 = vadd.f32 0.0, %v8805
        %8807 = vmatmul.bf16.gmra.mxu0 %v8320
        %v8808 = vpop.f32.mrf.mxu0
        %v8809 = vadd.f32 0.0, %v8808
        %v8810 = vpop.f32.mrf.mxu0
        %v8811 = vadd.f32 0.0, %v8810
        %8812 = vmatmul.bf16.gmra.mxu0 %v8321
        %v8813 = vpop.f32.mrf.mxu0
        %v8814 = vadd.f32 0.0, %v8813
        %v8815 = vpop.f32.mrf.mxu0
        %v8816 = vadd.f32 0.0, %v8815
        %8817 = vmatmul.bf16.gmra.mxu0 %v8322
        %v8818 = vpop.f32.mrf.mxu0
        %v8819 = vadd.f32 0.0, %v8818
        %v8820 = vpop.f32.mrf.mxu0
        %v8821 = vadd.f32 0.0, %v8820
        %8822 = vdwg.mxu0
        %8823 = vmatpush.bf16.msra.mxu0 %v8639
        %8824 = vmatpush.bf16.msra.mxu0 %v8631
        %8825 = vmatpush.bf16.msra.mxu0 %v8623
        %8826 = vmatpush.bf16.msra.mxu0 %v8615
        %8827 = vmatpush.bf16.msra.mxu0 %v8607
        %8828 = vmatpush.bf16.msra.mxu0 %v8599
        %8829 = vmatpush.bf16.msra.mxu0 %v8591
        %8830 = vmatpush.bf16.msra.mxu0 %v8583
        %8831 = vmatmul.bf16.gmra.mxu0 %v8319
        %v8832 = vpop.f32.mrf.mxu0
        %v8833 = vadd.f32 0.0, %v8832
        %v8834 = vpop.f32.mrf.mxu0
        %v8835 = vadd.f32 0.0, %v8834
        %8836 = vmatmul.bf16.gmra.mxu0 %v8320
        %v8837 = vpop.f32.mrf.mxu0
        %v8838 = vadd.f32 0.0, %v8837
        %v8839 = vpop.f32.mrf.mxu0
        %v8840 = vadd.f32 0.0, %v8839
        %8841 = vmatmul.bf16.gmra.mxu0 %v8321
        %v8842 = vpop.f32.mrf.mxu0
        %v8843 = vadd.f32 0.0, %v8842
        %v8844 = vpop.f32.mrf.mxu0
        %v8845 = vadd.f32 0.0, %v8844
        %8846 = vmatmul.bf16.gmra.mxu0 %v8322
        %v8847 = vpop.f32.mrf.mxu0
        %v8848 = vadd.f32 0.0, %v8847
        %v8849 = vpop.f32.mrf.mxu0
        %v8850 = vadd.f32 0.0, %v8849
        %8851 = vdwg.mxu0
        %8852 = vmatpush.bf16.msra.mxu0 %v8640
        %8853 = vmatpush.bf16.msra.mxu0 %v8632
        %8854 = vmatpush.bf16.msra.mxu0 %v8624
        %8855 = vmatpush.bf16.msra.mxu0 %v8616
        %8856 = vmatpush.bf16.msra.mxu0 %v8608
        %8857 = vmatpush.bf16.msra.mxu0 %v8600
        %8858 = vmatpush.bf16.msra.mxu0 %v8592
        %8859 = vmatpush.bf16.msra.mxu0 %v8584
        %8860 = vmatmul.bf16.gmra.mxu0 %v8319
        %v8861 = vpop.f32.mrf.mxu0
        %v8862 = vadd.f32 0.0, %v8861
        %v8863 = vpop.f32.mrf.mxu0
        %v8864 = vadd.f32 0.0, %v8863
        %8865 = vmatmul.bf16.gmra.mxu0 %v8320
        %v8866 = vpop.f32.mrf.mxu0
        %v8867 = vadd.f32 0.0, %v8866
        %v8868 = vpop.f32.mrf.mxu0
        %v8869 = vadd.f32 0.0, %v8868
        %8870 = vmatmul.bf16.gmra.mxu0 %v8321
        %v8871 = vpop.f32.mrf.mxu0
        %v8872 = vadd.f32 0.0, %v8871
        %v8873 = vpop.f32.mrf.mxu0
        %v8874 = vadd.f32 0.0, %v8873
        %8875 = vmatmul.bf16.gmra.mxu0 %v8322
        %v8876 = vpop.f32.mrf.mxu0
        %v8877 = vadd.f32 0.0, %v8876
        %v8878 = vpop.f32.mrf.mxu0
        %v8879 = vadd.f32 0.0, %v8878
        %8880 = vdwg.mxu0
        %8881 = vmatpush.bf16.msra.mxu0 %v8641
        %8882 = vmatpush.bf16.msra.mxu0 %v8633
        %8883 = vmatpush.bf16.msra.mxu0 %v8625
        %8884 = vmatpush.bf16.msra.mxu0 %v8617
        %8885 = vmatpush.bf16.msra.mxu0 %v8609
        %8886 = vmatpush.bf16.msra.mxu0 %v8601
        %8887 = vmatpush.bf16.msra.mxu0 %v8593
        %8888 = vmatpush.bf16.msra.mxu0 %v8585
        %8889 = vmatmul.bf16.gmra.mxu0 %v8319
        %v8890 = vpop.f32.mrf.mxu0
        %v8891 = vadd.f32 0.0, %v8890
        %v8892 = vpop.f32.mrf.mxu0
        %v8893 = vadd.f32 0.0, %v8892
        %8894 = vmatmul.bf16.gmra.mxu0 %v8320
        %v8895 = vpop.f32.mrf.mxu0
        %v8896 = vadd.f32 0.0, %v8895
        %v8897 = vpop.f32.mrf.mxu0
        %v8898 = vadd.f32 0.0, %v8897
        %8899 = vmatmul.bf16.gmra.mxu0 %v8321
        %v8900 = vpop.f32.mrf.mxu0
        %v8901 = vadd.f32 0.0, %v8900
        %v8902 = vpop.f32.mrf.mxu0
        %v8903 = vadd.f32 0.0, %v8902
        %8904 = vmatmul.bf16.gmra.mxu0 %v8322
        %v8905 = vpop.f32.mrf.mxu0
        %v8906 = vadd.f32 0.0, %v8905
        %v8907 = vpop.f32.mrf.mxu0
        %v8908 = vadd.f32 0.0, %v8907
        %8909 = vdwg.mxu0
        %8910 = vmatpush.bf16.msra.mxu0 %v8642
        %8911 = vmatpush.bf16.msra.mxu0 %v8634
        %8912 = vmatpush.bf16.msra.mxu0 %v8626
        %8913 = vmatpush.bf16.msra.mxu0 %v8618
        %8914 = vmatpush.bf16.msra.mxu0 %v8610
        %8915 = vmatpush.bf16.msra.mxu0 %v8602
        %8916 = vmatpush.bf16.msra.mxu0 %v8594
        %8917 = vmatpush.bf16.msra.mxu0 %v8586
        %8918 = vmatmul.bf16.gmra.mxu0 %v8319
        %v8919 = vpop.f32.mrf.mxu0
        %v8920 = vadd.f32 0.0, %v8919
        %v8921 = vpop.f32.mrf.mxu0
        %v8922 = vadd.f32 0.0, %v8921
        %8923 = vmatmul.bf16.gmra.mxu0 %v8320
        %v8924 = vpop.f32.mrf.mxu0
        %v8925 = vadd.f32 0.0, %v8924
        %v8926 = vpop.f32.mrf.mxu0
        %v8927 = vadd.f32 0.0, %v8926
        %8928 = vmatmul.bf16.gmra.mxu0 %v8321
        %v8929 = vpop.f32.mrf.mxu0
        %v8930 = vadd.f32 0.0, %v8929
        %v8931 = vpop.f32.mrf.mxu0
        %v8932 = vadd.f32 0.0, %v8931
        %8933 = vmatmul.bf16.gmra.mxu0 %v8322
        %v8934 = vpop.f32.mrf.mxu0
        %v8935 = vadd.f32 0.0, %v8934
        %v8936 = vpop.f32.mrf.mxu0
        %v8937 = vadd.f32 0.0, %v8936
        %8938 = vdwg.mxu0
        %v8939 = vxor.u32 %v8717, 2147483648
        %v8940 = vxor.u32 %v8746, 2147483648
        %v8941 = vxor.u32 %v8775, 2147483648
        %v8942 = vxor.u32 %v8804, 2147483648
        %v8943 = vxor.u32 %v8719, 2147483648
        %v8944 = vxor.u32 %v8748, 2147483648
        %v8945 = vxor.u32 %v8777, 2147483648
        %v8946 = vxor.u32 %v8806, 2147483648
        %v8947 = vxor.u32 %v8722, 2147483648
        %v8948 = vxor.u32 %v8751, 2147483648
        %v8949 = vxor.u32 %v8780, 2147483648
        %v8950 = vxor.u32 %v8809, 2147483648
        %v8951 = vxor.u32 %v8724, 2147483648
        %v8952 = vxor.u32 %v8753, 2147483648
        %v8953 = vxor.u32 %v8782, 2147483648
        %v8954 = vxor.u32 %v8811, 2147483648
        %v8955 = vxor.u32 %v8727, 2147483648
        %v8956 = vxor.u32 %v8756, 2147483648
        %v8957 = vxor.u32 %v8785, 2147483648
        %v8958 = vxor.u32 %v8814, 2147483648
        %v8959 = vxor.u32 %v8729, 2147483648
        %v8960 = vxor.u32 %v8758, 2147483648
        %v8961 = vxor.u32 %v8787, 2147483648
        %v8962 = vxor.u32 %v8816, 2147483648
        %v8963 = vxor.u32 %v8732, 2147483648
        %v8964 = vxor.u32 %v8761, 2147483648
        %v8965 = vxor.u32 %v8790, 2147483648
        %v8966 = vxor.u32 %v8819, 2147483648
        %v8967 = vxor.u32 %v8734, 2147483648
        %v8968 = vxor.u32 %v8763, 2147483648
        %v8969 = vxor.u32 %v8792, 2147483648
        %v8970 = vxor.u32 %v8821, 2147483648
        %v8971 = vmul.f32 %v8939, 1.442695
        %v8972 = vpow.pop %v8971
        %v8973 = vmul.f32 %v8940, 1.442695
        %v8974 = vpow.pop %v8973
        %v8975 = vmul.f32 %v8941, 1.442695
        %v8976 = vpow.pop %v8975
        %v8977 = vmul.f32 %v8942, 1.442695
        %v8978 = vpow.pop %v8977
        %v8979 = vmul.f32 %v8943, 1.442695
        %v8980 = vpow.pop %v8979
        %v8981 = vmul.f32 %v8944, 1.442695
        %v8982 = vpow.pop %v8981
        %v8983 = vmul.f32 %v8945, 1.442695
        %v8984 = vpow.pop %v8983
        %v8985 = vmul.f32 %v8946, 1.442695
        %v8986 = vpow.pop %v8985
        %v8987 = vmul.f32 %v8947, 1.442695
        %v8988 = vpow.pop %v8987
        %v8989 = vmul.f32 %v8948, 1.442695
        %v8990 = vpow.pop %v8989
        %v8991 = vmul.f32 %v8949, 1.442695
        %v8992 = vpow.pop %v8991
        %v8993 = vmul.f32 %v8950, 1.442695
        %v8994 = vpow.pop %v8993
        %v8995 = vmul.f32 %v8951, 1.442695
        %v8996 = vpow.pop %v8995
        %v8997 = vmul.f32 %v8952, 1.442695
        %v8998 = vpow.pop %v8997
        %v8999 = vmul.f32 %v8953, 1.442695
        %v9000 = vpow.pop %v8999
        %v9001 = vmul.f32 %v8954, 1.442695
        %v9002 = vpow.pop %v9001
        %v9003 = vmul.f32 %v8955, 1.442695
        %v9004 = vpow.pop %v9003
        %v9005 = vmul.f32 %v8956, 1.442695
        %v9006 = vpow.pop %v9005
        %v9007 = vmul.f32 %v8957, 1.442695
        %v9008 = vpow.pop %v9007
        %v9009 = vmul.f32 %v8958, 1.442695
        %v9010 = vpow.pop %v9009
        %v9011 = vmul.f32 %v8959, 1.442695
        %v9012 = vpow.pop %v9011
        %v9013 = vmul.f32 %v8960, 1.442695
        %v9014 = vpow.pop %v9013
        %v9015 = vmul.f32 %v8961, 1.442695
        %v9016 = vpow.pop %v9015
        %v9017 = vmul.f32 %v8962, 1.442695
        %v9018 = vpow.pop %v9017
        %v9019 = vmul.f32 %v8963, 1.442695
        %v9020 = vpow.pop %v9019
        %v9021 = vmul.f32 %v8964, 1.442695
        %v9022 = vpow.pop %v9021
        %v9023 = vmul.f32 %v8965, 1.442695
        %v9024 = vpow.pop %v9023
        %v9025 = vmul.f32 %v8966, 1.442695
        %v9026 = vpow.pop %v9025
        %v9027 = vmul.f32 %v8967, 1.442695
        %v9028 = vpow.pop %v9027
        %v9029 = vmul.f32 %v8968, 1.442695
        %v9030 = vpow.pop %v9029
        %v9031 = vmul.f32 %v8969, 1.442695
        %v9032 = vpow.pop %v9031
        %v9033 = vmul.f32 %v8970, 1.442695
        %v9034 = vpow.pop %v9033
        %v9035 = vadd.f32 %v8972, 1.0
        %v9036 = vadd.f32 %v8974, 1.0
        %v9037 = vadd.f32 %v8976, 1.0
        %v9038 = vadd.f32 %v8978, 1.0
        %v9039 = vadd.f32 %v8980, 1.0
        %v9040 = vadd.f32 %v8982, 1.0
        %v9041 = vadd.f32 %v8984, 1.0
        %v9042 = vadd.f32 %v8986, 1.0
        %v9043 = vadd.f32 %v8988, 1.0
        %v9044 = vadd.f32 %v8990, 1.0
        %v9045 = vadd.f32 %v8992, 1.0
        %v9046 = vadd.f32 %v8994, 1.0
        %v9047 = vadd.f32 %v8996, 1.0
        %v9048 = vadd.f32 %v8998, 1.0
        %v9049 = vadd.f32 %v9000, 1.0
        %v9050 = vadd.f32 %v9002, 1.0
        %v9051 = vadd.f32 %v9004, 1.0
        %v9052 = vadd.f32 %v9006, 1.0
        %v9053 = vadd.f32 %v9008, 1.0
        %v9054 = vadd.f32 %v9010, 1.0
        %v9055 = vadd.f32 %v9012, 1.0
        %v9056 = vadd.f32 %v9014, 1.0
        %v9057 = vadd.f32 %v9016, 1.0
        %v9058 = vadd.f32 %v9018, 1.0
        %v9059 = vadd.f32 %v9020, 1.0
        %v9060 = vadd.f32 %v9022, 1.0
        %v9061 = vadd.f32 %v9024, 1.0
        %v9062 = vadd.f32 %v9026, 1.0
        %v9063 = vadd.f32 %v9028, 1.0
        %v9064 = vadd.f32 %v9030, 1.0
        %v9065 = vadd.f32 %v9032, 1.0
        %v9066 = vadd.f32 %v9034, 1.0
        %v9067 = vrcp.pop %v9035
        %v9068 = vmul.f32 %v9035, %v9067
        %v9069 = vsub.f32 1.0, %v9068
        %v9070 = vmul.f32 %v9067, %v9069
        %v9071 = vadd.f32 %v9067, %v9070
        %vm9072 = vweird.f32 %v9035
        %vm9073 = vweird.f32 %v9067
        %vm9074 = vmor %vm9072, %vm9073
        %v9075 = vsel %vm9074, %v9067, %v9071
        %v9076 = vand.u32 2147483647, %v9035
        %vm9077 = vcmp.eq.f32.partialorder %v9076, 8.507059e+37
        %v9078 = vand.u32 %v9035, 2147483648
        %v9079 = vor.u32 1.1754944e-38, %v9078
        %v9080 = vsel %vm9077, %v9079, %v9075
        %v9081 = vmul.f32 1.0, %v9080
        %v9082 = vrcp.pop %v9036
        %v9083 = vmul.f32 %v9036, %v9082
        %v9084 = vsub.f32 1.0, %v9083
        %v9085 = vmul.f32 %v9082, %v9084
        %v9086 = vadd.f32 %v9082, %v9085
        %vm9087 = vweird.f32 %v9036
        %vm9088 = vweird.f32 %v9082
        %vm9089 = vmor %vm9087, %vm9088
        %v9090 = vsel %vm9089, %v9082, %v9086
        %v9091 = vand.u32 2147483647, %v9036
        %vm9092 = vcmp.eq.f32.partialorder %v9091, 8.507059e+37
        %v9093 = vand.u32 %v9036, 2147483648
        %v9094 = vor.u32 1.1754944e-38, %v9093
        %v9095 = vsel %vm9092, %v9094, %v9090
        %v9096 = vmul.f32 1.0, %v9095
        %v9097 = vrcp.pop %v9037
        %v9098 = vmul.f32 %v9037, %v9097
        %v9099 = vsub.f32 1.0, %v9098
        %v9100 = vmul.f32 %v9097, %v9099
        %v9101 = vadd.f32 %v9097, %v9100
        %vm9102 = vweird.f32 %v9037
        %vm9103 = vweird.f32 %v9097
        %vm9104 = vmor %vm9102, %vm9103
        %v9105 = vsel %vm9104, %v9097, %v9101
        %v9106 = vand.u32 2147483647, %v9037
        %vm9107 = vcmp.eq.f32.partialorder %v9106, 8.507059e+37
        %v9108 = vand.u32 %v9037, 2147483648
        %v9109 = vor.u32 1.1754944e-38, %v9108
        %v9110 = vsel %vm9107, %v9109, %v9105
        %v9111 = vmul.f32 1.0, %v9110
        %v9112 = vrcp.pop %v9038
        %v9113 = vmul.f32 %v9038, %v9112
        %v9114 = vsub.f32 1.0, %v9113
        %v9115 = vmul.f32 %v9112, %v9114
        %v9116 = vadd.f32 %v9112, %v9115
        %vm9117 = vweird.f32 %v9038
        %vm9118 = vweird.f32 %v9112
        %vm9119 = vmor %vm9117, %vm9118
        %v9120 = vsel %vm9119, %v9112, %v9116
        %v9121 = vand.u32 2147483647, %v9038
        %vm9122 = vcmp.eq.f32.partialorder %v9121, 8.507059e+37
        %v9123 = vand.u32 %v9038, 2147483648
        %v9124 = vor.u32 1.1754944e-38, %v9123
        %v9125 = vsel %vm9122, %v9124, %v9120
        %v9126 = vmul.f32 1.0, %v9125
        %v9127 = vrcp.pop %v9039
        %v9128 = vmul.f32 %v9039, %v9127
        %v9129 = vsub.f32 1.0, %v9128
        %v9130 = vmul.f32 %v9127, %v9129
        %v9131 = vadd.f32 %v9127, %v9130
        %vm9132 = vweird.f32 %v9039
        %vm9133 = vweird.f32 %v9127
        %vm9134 = vmor %vm9132, %vm9133
        %v9135 = vsel %vm9134, %v9127, %v9131
        %v9136 = vand.u32 2147483647, %v9039
        %vm9137 = vcmp.eq.f32.partialorder %v9136, 8.507059e+37
        %v9138 = vand.u32 %v9039, 2147483648
        %v9139 = vor.u32 1.1754944e-38, %v9138
        %v9140 = vsel %vm9137, %v9139, %v9135
        %v9141 = vmul.f32 1.0, %v9140
        %v9142 = vrcp.pop %v9040
        %v9143 = vmul.f32 %v9040, %v9142
        %v9144 = vsub.f32 1.0, %v9143
        %v9145 = vmul.f32 %v9142, %v9144
        %v9146 = vadd.f32 %v9142, %v9145
        %vm9147 = vweird.f32 %v9040
        %vm9148 = vweird.f32 %v9142
        %vm9149 = vmor %vm9147, %vm9148
        %v9150 = vsel %vm9149, %v9142, %v9146
        %v9151 = vand.u32 2147483647, %v9040
        %vm9152 = vcmp.eq.f32.partialorder %v9151, 8.507059e+37
        %v9153 = vand.u32 %v9040, 2147483648
        %v9154 = vor.u32 1.1754944e-38, %v9153
        %v9155 = vsel %vm9152, %v9154, %v9150
        %v9156 = vmul.f32 1.0, %v9155
        %v9157 = vrcp.pop %v9041
        %v9158 = vmul.f32 %v9041, %v9157
        %v9159 = vsub.f32 1.0, %v9158
        %v9160 = vmul.f32 %v9157, %v9159
        %v9161 = vadd.f32 %v9157, %v9160
        %vm9162 = vweird.f32 %v9041
        %vm9163 = vweird.f32 %v9157
        %vm9164 = vmor %vm9162, %vm9163
        %v9165 = vsel %vm9164, %v9157, %v9161
        %v9166 = vand.u32 2147483647, %v9041
        %vm9167 = vcmp.eq.f32.partialorder %v9166, 8.507059e+37
        %v9168 = vand.u32 %v9041, 2147483648
        %v9169 = vor.u32 1.1754944e-38, %v9168
        %v9170 = vsel %vm9167, %v9169, %v9165
        %v9171 = vmul.f32 1.0, %v9170
        %v9172 = vrcp.pop %v9042
        %v9173 = vmul.f32 %v9042, %v9172
        %v9174 = vsub.f32 1.0, %v9173
        %v9175 = vmul.f32 %v9172, %v9174
        %v9176 = vadd.f32 %v9172, %v9175
        %vm9177 = vweird.f32 %v9042
        %vm9178 = vweird.f32 %v9172
        %vm9179 = vmor %vm9177, %vm9178
        %v9180 = vsel %vm9179, %v9172, %v9176
        %v9181 = vand.u32 2147483647, %v9042
        %vm9182 = vcmp.eq.f32.partialorder %v9181, 8.507059e+37
        %v9183 = vand.u32 %v9042, 2147483648
        %v9184 = vor.u32 1.1754944e-38, %v9183
        %v9185 = vsel %vm9182, %v9184, %v9180
        %v9186 = vmul.f32 1.0, %v9185
        %v9187 = vrcp.pop %v9043
        %v9188 = vmul.f32 %v9043, %v9187
        %v9189 = vsub.f32 1.0, %v9188
        %v9190 = vmul.f32 %v9187, %v9189
        %v9191 = vadd.f32 %v9187, %v9190
        %vm9192 = vweird.f32 %v9043
        %vm9193 = vweird.f32 %v9187
        %vm9194 = vmor %vm9192, %vm9193
        %v9195 = vsel %vm9194, %v9187, %v9191
        %v9196 = vand.u32 2147483647, %v9043
        %vm9197 = vcmp.eq.f32.partialorder %v9196, 8.507059e+37
        %v9198 = vand.u32 %v9043, 2147483648
        %v9199 = vor.u32 1.1754944e-38, %v9198
        %v9200 = vsel %vm9197, %v9199, %v9195
        %v9201 = vmul.f32 1.0, %v9200
        %v9202 = vrcp.pop %v9044
        %v9203 = vmul.f32 %v9044, %v9202
        %v9204 = vsub.f32 1.0, %v9203
        %v9205 = vmul.f32 %v9202, %v9204
        %v9206 = vadd.f32 %v9202, %v9205
        %vm9207 = vweird.f32 %v9044
        %vm9208 = vweird.f32 %v9202
        %vm9209 = vmor %vm9207, %vm9208
        %v9210 = vsel %vm9209, %v9202, %v9206
        %v9211 = vand.u32 2147483647, %v9044
        %vm9212 = vcmp.eq.f32.partialorder %v9211, 8.507059e+37
        %v9213 = vand.u32 %v9044, 2147483648
        %v9214 = vor.u32 1.1754944e-38, %v9213
        %v9215 = vsel %vm9212, %v9214, %v9210
        %v9216 = vmul.f32 1.0, %v9215
        %v9217 = vrcp.pop %v9045
        %v9218 = vmul.f32 %v9045, %v9217
        %v9219 = vsub.f32 1.0, %v9218
        %v9220 = vmul.f32 %v9217, %v9219
        %v9221 = vadd.f32 %v9217, %v9220
        %vm9222 = vweird.f32 %v9045
        %vm9223 = vweird.f32 %v9217
        %vm9224 = vmor %vm9222, %vm9223
        %v9225 = vsel %vm9224, %v9217, %v9221
        %v9226 = vand.u32 2147483647, %v9045
        %vm9227 = vcmp.eq.f32.partialorder %v9226, 8.507059e+37
        %v9228 = vand.u32 %v9045, 2147483648
        %v9229 = vor.u32 1.1754944e-38, %v9228
        %v9230 = vsel %vm9227, %v9229, %v9225
        %v9231 = vmul.f32 1.0, %v9230
        %v9232 = vrcp.pop %v9046
        %v9233 = vmul.f32 %v9046, %v9232
        %v9234 = vsub.f32 1.0, %v9233
        %v9235 = vmul.f32 %v9232, %v9234
        %v9236 = vadd.f32 %v9232, %v9235
        %vm9237 = vweird.f32 %v9046
        %vm9238 = vweird.f32 %v9232
        %vm9239 = vmor %vm9237, %vm9238
        %v9240 = vsel %vm9239, %v9232, %v9236
        %v9241 = vand.u32 2147483647, %v9046
        %vm9242 = vcmp.eq.f32.partialorder %v9241, 8.507059e+37
        %v9243 = vand.u32 %v9046, 2147483648
        %v9244 = vor.u32 1.1754944e-38, %v9243
        %v9245 = vsel %vm9242, %v9244, %v9240
        %v9246 = vmul.f32 1.0, %v9245
        %v9247 = vrcp.pop %v9047
        %v9248 = vmul.f32 %v9047, %v9247
        %v9249 = vsub.f32 1.0, %v9248
        %v9250 = vmul.f32 %v9247, %v9249
        %v9251 = vadd.f32 %v9247, %v9250
        %vm9252 = vweird.f32 %v9047
        %vm9253 = vweird.f32 %v9247
        %vm9254 = vmor %vm9252, %vm9253
        %v9255 = vsel %vm9254, %v9247, %v9251
        %v9256 = vand.u32 2147483647, %v9047
        %vm9257 = vcmp.eq.f32.partialorder %v9256, 8.507059e+37
        %v9258 = vand.u32 %v9047, 2147483648
        %v9259 = vor.u32 1.1754944e-38, %v9258
        %v9260 = vsel %vm9257, %v9259, %v9255
        %v9261 = vmul.f32 1.0, %v9260
        %v9262 = vrcp.pop %v9048
        %v9263 = vmul.f32 %v9048, %v9262
        %v9264 = vsub.f32 1.0, %v9263
        %v9265 = vmul.f32 %v9262, %v9264
        %v9266 = vadd.f32 %v9262, %v9265
        %vm9267 = vweird.f32 %v9048
        %vm9268 = vweird.f32 %v9262
        %vm9269 = vmor %vm9267, %vm9268
        %v9270 = vsel %vm9269, %v9262, %v9266
        %v9271 = vand.u32 2147483647, %v9048
        %vm9272 = vcmp.eq.f32.partialorder %v9271, 8.507059e+37
        %v9273 = vand.u32 %v9048, 2147483648
        %v9274 = vor.u32 1.1754944e-38, %v9273
        %v9275 = vsel %vm9272, %v9274, %v9270
        %v9276 = vmul.f32 1.0, %v9275
        %v9277 = vrcp.pop %v9049
        %v9278 = vmul.f32 %v9049, %v9277
        %v9279 = vsub.f32 1.0, %v9278
        %v9280 = vmul.f32 %v9277, %v9279
        %v9281 = vadd.f32 %v9277, %v9280
        %vm9282 = vweird.f32 %v9049
        %vm9283 = vweird.f32 %v9277
        %vm9284 = vmor %vm9282, %vm9283
        %v9285 = vsel %vm9284, %v9277, %v9281
        %v9286 = vand.u32 2147483647, %v9049
        %vm9287 = vcmp.eq.f32.partialorder %v9286, 8.507059e+37
        %v9288 = vand.u32 %v9049, 2147483648
        %v9289 = vor.u32 1.1754944e-38, %v9288
        %v9290 = vsel %vm9287, %v9289, %v9285
        %v9291 = vmul.f32 1.0, %v9290
        %v9292 = vrcp.pop %v9050
        %v9293 = vmul.f32 %v9050, %v9292
        %v9294 = vsub.f32 1.0, %v9293
        %v9295 = vmul.f32 %v9292, %v9294
        %v9296 = vadd.f32 %v9292, %v9295
        %vm9297 = vweird.f32 %v9050
        %vm9298 = vweird.f32 %v9292
        %vm9299 = vmor %vm9297, %vm9298
        %v9300 = vsel %vm9299, %v9292, %v9296
        %v9301 = vand.u32 2147483647, %v9050
        %vm9302 = vcmp.eq.f32.partialorder %v9301, 8.507059e+37
        %v9303 = vand.u32 %v9050, 2147483648
        %v9304 = vor.u32 1.1754944e-38, %v9303
        %v9305 = vsel %vm9302, %v9304, %v9300
        %v9306 = vmul.f32 1.0, %v9305
        %v9307 = vrcp.pop %v9051
        %v9308 = vmul.f32 %v9051, %v9307
        %v9309 = vsub.f32 1.0, %v9308
        %v9310 = vmul.f32 %v9307, %v9309
        %v9311 = vadd.f32 %v9307, %v9310
        %vm9312 = vweird.f32 %v9051
        %vm9313 = vweird.f32 %v9307
        %vm9314 = vmor %vm9312, %vm9313
        %v9315 = vsel %vm9314, %v9307, %v9311
        %v9316 = vand.u32 2147483647, %v9051
        %vm9317 = vcmp.eq.f32.partialorder %v9316, 8.507059e+37
        %v9318 = vand.u32 %v9051, 2147483648
        %v9319 = vor.u32 1.1754944e-38, %v9318
        %v9320 = vsel %vm9317, %v9319, %v9315
        %v9321 = vmul.f32 1.0, %v9320
        %v9322 = vrcp.pop %v9052
        %v9323 = vmul.f32 %v9052, %v9322
        %v9324 = vsub.f32 1.0, %v9323
        %v9325 = vmul.f32 %v9322, %v9324
        %v9326 = vadd.f32 %v9322, %v9325
        %vm9327 = vweird.f32 %v9052
        %vm9328 = vweird.f32 %v9322
        %vm9329 = vmor %vm9327, %vm9328
        %v9330 = vsel %vm9329, %v9322, %v9326
        %v9331 = vand.u32 2147483647, %v9052
        %vm9332 = vcmp.eq.f32.partialorder %v9331, 8.507059e+37
        %v9333 = vand.u32 %v9052, 2147483648
        %v9334 = vor.u32 1.1754944e-38, %v9333
        %v9335 = vsel %vm9332, %v9334, %v9330
        %v9336 = vmul.f32 1.0, %v9335
        %v9337 = vrcp.pop %v9053
        %v9338 = vmul.f32 %v9053, %v9337
        %v9339 = vsub.f32 1.0, %v9338
        %v9340 = vmul.f32 %v9337, %v9339
        %v9341 = vadd.f32 %v9337, %v9340
        %vm9342 = vweird.f32 %v9053
        %vm9343 = vweird.f32 %v9337
        %vm9344 = vmor %vm9342, %vm9343
        %v9345 = vsel %vm9344, %v9337, %v9341
        %v9346 = vand.u32 2147483647, %v9053
        %vm9347 = vcmp.eq.f32.partialorder %v9346, 8.507059e+37
        %v9348 = vand.u32 %v9053, 2147483648
        %v9349 = vor.u32 1.1754944e-38, %v9348
        %v9350 = vsel %vm9347, %v9349, %v9345
        %v9351 = vmul.f32 1.0, %v9350
        %v9352 = vrcp.pop %v9054
        %v9353 = vmul.f32 %v9054, %v9352
        %v9354 = vsub.f32 1.0, %v9353
        %v9355 = vmul.f32 %v9352, %v9354
        %v9356 = vadd.f32 %v9352, %v9355
        %vm9357 = vweird.f32 %v9054
        %vm9358 = vweird.f32 %v9352
        %vm9359 = vmor %vm9357, %vm9358
        %v9360 = vsel %vm9359, %v9352, %v9356
        %v9361 = vand.u32 2147483647, %v9054
        %vm9362 = vcmp.eq.f32.partialorder %v9361, 8.507059e+37
        %v9363 = vand.u32 %v9054, 2147483648
        %v9364 = vor.u32 1.1754944e-38, %v9363
        %v9365 = vsel %vm9362, %v9364, %v9360
        %v9366 = vmul.f32 1.0, %v9365
        %v9367 = vrcp.pop %v9055
        %v9368 = vmul.f32 %v9055, %v9367
        %v9369 = vsub.f32 1.0, %v9368
        %v9370 = vmul.f32 %v9367, %v9369
        %v9371 = vadd.f32 %v9367, %v9370
        %vm9372 = vweird.f32 %v9055
        %vm9373 = vweird.f32 %v9367
        %vm9374 = vmor %vm9372, %vm9373
        %v9375 = vsel %vm9374, %v9367, %v9371
        %v9376 = vand.u32 2147483647, %v9055
        %vm9377 = vcmp.eq.f32.partialorder %v9376, 8.507059e+37
        %v9378 = vand.u32 %v9055, 2147483648
        %v9379 = vor.u32 1.1754944e-38, %v9378
        %v9380 = vsel %vm9377, %v9379, %v9375
        %v9381 = vmul.f32 1.0, %v9380
        %v9382 = vrcp.pop %v9056
        %v9383 = vmul.f32 %v9056, %v9382
        %v9384 = vsub.f32 1.0, %v9383
        %v9385 = vmul.f32 %v9382, %v9384
        %v9386 = vadd.f32 %v9382, %v9385
        %vm9387 = vweird.f32 %v9056
        %vm9388 = vweird.f32 %v9382
        %vm9389 = vmor %vm9387, %vm9388
        %v9390 = vsel %vm9389, %v9382, %v9386
        %v9391 = vand.u32 2147483647, %v9056
        %vm9392 = vcmp.eq.f32.partialorder %v9391, 8.507059e+37
        %v9393 = vand.u32 %v9056, 2147483648
        %v9394 = vor.u32 1.1754944e-38, %v9393
        %v9395 = vsel %vm9392, %v9394, %v9390
        %v9396 = vmul.f32 1.0, %v9395
        %v9397 = vrcp.pop %v9057
        %v9398 = vmul.f32 %v9057, %v9397
        %v9399 = vsub.f32 1.0, %v9398
        %v9400 = vmul.f32 %v9397, %v9399
        %v9401 = vadd.f32 %v9397, %v9400
        %vm9402 = vweird.f32 %v9057
        %vm9403 = vweird.f32 %v9397
        %vm9404 = vmor %vm9402, %vm9403
        %v9405 = vsel %vm9404, %v9397, %v9401
        %v9406 = vand.u32 2147483647, %v9057
        %vm9407 = vcmp.eq.f32.partialorder %v9406, 8.507059e+37
        %v9408 = vand.u32 %v9057, 2147483648
        %v9409 = vor.u32 1.1754944e-38, %v9408
        %v9410 = vsel %vm9407, %v9409, %v9405
        %v9411 = vmul.f32 1.0, %v9410
        %v9412 = vrcp.pop %v9058
        %v9413 = vmul.f32 %v9058, %v9412
        %v9414 = vsub.f32 1.0, %v9413
        %v9415 = vmul.f32 %v9412, %v9414
        %v9416 = vadd.f32 %v9412, %v9415
        %vm9417 = vweird.f32 %v9058
        %vm9418 = vweird.f32 %v9412
        %vm9419 = vmor %vm9417, %vm9418
        %v9420 = vsel %vm9419, %v9412, %v9416
        %v9421 = vand.u32 2147483647, %v9058
        %vm9422 = vcmp.eq.f32.partialorder %v9421, 8.507059e+37
        %v9423 = vand.u32 %v9058, 2147483648
        %v9424 = vor.u32 1.1754944e-38, %v9423
        %v9425 = vsel %vm9422, %v9424, %v9420
        %v9426 = vmul.f32 1.0, %v9425
        %v9427 = vrcp.pop %v9059
        %v9428 = vmul.f32 %v9059, %v9427
        %v9429 = vsub.f32 1.0, %v9428
        %v9430 = vmul.f32 %v9427, %v9429
        %v9431 = vadd.f32 %v9427, %v9430
        %vm9432 = vweird.f32 %v9059
        %vm9433 = vweird.f32 %v9427
        %vm9434 = vmor %vm9432, %vm9433
        %v9435 = vsel %vm9434, %v9427, %v9431
        %v9436 = vand.u32 2147483647, %v9059
        %vm9437 = vcmp.eq.f32.partialorder %v9436, 8.507059e+37
        %v9438 = vand.u32 %v9059, 2147483648
        %v9439 = vor.u32 1.1754944e-38, %v9438
        %v9440 = vsel %vm9437, %v9439, %v9435
        %v9441 = vmul.f32 1.0, %v9440
        %v9442 = vrcp.pop %v9060
        %v9443 = vmul.f32 %v9060, %v9442
        %v9444 = vsub.f32 1.0, %v9443
        %v9445 = vmul.f32 %v9442, %v9444
        %v9446 = vadd.f32 %v9442, %v9445
        %vm9447 = vweird.f32 %v9060
        %vm9448 = vweird.f32 %v9442
        %vm9449 = vmor %vm9447, %vm9448
        %v9450 = vsel %vm9449, %v9442, %v9446
        %v9451 = vand.u32 2147483647, %v9060
        %vm9452 = vcmp.eq.f32.partialorder %v9451, 8.507059e+37
        %v9453 = vand.u32 %v9060, 2147483648
        %v9454 = vor.u32 1.1754944e-38, %v9453
        %v9455 = vsel %vm9452, %v9454, %v9450
        %v9456 = vmul.f32 1.0, %v9455
        %v9457 = vrcp.pop %v9061
        %v9458 = vmul.f32 %v9061, %v9457
        %v9459 = vsub.f32 1.0, %v9458
        %v9460 = vmul.f32 %v9457, %v9459
        %v9461 = vadd.f32 %v9457, %v9460
        %vm9462 = vweird.f32 %v9061
        %vm9463 = vweird.f32 %v9457
        %vm9464 = vmor %vm9462, %vm9463
        %v9465 = vsel %vm9464, %v9457, %v9461
        %v9466 = vand.u32 2147483647, %v9061
        %vm9467 = vcmp.eq.f32.partialorder %v9466, 8.507059e+37
        %v9468 = vand.u32 %v9061, 2147483648
        %v9469 = vor.u32 1.1754944e-38, %v9468
        %v9470 = vsel %vm9467, %v9469, %v9465
        %v9471 = vmul.f32 1.0, %v9470
        %v9472 = vrcp.pop %v9062
        %v9473 = vmul.f32 %v9062, %v9472
        %v9474 = vsub.f32 1.0, %v9473
        %v9475 = vmul.f32 %v9472, %v9474
        %v9476 = vadd.f32 %v9472, %v9475
        %vm9477 = vweird.f32 %v9062
        %vm9478 = vweird.f32 %v9472
        %vm9479 = vmor %vm9477, %vm9478
        %v9480 = vsel %vm9479, %v9472, %v9476
        %v9481 = vand.u32 2147483647, %v9062
        %vm9482 = vcmp.eq.f32.partialorder %v9481, 8.507059e+37
        %v9483 = vand.u32 %v9062, 2147483648
        %v9484 = vor.u32 1.1754944e-38, %v9483
        %v9485 = vsel %vm9482, %v9484, %v9480
        %v9486 = vmul.f32 1.0, %v9485
        %v9487 = vrcp.pop %v9063
        %v9488 = vmul.f32 %v9063, %v9487
        %v9489 = vsub.f32 1.0, %v9488
        %v9490 = vmul.f32 %v9487, %v9489
        %v9491 = vadd.f32 %v9487, %v9490
        %vm9492 = vweird.f32 %v9063
        %vm9493 = vweird.f32 %v9487
        %vm9494 = vmor %vm9492, %vm9493
        %v9495 = vsel %vm9494, %v9487, %v9491
        %v9496 = vand.u32 2147483647, %v9063
        %vm9497 = vcmp.eq.f32.partialorder %v9496, 8.507059e+37
        %v9498 = vand.u32 %v9063, 2147483648
        %v9499 = vor.u32 1.1754944e-38, %v9498
        %v9500 = vsel %vm9497, %v9499, %v9495
        %v9501 = vmul.f32 1.0, %v9500
        %v9502 = vrcp.pop %v9064
        %v9503 = vmul.f32 %v9064, %v9502
        %v9504 = vsub.f32 1.0, %v9503
        %v9505 = vmul.f32 %v9502, %v9504
        %v9506 = vadd.f32 %v9502, %v9505
        %vm9507 = vweird.f32 %v9064
        %vm9508 = vweird.f32 %v9502
        %vm9509 = vmor %vm9507, %vm9508
        %v9510 = vsel %vm9509, %v9502, %v9506
        %v9511 = vand.u32 2147483647, %v9064
        %vm9512 = vcmp.eq.f32.partialorder %v9511, 8.507059e+37
        %v9513 = vand.u32 %v9064, 2147483648
        %v9514 = vor.u32 1.1754944e-38, %v9513
        %v9515 = vsel %vm9512, %v9514, %v9510
        %v9516 = vmul.f32 1.0, %v9515
        %v9517 = vrcp.pop %v9065
        %v9518 = vmul.f32 %v9065, %v9517
        %v9519 = vsub.f32 1.0, %v9518
        %v9520 = vmul.f32 %v9517, %v9519
        %v9521 = vadd.f32 %v9517, %v9520
        %vm9522 = vweird.f32 %v9065
        %vm9523 = vweird.f32 %v9517
        %vm9524 = vmor %vm9522, %vm9523
        %v9525 = vsel %vm9524, %v9517, %v9521
        %v9526 = vand.u32 2147483647, %v9065
        %vm9527 = vcmp.eq.f32.partialorder %v9526, 8.507059e+37
        %v9528 = vand.u32 %v9065, 2147483648
        %v9529 = vor.u32 1.1754944e-38, %v9528
        %v9530 = vsel %vm9527, %v9529, %v9525
        %v9531 = vmul.f32 1.0, %v9530
        %v9532 = vrcp.pop %v9066
        %v9533 = vmul.f32 %v9066, %v9532
        %v9534 = vsub.f32 1.0, %v9533
        %v9535 = vmul.f32 %v9532, %v9534
        %v9536 = vadd.f32 %v9532, %v9535
        %vm9537 = vweird.f32 %v9066
        %vm9538 = vweird.f32 %v9532
        %vm9539 = vmor %vm9537, %vm9538
        %v9540 = vsel %vm9539, %v9532, %v9536
        %v9541 = vand.u32 2147483647, %v9066
        %vm9542 = vcmp.eq.f32.partialorder %v9541, 8.507059e+37
        %v9543 = vand.u32 %v9066, 2147483648
        %v9544 = vor.u32 1.1754944e-38, %v9543
        %v9545 = vsel %vm9542, %v9544, %v9540
        %v9546 = vmul.f32 1.0, %v9545
        %v9547 = vmul.f32 %v8717, %v9081
        %v9548 = vmul.f32 %v8746, %v9096
        %v9549 = vmul.f32 %v8775, %v9111
        %v9550 = vmul.f32 %v8804, %v9126
        %v9551 = vmul.f32 %v8719, %v9141
        %v9552 = vmul.f32 %v8748, %v9156
        %v9553 = vmul.f32 %v8777, %v9171
        %v9554 = vmul.f32 %v8806, %v9186
        %v9555 = vmul.f32 %v8722, %v9201
        %v9556 = vmul.f32 %v8751, %v9216
        %v9557 = vmul.f32 %v8780, %v9231
        %v9558 = vmul.f32 %v8809, %v9246
        %v9559 = vmul.f32 %v8724, %v9261
        %v9560 = vmul.f32 %v8753, %v9276
        %v9561 = vmul.f32 %v8782, %v9291
        %v9562 = vmul.f32 %v8811, %v9306
        %v9563 = vmul.f32 %v8727, %v9321
        %v9564 = vmul.f32 %v8756, %v9336
        %v9565 = vmul.f32 %v8785, %v9351
        %v9566 = vmul.f32 %v8814, %v9366
        %v9567 = vmul.f32 %v8729, %v9381
        %v9568 = vmul.f32 %v8758, %v9396
        %v9569 = vmul.f32 %v8787, %v9411
        %v9570 = vmul.f32 %v8816, %v9426
        %v9571 = vmul.f32 %v8732, %v9441
        %v9572 = vmul.f32 %v8761, %v9456
        %v9573 = vmul.f32 %v8790, %v9471
        %v9574 = vmul.f32 %v8819, %v9486
        %v9575 = vmul.f32 %v8734, %v9501
        %v9576 = vmul.f32 %v8763, %v9516
        %v9577 = vmul.f32 %v8792, %v9531
        %v9578 = vmul.f32 %v8821, %v9546
        %v9579 = vmul.f32 %v9547, %v8833
        %v9580 = vmul.f32 %v9548, %v8862
        %v9581 = vmul.f32 %v9549, %v8891
        %v9582 = vmul.f32 %v9550, %v8920
        %v9583 = vmul.f32 %v9551, %v8835
        %v9584 = vmul.f32 %v9552, %v8864
        %v9585 = vmul.f32 %v9553, %v8893
        %v9586 = vmul.f32 %v9554, %v8922
        %v9587 = vmul.f32 %v9555, %v8838
        %v9588 = vmul.f32 %v9556, %v8867
        %v9589 = vmul.f32 %v9557, %v8896
        %v9590 = vmul.f32 %v9558, %v8925
        %v9591 = vmul.f32 %v9559, %v8840
        %v9592 = vmul.f32 %v9560, %v8869
        %v9593 = vmul.f32 %v9561, %v8898
        %v9594 = vmul.f32 %v9562, %v8927
        %v9595 = vmul.f32 %v9563, %v8843
        %v9596 = vmul.f32 %v9564, %v8872
        %v9597 = vmul.f32 %v9565, %v8901
        %v9598 = vmul.f32 %v9566, %v8930
        %v9599 = vmul.f32 %v9567, %v8845
        %v9600 = vmul.f32 %v9568, %v8874
        %v9601 = vmul.f32 %v9569, %v8903
        %v9602 = vmul.f32 %v9570, %v8932
        %v9603 = vmul.f32 %v9571, %v8848
        %v9604 = vmul.f32 %v9572, %v8877
        %v9605 = vmul.f32 %v9573, %v8906
        %v9606 = vmul.f32 %v9574, %v8935
        %v9607 = vmul.f32 %v9575, %v8850
        %v9608 = vmul.f32 %v9576, %v8879
        %v9609 = vmul.f32 %v9577, %v8908
        %v9610 = vmul.f32 %v9578, %v8937
        %v9611 = vpack.c.bf16 %v9583, %v9579
        %v9612 = vpack.c.bf16 %v9584, %v9580
        %v9613 = vpack.c.bf16 %v9585, %v9581
        %v9614 = vpack.c.bf16 %v9586, %v9582
        %v9615 = vpack.c.bf16 %v9591, %v9587
        %v9616 = vpack.c.bf16 %v9592, %v9588
        %v9617 = vpack.c.bf16 %v9593, %v9589
        %v9618 = vpack.c.bf16 %v9594, %v9590
        %v9619 = vpack.c.bf16 %v9599, %v9595
        %v9620 = vpack.c.bf16 %v9600, %v9596
        %v9621 = vpack.c.bf16 %v9601, %v9597
        %v9622 = vpack.c.bf16 %v9602, %v9598
        %v9623 = vpack.c.bf16 %v9607, %v9603
        %v9624 = vpack.c.bf16 %v9608, %v9604
        %v9625 = vpack.c.bf16 %v9609, %v9605
        %v9626 = vpack.c.bf16 %v9610, %v9606
        %v9627 = vld [vmem:[%s10] sm:$0xf]
        %v9628 = vld [vmem:[%s10 + $0x4] sm:$0xf]
        %v9629 = vld [vmem:[%s10 + $0x8] sm:$0xf]
        %v9630 = vld [vmem:[%s10 + $0xc] sm:$0xf]
        %v9631 = vld [vmem:[%s10 + $0x10] sm:$0xf]
        %v9632 = vld [vmem:[%s10 + $0x14] sm:$0xf]
        %v9633 = vld [vmem:[%s10 + $0x18] sm:$0xf]
        %v9634 = vld [vmem:[%s10 + $0x1c] sm:$0xf]
        %v9635 = vld [vmem:[%s10 + $0x20] sm:$0xf]
        %v9636 = vld [vmem:[%s10 + $0x24] sm:$0xf]
        %v9637 = vld [vmem:[%s10 + $0x28] sm:$0xf]
        %v9638 = vld [vmem:[%s10 + $0x2c] sm:$0xf]
        %v9639 = vld [vmem:[%s10 + $0x30] sm:$0xf]
        %v9640 = vld [vmem:[%s10 + $0x34] sm:$0xf]
        %v9641 = vld [vmem:[%s10 + $0x38] sm:$0xf]
        %v9642 = vld [vmem:[%s10 + $0x3c] sm:$0xf]
        %v9643 = vld [vmem:[%s10 + $0x40] sm:$0xf]
        %v9644 = vld [vmem:[%s10 + $0x44] sm:$0xf]
        %v9645 = vld [vmem:[%s10 + $0x48] sm:$0xf]
        %v9646 = vld [vmem:[%s10 + $0x4c] sm:$0xf]
        %v9647 = vld [vmem:[%s10 + $0x50] sm:$0xf]
        %v9648 = vld [vmem:[%s10 + $0x54] sm:$0xf]
        %v9649 = vld [vmem:[%s10 + $0x58] sm:$0xf]
        %v9650 = vld [vmem:[%s10 + $0x5c] sm:$0xf]
        %v9651 = vld [vmem:[%s10 + $0x60] sm:$0xf]
        %v9652 = vld [vmem:[%s10 + $0x64] sm:$0xf]
        %v9653 = vld [vmem:[%s10 + $0x68] sm:$0xf]
        %v9654 = vld [vmem:[%s10 + $0x6c] sm:$0xf]
        %v9655 = vld [vmem:[%s10 + $0x70] sm:$0xf]
        %v9656 = vld [vmem:[%s10 + $0x74] sm:$0xf]
        %v9657 = vld [vmem:[%s10 + $0x78] sm:$0xf]
        %v9658 = vld [vmem:[%s10 + $0x7c] sm:$0xf]
        %v9659 = vld [vmem:[%s10 + $0x80] sm:$0xf]
        %v9660 = vld [vmem:[%s10 + $0x84] sm:$0xf]
        %v9661 = vld [vmem:[%s10 + $0x88] sm:$0xf]
        %v9662 = vld [vmem:[%s10 + $0x8c] sm:$0xf]
        %v9663 = vld [vmem:[%s10 + $0x90] sm:$0xf]
        %v9664 = vld [vmem:[%s10 + $0x94] sm:$0xf]
        %v9665 = vld [vmem:[%s10 + $0x98] sm:$0xf]
        %v9666 = vld [vmem:[%s10 + $0x9c] sm:$0xf]
        %v9667 = vld [vmem:[%s10 + $0xa0] sm:$0xf]
        %v9668 = vld [vmem:[%s10 + $0xa4] sm:$0xf]
        %v9669 = vld [vmem:[%s10 + $0xa8] sm:$0xf]
        %v9670 = vld [vmem:[%s10 + $0xac] sm:$0xf]
        %v9671 = vld [vmem:[%s10 + $0xb0] sm:$0xf]
        %v9672 = vld [vmem:[%s10 + $0xb4] sm:$0xf]
        %v9673 = vld [vmem:[%s10 + $0xb8] sm:$0xf]
        %v9674 = vld [vmem:[%s10 + $0xbc] sm:$0xf]
        %v9675 = vld [vmem:[%s10 + $0xc0] sm:$0xf]
        %v9676 = vld [vmem:[%s10 + $0xc4] sm:$0xf]
        %v9677 = vld [vmem:[%s10 + $0xc8] sm:$0xf]
        %v9678 = vld [vmem:[%s10 + $0xcc] sm:$0xf]
        %v9679 = vld [vmem:[%s10 + $0xd0] sm:$0xf]
        %v9680 = vld [vmem:[%s10 + $0xd4] sm:$0xf]
        %v9681 = vld [vmem:[%s10 + $0xd8] sm:$0xf]
        %v9682 = vld [vmem:[%s10 + $0xdc] sm:$0xf]
        %v9683 = vld [vmem:[%s10 + $0xe0] sm:$0xf]
        %v9684 = vld [vmem:[%s10 + $0xe4] sm:$0xf]
        %v9685 = vld [vmem:[%s10 + $0xe8] sm:$0xf]
        %v9686 = vld [vmem:[%s10 + $0xec] sm:$0xf]
        %v9687 = vld [vmem:[%s10 + $0xf0] sm:$0xf]
        %v9688 = vld [vmem:[%s10 + $0xf4] sm:$0xf]
        %v9689 = vld [vmem:[%s10 + $0xf8] sm:$0xf]
        %v9690 = vld [vmem:[%s10 + $0xfc] sm:$0xf]
        %v9755 = vunpack.c.l.b16 %v9627
        %v9756 = vunpack.c.l.b16 %v9628
        %v9757 = vunpack.c.l.b16 %v9629
        %v9758 = vunpack.c.l.b16 %v9630
        %v9759 = vunpack.c.l.b16 %v9631
        %v9760 = vunpack.c.l.b16 %v9632
        %v9761 = vunpack.c.l.b16 %v9633
        %v9762 = vunpack.c.l.b16 %v9634
        %v9763 = vunpack.c.l.b16 %v9635
        %v9764 = vunpack.c.l.b16 %v9636
        %v9765 = vunpack.c.l.b16 %v9637
        %v9766 = vunpack.c.l.b16 %v9638
        %v9767 = vunpack.c.l.b16 %v9639
        %v9768 = vunpack.c.l.b16 %v9640
        %v9769 = vunpack.c.l.b16 %v9641
        %v9770 = vunpack.c.l.b16 %v9642
        %v9771 = vunpack.c.l.b16 %v9643
        %v9772 = vunpack.c.l.b16 %v9644
        %v9773 = vunpack.c.l.b16 %v9645
        %v9774 = vunpack.c.l.b16 %v9646
        %v9775 = vunpack.c.l.b16 %v9647
        %v9776 = vunpack.c.l.b16 %v9648
        %v9777 = vunpack.c.l.b16 %v9649
        %v9778 = vunpack.c.l.b16 %v9650
        %v9779 = vunpack.c.l.b16 %v9651
        %v9780 = vunpack.c.l.b16 %v9652
        %v9781 = vunpack.c.l.b16 %v9653
        %v9782 = vunpack.c.l.b16 %v9654
        %v9783 = vunpack.c.l.b16 %v9655
        %v9784 = vunpack.c.l.b16 %v9656
        %v9785 = vunpack.c.l.b16 %v9657
        %v9786 = vunpack.c.l.b16 %v9658
        %v9787 = vunpack.c.l.b16 %v9659
        %v9788 = vunpack.c.l.b16 %v9660
        %v9789 = vunpack.c.l.b16 %v9661
        %v9790 = vunpack.c.l.b16 %v9662
        %v9791 = vunpack.c.l.b16 %v9663
        %v9792 = vunpack.c.l.b16 %v9664
        %v9793 = vunpack.c.l.b16 %v9665
        %v9794 = vunpack.c.l.b16 %v9666
        %v9795 = vunpack.c.l.b16 %v9667
        %v9796 = vunpack.c.l.b16 %v9668
        %v9797 = vunpack.c.l.b16 %v9669
        %v9798 = vunpack.c.l.b16 %v9670
        %v9799 = vunpack.c.l.b16 %v9671
        %v9800 = vunpack.c.l.b16 %v9672
        %v9801 = vunpack.c.l.b16 %v9673
        %v9802 = vunpack.c.l.b16 %v9674
        %v9803 = vunpack.c.l.b16 %v9675
        %v9804 = vunpack.c.l.b16 %v9676
        %v9805 = vunpack.c.l.b16 %v9677
        %v9806 = vunpack.c.l.b16 %v9678
        %v9807 = vunpack.c.l.b16 %v9679
        %v9808 = vunpack.c.l.b16 %v9680
        %v9809 = vunpack.c.l.b16 %v9681
        %v9810 = vunpack.c.l.b16 %v9682
        %v9811 = vunpack.c.l.b16 %v9683
        %v9812 = vunpack.c.l.b16 %v9684
        %v9813 = vunpack.c.l.b16 %v9685
        %v9814 = vunpack.c.l.b16 %v9686
        %v9815 = vunpack.c.l.b16 %v9687
        %v9816 = vunpack.c.l.b16 %v9688
        %v9817 = vunpack.c.l.b16 %v9689
        %v9818 = vunpack.c.l.b16 %v9690
        %v9819 = vpack.c.b16 %v9756, %v9755
        %v9820 = vpack.c.b16 %v9758, %v9757
        %v9821 = vpack.c.b16 %v9760, %v9759
        %v9822 = vpack.c.b16 %v9762, %v9761
        %v9823 = vpack.c.b16 %v9764, %v9763
        %v9824 = vpack.c.b16 %v9766, %v9765
        %v9825 = vpack.c.b16 %v9768, %v9767
        %v9826 = vpack.c.b16 %v9770, %v9769
        %v9827 = vpack.c.b16 %v9772, %v9771
        %v9828 = vpack.c.b16 %v9774, %v9773
        %v9829 = vpack.c.b16 %v9776, %v9775
        %v9830 = vpack.c.b16 %v9778, %v9777
        %v9831 = vpack.c.b16 %v9780, %v9779
        %v9832 = vpack.c.b16 %v9782, %v9781
        %v9833 = vpack.c.b16 %v9784, %v9783
        %v9834 = vpack.c.b16 %v9786, %v9785
        %v9835 = vpack.c.b16 %v9788, %v9787
        %v9836 = vpack.c.b16 %v9790, %v9789
        %v9837 = vpack.c.b16 %v9792, %v9791
        %v9838 = vpack.c.b16 %v9794, %v9793
        %v9839 = vpack.c.b16 %v9796, %v9795
        %v9840 = vpack.c.b16 %v9798, %v9797
        %v9841 = vpack.c.b16 %v9800, %v9799
        %v9842 = vpack.c.b16 %v9802, %v9801
        %v9843 = vpack.c.b16 %v9804, %v9803
        %v9844 = vpack.c.b16 %v9806, %v9805
        %v9845 = vpack.c.b16 %v9808, %v9807
        %v9846 = vpack.c.b16 %v9810, %v9809
        %v9847 = vpack.c.b16 %v9812, %v9811
        %v9848 = vpack.c.b16 %v9814, %v9813
        %v9849 = vpack.c.b16 %v9816, %v9815
        %v9850 = vpack.c.b16 %v9818, %v9817
        %9883 = vmatpush.bf16.msra.mxu0 %v9826
        %9884 = vmatpush.bf16.msra.mxu0 %v9825
        %9885 = vmatpush.bf16.msra.mxu0 %v9824
        %9886 = vmatpush.bf16.msra.mxu0 %v9823
        %9887 = vmatpush.bf16.msra.mxu0 %v9822
        %9888 = vmatpush.bf16.msra.mxu0 %v9821
        %9889 = vmatpush.bf16.msra.mxu0 %v9820
        %9890 = vmatpush.bf16.msra.mxu0 %v9819
        %9891 = vmatmul.bf16.gmra.mxu0 %v9611
        %v9892 = vpop.f32.mrf.mxu0
        %v9893 = vadd.f32 0.0, %v9892
        %v9894 = vpop.f32.mrf.mxu0
        %v9895 = vadd.f32 0.0, %v9894
        %9896 = vmatmul.bf16.gmra.mxu0 %v9615
        %v9897 = vpop.f32.mrf.mxu0
        %v9898 = vadd.f32 0.0, %v9897
        %v9899 = vpop.f32.mrf.mxu0
        %v9900 = vadd.f32 0.0, %v9899
        %9901 = vmatmul.bf16.gmra.mxu0 %v9619
        %v9902 = vpop.f32.mrf.mxu0
        %v9903 = vadd.f32 0.0, %v9902
        %v9904 = vpop.f32.mrf.mxu0
        %v9905 = vadd.f32 0.0, %v9904
        %9906 = vmatmul.bf16.gmra.mxu0 %v9623
        %v9907 = vpop.f32.mrf.mxu0
        %v9908 = vadd.f32 0.0, %v9907
        %v9909 = vpop.f32.mrf.mxu0
        %v9910 = vadd.f32 0.0, %v9909
        %9911 = vdwg.mxu0
        %9912 = vmatpush.bf16.msra.mxu0 %v9834
        %9913 = vmatpush.bf16.msra.mxu0 %v9833
        %9914 = vmatpush.bf16.msra.mxu0 %v9832
        %9915 = vmatpush.bf16.msra.mxu0 %v9831
        %9916 = vmatpush.bf16.msra.mxu0 %v9830
        %9917 = vmatpush.bf16.msra.mxu0 %v9829
        %9918 = vmatpush.bf16.msra.mxu0 %v9828
        %9919 = vmatpush.bf16.msra.mxu0 %v9827
        %9920 = vmatmul.bf16.gmra.mxu0 %v9612
        %v9921 = vpop.f32.mrf.mxu0
        %v9922 = vadd.f32 %v9893, %v9921
        %v9923 = vpop.f32.mrf.mxu0
        %v9924 = vadd.f32 %v9895, %v9923
        %9925 = vmatmul.bf16.gmra.mxu0 %v9616
        %v9926 = vpop.f32.mrf.mxu0
        %v9927 = vadd.f32 %v9898, %v9926
        %v9928 = vpop.f32.mrf.mxu0
        %v9929 = vadd.f32 %v9900, %v9928
        %9930 = vmatmul.bf16.gmra.mxu0 %v9620
        %v9931 = vpop.f32.mrf.mxu0
        %v9932 = vadd.f32 %v9903, %v9931
        %v9933 = vpop.f32.mrf.mxu0
        %v9934 = vadd.f32 %v9905, %v9933
        %9935 = vmatmul.bf16.gmra.mxu0 %v9624
        %v9936 = vpop.f32.mrf.mxu0
        %v9937 = vadd.f32 %v9908, %v9936
        %v9938 = vpop.f32.mrf.mxu0
        %v9939 = vadd.f32 %v9910, %v9938
        %9940 = vdwg.mxu0
        %9941 = vmatpush.bf16.msra.mxu0 %v9842
        %9942 = vmatpush.bf16.msra.mxu0 %v9841
        %9943 = vmatpush.bf16.msra.mxu0 %v9840
        %9944 = vmatpush.bf16.msra.mxu0 %v9839
        %9945 = vmatpush.bf16.msra.mxu0 %v9838
        %9946 = vmatpush.bf16.msra.mxu0 %v9837
        %9947 = vmatpush.bf16.msra.mxu0 %v9836
        %9948 = vmatpush.bf16.msra.mxu0 %v9835
        %9949 = vmatmul.bf16.gmra.mxu0 %v9613
        %v9950 = vpop.f32.mrf.mxu0
        %v9951 = vadd.f32 %v9922, %v9950
        %v9952 = vpop.f32.mrf.mxu0
        %v9953 = vadd.f32 %v9924, %v9952
        %9954 = vmatmul.bf16.gmra.mxu0 %v9617
        %v9955 = vpop.f32.mrf.mxu0
        %v9956 = vadd.f32 %v9927, %v9955
        %v9957 = vpop.f32.mrf.mxu0
        %v9958 = vadd.f32 %v9929, %v9957
        %9959 = vmatmul.bf16.gmra.mxu0 %v9621
        %v9960 = vpop.f32.mrf.mxu0
        %v9961 = vadd.f32 %v9932, %v9960
        %v9962 = vpop.f32.mrf.mxu0
        %v9963 = vadd.f32 %v9934, %v9962
        %9964 = vmatmul.bf16.gmra.mxu0 %v9625
        %v9965 = vpop.f32.mrf.mxu0
        %v9966 = vadd.f32 %v9937, %v9965
        %v9967 = vpop.f32.mrf.mxu0
        %v9968 = vadd.f32 %v9939, %v9967
        %9969 = vdwg.mxu0
        %9970 = vmatpush.bf16.msra.mxu0 %v9850
        %9971 = vmatpush.bf16.msra.mxu0 %v9849
        %9972 = vmatpush.bf16.msra.mxu0 %v9848
        %9973 = vmatpush.bf16.msra.mxu0 %v9847
        %9974 = vmatpush.bf16.msra.mxu0 %v9846
        %9975 = vmatpush.bf16.msra.mxu0 %v9845
        %9976 = vmatpush.bf16.msra.mxu0 %v9844
        %9977 = vmatpush.bf16.msra.mxu0 %v9843
        %9978 = vmatmul.bf16.gmra.mxu0 %v9614
        %v9979 = vpop.f32.mrf.mxu0
        %v9980 = vadd.f32 %v9951, %v9979
        %v9981 = vpop.f32.mrf.mxu0
        %v9982 = vadd.f32 %v9953, %v9981
        %9983 = vmatmul.bf16.gmra.mxu0 %v9618
        %v9984 = vpop.f32.mrf.mxu0
        %v9985 = vadd.f32 %v9956, %v9984
        %v9986 = vpop.f32.mrf.mxu0
        %v9987 = vadd.f32 %v9958, %v9986
        %9988 = vmatmul.bf16.gmra.mxu0 %v9622
        %v9989 = vpop.f32.mrf.mxu0
        %v9990 = vadd.f32 %v9961, %v9989
        %v9991 = vpop.f32.mrf.mxu0
        %v9992 = vadd.f32 %v9963, %v9991
        %9993 = vmatmul.bf16.gmra.mxu0 %v9626
        %v9994 = vpop.f32.mrf.mxu0
        %v9995 = vadd.f32 %v9966, %v9994
        %v9996 = vpop.f32.mrf.mxu0
        %v9997 = vadd.f32 %v9968, %v9996
        %9998 = vdwg.mxu0
        %v9999 = vadd.f32 %v8164, %v9980
        %v10000 = vadd.f32 %v8165, %v9982
        %v10001 = vadd.f32 %v8166, %v9985
        %v10002 = vadd.f32 %v8167, %v9987
        %v10003 = vadd.f32 %v8168, %v9990
        %v10004 = vadd.f32 %v8169, %v9992
        %v10005 = vadd.f32 %v8170, %v9995
        %v10006 = vadd.f32 %v8171, %v9997
        %v10007 = vpack.c.bf16 %v9999, %v9999
        %v10008 = vpack.c.bf16 %v10000, %v10000
        %v10009 = vpack.c.bf16 %v10001, %v10001
        %v10010 = vpack.c.bf16 %v10002, %v10002
        %v10011 = vpack.c.bf16 %v10003, %v10003
        %v10012 = vpack.c.bf16 %v10004, %v10004
        %v10013 = vpack.c.bf16 %v10005, %v10005
        %v10014 = vpack.c.bf16 %v10006, %v10006
        %10015 = vst [vmem:[%s503] sm:$0xf] %v10007
        %10016 = vst [vmem:[%s503 + $0x4] sm:$0xf] %v10008
        %10017 = vst [vmem:[%s503 + $0x8] sm:$0xf] %v10009
        %10018 = vst [vmem:[%s503 + $0xc] sm:$0xf] %v10010
        %10019 = vst [vmem:[%s503 + $0x10] sm:$0xf] %v10011
        %10020 = vst [vmem:[%s503 + $0x14] sm:$0xf] %v10012
        %10021 = vst [vmem:[%s503 + $0x18] sm:$0xf] %v10013
        %10022 = vst [vmem:[%s503 + $0x1c] sm:$0xf] %v10014
        %s10023 = sand.u32 %s289, 1
        %s10024 = scalar_lea.sflag [#allocation7], %s10023
        %s10025 = sand.u32 %s289, 1
        %s10026 = smul.addr %s10025, 32
        %s10027 = scalar_lea.vmem [#allocation16], %s10026
        // Predicated region
        $region100: #{tpu_custom_call.1} parent=63 // pred_check
          %p10028 = pneg %p299
        $region101: #{tpu_custom_call.1} parent=63 // pred_check_branch
          %10030 = sbr.rel (%p10028) target = $region103
        $region102: #{tpu_custom_call.1} parent=63 // pred_region
          %s10031 = smul.u32 8, %s36
          %10033 = vsyncadd %s10024, 0
          %s10034 = smul.addr %s35, 16
          %s10035 = sadd.s32 %s10031, %s10034
          %s10036 = smul.addr %s10035, 4
          %s10037 = scalar_lea.hbm %s11, %s10036
          %s10038 = sshll.u32 %s10027, 4
          %s10039 = int_to_ptr.vmem [resolvable:$true] %s10038
          %s10040 = sshll.u32 %s10037, 4
          %s10041 = int_to_ptr.hbm [resolvable:$true] %s10040
          %10046 = dma.vmem_to_hbm [thread:$0]  %s10039, 512, %s10041, %s10024, 64, 64, 4
        $region103: #{tpu_custom_call.1} parent=63 // pred_fallthru
          _
      $region64: #{tpu_custom_call.1} parent=5 // pred_fallthru
        _
      %p10047 = scmp.le.s32.totalorder 2, %s26
      // Predicated region
      $region104: #{tpu_custom_call.1} parent=5 // pred_check
        %p10048 = pneg %p10047
      $region105: #{tpu_custom_call.1} parent=5 // pred_check_branch
        %10050 = sbr.rel (%p10048) target = $region107
      $region106: #{tpu_custom_call.1} parent=5 // pred_region
        %s10051 = ssub.s32 %s26, 2
        // Predicated region
        $region108: #{tpu_custom_call.1} parent=106 // pred_check
          %p10052 = pneg %p305
        $region109: #{tpu_custom_call.1} parent=106 // pred_check_branch
          %10054 = sbr.rel (%p10052) target = $region111
        $region110: #{tpu_custom_call.1} parent=106 // pred_region
          %s10055 = sand.u32 %s290, 1
          %s10056 = scalar_lea.sflag [#allocation7], %s10055
          %s10057 = sand.u32 %s290, 1
          %s10058 = smul.addr %s10057, 32
          %s10059 = scalar_lea.vmem [#allocation16], %s10058
          %10061 = dma.done %s10056, 512
        $region111: #{tpu_custom_call.1} parent=106 // pred_fallthru
          _
      $region107: #{tpu_custom_call.1} parent=5 // pred_fallthru
        _
    $region6: #{tpu_custom_call.1} parent=1 // loop_footer
      %s30 = sadd.s32 1, %s26
    $region7: #{tpu_custom_call.1} parent=1 // loop_footer_branch
      %25 = sbr.rel target = $region3
    $region8: #{tpu_custom_call.1} parent=1 // loop_exit
      _
    %10062 = vsyncpa [#allocation6], 1
    %s10063 = scalar_lea.sflag [#allocation6], 1
    %10064 = vsyncpa %s10063, 1
    %10065 = vsyncpa [#allocation9], 1
    %10066 = vsyncpa [#allocation12], 1
    %10067 = vsyncpa [#allocation15], 1
    %10068 = vsyncpa [#allocation7], 1
    %s10069 = scalar_lea.sflag [#allocation7], 1
    %10070 = vsyncpa %s10069, 1

</llo_original>
